<compile_context>
chip_gen: v7x
topology: tpu7x:2x2x1
jax: 0.10.0
libtpu: 0.0.40
codegen_flags: <defaults>
</compile_context>

<pallas_src>
import jax
import jax.numpy as jnp
from jax import lax
from jax.experimental import pallas as pl
from jax.experimental.pallas import tpu as pltpu


def _make_kernel(H, W, kh, kw, r_off, c_off):
    HW = H * W

    def exact_floordiv(v, c):
        # exact v // c for int32 v in [0, HW); c is a positive Python int.
        # (compare-sum on a tiny (1,1,S,128) array; avoids vector int division)
        q = jnp.zeros_like(v)
        for t in range(1, (HW - 1) // c + 1):
            q = q + (v >= t * c).astype(v.dtype)
        return q

    def kernel(x_ref, o_ref):
        S, L = x_ref.shape[2], x_ref.shape[3]
        x = x_ref[...].astype(jnp.float32)                     # (H, W, S, L)

        # ---- separable ones(kh, kw) box filter, zero padded, cropped to HxW.
        # NOTE: the module's positive 1/(kh+kw) scale cannot move the argmax,
        # so it is omitted (documented float-tie caveat in the wrapper).
        parts = []
        if kh // 2:
            parts.append(jnp.zeros((kh // 2, W, S, L), jnp.float32))
        parts.append(x)
        if kh - 1 - kh // 2:
            parts.append(jnp.zeros((kh - 1 - kh // 2, W, S, L), jnp.float32))
        xp = jnp.concatenate(parts, axis=0) if len(parts) > 1 else x
        rsum = xp[0:H]                                         # row sliding sum
        for d in range(1, kh):
            rsum = rsum + xp[d:d + H]

        parts = []
        if kw // 2:
            parts.append(jnp.zeros((H, kw // 2, S, L), jnp.float32))
        parts.append(rsum)
        if kw - 1 - kw // 2:
            parts.append(jnp.zeros((H, kw - 1 - kw // 2, S, L), jnp.float32))
        cp = jnp.concatenate(parts, axis=1) if len(parts) > 1 else rsum
        xc = cp[:, 0:W]                                        # col sliding sum
        for d in range(1, kw):
            xc = xc + cp[:, d:d + W]

        # ---- per-plane argmax over the flattened (H*W) smoothed image
        #      (first maximal index, like torch/jnp argmax).
        m = jnp.max(xc, axis=(0, 1), keepdims=True)            # (1,1,S,L)
        hi = lax.broadcasted_iota(jnp.int32, (H, W, S, L), 0)
        wi = lax.broadcasted_iota(jnp.int32, (H, W, S, L), 1)
        flat = hi * W + wi
        amax = jnp.min(jnp.where(xc == m, flat, HW),
                       axis=(0, 1), keepdims=True)             # (1,1,S,L) int32

        # PyTorch's decode (quirky: // H, % W) -- kept verbatim.
        row = exact_floordiv(amax, H)
        col = amax - W * exact_floordiv(amax, W)

        # window start in original-image coordinates; out-of-range rows/cols
        # fall in the zero padding and come out as zeros from the selection.
        rs = row + r_off                                       # (1,1,S,L)
        cs = col + c_off

        # ---- one-hot window extraction (pure VPU compare/select/reduce):
        # stage 1 picks window row rs+u, stage 2 picks window column cs+v.
        hsel = lax.broadcasted_iota(jnp.int32, (H, 1, S, L), 0)
        wsel = lax.broadcasted_iota(jnp.int32, (W, S, L), 0)
        cmasks = [wsel == (cs[0] + v) for v in range(kw)]      # kw x (W,S,L)
        outs = []
        for u in range(kh):
            row_u = jnp.sum(jnp.where(hsel == rs + u, x, 0.0), axis=0)  # (W,S,L)
            for v in range(kw):
                outs.append(jnp.sum(jnp.where(cmasks[v], row_u, 0.0), axis=0))
        out = jnp.stack(outs, axis=0)                          # (kh*kw, S, L)
        o_ref[...] = out.astype(o_ref.dtype)

    return kernel


def maxpool2d_g(x, ker_size):
    B, C, H, W = x.shape
    kh, kw = H // ker_size[0], W // ker_size[1]
    assert kh >= 1 and kw >= 1, (H, W, ker_size)
    pH, pW = H + kh, W + kw
    place_r, place_c = pH // 2 - H // 2, pW // 2 - W // 2   # x placement in paddedX
    shift_r, shift_c = H // (2 * ker_size[0]), W // (2 * ker_size[1])
    r_off = shift_r - kh // 2 - place_r                     # window start offset (x coords)
    c_off = shift_c - kw // 2 - place_c

    # The PyTorch module implicitly assumes every (kh, kw) window around a
    # (shifted) argmax stays inside paddedX (otherwise its masked .view() fails).
    # Under that invariant, zero-filling outside x (what the one-hot selection in
    # the kernel does) is exactly equivalent to reading paddedX.
    max_row = (H * W - 1) // H            # after the quirky // H decode
    max_col = W - 1
    assert shift_r - kh // 2 >= 0 and max_row + shift_r - kh // 2 + kh <= pH, \
        "argmax window would leave paddedX (the PyTorch module itself would fail)"
    assert shift_c - kw // 2 >= 0 and max_col + shift_c - kw // 2 + kw <= pW, \
        "argmax window would leave paddedX (the PyTorch module itself would fail)"

    # --- plane packing: every (b, c) plane is independent; put the plane axis on
    # the (sublane, lane) = (S_total, 128) tile so all VPU work is fully dense.
    P = B * C
    G = -(-P // 128)                       # number of 128-plane lane groups
    S_BLK = G if G <= 8 else 8             # full (8,128) tiles once P > 1024
    S_total = -(-G // S_BLK) * S_BLK
    n_steps = S_total // S_BLK             # >= 2 once P > 1024 (v7x megacore)
    P_pad = S_total * 128

    xp = x.reshape(P, H * W)
    if P_pad != P:
        xp = jnp.pad(xp, ((0, P_pad - P), (0, 0)))    # dummy all-zero planes
    xl = xp.T.reshape(H, W, S_total, 128)  # plane axis on (sublanes, lanes)

    kernel = _make_kernel(H, W, kh, kw, r_off, c_off)
    out = pl.pallas_call(
        kernel,
        out_shape=jax.ShapeDtypeStruct((kh * kw, S_total, 128), x.dtype),
        grid=(n_steps,),
        in_specs=[pl.BlockSpec((H, W, S_BLK, 128), lambda i: (0, 0, i, 0))],
        out_specs=pl.BlockSpec((kh * kw, S_BLK, 128), lambda i: (0, i, 0)),
        compiler_params=pltpu.CompilerParams(
            dimension_semantics=("parallel",),
            vmem_limit_bytes=32 * 1024 * 1024),
    )(xl)

    # (kh*kw, S_total, 128) -> (B, C, kh, kw); padded planes are dropped.
    return out.reshape(kh * kw, P_pad).T[:P].reshape(B, C, kh, kw)


def maxpool2d_g_ref(x, ker_size):
    """Pure-JAX reference mirroring the PyTorch forward exactly."""
    B, C, H, W = x.shape
    kh, kw = H // ker_size[0], W // ker_size[1]
    weight = jnp.ones((C, 1, kh, kw), x.dtype) / (kh + kw)
    xc = lax.conv_general_dilated(
        x, weight, window_strides=(1, 1),
        padding=((kh // 2, kh // 2), (kw // 2, kw // 2)),
        dimension_numbers=("NCHW", "OIHW", "NCHW"),
        feature_group_count=C)[:, :, :H, :W]
    flat = jnp.argmax(xc.reshape(B, C, H * W), axis=-1)
    row = flat // H
    col = flat % W
    pH, pW = H + H // ker_size[0], W + W // ker_size[1]
    padded = jnp.zeros((B, C, pH, pW), x.dtype)
    ctr = (pH // 2, pW // 2)
    widths = (H // 2, W // 2)
    padded = padded.at[:, :, ctr[0] - widths[0]:ctr[0] + widths[0] + H % 2,
                       ctr[1] - widths[1]:ctr[1] + widths[1] + W % 2].set(x)
    r0 = row + H // (2 * ker_size[0]) - kh // 2
    c0 = col + W // (2 * ker_size[1]) - kw // 2
    gather = jax.vmap(jax.vmap(
        lambda p, r, c: lax.dynamic_slice(p, (r, c), (kh, kw))))
    return gather(padded, r0, c0)


if __name__ == "__main__":
    key = jax.random.PRNGKey(0)
    B, C, H, W = 2, 4, 16, 16
    ker_size = (4, 4)                 # -> convKerSize = (4, 4), output (B, C, 4, 4)
    x = jax.random.normal(key, (B, C, H, W), dtype=jnp.float32)

    out = jax.block_until_ready(maxpool2d_g(x, ker_size))
    ref = maxpool2d_g_ref(x, ker_size)
    assert out.shape == (B, C, H // ker_size[0], W // ker_size[1]), out.shape
    assert jnp.allclose(out, ref, atol=1e-5), (out, ref)

    # Non-square spatial dims: exercises the module's quirky (// H, % W) decode
    # and a rectangular (kh, kw) = (4, 2) window.
    x2 = jax.random.normal(jax.random.PRNGKey(1), (2, 4, 16, 8), dtype=jnp.float32)
    out2 = jax.block_until_ready(maxpool2d_g(x2, ker_size))
    ref2 = maxpool2d_g_ref(x2, ker_size)
    assert out2.shape == (2, 4, 4, 2), out2.shape
    assert jnp.allclose(out2, ref2, atol=1e-5), (out2, ref2)

    # Enough planes for full (8,128) tiles and a 2-step "parallel" grid
    # (exercises the multi-block path / v7x megacore sharding).
    x3 = jax.random.normal(jax.random.PRNGKey(2), (2, 1024, 16, 16), dtype=jnp.float32)
    out3 = jax.block_until_ready(maxpool2d_g(x3, ker_size))
    ref3 = maxpool2d_g_ref(x3, ker_size)
    assert jnp.allclose(out3, ref3, atol=1e-5)

    print("KERNEL_OK")
</pallas_src>

<mosaic_0001>
module attributes {stable_mosaic.version = 11 : i64} {
  func.func @kernel(%arg0: i32, %arg1: memref<16x16x1x128xf32, #tpu.memory_space<vmem>>, %arg2: memref<16x1x128xf32, #tpu.memory_space<vmem>>) attributes {dimension_semantics = [#tpu.dimension_semantics<parallel>], iteration_bounds = array<i64: 1>, scalar_prefetch = 0 : i64, scratch_operands = 0 : i64, tpu.core_type = #tpu.core_type<tc>, window_params = [{transform_indices = @transform_0, window_bounds = array<i64: 16, 16, 1, 128>}, {transform_indices = @transform_1, window_bounds = array<i64: 16, 1, 128>}]} {
    %c0 = arith.constant 0 : index
    %c0_0 = arith.constant 0 : index
    %c0_1 = arith.constant 0 : index
    %c0_2 = arith.constant 0 : index
    %0 = vector.load %arg1[%c0, %c0_0, %c0_1, %c0_2] : memref<16x16x1x128xf32, #tpu.memory_space<vmem>>, vector<16x16x1x128xf32>
    %cst = arith.constant 0.000000e+00 : f32
    %1 = vector.broadcast %cst : f32 to vector<2x16x1x128xf32>
    %cst_3 = arith.constant 0.000000e+00 : f32
    %2 = vector.broadcast %cst_3 : f32 to vector<1x16x1x128xf32>
    %3 = tpu.concatenate %1, %0, %2 in 0 : vector<2x16x1x128xf32>, vector<16x16x1x128xf32>, vector<1x16x1x128xf32> -> vector<19x16x1x128xf32>
    %4 = vector.extract_strided_slice %3 {offsets = [0, 0, 0, 0], sizes = [16, 16, 1, 128], strides = [1, 1, 1, 1]} : vector<19x16x1x128xf32> to vector<16x16x1x128xf32>
    %5 = vector.extract_strided_slice %3 {offsets = [1, 0, 0, 0], sizes = [16, 16, 1, 128], strides = [1, 1, 1, 1]} : vector<19x16x1x128xf32> to vector<16x16x1x128xf32>
    %6 = arith.addf %4, %5 : vector<16x16x1x128xf32>
    %7 = vector.extract_strided_slice %3 {offsets = [2, 0, 0, 0], sizes = [16, 16, 1, 128], strides = [1, 1, 1, 1]} : vector<19x16x1x128xf32> to vector<16x16x1x128xf32>
    %8 = arith.addf %6, %7 : vector<16x16x1x128xf32>
    %9 = vector.extract_strided_slice %3 {offsets = [3, 0, 0, 0], sizes = [16, 16, 1, 128], strides = [1, 1, 1, 1]} : vector<19x16x1x128xf32> to vector<16x16x1x128xf32>
    %10 = arith.addf %8, %9 : vector<16x16x1x128xf32>
    %cst_4 = arith.constant 0.000000e+00 : f32
    %11 = vector.broadcast %cst_4 : f32 to vector<16x2x1x128xf32>
    %cst_5 = arith.constant 0.000000e+00 : f32
    %12 = vector.broadcast %cst_5 : f32 to vector<16x1x1x128xf32>
    %13 = tpu.concatenate %11, %10, %12 in 1 : vector<16x2x1x128xf32>, vector<16x16x1x128xf32>, vector<16x1x1x128xf32> -> vector<16x19x1x128xf32>
    %14 = vector.extract_strided_slice %13 {offsets = [0, 0, 0, 0], sizes = [16, 16, 1, 128], strides = [1, 1, 1, 1]} : vector<16x19x1x128xf32> to vector<16x16x1x128xf32>
    %15 = vector.extract_strided_slice %13 {offsets = [0, 1, 0, 0], sizes = [16, 16, 1, 128], strides = [1, 1, 1, 1]} : vector<16x19x1x128xf32> to vector<16x16x1x128xf32>
    %16 = arith.addf %14, %15 : vector<16x16x1x128xf32>
    %17 = vector.extract_strided_slice %13 {offsets = [0, 2, 0, 0], sizes = [16, 16, 1, 128], strides = [1, 1, 1, 1]} : vector<16x19x1x128xf32> to vector<16x16x1x128xf32>
    %18 = arith.addf %16, %17 : vector<16x16x1x128xf32>
    %19 = vector.extract_strided_slice %13 {offsets = [0, 3, 0, 0], sizes = [16, 16, 1, 128], strides = [1, 1, 1, 1]} : vector<16x19x1x128xf32> to vector<16x16x1x128xf32>
    %20 = arith.addf %18, %19 : vector<16x16x1x128xf32>
    %cst_6 = arith.constant dense<0xFF800000> : vector<1x128xf32>
    %21 = vector.multi_reduction <maximumf>, %20, %cst_6 [0, 1] : vector<16x16x1x128xf32> to vector<1x128xf32>
    %22 = vector.shape_cast %21 : vector<1x128xf32> to vector<1x1x1x128xf32>
    %23 = tpu.iota {dimensions = array<i32: 0>} : vector<16x16x1x128xi32>
    %24 = tpu.iota {dimensions = array<i32: 1>} : vector<16x16x1x128xi32>
    %c16_i32 = arith.constant 16 : i32
    %25 = vector.broadcast %c16_i32 : i32 to vector<16x16x1x128xi32>
    %26 = arith.muli %23, %25 : vector<16x16x1x128xi32>
    %27 = arith.addi %26, %24 : vector<16x16x1x128xi32>
    %28 = vector.broadcast %22 : vector<1x1x1x128xf32> to vector<16x16x1x128xf32>
    %29 = arith.cmpf oeq, %20, %28 : vector<16x16x1x128xf32>
    %c256_i32 = arith.constant 256 : i32
    %30 = vector.broadcast %c256_i32 : i32 to vector<16x16x1x128xi32>
    %31 = arith.select %29, %27, %30 : vector<16x16x1x128xi1>, vector<16x16x1x128xi32>
    %cst_7 = arith.constant dense<2147483647> : vector<1x128xi32>
    %32 = vector.multi_reduction <minsi>, %31, %cst_7 [0, 1] : vector<16x16x1x128xi32> to vector<1x128xi32>
    %33 = vector.shape_cast %32 : vector<1x128xi32> to vector<1x1x1x128xi32>
    %c0_i32 = arith.constant 0 : i32
    %34 = vector.broadcast %c0_i32 : i32 to vector<1x1x1x128xi32>
    %c16_i32_8 = arith.constant 16 : i32
    %35 = vector.broadcast %c16_i32_8 : i32 to vector<1x1x1x128xi32>
    %36 = arith.cmpi sge, %33, %35 : vector<1x1x1x128xi32>
    %37 = arith.extui %36 : vector<1x1x1x128xi1> to vector<1x1x1x128xi32>
    %38 = arith.addi %34, %37 : vector<1x1x1x128xi32>
    %c32_i32 = arith.constant 32 : i32
    %39 = vector.broadcast %c32_i32 : i32 to vector<1x1x1x128xi32>
    %40 = arith.cmpi sge, %33, %39 : vector<1x1x1x128xi32>
    %41 = arith.extui %40 : vector<1x1x1x128xi1> to vector<1x1x1x128xi32>
    %42 = arith.addi %38, %41 : vector<1x1x1x128xi32>
    %c48_i32 = arith.constant 48 : i32
    %43 = vector.broadcast %c48_i32 : i32 to vector<1x1x1x128xi32>
    %44 = arith.cmpi sge, %33, %43 : vector<1x1x1x128xi32>
    %45 = arith.extui %44 : vector<1x1x1x128xi1> to vector<1x1x1x128xi32>
    %46 = arith.addi %42, %45 : vector<1x1x1x128xi32>
    %c64_i32 = arith.constant 64 : i32
    %47 = vector.broadcast %c64_i32 : i32 to vector<1x1x1x128xi32>
    %48 = arith.cmpi sge, %33, %47 : vector<1x1x1x128xi32>
    %49 = arith.extui %48 : vector<1x1x1x128xi1> to vector<1x1x1x128xi32>
    %50 = arith.addi %46, %49 : vector<1x1x1x128xi32>
    %c80_i32 = arith.constant 80 : i32
    %51 = vector.broadcast %c80_i32 : i32 to vector<1x1x1x128xi32>
    %52 = arith.cmpi sge, %33, %51 : vector<1x1x1x128xi32>
    %53 = arith.extui %52 : vector<1x1x1x128xi1> to vector<1x1x1x128xi32>
    %54 = arith.addi %50, %53 : vector<1x1x1x128xi32>
    %c96_i32 = arith.constant 96 : i32
    %55 = vector.broadcast %c96_i32 : i32 to vector<1x1x1x128xi32>
    %56 = arith.cmpi sge, %33, %55 : vector<1x1x1x128xi32>
    %57 = arith.extui %56 : vector<1x1x1x128xi1> to vector<1x1x1x128xi32>
    %58 = arith.addi %54, %57 : vector<1x1x1x128xi32>
    %c112_i32 = arith.constant 112 : i32
    %59 = vector.broadcast %c112_i32 : i32 to vector<1x1x1x128xi32>
    %60 = arith.cmpi sge, %33, %59 : vector<1x1x1x128xi32>
    %61 = arith.extui %60 : vector<1x1x1x128xi1> to vector<1x1x1x128xi32>
    %62 = arith.addi %58, %61 : vector<1x1x1x128xi32>
    %c128_i32 = arith.constant 128 : i32
    %63 = vector.broadcast %c128_i32 : i32 to vector<1x1x1x128xi32>
    %64 = arith.cmpi sge, %33, %63 : vector<1x1x1x128xi32>
    %65 = arith.extui %64 : vector<1x1x1x128xi1> to vector<1x1x1x128xi32>
    %66 = arith.addi %62, %65 : vector<1x1x1x128xi32>
    %c144_i32 = arith.constant 144 : i32
    %67 = vector.broadcast %c144_i32 : i32 to vector<1x1x1x128xi32>
    %68 = arith.cmpi sge, %33, %67 : vector<1x1x1x128xi32>
    %69 = arith.extui %68 : vector<1x1x1x128xi1> to vector<1x1x1x128xi32>
    %70 = arith.addi %66, %69 : vector<1x1x1x128xi32>
    %c160_i32 = arith.constant 160 : i32
    %71 = vector.broadcast %c160_i32 : i32 to vector<1x1x1x128xi32>
    %72 = arith.cmpi sge, %33, %71 : vector<1x1x1x128xi32>
    %73 = arith.extui %72 : vector<1x1x1x128xi1> to vector<1x1x1x128xi32>
    %74 = arith.addi %70, %73 : vector<1x1x1x128xi32>
    %c176_i32 = arith.constant 176 : i32
    %75 = vector.broadcast %c176_i32 : i32 to vector<1x1x1x128xi32>
    %76 = arith.cmpi sge, %33, %75 : vector<1x1x1x128xi32>
    %77 = arith.extui %76 : vector<1x1x1x128xi1> to vector<1x1x1x128xi32>
    %78 = arith.addi %74, %77 : vector<1x1x1x128xi32>
    %c192_i32 = arith.constant 192 : i32
    %79 = vector.broadcast %c192_i32 : i32 to vector<1x1x1x128xi32>
    %80 = arith.cmpi sge, %33, %79 : vector<1x1x1x128xi32>
    %81 = arith.extui %80 : vector<1x1x1x128xi1> to vector<1x1x1x128xi32>
    %82 = arith.addi %78, %81 : vector<1x1x1x128xi32>
    %c208_i32 = arith.constant 208 : i32
    %83 = vector.broadcast %c208_i32 : i32 to vector<1x1x1x128xi32>
    %84 = arith.cmpi sge, %33, %83 : vector<1x1x1x128xi32>
    %85 = arith.extui %84 : vector<1x1x1x128xi1> to vector<1x1x1x128xi32>
    %86 = arith.addi %82, %85 : vector<1x1x1x128xi32>
    %c224_i32 = arith.constant 224 : i32
    %87 = vector.broadcast %c224_i32 : i32 to vector<1x1x1x128xi32>
    %88 = arith.cmpi sge, %33, %87 : vector<1x1x1x128xi32>
    %89 = arith.extui %88 : vector<1x1x1x128xi1> to vector<1x1x1x128xi32>
    %90 = arith.addi %86, %89 : vector<1x1x1x128xi32>
    %c240_i32 = arith.constant 240 : i32
    %91 = vector.broadcast %c240_i32 : i32 to vector<1x1x1x128xi32>
    %92 = arith.cmpi sge, %33, %91 : vector<1x1x1x128xi32>
    %93 = arith.extui %92 : vector<1x1x1x128xi1> to vector<1x1x1x128xi32>
    %94 = arith.addi %90, %93 : vector<1x1x1x128xi32>
    %c0_i32_9 = arith.constant 0 : i32
    %95 = vector.broadcast %c0_i32_9 : i32 to vector<1x1x1x128xi32>
    %c16_i32_10 = arith.constant 16 : i32
    %96 = vector.broadcast %c16_i32_10 : i32 to vector<1x1x1x128xi32>
    %97 = arith.cmpi sge, %33, %96 : vector<1x1x1x128xi32>
    %98 = arith.extui %97 : vector<1x1x1x128xi1> to vector<1x1x1x128xi32>
    %99 = arith.addi %95, %98 : vector<1x1x1x128xi32>
    %c32_i32_11 = arith.constant 32 : i32
    %100 = vector.broadcast %c32_i32_11 : i32 to vector<1x1x1x128xi32>
    %101 = arith.cmpi sge, %33, %100 : vector<1x1x1x128xi32>
    %102 = arith.extui %101 : vector<1x1x1x128xi1> to vector<1x1x1x128xi32>
    %103 = arith.addi %99, %102 : vector<1x1x1x128xi32>
    %c48_i32_12 = arith.constant 48 : i32
    %104 = vector.broadcast %c48_i32_12 : i32 to vector<1x1x1x128xi32>
    %105 = arith.cmpi sge, %33, %104 : vector<1x1x1x128xi32>
    %106 = arith.extui %105 : vector<1x1x1x128xi1> to vector<1x1x1x128xi32>
    %107 = arith.addi %103, %106 : vector<1x1x1x128xi32>
    %c64_i32_13 = arith.constant 64 : i32
    %108 = vector.broadcast %c64_i32_13 : i32 to vector<1x1x1x128xi32>
    %109 = arith.cmpi sge, %33, %108 : vector<1x1x1x128xi32>
    %110 = arith.extui %109 : vector<1x1x1x128xi1> to vector<1x1x1x128xi32>
    %111 = arith.addi %107, %110 : vector<1x1x1x128xi32>
    %c80_i32_14 = arith.constant 80 : i32
    %112 = vector.broadcast %c80_i32_14 : i32 to vector<1x1x1x128xi32>
    %113 = arith.cmpi sge, %33, %112 : vector<1x1x1x128xi32>
    %114 = arith.extui %113 : vector<1x1x1x128xi1> to vector<1x1x1x128xi32>
    %115 = arith.addi %111, %114 : vector<1x1x1x128xi32>
    %c96_i32_15 = arith.constant 96 : i32
    %116 = vector.broadcast %c96_i32_15 : i32 to vector<1x1x1x128xi32>
    %117 = arith.cmpi sge, %33, %116 : vector<1x1x1x128xi32>
    %118 = arith.extui %117 : vector<1x1x1x128xi1> to vector<1x1x1x128xi32>
    %119 = arith.addi %115, %118 : vector<1x1x1x128xi32>
    %c112_i32_16 = arith.constant 112 : i32
    %120 = vector.broadcast %c112_i32_16 : i32 to vector<1x1x1x128xi32>
    %121 = arith.cmpi sge, %33, %120 : vector<1x1x1x128xi32>
    %122 = arith.extui %121 : vector<1x1x1x128xi1> to vector<1x1x1x128xi32>
    %123 = arith.addi %119, %122 : vector<1x1x1x128xi32>
    %c128_i32_17 = arith.constant 128 : i32
    %124 = vector.broadcast %c128_i32_17 : i32 to vector<1x1x1x128xi32>
    %125 = arith.cmpi sge, %33, %124 : vector<1x1x1x128xi32>
    %126 = arith.extui %125 : vector<1x1x1x128xi1> to vector<1x1x1x128xi32>
    %127 = arith.addi %123, %126 : vector<1x1x1x128xi32>
    %c144_i32_18 = arith.constant 144 : i32
    %128 = vector.broadcast %c144_i32_18 : i32 to vector<1x1x1x128xi32>
    %129 = arith.cmpi sge, %33, %128 : vector<1x1x1x128xi32>
    %130 = arith.extui %129 : vector<1x1x1x128xi1> to vector<1x1x1x128xi32>
    %131 = arith.addi %127, %130 : vector<1x1x1x128xi32>
    %c160_i32_19 = arith.constant 160 : i32
    %132 = vector.broadcast %c160_i32_19 : i32 to vector<1x1x1x128xi32>
    %133 = arith.cmpi sge, %33, %132 : vector<1x1x1x128xi32>
    %134 = arith.extui %133 : vector<1x1x1x128xi1> to vector<1x1x1x128xi32>
    %135 = arith.addi %131, %134 : vector<1x1x1x128xi32>
    %c176_i32_20 = arith.constant 176 : i32
    %136 = vector.broadcast %c176_i32_20 : i32 to vector<1x1x1x128xi32>
    %137 = arith.cmpi sge, %33, %136 : vector<1x1x1x128xi32>
    %138 = arith.extui %137 : vector<1x1x1x128xi1> to vector<1x1x1x128xi32>
    %139 = arith.addi %135, %138 : vector<1x1x1x128xi32>
    %c192_i32_21 = arith.constant 192 : i32
    %140 = vector.broadcast %c192_i32_21 : i32 to vector<1x1x1x128xi32>
    %141 = arith.cmpi sge, %33, %140 : vector<1x1x1x128xi32>
    %142 = arith.extui %141 : vector<1x1x1x128xi1> to vector<1x1x1x128xi32>
    %143 = arith.addi %139, %142 : vector<1x1x1x128xi32>
    %c208_i32_22 = arith.constant 208 : i32
    %144 = vector.broadcast %c208_i32_22 : i32 to vector<1x1x1x128xi32>
    %145 = arith.cmpi sge, %33, %144 : vector<1x1x1x128xi32>
    %146 = arith.extui %145 : vector<1x1x1x128xi1> to vector<1x1x1x128xi32>
    %147 = arith.addi %143, %146 : vector<1x1x1x128xi32>
    %c224_i32_23 = arith.constant 224 : i32
    %148 = vector.broadcast %c224_i32_23 : i32 to vector<1x1x1x128xi32>
    %149 = arith.cmpi sge, %33, %148 : vector<1x1x1x128xi32>
    %150 = arith.extui %149 : vector<1x1x1x128xi1> to vector<1x1x1x128xi32>
    %151 = arith.addi %147, %150 : vector<1x1x1x128xi32>
    %c240_i32_24 = arith.constant 240 : i32
    %152 = vector.broadcast %c240_i32_24 : i32 to vector<1x1x1x128xi32>
    %153 = arith.cmpi sge, %33, %152 : vector<1x1x1x128xi32>
    %154 = arith.extui %153 : vector<1x1x1x128xi1> to vector<1x1x1x128xi32>
    %155 = arith.addi %151, %154 : vector<1x1x1x128xi32>
    %c16_i32_25 = arith.constant 16 : i32
    %156 = vector.broadcast %c16_i32_25 : i32 to vector<1x1x1x128xi32>
    %157 = arith.muli %156, %155 : vector<1x1x1x128xi32>
    %158 = arith.subi %33, %157 : vector<1x1x1x128xi32>
    %c-2_i32 = arith.constant -2 : i32
    %159 = vector.broadcast %c-2_i32 : i32 to vector<1x1x1x128xi32>
    %160 = arith.addi %94, %159 : vector<1x1x1x128xi32>
    %c-2_i32_26 = arith.constant -2 : i32
    %161 = vector.broadcast %c-2_i32_26 : i32 to vector<1x1x1x128xi32>
    %162 = arith.addi %158, %161 : vector<1x1x1x128xi32>
    %163 = tpu.iota {dimensions = array<i32: 0>} : vector<16x1x1x128xi32>
    %164 = tpu.iota {dimensions = array<i32: 0>} : vector<16x1x128xi32>
    %165 = vector.shape_cast %162 : vector<1x1x1x128xi32> to vector<1x1x128xi32>
    %c0_i32_27 = arith.constant 0 : i32
    %166 = vector.broadcast %c0_i32_27 : i32 to vector<1x1x128xi32>
    %167 = arith.addi %165, %166 : vector<1x1x128xi32>
    %168 = vector.broadcast %167 : vector<1x1x128xi32> to vector<16x1x128xi32>
    %169 = arith.cmpi eq, %164, %168 : vector<16x1x128xi32>
    %170 = vector.shape_cast %162 : vector<1x1x1x128xi32> to vector<1x1x128xi32>
    %c1_i32 = arith.constant 1 : i32
    %171 = vector.broadcast %c1_i32 : i32 to vector<1x1x128xi32>
    %172 = arith.addi %170, %171 : vector<1x1x128xi32>
    %173 = vector.broadcast %172 : vector<1x1x128xi32> to vector<16x1x128xi32>
    %174 = arith.cmpi eq, %164, %173 : vector<16x1x128xi32>
    %175 = vector.shape_cast %162 : vector<1x1x1x128xi32> to vector<1x1x128xi32>
    %c2_i32 = arith.constant 2 : i32
    %176 = vector.broadcast %c2_i32 : i32 to vector<1x1x128xi32>
    %177 = arith.addi %175, %176 : vector<1x1x128xi32>
    %178 = vector.broadcast %177 : vector<1x1x128xi32> to vector<16x1x128xi32>
    %179 = arith.cmpi eq, %164, %178 : vector<16x1x128xi32>
    %180 = vector.shape_cast %162 : vector<1x1x1x128xi32> to vector<1x1x128xi32>
    %c3_i32 = arith.constant 3 : i32
    %181 = vector.broadcast %c3_i32 : i32 to vector<1x1x128xi32>
    %182 = arith.addi %180, %181 : vector<1x1x128xi32>
    %183 = vector.broadcast %182 : vector<1x1x128xi32> to vector<16x1x128xi32>
    %184 = arith.cmpi eq, %164, %183 : vector<16x1x128xi32>
    %c0_i32_28 = arith.constant 0 : i32
    %185 = vector.broadcast %c0_i32_28 : i32 to vector<1x1x1x128xi32>
    %186 = arith.addi %160, %185 : vector<1x1x1x128xi32>
    %187 = vector.broadcast %186 : vector<1x1x1x128xi32> to vector<16x1x1x128xi32>
    %188 = arith.cmpi eq, %163, %187 : vector<16x1x1x128xi32>
    %cst_29 = arith.constant 0.000000e+00 : f32
    %189 = vector.shape_cast %188 : vector<16x1x1x128xi1> to vector<16x1x1x128xi1>
    %190 = vector.broadcast %189 : vector<16x1x1x128xi1> to vector<16x16x1x128xi1>
    %191 = vector.broadcast %cst_29 : f32 to vector<16x16x1x128xf32>
    %192 = arith.select %190, %0, %191 : vector<16x16x1x128xi1>, vector<16x16x1x128xf32>
    %cst_30 = arith.constant dense<0.000000e+00> : vector<16x1x128xf32>
    %193 = vector.multi_reduction <add>, %192, %cst_30 [0] : vector<16x16x1x128xf32> to vector<16x1x128xf32>
    %cst_31 = arith.constant 0.000000e+00 : f32
    %194 = vector.broadcast %cst_31 : f32 to vector<16x1x128xf32>
    %195 = arith.select %169, %193, %194 : vector<16x1x128xi1>, vector<16x1x128xf32>
    %cst_32 = arith.constant dense<0.000000e+00> : vector<1x128xf32>
    %196 = vector.multi_reduction <add>, %195, %cst_32 [0] : vector<16x1x128xf32> to vector<1x128xf32>
    %cst_33 = arith.constant 0.000000e+00 : f32
    %197 = vector.broadcast %cst_33 : f32 to vector<16x1x128xf32>
    %198 = arith.select %174, %193, %197 : vector<16x1x128xi1>, vector<16x1x128xf32>
    %cst_34 = arith.constant dense<0.000000e+00> : vector<1x128xf32>
    %199 = vector.multi_reduction <add>, %198, %cst_34 [0] : vector<16x1x128xf32> to vector<1x128xf32>
    %cst_35 = arith.constant 0.000000e+00 : f32
    %200 = vector.broadcast %cst_35 : f32 to vector<16x1x128xf32>
    %201 = arith.select %179, %193, %200 : vector<16x1x128xi1>, vector<16x1x128xf32>
    %cst_36 = arith.constant dense<0.000000e+00> : vector<1x128xf32>
    %202 = vector.multi_reduction <add>, %201, %cst_36 [0] : vector<16x1x128xf32> to vector<1x128xf32>
    %cst_37 = arith.constant 0.000000e+00 : f32
    %203 = vector.broadcast %cst_37 : f32 to vector<16x1x128xf32>
    %204 = arith.select %184, %193, %203 : vector<16x1x128xi1>, vector<16x1x128xf32>
    %cst_38 = arith.constant dense<0.000000e+00> : vector<1x128xf32>
    %205 = vector.multi_reduction <add>, %204, %cst_38 [0] : vector<16x1x128xf32> to vector<1x128xf32>
    %c1_i32_39 = arith.constant 1 : i32
    %206 = vector.broadcast %c1_i32_39 : i32 to vector<1x1x1x128xi32>
    %207 = arith.addi %160, %206 : vector<1x1x1x128xi32>
    %208 = vector.broadcast %207 : vector<1x1x1x128xi32> to vector<16x1x1x128xi32>
    %209 = arith.cmpi eq, %163, %208 : vector<16x1x1x128xi32>
    %cst_40 = arith.constant 0.000000e+00 : f32
    %210 = vector.shape_cast %209 : vector<16x1x1x128xi1> to vector<16x1x1x128xi1>
    %211 = vector.broadcast %210 : vector<16x1x1x128xi1> to vector<16x16x1x128xi1>
    %212 = vector.broadcast %cst_40 : f32 to vector<16x16x1x128xf32>
    %213 = arith.select %211, %0, %212 : vector<16x16x1x128xi1>, vector<16x16x1x128xf32>
    %cst_41 = arith.constant dense<0.000000e+00> : vector<16x1x128xf32>
    %214 = vector.multi_reduction <add>, %213, %cst_41 [0] : vector<16x16x1x128xf32> to vector<16x1x128xf32>
    %cst_42 = arith.constant 0.000000e+00 : f32
    %215 = vector.broadcast %cst_42 : f32 to vector<16x1x128xf32>
    %216 = arith.select %169, %214, %215 : vector<16x1x128xi1>, vector<16x1x128xf32>
    %cst_43 = arith.constant dense<0.000000e+00> : vector<1x128xf32>
    %217 = vector.multi_reduction <add>, %216, %cst_43 [0] : vector<16x1x128xf32> to vector<1x128xf32>
    %cst_44 = arith.constant 0.000000e+00 : f32
    %218 = vector.broadcast %cst_44 : f32 to vector<16x1x128xf32>
    %219 = arith.select %174, %214, %218 : vector<16x1x128xi1>, vector<16x1x128xf32>
    %cst_45 = arith.constant dense<0.000000e+00> : vector<1x128xf32>
    %220 = vector.multi_reduction <add>, %219, %cst_45 [0] : vector<16x1x128xf32> to vector<1x128xf32>
    %cst_46 = arith.constant 0.000000e+00 : f32
    %221 = vector.broadcast %cst_46 : f32 to vector<16x1x128xf32>
    %222 = arith.select %179, %214, %221 : vector<16x1x128xi1>, vector<16x1x128xf32>
    %cst_47 = arith.constant dense<0.000000e+00> : vector<1x128xf32>
    %223 = vector.multi_reduction <add>, %222, %cst_47 [0] : vector<16x1x128xf32> to vector<1x128xf32>
    %cst_48 = arith.constant 0.000000e+00 : f32
    %224 = vector.broadcast %cst_48 : f32 to vector<16x1x128xf32>
    %225 = arith.select %184, %214, %224 : vector<16x1x128xi1>, vector<16x1x128xf32>
    %cst_49 = arith.constant dense<0.000000e+00> : vector<1x128xf32>
    %226 = vector.multi_reduction <add>, %225, %cst_49 [0] : vector<16x1x128xf32> to vector<1x128xf32>
    %c2_i32_50 = arith.constant 2 : i32
    %227 = vector.broadcast %c2_i32_50 : i32 to vector<1x1x1x128xi32>
    %228 = arith.addi %160, %227 : vector<1x1x1x128xi32>
    %229 = vector.broadcast %228 : vector<1x1x1x128xi32> to vector<16x1x1x128xi32>
    %230 = arith.cmpi eq, %163, %229 : vector<16x1x1x128xi32>
    %cst_51 = arith.constant 0.000000e+00 : f32
    %231 = vector.shape_cast %230 : vector<16x1x1x128xi1> to vector<16x1x1x128xi1>
    %232 = vector.broadcast %231 : vector<16x1x1x128xi1> to vector<16x16x1x128xi1>
    %233 = vector.broadcast %cst_51 : f32 to vector<16x16x1x128xf32>
    %234 = arith.select %232, %0, %233 : vector<16x16x1x128xi1>, vector<16x16x1x128xf32>
    %cst_52 = arith.constant dense<0.000000e+00> : vector<16x1x128xf32>
    %235 = vector.multi_reduction <add>, %234, %cst_52 [0] : vector<16x16x1x128xf32> to vector<16x1x128xf32>
    %cst_53 = arith.constant 0.000000e+00 : f32
    %236 = vector.broadcast %cst_53 : f32 to vector<16x1x128xf32>
    %237 = arith.select %169, %235, %236 : vector<16x1x128xi1>, vector<16x1x128xf32>
    %cst_54 = arith.constant dense<0.000000e+00> : vector<1x128xf32>
    %238 = vector.multi_reduction <add>, %237, %cst_54 [0] : vector<16x1x128xf32> to vector<1x128xf32>
    %cst_55 = arith.constant 0.000000e+00 : f32
    %239 = vector.broadcast %cst_55 : f32 to vector<16x1x128xf32>
    %240 = arith.select %174, %235, %239 : vector<16x1x128xi1>, vector<16x1x128xf32>
    %cst_56 = arith.constant dense<0.000000e+00> : vector<1x128xf32>
    %241 = vector.multi_reduction <add>, %240, %cst_56 [0] : vector<16x1x128xf32> to vector<1x128xf32>
    %cst_57 = arith.constant 0.000000e+00 : f32
    %242 = vector.broadcast %cst_57 : f32 to vector<16x1x128xf32>
    %243 = arith.select %179, %235, %242 : vector<16x1x128xi1>, vector<16x1x128xf32>
    %cst_58 = arith.constant dense<0.000000e+00> : vector<1x128xf32>
    %244 = vector.multi_reduction <add>, %243, %cst_58 [0] : vector<16x1x128xf32> to vector<1x128xf32>
    %cst_59 = arith.constant 0.000000e+00 : f32
    %245 = vector.broadcast %cst_59 : f32 to vector<16x1x128xf32>
    %246 = arith.select %184, %235, %245 : vector<16x1x128xi1>, vector<16x1x128xf32>
    %cst_60 = arith.constant dense<0.000000e+00> : vector<1x128xf32>
    %247 = vector.multi_reduction <add>, %246, %cst_60 [0] : vector<16x1x128xf32> to vector<1x128xf32>
    %c3_i32_61 = arith.constant 3 : i32
    %248 = vector.broadcast %c3_i32_61 : i32 to vector<1x1x1x128xi32>
    %249 = arith.addi %160, %248 : vector<1x1x1x128xi32>
    %250 = vector.broadcast %249 : vector<1x1x1x128xi32> to vector<16x1x1x128xi32>
    %251 = arith.cmpi eq, %163, %250 : vector<16x1x1x128xi32>
    %cst_62 = arith.constant 0.000000e+00 : f32
    %252 = vector.shape_cast %251 : vector<16x1x1x128xi1> to vector<16x1x1x128xi1>
    %253 = vector.broadcast %252 : vector<16x1x1x128xi1> to vector<16x16x1x128xi1>
    %254 = vector.broadcast %cst_62 : f32 to vector<16x16x1x128xf32>
    %255 = arith.select %253, %0, %254 : vector<16x16x1x128xi1>, vector<16x16x1x128xf32>
    %cst_63 = arith.constant dense<0.000000e+00> : vector<16x1x128xf32>
    %256 = vector.multi_reduction <add>, %255, %cst_63 [0] : vector<16x16x1x128xf32> to vector<16x1x128xf32>
    %cst_64 = arith.constant 0.000000e+00 : f32
    %257 = vector.broadcast %cst_64 : f32 to vector<16x1x128xf32>
    %258 = arith.select %169, %256, %257 : vector<16x1x128xi1>, vector<16x1x128xf32>
    %cst_65 = arith.constant dense<0.000000e+00> : vector<1x128xf32>
    %259 = vector.multi_reduction <add>, %258, %cst_65 [0] : vector<16x1x128xf32> to vector<1x128xf32>
    %cst_66 = arith.constant 0.000000e+00 : f32
    %260 = vector.broadcast %cst_66 : f32 to vector<16x1x128xf32>
    %261 = arith.select %174, %256, %260 : vector<16x1x128xi1>, vector<16x1x128xf32>
    %cst_67 = arith.constant dense<0.000000e+00> : vector<1x128xf32>
    %262 = vector.multi_reduction <add>, %261, %cst_67 [0] : vector<16x1x128xf32> to vector<1x128xf32>
    %cst_68 = arith.constant 0.000000e+00 : f32
    %263 = vector.broadcast %cst_68 : f32 to vector<16x1x128xf32>
    %264 = arith.select %179, %256, %263 : vector<16x1x128xi1>, vector<16x1x128xf32>
    %cst_69 = arith.constant dense<0.000000e+00> : vector<1x128xf32>
    %265 = vector.multi_reduction <add>, %264, %cst_69 [0] : vector<16x1x128xf32> to vector<1x128xf32>
    %cst_70 = arith.constant 0.000000e+00 : f32
    %266 = vector.broadcast %cst_70 : f32 to vector<16x1x128xf32>
    %267 = arith.select %184, %256, %266 : vector<16x1x128xi1>, vector<16x1x128xf32>
    %cst_71 = arith.constant dense<0.000000e+00> : vector<1x128xf32>
    %268 = vector.multi_reduction <add>, %267, %cst_71 [0] : vector<16x1x128xf32> to vector<1x128xf32>
    %269 = vector.shape_cast %196 : vector<1x128xf32> to vector<1x1x128xf32>
    %270 = vector.shape_cast %199 : vector<1x128xf32> to vector<1x1x128xf32>
    %271 = vector.shape_cast %202 : vector<1x128xf32> to vector<1x1x128xf32>
    %272 = vector.shape_cast %205 : vector<1x128xf32> to vector<1x1x128xf32>
    %273 = vector.shape_cast %217 : vector<1x128xf32> to vector<1x1x128xf32>
    %274 = vector.shape_cast %220 : vector<1x128xf32> to vector<1x1x128xf32>
    %275 = vector.shape_cast %223 : vector<1x128xf32> to vector<1x1x128xf32>
    %276 = vector.shape_cast %226 : vector<1x128xf32> to vector<1x1x128xf32>
    %277 = vector.shape_cast %238 : vector<1x128xf32> to vector<1x1x128xf32>
    %278 = vector.shape_cast %241 : vector<1x128xf32> to vector<1x1x128xf32>
    %279 = vector.shape_cast %244 : vector<1x128xf32> to vector<1x1x128xf32>
    %280 = vector.shape_cast %247 : vector<1x128xf32> to vector<1x1x128xf32>
    %281 = vector.shape_cast %259 : vector<1x128xf32> to vector<1x1x128xf32>
    %282 = vector.shape_cast %262 : vector<1x128xf32> to vector<1x1x128xf32>
    %283 = vector.shape_cast %265 : vector<1x128xf32> to vector<1x1x128xf32>
    %284 = vector.shape_cast %268 : vector<1x128xf32> to vector<1x1x128xf32>
    %285 = tpu.concatenate %269, %270, %271, %272, %273, %274, %275, %276, %277, %278, %279, %280, %281, %282, %283, %284 in 0 : vector<1x1x128xf32>, vector<1x1x128xf32>, vector<1x1x128xf32>, vector<1x1x128xf32>, vector<1x1x128xf32>, vector<1x1x128xf32>, vector<1x1x128xf32>, vector<1x1x128xf32>, vector<1x1x128xf32>, vector<1x1x128xf32>, vector<1x1x128xf32>, vector<1x1x128xf32>, vector<1x1x128xf32>, vector<1x1x128xf32>, vector<1x1x128xf32>, vector<1x1x128xf32> -> vector<16x1x128xf32>
    %c0_72 = arith.constant 0 : index
    %c0_73 = arith.constant 0 : index
    %c0_74 = arith.constant 0 : index
    %286 = vector.load %arg2[%c0_72, %c0_73, %c0_74] : memref<16x1x128xf32, #tpu.memory_space<vmem>>, vector<16x1x128xf32>
    tpu.vector_store %arg2[%c0_72, %c0_73, %c0_74], %285 {strides = array<i32>} : memref<16x1x128xf32, #tpu.memory_space<vmem>>, vector<16x1x128xf32>,
    return
  }
  func.func @transform_0(%arg0: i32) -> (i32, i32, i32, i32) {
    %c0_i32 = arith.constant 0 : i32
    %c0_i32_0 = arith.constant 0 : i32
    %c0_i32_1 = arith.constant 0 : i32
    %c0_i32_2 = arith.constant 0 : i32
    return %c0_i32, %c0_i32_0, %arg0, %c0_i32_1 : i32, i32, i32, i32
  }
  func.func @transform_1(%arg0: i32) -> (i32, i32, i32) {
    %c0_i32 = arith.constant 0 : i32
    %c0_i32_0 = arith.constant 0 : i32
    %c0_i32_1 = arith.constant 0 : i32
    return %c0_i32, %arg0, %c0_i32_0 : i32, i32, i32
  }
}

</mosaic_0001>

<llo_original>
// kernel: tpu_custom_call.1
$region0: #{tpu_custom_call.1}
  #allocation0 [shape = 'u32[]', space=smem, size = 0x4, offset = 0x4, fixed_abs, tag = 'smem constant byte address 0x4 - core index']
  #allocation1 [shape = 'u32[144,128]{1,0:T(1,128)}', space=vmem, size = 0x12000, scoped, tag = 'internal scratch']
  %s0 = inlined_call_operand.hbm [shape: f32[16,16,1,128], index: 0, kind: input, shape index: {}]
  %s1 = inlined_call_operand.hbm [shape: f32[16,1,128], index: 1, kind: output, shape index: {}]
  %s2 = sld [smem:[#allocation0]]
  $region18: #{tpu_custom_call.1} parent=0
    _
  %s4 = ssub.s32 1, %s2
  %s5 = scalar_select 0, %s4, %s2
  $region1: #{tpu_custom_call.1} parent=0
    #allocation2 [shape = 'u8[131072]{0}', space=vmem, size = 0x20000, scoped, tag = 'input window, operand 0, single buffered']
    #allocation3 [shape = 's32[1]{0}', space=sflag, size = 0x4, scoped, tag = 'scoped memory for tpu_custom_call.1']
    #allocation4 [shape = 's32[1]{0}', space=sflag, size = 0x4, scoped, tag = 'scoped memory for tpu_custom_call.1']
    #allocation5 [shape = 'u8[8192]{0}', space=vmem, size = 0x2000, scoped, tag = 'output window, operand 0, single buffered']
    %6 = vsyncpa [#allocation3], 0
    %7 = vsyncpa [#allocation4], 0
    // Predicated region
    $region2: #{tpu_custom_call.1} parent=1 // pred_check
      _
    $region3: #{tpu_custom_call.1} parent=1 // pred_check_branch
      %9 = sbr.rel (0) target = $region5
    $region4: #{tpu_custom_call.1} parent=1 // pred_region
      %s11 = ssub.s32 4096, 4096
      %12 = vsyncadd [#allocation3], %s11
      %s13 = sshll.u32 [#allocation2], 4
      %s14 = int_to_ptr.vmem [resolvable:$true] %s13
      %19 = dma.hbm_to_vmem [thread:$0]  %s0, 4096, %s14, [#allocation3], 16, 16, 1
    $region5: #{tpu_custom_call.1} parent=1 // pred_fallthru
      _
    // Predicated region
    $region6: #{tpu_custom_call.1} parent=1 // pred_check
      _
    $region7: #{tpu_custom_call.1} parent=1 // pred_check_branch
      %21 = sbr.rel (0) target = $region9
    $region8: #{tpu_custom_call.1} parent=1 // pred_region
      %22 = dma.done [#allocation3], 4096
    $region9: #{tpu_custom_call.1} parent=1 // pred_fallthru
      _
    %v23 = vld [vmem:[#allocation2] sm:$0x1]
    %v24 = vld [vmem:[#allocation2 + $0x1] sm:$0x1]
    %v25 = vld [vmem:[#allocation2 + $0x2] sm:$0x1]
    %v26 = vld [vmem:[#allocation2 + $0x3] sm:$0x1]
    %v27 = vld [vmem:[#allocation2 + $0x4] sm:$0x1]
    %v28 = vld [vmem:[#allocation2 + $0x5] sm:$0x1]
    %v29 = vld [vmem:[#allocation2 + $0x6] sm:$0x1]
    %v30 = vld [vmem:[#allocation2 + $0x7] sm:$0x1]
    %v31 = vld [vmem:[#allocation2 + $0x8] sm:$0x1]
    %v32 = vld [vmem:[#allocation2 + $0x9] sm:$0x1]
    %v33 = vld [vmem:[#allocation2 + $0xa] sm:$0x1]
    %v34 = vld [vmem:[#allocation2 + $0xb] sm:$0x1]
    %v35 = vld [vmem:[#allocation2 + $0xc] sm:$0x1]
    %v36 = vld [vmem:[#allocation2 + $0xd] sm:$0x1]
    %v37 = vld [vmem:[#allocation2 + $0xe] sm:$0x1]
    %v38 = vld [vmem:[#allocation2 + $0xf] sm:$0x1]
    %v39 = vld [vmem:[#allocation2 + $0x10] sm:$0x1]
    %v40 = vld [vmem:[#allocation2 + $0x11] sm:$0x1]
    %v41 = vld [vmem:[#allocation2 + $0x12] sm:$0x1]
    %v42 = vld [vmem:[#allocation2 + $0x13] sm:$0x1]
    %v43 = vld [vmem:[#allocation2 + $0x14] sm:$0x1]
    %v44 = vld [vmem:[#allocation2 + $0x15] sm:$0x1]
    %v45 = vld [vmem:[#allocation2 + $0x16] sm:$0x1]
    %v46 = vld [vmem:[#allocation2 + $0x17] sm:$0x1]
    %v47 = vld [vmem:[#allocation2 + $0x18] sm:$0x1]
    %v48 = vld [vmem:[#allocation2 + $0x19] sm:$0x1]
    %v49 = vld [vmem:[#allocation2 + $0x1a] sm:$0x1]
    %v50 = vld [vmem:[#allocation2 + $0x1b] sm:$0x1]
    %v51 = vld [vmem:[#allocation2 + $0x1c] sm:$0x1]
    %v52 = vld [vmem:[#allocation2 + $0x1d] sm:$0x1]
    %v53 = vld [vmem:[#allocation2 + $0x1e] sm:$0x1]
    %v54 = vld [vmem:[#allocation2 + $0x1f] sm:$0x1]
    %v55 = vld [vmem:[#allocation2 + $0x20] sm:$0x1]
    %v56 = vld [vmem:[#allocation2 + $0x21] sm:$0x1]
    %v57 = vld [vmem:[#allocation2 + $0x22] sm:$0x1]
    %v58 = vld [vmem:[#allocation2 + $0x23] sm:$0x1]
    %v59 = vld [vmem:[#allocation2 + $0x24] sm:$0x1]
    %v60 = vld [vmem:[#allocation2 + $0x25] sm:$0x1]
    %v61 = vld [vmem:[#allocation2 + $0x26] sm:$0x1]
    %v62 = vld [vmem:[#allocation2 + $0x27] sm:$0x1]
    %v63 = vld [vmem:[#allocation2 + $0x28] sm:$0x1]
    %v64 = vld [vmem:[#allocation2 + $0x29] sm:$0x1]
    %v65 = vld [vmem:[#allocation2 + $0x2a] sm:$0x1]
    %v66 = vld [vmem:[#allocation2 + $0x2b] sm:$0x1]
    %v67 = vld [vmem:[#allocation2 + $0x2c] sm:$0x1]
    %v68 = vld [vmem:[#allocation2 + $0x2d] sm:$0x1]
    %v69 = vld [vmem:[#allocation2 + $0x2e] sm:$0x1]
    %v70 = vld [vmem:[#allocation2 + $0x2f] sm:$0x1]
    %v71 = vld [vmem:[#allocation2 + $0x30] sm:$0x1]
    %v72 = vld [vmem:[#allocation2 + $0x31] sm:$0x1]
    %v73 = vld [vmem:[#allocation2 + $0x32] sm:$0x1]
    %v74 = vld [vmem:[#allocation2 + $0x33] sm:$0x1]
    %v75 = vld [vmem:[#allocation2 + $0x34] sm:$0x1]
    %v76 = vld [vmem:[#allocation2 + $0x35] sm:$0x1]
    %v77 = vld [vmem:[#allocation2 + $0x36] sm:$0x1]
    %v78 = vld [vmem:[#allocation2 + $0x37] sm:$0x1]
    %v79 = vld [vmem:[#allocation2 + $0x38] sm:$0x1]
    %v80 = vld [vmem:[#allocation2 + $0x39] sm:$0x1]
    %v81 = vld [vmem:[#allocation2 + $0x3a] sm:$0x1]
    %v82 = vld [vmem:[#allocation2 + $0x3b] sm:$0x1]
    %v83 = vld [vmem:[#allocation2 + $0x3c] sm:$0x1]
    %v84 = vld [vmem:[#allocation2 + $0x3d] sm:$0x1]
    %v85 = vld [vmem:[#allocation2 + $0x3e] sm:$0x1]
    %v86 = vld [vmem:[#allocation2 + $0x3f] sm:$0x1]
    %v87 = vld [vmem:[#allocation2 + $0x40] sm:$0x1]
    %v88 = vld [vmem:[#allocation2 + $0x41] sm:$0x1]
    %v89 = vld [vmem:[#allocation2 + $0x42] sm:$0x1]
    %v90 = vld [vmem:[#allocation2 + $0x43] sm:$0x1]
    %v91 = vld [vmem:[#allocation2 + $0x44] sm:$0x1]
    %v92 = vld [vmem:[#allocation2 + $0x45] sm:$0x1]
    %v93 = vld [vmem:[#allocation2 + $0x46] sm:$0x1]
    %v94 = vld [vmem:[#allocation2 + $0x47] sm:$0x1]
    %v95 = vld [vmem:[#allocation2 + $0x48] sm:$0x1]
    %v96 = vld [vmem:[#allocation2 + $0x49] sm:$0x1]
    %v97 = vld [vmem:[#allocation2 + $0x4a] sm:$0x1]
    %v98 = vld [vmem:[#allocation2 + $0x4b] sm:$0x1]
    %v99 = vld [vmem:[#allocation2 + $0x4c] sm:$0x1]
    %v100 = vld [vmem:[#allocation2 + $0x4d] sm:$0x1]
    %v101 = vld [vmem:[#allocation2 + $0x4e] sm:$0x1]
    %v102 = vld [vmem:[#allocation2 + $0x4f] sm:$0x1]
    %v103 = vld [vmem:[#allocation2 + $0x50] sm:$0x1]
    %v104 = vld [vmem:[#allocation2 + $0x51] sm:$0x1]
    %v105 = vld [vmem:[#allocation2 + $0x52] sm:$0x1]
    %v106 = vld [vmem:[#allocation2 + $0x53] sm:$0x1]
    %v107 = vld [vmem:[#allocation2 + $0x54] sm:$0x1]
    %v108 = vld [vmem:[#allocation2 + $0x55] sm:$0x1]
    %v109 = vld [vmem:[#allocation2 + $0x56] sm:$0x1]
    %v110 = vld [vmem:[#allocation2 + $0x57] sm:$0x1]
    %v111 = vld [vmem:[#allocation2 + $0x58] sm:$0x1]
    %v112 = vld [vmem:[#allocation2 + $0x59] sm:$0x1]
    %v113 = vld [vmem:[#allocation2 + $0x5a] sm:$0x1]
    %v114 = vld [vmem:[#allocation2 + $0x5b] sm:$0x1]
    %v115 = vld [vmem:[#allocation2 + $0x5c] sm:$0x1]
    %v116 = vld [vmem:[#allocation2 + $0x5d] sm:$0x1]
    %v117 = vld [vmem:[#allocation2 + $0x5e] sm:$0x1]
    %v118 = vld [vmem:[#allocation2 + $0x5f] sm:$0x1]
    %v119 = vld [vmem:[#allocation2 + $0x60] sm:$0x1]
    %v120 = vld [vmem:[#allocation2 + $0x61] sm:$0x1]
    %v121 = vld [vmem:[#allocation2 + $0x62] sm:$0x1]
    %v122 = vld [vmem:[#allocation2 + $0x63] sm:$0x1]
    %v123 = vld [vmem:[#allocation2 + $0x64] sm:$0x1]
    %v124 = vld [vmem:[#allocation2 + $0x65] sm:$0x1]
    %v125 = vld [vmem:[#allocation2 + $0x66] sm:$0x1]
    %v126 = vld [vmem:[#allocation2 + $0x67] sm:$0x1]
    %v127 = vld [vmem:[#allocation2 + $0x68] sm:$0x1]
    %v128 = vld [vmem:[#allocation2 + $0x69] sm:$0x1]
    %v129 = vld [vmem:[#allocation2 + $0x6a] sm:$0x1]
    %v130 = vld [vmem:[#allocation2 + $0x6b] sm:$0x1]
    %v131 = vld [vmem:[#allocation2 + $0x6c] sm:$0x1]
    %v132 = vld [vmem:[#allocation2 + $0x6d] sm:$0x1]
    %v133 = vld [vmem:[#allocation2 + $0x6e] sm:$0x1]
    %v134 = vld [vmem:[#allocation2 + $0x6f] sm:$0x1]
    %v135 = vld [vmem:[#allocation2 + $0x70] sm:$0x1]
    %v136 = vld [vmem:[#allocation2 + $0x71] sm:$0x1]
    %v137 = vld [vmem:[#allocation2 + $0x72] sm:$0x1]
    %v138 = vld [vmem:[#allocation2 + $0x73] sm:$0x1]
    %v139 = vld [vmem:[#allocation2 + $0x74] sm:$0x1]
    %v140 = vld [vmem:[#allocation2 + $0x75] sm:$0x1]
    %v141 = vld [vmem:[#allocation2 + $0x76] sm:$0x1]
    %v142 = vld [vmem:[#allocation2 + $0x77] sm:$0x1]
    %v143 = vld [vmem:[#allocation2 + $0x78] sm:$0x1]
    %v144 = vld [vmem:[#allocation2 + $0x79] sm:$0x1]
    %v145 = vld [vmem:[#allocation2 + $0x7a] sm:$0x1]
    %v146 = vld [vmem:[#allocation2 + $0x7b] sm:$0x1]
    %v147 = vld [vmem:[#allocation2 + $0x7c] sm:$0x1]
    %v148 = vld [vmem:[#allocation2 + $0x7d] sm:$0x1]
    %v149 = vld [vmem:[#allocation2 + $0x7e] sm:$0x1]
    %v150 = vld [vmem:[#allocation2 + $0x7f] sm:$0x1]
    %v151 = vld [vmem:[#allocation2 + $0x80] sm:$0x1]
    %v152 = vld [vmem:[#allocation2 + $0x81] sm:$0x1]
    %v153 = vld [vmem:[#allocation2 + $0x82] sm:$0x1]
    %v154 = vld [vmem:[#allocation2 + $0x83] sm:$0x1]
    %v155 = vld [vmem:[#allocation2 + $0x84] sm:$0x1]
    %v156 = vld [vmem:[#allocation2 + $0x85] sm:$0x1]
    %v157 = vld [vmem:[#allocation2 + $0x86] sm:$0x1]
    %v158 = vld [vmem:[#allocation2 + $0x87] sm:$0x1]
    %v159 = vld [vmem:[#allocation2 + $0x88] sm:$0x1]
    %v160 = vld [vmem:[#allocation2 + $0x89] sm:$0x1]
    %v161 = vld [vmem:[#allocation2 + $0x8a] sm:$0x1]
    %v162 = vld [vmem:[#allocation2 + $0x8b] sm:$0x1]
    %v163 = vld [vmem:[#allocation2 + $0x8c] sm:$0x1]
    %v164 = vld [vmem:[#allocation2 + $0x8d] sm:$0x1]
    %v165 = vld [vmem:[#allocation2 + $0x8e] sm:$0x1]
    %v166 = vld [vmem:[#allocation2 + $0x8f] sm:$0x1]
    %v167 = vld [vmem:[#allocation2 + $0x90] sm:$0x1]
    %v168 = vld [vmem:[#allocation2 + $0x91] sm:$0x1]
    %v169 = vld [vmem:[#allocation2 + $0x92] sm:$0x1]
    %v170 = vld [vmem:[#allocation2 + $0x93] sm:$0x1]
    %v171 = vld [vmem:[#allocation2 + $0x94] sm:$0x1]
    %v172 = vld [vmem:[#allocation2 + $0x95] sm:$0x1]
    %v173 = vld [vmem:[#allocation2 + $0x96] sm:$0x1]
    %v174 = vld [vmem:[#allocation2 + $0x97] sm:$0x1]
    %v175 = vld [vmem:[#allocation2 + $0x98] sm:$0x1]
    %v176 = vld [vmem:[#allocation2 + $0x99] sm:$0x1]
    %v177 = vld [vmem:[#allocation2 + $0x9a] sm:$0x1]
    %v178 = vld [vmem:[#allocation2 + $0x9b] sm:$0x1]
    %v179 = vld [vmem:[#allocation2 + $0x9c] sm:$0x1]
    %v180 = vld [vmem:[#allocation2 + $0x9d] sm:$0x1]
    %v181 = vld [vmem:[#allocation2 + $0x9e] sm:$0x1]
    %v182 = vld [vmem:[#allocation2 + $0x9f] sm:$0x1]
    %v183 = vld [vmem:[#allocation2 + $0xa0] sm:$0x1]
    %v184 = vld [vmem:[#allocation2 + $0xa1] sm:$0x1]
    %v185 = vld [vmem:[#allocation2 + $0xa2] sm:$0x1]
    %v186 = vld [vmem:[#allocation2 + $0xa3] sm:$0x1]
    %v187 = vld [vmem:[#allocation2 + $0xa4] sm:$0x1]
    %v188 = vld [vmem:[#allocation2 + $0xa5] sm:$0x1]
    %v189 = vld [vmem:[#allocation2 + $0xa6] sm:$0x1]
    %v190 = vld [vmem:[#allocation2 + $0xa7] sm:$0x1]
    %v191 = vld [vmem:[#allocation2 + $0xa8] sm:$0x1]
    %v192 = vld [vmem:[#allocation2 + $0xa9] sm:$0x1]
    %v193 = vld [vmem:[#allocation2 + $0xaa] sm:$0x1]
    %v194 = vld [vmem:[#allocation2 + $0xab] sm:$0x1]
    %v195 = vld [vmem:[#allocation2 + $0xac] sm:$0x1]
    %v196 = vld [vmem:[#allocation2 + $0xad] sm:$0x1]
    %v197 = vld [vmem:[#allocation2 + $0xae] sm:$0x1]
    %v198 = vld [vmem:[#allocation2 + $0xaf] sm:$0x1]
    %v199 = vld [vmem:[#allocation2 + $0xb0] sm:$0x1]
    %v200 = vld [vmem:[#allocation2 + $0xb1] sm:$0x1]
    %v201 = vld [vmem:[#allocation2 + $0xb2] sm:$0x1]
    %v202 = vld [vmem:[#allocation2 + $0xb3] sm:$0x1]
    %v203 = vld [vmem:[#allocation2 + $0xb4] sm:$0x1]
    %v204 = vld [vmem:[#allocation2 + $0xb5] sm:$0x1]
    %v205 = vld [vmem:[#allocation2 + $0xb6] sm:$0x1]
    %v206 = vld [vmem:[#allocation2 + $0xb7] sm:$0x1]
    %v207 = vld [vmem:[#allocation2 + $0xb8] sm:$0x1]
    %v208 = vld [vmem:[#allocation2 + $0xb9] sm:$0x1]
    %v209 = vld [vmem:[#allocation2 + $0xba] sm:$0x1]
    %v210 = vld [vmem:[#allocation2 + $0xbb] sm:$0x1]
    %v211 = vld [vmem:[#allocation2 + $0xbc] sm:$0x1]
    %v212 = vld [vmem:[#allocation2 + $0xbd] sm:$0x1]
    %v213 = vld [vmem:[#allocation2 + $0xbe] sm:$0x1]
    %v214 = vld [vmem:[#allocation2 + $0xbf] sm:$0x1]
    %v215 = vld [vmem:[#allocation2 + $0xc0] sm:$0x1]
    %v216 = vld [vmem:[#allocation2 + $0xc1] sm:$0x1]
    %v217 = vld [vmem:[#allocation2 + $0xc2] sm:$0x1]
    %v218 = vld [vmem:[#allocation2 + $0xc3] sm:$0x1]
    %v219 = vld [vmem:[#allocation2 + $0xc4] sm:$0x1]
    %v220 = vld [vmem:[#allocation2 + $0xc5] sm:$0x1]
    %v221 = vld [vmem:[#allocation2 + $0xc6] sm:$0x1]
    %v222 = vld [vmem:[#allocation2 + $0xc7] sm:$0x1]
    %v223 = vld [vmem:[#allocation2 + $0xc8] sm:$0x1]
    %v224 = vld [vmem:[#allocation2 + $0xc9] sm:$0x1]
    %v225 = vld [vmem:[#allocation2 + $0xca] sm:$0x1]
    %v226 = vld [vmem:[#allocation2 + $0xcb] sm:$0x1]
    %v227 = vld [vmem:[#allocation2 + $0xcc] sm:$0x1]
    %v228 = vld [vmem:[#allocation2 + $0xcd] sm:$0x1]
    %v229 = vld [vmem:[#allocation2 + $0xce] sm:$0x1]
    %v230 = vld [vmem:[#allocation2 + $0xcf] sm:$0x1]
    %v231 = vld [vmem:[#allocation2 + $0xd0] sm:$0x1]
    %v232 = vld [vmem:[#allocation2 + $0xd1] sm:$0x1]
    %v233 = vld [vmem:[#allocation2 + $0xd2] sm:$0x1]
    %v234 = vld [vmem:[#allocation2 + $0xd3] sm:$0x1]
    %v235 = vld [vmem:[#allocation2 + $0xd4] sm:$0x1]
    %v236 = vld [vmem:[#allocation2 + $0xd5] sm:$0x1]
    %v237 = vld [vmem:[#allocation2 + $0xd6] sm:$0x1]
    %v238 = vld [vmem:[#allocation2 + $0xd7] sm:$0x1]
    %v239 = vld [vmem:[#allocation2 + $0xd8] sm:$0x1]
    %v240 = vld [vmem:[#allocation2 + $0xd9] sm:$0x1]
    %v241 = vld [vmem:[#allocation2 + $0xda] sm:$0x1]
    %v242 = vld [vmem:[#allocation2 + $0xdb] sm:$0x1]
    %v243 = vld [vmem:[#allocation2 + $0xdc] sm:$0x1]
    %v244 = vld [vmem:[#allocation2 + $0xdd] sm:$0x1]
    %v245 = vld [vmem:[#allocation2 + $0xde] sm:$0x1]
    %v246 = vld [vmem:[#allocation2 + $0xdf] sm:$0x1]
    %v247 = vld [vmem:[#allocation2 + $0xe0] sm:$0x1]
    %v248 = vld [vmem:[#allocation2 + $0xe1] sm:$0x1]
    %v249 = vld [vmem:[#allocation2 + $0xe2] sm:$0x1]
    %v250 = vld [vmem:[#allocation2 + $0xe3] sm:$0x1]
    %v251 = vld [vmem:[#allocation2 + $0xe4] sm:$0x1]
    %v252 = vld [vmem:[#allocation2 + $0xe5] sm:$0x1]
    %v253 = vld [vmem:[#allocation2 + $0xe6] sm:$0x1]
    %v254 = vld [vmem:[#allocation2 + $0xe7] sm:$0x1]
    %v255 = vld [vmem:[#allocation2 + $0xe8] sm:$0x1]
    %v256 = vld [vmem:[#allocation2 + $0xe9] sm:$0x1]
    %v257 = vld [vmem:[#allocation2 + $0xea] sm:$0x1]
    %v258 = vld [vmem:[#allocation2 + $0xeb] sm:$0x1]
    %v259 = vld [vmem:[#allocation2 + $0xec] sm:$0x1]
    %v260 = vld [vmem:[#allocation2 + $0xed] sm:$0x1]
    %v261 = vld [vmem:[#allocation2 + $0xee] sm:$0x1]
    %v262 = vld [vmem:[#allocation2 + $0xef] sm:$0x1]
    %v263 = vld [vmem:[#allocation2 + $0xf0] sm:$0x1]
    %v264 = vld [vmem:[#allocation2 + $0xf1] sm:$0x1]
    %v265 = vld [vmem:[#allocation2 + $0xf2] sm:$0x1]
    %v266 = vld [vmem:[#allocation2 + $0xf3] sm:$0x1]
    %v267 = vld [vmem:[#allocation2 + $0xf4] sm:$0x1]
    %v268 = vld [vmem:[#allocation2 + $0xf5] sm:$0x1]
    %v269 = vld [vmem:[#allocation2 + $0xf6] sm:$0x1]
    %v270 = vld [vmem:[#allocation2 + $0xf7] sm:$0x1]
    %v271 = vld [vmem:[#allocation2 + $0xf8] sm:$0x1]
    %v272 = vld [vmem:[#allocation2 + $0xf9] sm:$0x1]
    %v273 = vld [vmem:[#allocation2 + $0xfa] sm:$0x1]
    %v274 = vld [vmem:[#allocation2 + $0xfb] sm:$0x1]
    %v275 = vld [vmem:[#allocation2 + $0xfc] sm:$0x1]
    %v276 = vld [vmem:[#allocation2 + $0xfd] sm:$0x1]
    %v277 = vld [vmem:[#allocation2 + $0xfe] sm:$0x1]
    %v278 = vld [vmem:[#allocation2 + $0xff] sm:$0x1]
    %v279 = vadd.f32 %v23, 0.0
    %v280 = vadd.f32 %v24, 0.0
    %v281 = vadd.f32 %v25, 0.0
    %v282 = vadd.f32 %v26, 0.0
    %v283 = vadd.f32 %v27, 0.0
    %v284 = vadd.f32 %v28, 0.0
    %v285 = vadd.f32 %v29, 0.0
    %v286 = vadd.f32 %v30, 0.0
    %v287 = vadd.f32 %v31, 0.0
    %v288 = vadd.f32 %v32, 0.0
    %v289 = vadd.f32 %v33, 0.0
    %v290 = vadd.f32 %v34, 0.0
    %v291 = vadd.f32 %v35, 0.0
    %v292 = vadd.f32 %v36, 0.0
    %v293 = vadd.f32 %v37, 0.0
    %v294 = vadd.f32 %v38, 0.0
    %v295 = vadd.f32 %v23, %v39
    %v296 = vadd.f32 %v24, %v40
    %v297 = vadd.f32 %v25, %v41
    %v298 = vadd.f32 %v26, %v42
    %v299 = vadd.f32 %v27, %v43
    %v300 = vadd.f32 %v28, %v44
    %v301 = vadd.f32 %v29, %v45
    %v302 = vadd.f32 %v30, %v46
    %v303 = vadd.f32 %v31, %v47
    %v304 = vadd.f32 %v32, %v48
    %v305 = vadd.f32 %v33, %v49
    %v306 = vadd.f32 %v34, %v50
    %v307 = vadd.f32 %v35, %v51
    %v308 = vadd.f32 %v36, %v52
    %v309 = vadd.f32 %v37, %v53
    %v310 = vadd.f32 %v38, %v54
    %v311 = vadd.f32 %v39, %v55
    %v312 = vadd.f32 %v40, %v56
    %v313 = vadd.f32 %v41, %v57
    %v314 = vadd.f32 %v42, %v58
    %v315 = vadd.f32 %v43, %v59
    %v316 = vadd.f32 %v44, %v60
    %v317 = vadd.f32 %v45, %v61
    %v318 = vadd.f32 %v46, %v62
    %v319 = vadd.f32 %v47, %v63
    %v320 = vadd.f32 %v48, %v64
    %v321 = vadd.f32 %v49, %v65
    %v322 = vadd.f32 %v50, %v66
    %v323 = vadd.f32 %v51, %v67
    %v324 = vadd.f32 %v52, %v68
    %v325 = vadd.f32 %v53, %v69
    %v326 = vadd.f32 %v54, %v70
    %v327 = vadd.f32 %v55, %v71
    %v328 = vadd.f32 %v56, %v72
    %v329 = vadd.f32 %v57, %v73
    %v330 = vadd.f32 %v58, %v74
    %v331 = vadd.f32 %v59, %v75
    %v332 = vadd.f32 %v60, %v76
    %v333 = vadd.f32 %v61, %v77
    %v334 = vadd.f32 %v62, %v78
    %v335 = vadd.f32 %v63, %v79
    %v336 = vadd.f32 %v64, %v80
    %v337 = vadd.f32 %v65, %v81
    %v338 = vadd.f32 %v66, %v82
    %v339 = vadd.f32 %v67, %v83
    %v340 = vadd.f32 %v68, %v84
    %v341 = vadd.f32 %v69, %v85
    %v342 = vadd.f32 %v70, %v86
    %v343 = vadd.f32 %v71, %v87
    %v344 = vadd.f32 %v72, %v88
    %v345 = vadd.f32 %v73, %v89
    %v346 = vadd.f32 %v74, %v90
    %v347 = vadd.f32 %v75, %v91
    %v348 = vadd.f32 %v76, %v92
    %v349 = vadd.f32 %v77, %v93
    %v350 = vadd.f32 %v78, %v94
    %v351 = vadd.f32 %v79, %v95
    %v352 = vadd.f32 %v80, %v96
    %v353 = vadd.f32 %v81, %v97
    %v354 = vadd.f32 %v82, %v98
    %v355 = vadd.f32 %v83, %v99
    %v356 = vadd.f32 %v84, %v100
    %v357 = vadd.f32 %v85, %v101
    %v358 = vadd.f32 %v86, %v102
    %v359 = vadd.f32 %v87, %v103
    %v360 = vadd.f32 %v88, %v104
    %v361 = vadd.f32 %v89, %v105
    %v362 = vadd.f32 %v90, %v106
    %v363 = vadd.f32 %v91, %v107
    %v364 = vadd.f32 %v92, %v108
    %v365 = vadd.f32 %v93, %v109
    %v366 = vadd.f32 %v94, %v110
    %v367 = vadd.f32 %v95, %v111
    %v368 = vadd.f32 %v96, %v112
    %v369 = vadd.f32 %v97, %v113
    %v370 = vadd.f32 %v98, %v114
    %v371 = vadd.f32 %v99, %v115
    %v372 = vadd.f32 %v100, %v116
    %v373 = vadd.f32 %v101, %v117
    %v374 = vadd.f32 %v102, %v118
    %v375 = vadd.f32 %v103, %v119
    %v376 = vadd.f32 %v104, %v120
    %v377 = vadd.f32 %v105, %v121
    %v378 = vadd.f32 %v106, %v122
    %v379 = vadd.f32 %v107, %v123
    %v380 = vadd.f32 %v108, %v124
    %v381 = vadd.f32 %v109, %v125
    %v382 = vadd.f32 %v110, %v126
    %v383 = vadd.f32 %v111, %v127
    %v384 = vadd.f32 %v112, %v128
    %v385 = vadd.f32 %v113, %v129
    %v386 = vadd.f32 %v114, %v130
    %v387 = vadd.f32 %v115, %v131
    %v388 = vadd.f32 %v116, %v132
    %v389 = vadd.f32 %v117, %v133
    %v390 = vadd.f32 %v118, %v134
    %v391 = vadd.f32 %v119, %v135
    %v392 = vadd.f32 %v120, %v136
    %v393 = vadd.f32 %v121, %v137
    %v394 = vadd.f32 %v122, %v138
    %v395 = vadd.f32 %v123, %v139
    %v396 = vadd.f32 %v124, %v140
    %v397 = vadd.f32 %v125, %v141
    %v398 = vadd.f32 %v126, %v142
    %v399 = vadd.f32 %v127, %v143
    %v400 = vadd.f32 %v128, %v144
    %v401 = vadd.f32 %v129, %v145
    %v402 = vadd.f32 %v130, %v146
    %v403 = vadd.f32 %v131, %v147
    %v404 = vadd.f32 %v132, %v148
    %v405 = vadd.f32 %v133, %v149
    %v406 = vadd.f32 %v134, %v150
    %v407 = vadd.f32 %v135, %v151
    %v408 = vadd.f32 %v136, %v152
    %v409 = vadd.f32 %v137, %v153
    %v410 = vadd.f32 %v138, %v154
    %v411 = vadd.f32 %v139, %v155
    %v412 = vadd.f32 %v140, %v156
    %v413 = vadd.f32 %v141, %v157
    %v414 = vadd.f32 %v142, %v158
    %v415 = vadd.f32 %v143, %v159
    %v416 = vadd.f32 %v144, %v160
    %v417 = vadd.f32 %v145, %v161
    %v418 = vadd.f32 %v146, %v162
    %v419 = vadd.f32 %v147, %v163
    %v420 = vadd.f32 %v148, %v164
    %v421 = vadd.f32 %v149, %v165
    %v422 = vadd.f32 %v150, %v166
    %v423 = vadd.f32 %v151, %v167
    %v424 = vadd.f32 %v152, %v168
    %v425 = vadd.f32 %v153, %v169
    %v426 = vadd.f32 %v154, %v170
    %v427 = vadd.f32 %v155, %v171
    %v428 = vadd.f32 %v156, %v172
    %v429 = vadd.f32 %v157, %v173
    %v430 = vadd.f32 %v158, %v174
    %v431 = vadd.f32 %v159, %v175
    %v432 = vadd.f32 %v160, %v176
    %v433 = vadd.f32 %v161, %v177
    %v434 = vadd.f32 %v162, %v178
    %v435 = vadd.f32 %v163, %v179
    %v436 = vadd.f32 %v164, %v180
    %v437 = vadd.f32 %v165, %v181
    %v438 = vadd.f32 %v166, %v182
    %v439 = vadd.f32 %v167, %v183
    %v440 = vadd.f32 %v168, %v184
    %v441 = vadd.f32 %v169, %v185
    %v442 = vadd.f32 %v170, %v186
    %v443 = vadd.f32 %v171, %v187
    %v444 = vadd.f32 %v172, %v188
    %v445 = vadd.f32 %v173, %v189
    %v446 = vadd.f32 %v174, %v190
    %v447 = vadd.f32 %v175, %v191
    %v448 = vadd.f32 %v176, %v192
    %v449 = vadd.f32 %v177, %v193
    %v450 = vadd.f32 %v178, %v194
    %v451 = vadd.f32 %v179, %v195
    %v452 = vadd.f32 %v180, %v196
    %v453 = vadd.f32 %v181, %v197
    %v454 = vadd.f32 %v182, %v198
    %v455 = vadd.f32 %v183, %v199
    %v456 = vadd.f32 %v184, %v200
    %v457 = vadd.f32 %v185, %v201
    %v458 = vadd.f32 %v186, %v202
    %v459 = vadd.f32 %v187, %v203
    %v460 = vadd.f32 %v188, %v204
    %v461 = vadd.f32 %v189, %v205
    %v462 = vadd.f32 %v190, %v206
    %v463 = vadd.f32 %v191, %v207
    %v464 = vadd.f32 %v192, %v208
    %v465 = vadd.f32 %v193, %v209
    %v466 = vadd.f32 %v194, %v210
    %v467 = vadd.f32 %v195, %v211
    %v468 = vadd.f32 %v196, %v212
    %v469 = vadd.f32 %v197, %v213
    %v470 = vadd.f32 %v198, %v214
    %v471 = vadd.f32 %v199, %v215
    %v472 = vadd.f32 %v200, %v216
    %v473 = vadd.f32 %v201, %v217
    %v474 = vadd.f32 %v202, %v218
    %v475 = vadd.f32 %v203, %v219
    %v476 = vadd.f32 %v204, %v220
    %v477 = vadd.f32 %v205, %v221
    %v478 = vadd.f32 %v206, %v222
    %v479 = vadd.f32 %v207, %v223
    %v480 = vadd.f32 %v208, %v224
    %v481 = vadd.f32 %v209, %v225
    %v482 = vadd.f32 %v210, %v226
    %v483 = vadd.f32 %v211, %v227
    %v484 = vadd.f32 %v212, %v228
    %v485 = vadd.f32 %v213, %v229
    %v486 = vadd.f32 %v214, %v230
    %v487 = vadd.f32 %v215, %v231
    %v488 = vadd.f32 %v216, %v232
    %v489 = vadd.f32 %v217, %v233
    %v490 = vadd.f32 %v218, %v234
    %v491 = vadd.f32 %v219, %v235
    %v492 = vadd.f32 %v220, %v236
    %v493 = vadd.f32 %v221, %v237
    %v494 = vadd.f32 %v222, %v238
    %v495 = vadd.f32 %v223, %v239
    %v496 = vadd.f32 %v224, %v240
    %v497 = vadd.f32 %v225, %v241
    %v498 = vadd.f32 %v226, %v242
    %v499 = vadd.f32 %v227, %v243
    %v500 = vadd.f32 %v228, %v244
    %v501 = vadd.f32 %v229, %v245
    %v502 = vadd.f32 %v230, %v246
    %v503 = vadd.f32 %v231, %v247
    %v504 = vadd.f32 %v232, %v248
    %v505 = vadd.f32 %v233, %v249
    %v506 = vadd.f32 %v234, %v250
    %v507 = vadd.f32 %v235, %v251
    %v508 = vadd.f32 %v236, %v252
    %v509 = vadd.f32 %v237, %v253
    %v510 = vadd.f32 %v238, %v254
    %v511 = vadd.f32 %v239, %v255
    %v512 = vadd.f32 %v240, %v256
    %v513 = vadd.f32 %v241, %v257
    %v514 = vadd.f32 %v242, %v258
    %v515 = vadd.f32 %v243, %v259
    %v516 = vadd.f32 %v244, %v260
    %v517 = vadd.f32 %v245, %v261
    %v518 = vadd.f32 %v246, %v262
    %v519 = vadd.f32 %v279, %v39
    %v520 = vadd.f32 %v280, %v40
    %v521 = vadd.f32 %v281, %v41
    %v522 = vadd.f32 %v282, %v42
    %v523 = vadd.f32 %v283, %v43
    %v524 = vadd.f32 %v284, %v44
    %v525 = vadd.f32 %v285, %v45
    %v526 = vadd.f32 %v286, %v46
    %v527 = vadd.f32 %v287, %v47
    %v528 = vadd.f32 %v288, %v48
    %v529 = vadd.f32 %v289, %v49
    %v530 = vadd.f32 %v290, %v50
    %v531 = vadd.f32 %v291, %v51
    %v532 = vadd.f32 %v292, %v52
    %v533 = vadd.f32 %v293, %v53
    %v534 = vadd.f32 %v294, %v54
    %v535 = vadd.f32 %v295, %v55
    %v536 = vadd.f32 %v296, %v56
    %v537 = vadd.f32 %v297, %v57
    %v538 = vadd.f32 %v298, %v58
    %v539 = vadd.f32 %v299, %v59
    %v540 = vadd.f32 %v300, %v60
    %v541 = vadd.f32 %v301, %v61
    %v542 = vadd.f32 %v302, %v62
    %v543 = vadd.f32 %v303, %v63
    %v544 = vadd.f32 %v304, %v64
    %v545 = vadd.f32 %v305, %v65
    %v546 = vadd.f32 %v306, %v66
    %v547 = vadd.f32 %v307, %v67
    %v548 = vadd.f32 %v308, %v68
    %v549 = vadd.f32 %v309, %v69
    %v550 = vadd.f32 %v310, %v70
    %v551 = vadd.f32 %v311, %v71
    %v552 = vadd.f32 %v312, %v72
    %v553 = vadd.f32 %v313, %v73
    %v554 = vadd.f32 %v314, %v74
    %v555 = vadd.f32 %v315, %v75
    %v556 = vadd.f32 %v316, %v76
    %v557 = vadd.f32 %v317, %v77
    %v558 = vadd.f32 %v318, %v78
    %v559 = vadd.f32 %v319, %v79
    %v560 = vadd.f32 %v320, %v80
    %v561 = vadd.f32 %v321, %v81
    %v562 = vadd.f32 %v322, %v82
    %v563 = vadd.f32 %v323, %v83
    %v564 = vadd.f32 %v324, %v84
    %v565 = vadd.f32 %v325, %v85
    %v566 = vadd.f32 %v326, %v86
    %v567 = vadd.f32 %v327, %v87
    %v568 = vadd.f32 %v328, %v88
    %v569 = vadd.f32 %v329, %v89
    %v570 = vadd.f32 %v330, %v90
    %v571 = vadd.f32 %v331, %v91
    %v572 = vadd.f32 %v332, %v92
    %v573 = vadd.f32 %v333, %v93
    %v574 = vadd.f32 %v334, %v94
    %v575 = vadd.f32 %v335, %v95
    %v576 = vadd.f32 %v336, %v96
    %v577 = vadd.f32 %v337, %v97
    %v578 = vadd.f32 %v338, %v98
    %v579 = vadd.f32 %v339, %v99
    %v580 = vadd.f32 %v340, %v100
    %v581 = vadd.f32 %v341, %v101
    %v582 = vadd.f32 %v342, %v102
    %v583 = vadd.f32 %v343, %v103
    %v584 = vadd.f32 %v344, %v104
    %v585 = vadd.f32 %v345, %v105
    %v586 = vadd.f32 %v346, %v106
    %v587 = vadd.f32 %v347, %v107
    %v588 = vadd.f32 %v348, %v108
    %v589 = vadd.f32 %v349, %v109
    %v590 = vadd.f32 %v350, %v110
    %v591 = vadd.f32 %v351, %v111
    %v592 = vadd.f32 %v352, %v112
    %v593 = vadd.f32 %v353, %v113
    %v594 = vadd.f32 %v354, %v114
    %v595 = vadd.f32 %v355, %v115
    %v596 = vadd.f32 %v356, %v116
    %v597 = vadd.f32 %v357, %v117
    %v598 = vadd.f32 %v358, %v118
    %v599 = vadd.f32 %v359, %v119
    %v600 = vadd.f32 %v360, %v120
    %v601 = vadd.f32 %v361, %v121
    %v602 = vadd.f32 %v362, %v122
    %v603 = vadd.f32 %v363, %v123
    %v604 = vadd.f32 %v364, %v124
    %v605 = vadd.f32 %v365, %v125
    %v606 = vadd.f32 %v366, %v126
    %v607 = vadd.f32 %v367, %v127
    %v608 = vadd.f32 %v368, %v128
    %v609 = vadd.f32 %v369, %v129
    %v610 = vadd.f32 %v370, %v130
    %v611 = vadd.f32 %v371, %v131
    %v612 = vadd.f32 %v372, %v132
    %v613 = vadd.f32 %v373, %v133
    %v614 = vadd.f32 %v374, %v134
    %v615 = vadd.f32 %v375, %v135
    %v616 = vadd.f32 %v376, %v136
    %v617 = vadd.f32 %v377, %v137
    %v618 = vadd.f32 %v378, %v138
    %v619 = vadd.f32 %v379, %v139
    %v620 = vadd.f32 %v380, %v140
    %v621 = vadd.f32 %v381, %v141
    %v622 = vadd.f32 %v382, %v142
    %v623 = vadd.f32 %v383, %v143
    %v624 = vadd.f32 %v384, %v144
    %v625 = vadd.f32 %v385, %v145
    %v626 = vadd.f32 %v386, %v146
    %v627 = vadd.f32 %v387, %v147
    %v628 = vadd.f32 %v388, %v148
    %v629 = vadd.f32 %v389, %v149
    %v630 = vadd.f32 %v390, %v150
    %v631 = vadd.f32 %v391, %v151
    %v632 = vadd.f32 %v392, %v152
    %v633 = vadd.f32 %v393, %v153
    %v634 = vadd.f32 %v394, %v154
    %v635 = vadd.f32 %v395, %v155
    %v636 = vadd.f32 %v396, %v156
    %v637 = vadd.f32 %v397, %v157
    %v638 = vadd.f32 %v398, %v158
    %v639 = vadd.f32 %v399, %v159
    %v640 = vadd.f32 %v400, %v160
    %v641 = vadd.f32 %v401, %v161
    %v642 = vadd.f32 %v402, %v162
    %v643 = vadd.f32 %v403, %v163
    %v644 = vadd.f32 %v404, %v164
    %v645 = vadd.f32 %v405, %v165
    %v646 = vadd.f32 %v406, %v166
    %v647 = vadd.f32 %v407, %v167
    %v648 = vadd.f32 %v408, %v168
    %v649 = vadd.f32 %v409, %v169
    %v650 = vadd.f32 %v410, %v170
    %v651 = vadd.f32 %v411, %v171
    %v652 = vadd.f32 %v412, %v172
    %v653 = vadd.f32 %v413, %v173
    %v654 = vadd.f32 %v414, %v174
    %v655 = vadd.f32 %v415, %v175
    %v656 = vadd.f32 %v416, %v176
    %v657 = vadd.f32 %v417, %v177
    %v658 = vadd.f32 %v418, %v178
    %v659 = vadd.f32 %v419, %v179
    %v660 = vadd.f32 %v420, %v180
    %v661 = vadd.f32 %v421, %v181
    %v662 = vadd.f32 %v422, %v182
    %v663 = vadd.f32 %v423, %v183
    %v664 = vadd.f32 %v424, %v184
    %v665 = vadd.f32 %v425, %v185
    %v666 = vadd.f32 %v426, %v186
    %v667 = vadd.f32 %v427, %v187
    %v668 = vadd.f32 %v428, %v188
    %v669 = vadd.f32 %v429, %v189
    %v670 = vadd.f32 %v430, %v190
    %v671 = vadd.f32 %v431, %v191
    %v672 = vadd.f32 %v432, %v192
    %v673 = vadd.f32 %v433, %v193
    %v674 = vadd.f32 %v434, %v194
    %v675 = vadd.f32 %v435, %v195
    %v676 = vadd.f32 %v436, %v196
    %v677 = vadd.f32 %v437, %v197
    %v678 = vadd.f32 %v438, %v198
    %v679 = vadd.f32 %v439, %v199
    %v680 = vadd.f32 %v440, %v200
    %v681 = vadd.f32 %v441, %v201
    %v682 = vadd.f32 %v442, %v202
    %v683 = vadd.f32 %v443, %v203
    %v684 = vadd.f32 %v444, %v204
    %v685 = vadd.f32 %v445, %v205
    %v686 = vadd.f32 %v446, %v206
    %v687 = vadd.f32 %v447, %v207
    %v688 = vadd.f32 %v448, %v208
    %v689 = vadd.f32 %v449, %v209
    %v690 = vadd.f32 %v450, %v210
    %v691 = vadd.f32 %v451, %v211
    %v692 = vadd.f32 %v452, %v212
    %v693 = vadd.f32 %v453, %v213
    %v694 = vadd.f32 %v454, %v214
    %v695 = vadd.f32 %v455, %v215
    %v696 = vadd.f32 %v456, %v216
    %v697 = vadd.f32 %v457, %v217
    %v698 = vadd.f32 %v458, %v218
    %v699 = vadd.f32 %v459, %v219
    %v700 = vadd.f32 %v460, %v220
    %v701 = vadd.f32 %v461, %v221
    %v702 = vadd.f32 %v462, %v222
    %v703 = vadd.f32 %v463, %v223
    %v704 = vadd.f32 %v464, %v224
    %v705 = vadd.f32 %v465, %v225
    %v706 = vadd.f32 %v466, %v226
    %v707 = vadd.f32 %v467, %v227
    %v708 = vadd.f32 %v468, %v228
    %v709 = vadd.f32 %v469, %v229
    %v710 = vadd.f32 %v470, %v230
    %v711 = vadd.f32 %v471, %v231
    %v712 = vadd.f32 %v472, %v232
    %v713 = vadd.f32 %v473, %v233
    %v714 = vadd.f32 %v474, %v234
    %v715 = vadd.f32 %v475, %v235
    %v716 = vadd.f32 %v476, %v236
    %v717 = vadd.f32 %v477, %v237
    %v718 = vadd.f32 %v478, %v238
    %v719 = vadd.f32 %v479, %v239
    %v720 = vadd.f32 %v480, %v240
    %v721 = vadd.f32 %v481, %v241
    %v722 = vadd.f32 %v482, %v242
    %v723 = vadd.f32 %v483, %v243
    %v724 = vadd.f32 %v484, %v244
    %v725 = vadd.f32 %v485, %v245
    %v726 = vadd.f32 %v486, %v246
    %v727 = vadd.f32 %v487, %v247
    %v728 = vadd.f32 %v488, %v248
    %v729 = vadd.f32 %v489, %v249
    %v730 = vadd.f32 %v490, %v250
    %v731 = vadd.f32 %v491, %v251
    %v732 = vadd.f32 %v492, %v252
    %v733 = vadd.f32 %v493, %v253
    %v734 = vadd.f32 %v494, %v254
    %v735 = vadd.f32 %v495, %v255
    %v736 = vadd.f32 %v496, %v256
    %v737 = vadd.f32 %v497, %v257
    %v738 = vadd.f32 %v498, %v258
    %v739 = vadd.f32 %v499, %v259
    %v740 = vadd.f32 %v500, %v260
    %v741 = vadd.f32 %v501, %v261
    %v742 = vadd.f32 %v502, %v262
    %v743 = vadd.f32 %v503, %v263
    %v744 = vadd.f32 %v504, %v264
    %v745 = vadd.f32 %v505, %v265
    %v746 = vadd.f32 %v506, %v266
    %v747 = vadd.f32 %v507, %v267
    %v748 = vadd.f32 %v508, %v268
    %v749 = vadd.f32 %v509, %v269
    %v750 = vadd.f32 %v510, %v270
    %v751 = vadd.f32 %v511, %v271
    %v752 = vadd.f32 %v512, %v272
    %v753 = vadd.f32 %v513, %v273
    %v754 = vadd.f32 %v514, %v274
    %v755 = vadd.f32 %v515, %v275
    %v756 = vadd.f32 %v516, %v276
    %v757 = vadd.f32 %v517, %v277
    %v758 = vadd.f32 %v518, %v278
    %v759 = vadd.f32 %v519, %v55
    %v760 = vadd.f32 %v520, %v56
    %v761 = vadd.f32 %v521, %v57
    %v762 = vadd.f32 %v522, %v58
    %v763 = vadd.f32 %v523, %v59
    %v764 = vadd.f32 %v524, %v60
    %v765 = vadd.f32 %v525, %v61
    %v766 = vadd.f32 %v526, %v62
    %v767 = vadd.f32 %v527, %v63
    %v768 = vadd.f32 %v528, %v64
    %v769 = vadd.f32 %v529, %v65
    %v770 = vadd.f32 %v530, %v66
    %v771 = vadd.f32 %v531, %v67
    %v772 = vadd.f32 %v532, %v68
    %v773 = vadd.f32 %v533, %v69
    %v774 = vadd.f32 %v534, %v70
    %v775 = vadd.f32 %v535, %v71
    %v776 = vadd.f32 %v536, %v72
    %v777 = vadd.f32 %v537, %v73
    %v778 = vadd.f32 %v538, %v74
    %v779 = vadd.f32 %v539, %v75
    %v780 = vadd.f32 %v540, %v76
    %v781 = vadd.f32 %v541, %v77
    %v782 = vadd.f32 %v542, %v78
    %v783 = vadd.f32 %v543, %v79
    %v784 = vadd.f32 %v544, %v80
    %v785 = vadd.f32 %v545, %v81
    %v786 = vadd.f32 %v546, %v82
    %v787 = vadd.f32 %v547, %v83
    %v788 = vadd.f32 %v548, %v84
    %v789 = vadd.f32 %v549, %v85
    %v790 = vadd.f32 %v550, %v86
    %v791 = vadd.f32 %v551, %v87
    %v792 = vadd.f32 %v552, %v88
    %v793 = vadd.f32 %v553, %v89
    %v794 = vadd.f32 %v554, %v90
    %v795 = vadd.f32 %v555, %v91
    %v796 = vadd.f32 %v556, %v92
    %v797 = vadd.f32 %v557, %v93
    %v798 = vadd.f32 %v558, %v94
    %v799 = vadd.f32 %v559, %v95
    %v800 = vadd.f32 %v560, %v96
    %v801 = vadd.f32 %v561, %v97
    %v802 = vadd.f32 %v562, %v98
    %v803 = vadd.f32 %v563, %v99
    %v804 = vadd.f32 %v564, %v100
    %v805 = vadd.f32 %v565, %v101
    %v806 = vadd.f32 %v566, %v102
    %v807 = vadd.f32 %v567, %v103
    %v808 = vadd.f32 %v568, %v104
    %v809 = vadd.f32 %v569, %v105
    %v810 = vadd.f32 %v570, %v106
    %v811 = vadd.f32 %v571, %v107
    %v812 = vadd.f32 %v572, %v108
    %v813 = vadd.f32 %v573, %v109
    %v814 = vadd.f32 %v574, %v110
    %v815 = vadd.f32 %v575, %v111
    %v816 = vadd.f32 %v576, %v112
    %v817 = vadd.f32 %v577, %v113
    %v818 = vadd.f32 %v578, %v114
    %v819 = vadd.f32 %v579, %v115
    %v820 = vadd.f32 %v580, %v116
    %v821 = vadd.f32 %v581, %v117
    %v822 = vadd.f32 %v582, %v118
    %v823 = vadd.f32 %v583, %v119
    %v824 = vadd.f32 %v584, %v120
    %v825 = vadd.f32 %v585, %v121
    %v826 = vadd.f32 %v586, %v122
    %v827 = vadd.f32 %v587, %v123
    %v828 = vadd.f32 %v588, %v124
    %v829 = vadd.f32 %v589, %v125
    %v830 = vadd.f32 %v590, %v126
    %v831 = vadd.f32 %v591, %v127
    %v832 = vadd.f32 %v592, %v128
    %v833 = vadd.f32 %v593, %v129
    %v834 = vadd.f32 %v594, %v130
    %v835 = vadd.f32 %v595, %v131
    %v836 = vadd.f32 %v596, %v132
    %v837 = vadd.f32 %v597, %v133
    %v838 = vadd.f32 %v598, %v134
    %v839 = vadd.f32 %v599, %v135
    %v840 = vadd.f32 %v600, %v136
    %v841 = vadd.f32 %v601, %v137
    %v842 = vadd.f32 %v602, %v138
    %v843 = vadd.f32 %v603, %v139
    %v844 = vadd.f32 %v604, %v140
    %v845 = vadd.f32 %v605, %v141
    %v846 = vadd.f32 %v606, %v142
    %v847 = vadd.f32 %v607, %v143
    %v848 = vadd.f32 %v608, %v144
    %v849 = vadd.f32 %v609, %v145
    %v850 = vadd.f32 %v610, %v146
    %v851 = vadd.f32 %v611, %v147
    %v852 = vadd.f32 %v612, %v148
    %v853 = vadd.f32 %v613, %v149
    %v854 = vadd.f32 %v614, %v150
    %v855 = vadd.f32 %v615, %v151
    %v856 = vadd.f32 %v616, %v152
    %v857 = vadd.f32 %v617, %v153
    %v858 = vadd.f32 %v618, %v154
    %v859 = vadd.f32 %v619, %v155
    %v860 = vadd.f32 %v620, %v156
    %v861 = vadd.f32 %v621, %v157
    %v862 = vadd.f32 %v622, %v158
    %v863 = vadd.f32 %v623, %v159
    %v864 = vadd.f32 %v624, %v160
    %v865 = vadd.f32 %v625, %v161
    %v866 = vadd.f32 %v626, %v162
    %v867 = vadd.f32 %v627, %v163
    %v868 = vadd.f32 %v628, %v164
    %v869 = vadd.f32 %v629, %v165
    %v870 = vadd.f32 %v630, %v166
    %v871 = vadd.f32 %v631, %v167
    %v872 = vadd.f32 %v632, %v168
    %v873 = vadd.f32 %v633, %v169
    %v874 = vadd.f32 %v634, %v170
    %v875 = vadd.f32 %v635, %v171
    %v876 = vadd.f32 %v636, %v172
    %v877 = vadd.f32 %v637, %v173
    %v878 = vadd.f32 %v638, %v174
    %v879 = vadd.f32 %v639, %v175
    %v880 = vadd.f32 %v640, %v176
    %v881 = vadd.f32 %v641, %v177
    %v882 = vadd.f32 %v642, %v178
    %v883 = vadd.f32 %v643, %v179
    %v884 = vadd.f32 %v644, %v180
    %v885 = vadd.f32 %v645, %v181
    %v886 = vadd.f32 %v646, %v182
    %v887 = vadd.f32 %v647, %v183
    %v888 = vadd.f32 %v648, %v184
    %v889 = vadd.f32 %v649, %v185
    %v890 = vadd.f32 %v650, %v186
    %v891 = vadd.f32 %v651, %v187
    %v892 = vadd.f32 %v652, %v188
    %v893 = vadd.f32 %v653, %v189
    %v894 = vadd.f32 %v654, %v190
    %v895 = vadd.f32 %v655, %v191
    %v896 = vadd.f32 %v656, %v192
    %v897 = vadd.f32 %v657, %v193
    %v898 = vadd.f32 %v658, %v194
    %v899 = vadd.f32 %v659, %v195
    %v900 = vadd.f32 %v660, %v196
    %v901 = vadd.f32 %v661, %v197
    %v902 = vadd.f32 %v662, %v198
    %v903 = vadd.f32 %v663, %v199
    %v904 = vadd.f32 %v664, %v200
    %v905 = vadd.f32 %v665, %v201
    %v906 = vadd.f32 %v666, %v202
    %v907 = vadd.f32 %v667, %v203
    %v908 = vadd.f32 %v668, %v204
    %v909 = vadd.f32 %v669, %v205
    %v910 = vadd.f32 %v670, %v206
    %v911 = vadd.f32 %v671, %v207
    %v912 = vadd.f32 %v672, %v208
    %v913 = vadd.f32 %v673, %v209
    %v914 = vadd.f32 %v674, %v210
    %v915 = vadd.f32 %v675, %v211
    %v916 = vadd.f32 %v676, %v212
    %v917 = vadd.f32 %v677, %v213
    %v918 = vadd.f32 %v678, %v214
    %v919 = vadd.f32 %v679, %v215
    %v920 = vadd.f32 %v680, %v216
    %v921 = vadd.f32 %v681, %v217
    %v922 = vadd.f32 %v682, %v218
    %v923 = vadd.f32 %v683, %v219
    %v924 = vadd.f32 %v684, %v220
    %v925 = vadd.f32 %v685, %v221
    %v926 = vadd.f32 %v686, %v222
    %v927 = vadd.f32 %v687, %v223
    %v928 = vadd.f32 %v688, %v224
    %v929 = vadd.f32 %v689, %v225
    %v930 = vadd.f32 %v690, %v226
    %v931 = vadd.f32 %v691, %v227
    %v932 = vadd.f32 %v692, %v228
    %v933 = vadd.f32 %v693, %v229
    %v934 = vadd.f32 %v694, %v230
    %v935 = vadd.f32 %v695, %v231
    %v936 = vadd.f32 %v696, %v232
    %v937 = vadd.f32 %v697, %v233
    %v938 = vadd.f32 %v698, %v234
    %v939 = vadd.f32 %v699, %v235
    %v940 = vadd.f32 %v700, %v236
    %v941 = vadd.f32 %v701, %v237
    %v942 = vadd.f32 %v702, %v238
    %v943 = vadd.f32 %v703, %v239
    %v944 = vadd.f32 %v704, %v240
    %v945 = vadd.f32 %v705, %v241
    %v946 = vadd.f32 %v706, %v242
    %v947 = vadd.f32 %v707, %v243
    %v948 = vadd.f32 %v708, %v244
    %v949 = vadd.f32 %v709, %v245
    %v950 = vadd.f32 %v710, %v246
    %v951 = vadd.f32 %v711, %v247
    %v952 = vadd.f32 %v712, %v248
    %v953 = vadd.f32 %v713, %v249
    %v954 = vadd.f32 %v714, %v250
    %v955 = vadd.f32 %v715, %v251
    %v956 = vadd.f32 %v716, %v252
    %v957 = vadd.f32 %v717, %v253
    %v958 = vadd.f32 %v718, %v254
    %v959 = vadd.f32 %v719, %v255
    %v960 = vadd.f32 %v720, %v256
    %v961 = vadd.f32 %v721, %v257
    %v962 = vadd.f32 %v722, %v258
    %v963 = vadd.f32 %v723, %v259
    %v964 = vadd.f32 %v724, %v260
    %v965 = vadd.f32 %v725, %v261
    %v966 = vadd.f32 %v726, %v262
    %v967 = vadd.f32 %v727, %v263
    %v968 = vadd.f32 %v728, %v264
    %v969 = vadd.f32 %v729, %v265
    %v970 = vadd.f32 %v730, %v266
    %v971 = vadd.f32 %v731, %v267
    %v972 = vadd.f32 %v732, %v268
    %v973 = vadd.f32 %v733, %v269
    %v974 = vadd.f32 %v734, %v270
    %v975 = vadd.f32 %v735, %v271
    %v976 = vadd.f32 %v736, %v272
    %v977 = vadd.f32 %v737, %v273
    %v978 = vadd.f32 %v738, %v274
    %v979 = vadd.f32 %v739, %v275
    %v980 = vadd.f32 %v740, %v276
    %v981 = vadd.f32 %v741, %v277
    %v982 = vadd.f32 %v742, %v278
    %v983 = vadd.f32 %v743, 0.0
    %v984 = vadd.f32 %v744, 0.0
    %v985 = vadd.f32 %v745, 0.0
    %v986 = vadd.f32 %v746, 0.0
    %v987 = vadd.f32 %v747, 0.0
    %v988 = vadd.f32 %v748, 0.0
    %v989 = vadd.f32 %v749, 0.0
    %v990 = vadd.f32 %v750, 0.0
    %v991 = vadd.f32 %v751, 0.0
    %v992 = vadd.f32 %v752, 0.0
    %v993 = vadd.f32 %v753, 0.0
    %v994 = vadd.f32 %v754, 0.0
    %v995 = vadd.f32 %v755, 0.0
    %v996 = vadd.f32 %v756, 0.0
    %v997 = vadd.f32 %v757, 0.0
    %v998 = vadd.f32 %v758, 0.0
    %v999 = vadd.f32 %v519, 0.0
    %v1000 = vadd.f32 %v519, %v520
    %v1001 = vadd.f32 %v520, %v521
    %v1002 = vadd.f32 %v521, %v522
    %v1003 = vadd.f32 %v522, %v523
    %v1004 = vadd.f32 %v523, %v524
    %v1005 = vadd.f32 %v524, %v525
    %v1006 = vadd.f32 %v525, %v526
    %v1007 = vadd.f32 %v526, %v527
    %v1008 = vadd.f32 %v527, %v528
    %v1009 = vadd.f32 %v528, %v529
    %v1010 = vadd.f32 %v529, %v530
    %v1011 = vadd.f32 %v530, %v531
    %v1012 = vadd.f32 %v531, %v532
    %v1013 = vadd.f32 %v532, %v533
    %v1014 = vadd.f32 %v759, 0.0
    %v1015 = vadd.f32 %v759, %v760
    %v1016 = vadd.f32 %v760, %v761
    %v1017 = vadd.f32 %v761, %v762
    %v1018 = vadd.f32 %v762, %v763
    %v1019 = vadd.f32 %v763, %v764
    %v1020 = vadd.f32 %v764, %v765
    %v1021 = vadd.f32 %v765, %v766
    %v1022 = vadd.f32 %v766, %v767
    %v1023 = vadd.f32 %v767, %v768
    %v1024 = vadd.f32 %v768, %v769
    %v1025 = vadd.f32 %v769, %v770
    %v1026 = vadd.f32 %v770, %v771
    %v1027 = vadd.f32 %v771, %v772
    %v1028 = vadd.f32 %v772, %v773
    %v1029 = vadd.f32 %v775, 0.0
    %v1030 = vadd.f32 %v775, %v776
    %v1031 = vadd.f32 %v776, %v777
    %v1032 = vadd.f32 %v777, %v778
    %v1033 = vadd.f32 %v778, %v779
    %v1034 = vadd.f32 %v779, %v780
    %v1035 = vadd.f32 %v780, %v781
    %v1036 = vadd.f32 %v781, %v782
    %v1037 = vadd.f32 %v782, %v783
    %v1038 = vadd.f32 %v783, %v784
    %v1039 = vadd.f32 %v784, %v785
    %v1040 = vadd.f32 %v785, %v786
    %v1041 = vadd.f32 %v786, %v787
    %v1042 = vadd.f32 %v787, %v788
    %v1043 = vadd.f32 %v788, %v789
    %v1044 = vadd.f32 %v791, 0.0
    %v1045 = vadd.f32 %v791, %v792
    %v1046 = vadd.f32 %v792, %v793
    %v1047 = vadd.f32 %v793, %v794
    %v1048 = vadd.f32 %v794, %v795
    %v1049 = vadd.f32 %v795, %v796
    %v1050 = vadd.f32 %v796, %v797
    %v1051 = vadd.f32 %v797, %v798
    %v1052 = vadd.f32 %v798, %v799
    %v1053 = vadd.f32 %v799, %v800
    %v1054 = vadd.f32 %v800, %v801
    %v1055 = vadd.f32 %v801, %v802
    %v1056 = vadd.f32 %v802, %v803
    %v1057 = vadd.f32 %v803, %v804
    %v1058 = vadd.f32 %v804, %v805
    %v1059 = vadd.f32 %v807, 0.0
    %v1060 = vadd.f32 %v807, %v808
    %v1061 = vadd.f32 %v808, %v809
    %v1062 = vadd.f32 %v809, %v810
    %v1063 = vadd.f32 %v810, %v811
    %v1064 = vadd.f32 %v811, %v812
    %v1065 = vadd.f32 %v812, %v813
    %v1066 = vadd.f32 %v813, %v814
    %v1067 = vadd.f32 %v814, %v815
    %v1068 = vadd.f32 %v815, %v816
    %v1069 = vadd.f32 %v816, %v817
    %v1070 = vadd.f32 %v817, %v818
    %v1071 = vadd.f32 %v818, %v819
    %v1072 = vadd.f32 %v819, %v820
    %v1073 = vadd.f32 %v820, %v821
    %v1074 = vadd.f32 %v823, 0.0
    %v1075 = vadd.f32 %v823, %v824
    %v1076 = vadd.f32 %v824, %v825
    %v1077 = vadd.f32 %v825, %v826
    %v1078 = vadd.f32 %v826, %v827
    %v1079 = vadd.f32 %v827, %v828
    %v1080 = vadd.f32 %v828, %v829
    %v1081 = vadd.f32 %v829, %v830
    %v1082 = vadd.f32 %v830, %v831
    %v1083 = vadd.f32 %v831, %v832
    %v1084 = vadd.f32 %v832, %v833
    %v1085 = vadd.f32 %v833, %v834
    %v1086 = vadd.f32 %v834, %v835
    %v1087 = vadd.f32 %v835, %v836
    %v1088 = vadd.f32 %v836, %v837
    %v1089 = vadd.f32 %v839, 0.0
    %v1090 = vadd.f32 %v839, %v840
    %v1091 = vadd.f32 %v840, %v841
    %v1092 = vadd.f32 %v841, %v842
    %v1093 = vadd.f32 %v842, %v843
    %v1094 = vadd.f32 %v843, %v844
    %v1095 = vadd.f32 %v844, %v845
    %v1096 = vadd.f32 %v845, %v846
    %v1097 = vadd.f32 %v846, %v847
    %v1098 = vadd.f32 %v847, %v848
    %v1099 = vadd.f32 %v848, %v849
    %v1100 = vadd.f32 %v849, %v850
    %v1101 = vadd.f32 %v850, %v851
    %v1102 = vadd.f32 %v851, %v852
    %v1103 = vadd.f32 %v852, %v853
    %v1104 = vadd.f32 %v855, 0.0
    %v1105 = vadd.f32 %v855, %v856
    %v1106 = vadd.f32 %v856, %v857
    %v1107 = vadd.f32 %v857, %v858
    %v1108 = vadd.f32 %v858, %v859
    %v1109 = vadd.f32 %v859, %v860
    %v1110 = vadd.f32 %v860, %v861
    %v1111 = vadd.f32 %v861, %v862
    %v1112 = vadd.f32 %v862, %v863
    %v1113 = vadd.f32 %v863, %v864
    %v1114 = vadd.f32 %v864, %v865
    %v1115 = vadd.f32 %v865, %v866
    %v1116 = vadd.f32 %v866, %v867
    %v1117 = vadd.f32 %v867, %v868
    %v1118 = vadd.f32 %v868, %v869
    %v1119 = vadd.f32 %v871, 0.0
    %v1120 = vadd.f32 %v871, %v872
    %v1121 = vadd.f32 %v872, %v873
    %v1122 = vadd.f32 %v873, %v874
    %v1123 = vadd.f32 %v874, %v875
    %v1124 = vadd.f32 %v875, %v876
    %v1125 = vadd.f32 %v876, %v877
    %v1126 = vadd.f32 %v877, %v878
    %v1127 = vadd.f32 %v878, %v879
    %v1128 = vadd.f32 %v879, %v880
    %v1129 = vadd.f32 %v880, %v881
    %v1130 = vadd.f32 %v881, %v882
    %v1131 = vadd.f32 %v882, %v883
    %v1132 = vadd.f32 %v883, %v884
    %v1133 = vadd.f32 %v884, %v885
    %v1134 = vadd.f32 %v887, 0.0
    %v1135 = vadd.f32 %v887, %v888
    %v1136 = vadd.f32 %v888, %v889
    %v1137 = vadd.f32 %v889, %v890
    %v1138 = vadd.f32 %v890, %v891
    %v1139 = vadd.f32 %v891, %v892
    %v1140 = vadd.f32 %v892, %v893
    %v1141 = vadd.f32 %v893, %v894
    %v1142 = vadd.f32 %v894, %v895
    %v1143 = vadd.f32 %v895, %v896
    %v1144 = vadd.f32 %v896, %v897
    %v1145 = vadd.f32 %v897, %v898
    %v1146 = vadd.f32 %v898, %v899
    %v1147 = vadd.f32 %v899, %v900
    %v1148 = vadd.f32 %v900, %v901
    %v1149 = vadd.f32 %v903, 0.0
    %v1150 = vadd.f32 %v903, %v904
    %v1151 = vadd.f32 %v904, %v905
    %v1152 = vadd.f32 %v905, %v906
    %v1153 = vadd.f32 %v906, %v907
    %v1154 = vadd.f32 %v907, %v908
    %v1155 = vadd.f32 %v908, %v909
    %v1156 = vadd.f32 %v909, %v910
    %v1157 = vadd.f32 %v910, %v911
    %v1158 = vadd.f32 %v911, %v912
    %v1159 = vadd.f32 %v912, %v913
    %v1160 = vadd.f32 %v913, %v914
    %v1161 = vadd.f32 %v914, %v915
    %v1162 = vadd.f32 %v915, %v916
    %v1163 = vadd.f32 %v916, %v917
    %v1164 = vadd.f32 %v919, 0.0
    %v1165 = vadd.f32 %v919, %v920
    %v1166 = vadd.f32 %v920, %v921
    %v1167 = vadd.f32 %v921, %v922
    %v1168 = vadd.f32 %v922, %v923
    %v1169 = vadd.f32 %v923, %v924
    %v1170 = vadd.f32 %v924, %v925
    %v1171 = vadd.f32 %v925, %v926
    %v1172 = vadd.f32 %v926, %v927
    %v1173 = vadd.f32 %v927, %v928
    %v1174 = vadd.f32 %v928, %v929
    %v1175 = vadd.f32 %v929, %v930
    %v1176 = vadd.f32 %v930, %v931
    %v1177 = vadd.f32 %v931, %v932
    %v1178 = vadd.f32 %v932, %v933
    %v1179 = vadd.f32 %v935, 0.0
    %v1180 = vadd.f32 %v935, %v936
    %v1181 = vadd.f32 %v936, %v937
    %v1182 = vadd.f32 %v937, %v938
    %v1183 = vadd.f32 %v938, %v939
    %v1184 = vadd.f32 %v939, %v940
    %v1185 = vadd.f32 %v940, %v941
    %v1186 = vadd.f32 %v941, %v942
    %v1187 = vadd.f32 %v942, %v943
    %v1188 = vadd.f32 %v943, %v944
    %v1189 = vadd.f32 %v944, %v945
    %v1190 = vadd.f32 %v945, %v946
    %v1191 = vadd.f32 %v946, %v947
    %v1192 = vadd.f32 %v947, %v948
    %v1193 = vadd.f32 %v948, %v949
    %v1194 = vadd.f32 %v951, 0.0
    %v1195 = vadd.f32 %v951, %v952
    %v1196 = vadd.f32 %v952, %v953
    %v1197 = vadd.f32 %v953, %v954
    %v1198 = vadd.f32 %v954, %v955
    %v1199 = vadd.f32 %v955, %v956
    %v1200 = vadd.f32 %v956, %v957
    %v1201 = vadd.f32 %v957, %v958
    %v1202 = vadd.f32 %v958, %v959
    %v1203 = vadd.f32 %v959, %v960
    %v1204 = vadd.f32 %v960, %v961
    %v1205 = vadd.f32 %v961, %v962
    %v1206 = vadd.f32 %v962, %v963
    %v1207 = vadd.f32 %v963, %v964
    %v1208 = vadd.f32 %v964, %v965
    %v1209 = vadd.f32 %v967, 0.0
    %v1210 = vadd.f32 %v967, %v968
    %v1211 = vadd.f32 %v968, %v969
    %v1212 = vadd.f32 %v969, %v970
    %v1213 = vadd.f32 %v970, %v971
    %v1214 = vadd.f32 %v971, %v972
    %v1215 = vadd.f32 %v972, %v973
    %v1216 = vadd.f32 %v973, %v974
    %v1217 = vadd.f32 %v974, %v975
    %v1218 = vadd.f32 %v975, %v976
    %v1219 = vadd.f32 %v976, %v977
    %v1220 = vadd.f32 %v977, %v978
    %v1221 = vadd.f32 %v978, %v979
    %v1222 = vadd.f32 %v979, %v980
    %v1223 = vadd.f32 %v980, %v981
    %v1224 = vadd.f32 %v983, 0.0
    %v1225 = vadd.f32 %v983, %v984
    %v1226 = vadd.f32 %v984, %v985
    %v1227 = vadd.f32 %v985, %v986
    %v1228 = vadd.f32 %v986, %v987
    %v1229 = vadd.f32 %v987, %v988
    %v1230 = vadd.f32 %v988, %v989
    %v1231 = vadd.f32 %v989, %v990
    %v1232 = vadd.f32 %v990, %v991
    %v1233 = vadd.f32 %v991, %v992
    %v1234 = vadd.f32 %v992, %v993
    %v1235 = vadd.f32 %v993, %v994
    %v1236 = vadd.f32 %v994, %v995
    %v1237 = vadd.f32 %v995, %v996
    %v1238 = vadd.f32 %v996, %v997
    %v1239 = vadd.f32 %v999, %v520
    %v1240 = vadd.f32 %v1000, %v521
    %v1241 = vadd.f32 %v1001, %v522
    %v1242 = vadd.f32 %v1002, %v523
    %v1243 = vadd.f32 %v1003, %v524
    %v1244 = vadd.f32 %v1004, %v525
    %v1245 = vadd.f32 %v1005, %v526
    %v1246 = vadd.f32 %v1006, %v527
    %v1247 = vadd.f32 %v1007, %v528
    %v1248 = vadd.f32 %v1008, %v529
    %v1249 = vadd.f32 %v1009, %v530
    %v1250 = vadd.f32 %v1010, %v531
    %v1251 = vadd.f32 %v1011, %v532
    %v1252 = vadd.f32 %v1012, %v533
    %v1253 = vadd.f32 %v1013, %v534
    %v1254 = vadd.f32 %v1014, %v760
    %v1255 = vadd.f32 %v1015, %v761
    %v1256 = vadd.f32 %v1016, %v762
    %v1257 = vadd.f32 %v1017, %v763
    %v1258 = vadd.f32 %v1018, %v764
    %v1259 = vadd.f32 %v1019, %v765
    %v1260 = vadd.f32 %v1020, %v766
    %v1261 = vadd.f32 %v1021, %v767
    %v1262 = vadd.f32 %v1022, %v768
    %v1263 = vadd.f32 %v1023, %v769
    %v1264 = vadd.f32 %v1024, %v770
    %v1265 = vadd.f32 %v1025, %v771
    %v1266 = vadd.f32 %v1026, %v772
    %v1267 = vadd.f32 %v1027, %v773
    %v1268 = vadd.f32 %v1028, %v774
    %v1269 = vadd.f32 %v1029, %v776
    %v1270 = vadd.f32 %v1030, %v777
    %v1271 = vadd.f32 %v1031, %v778
    %v1272 = vadd.f32 %v1032, %v779
    %v1273 = vadd.f32 %v1033, %v780
    %v1274 = vadd.f32 %v1034, %v781
    %v1275 = vadd.f32 %v1035, %v782
    %v1276 = vadd.f32 %v1036, %v783
    %v1277 = vadd.f32 %v1037, %v784
    %v1278 = vadd.f32 %v1038, %v785
    %v1279 = vadd.f32 %v1039, %v786
    %v1280 = vadd.f32 %v1040, %v787
    %v1281 = vadd.f32 %v1041, %v788
    %v1282 = vadd.f32 %v1042, %v789
    %v1283 = vadd.f32 %v1043, %v790
    %v1284 = vadd.f32 %v1044, %v792
    %v1285 = vadd.f32 %v1045, %v793
    %v1286 = vadd.f32 %v1046, %v794
    %v1287 = vadd.f32 %v1047, %v795
    %v1288 = vadd.f32 %v1048, %v796
    %v1289 = vadd.f32 %v1049, %v797
    %v1290 = vadd.f32 %v1050, %v798
    %v1291 = vadd.f32 %v1051, %v799
    %v1292 = vadd.f32 %v1052, %v800
    %v1293 = vadd.f32 %v1053, %v801
    %v1294 = vadd.f32 %v1054, %v802
    %v1295 = vadd.f32 %v1055, %v803
    %v1296 = vadd.f32 %v1056, %v804
    %v1297 = vadd.f32 %v1057, %v805
    %v1298 = vadd.f32 %v1058, %v806
    %v1299 = vadd.f32 %v1059, %v808
    %v1300 = vadd.f32 %v1060, %v809
    %v1301 = vadd.f32 %v1061, %v810
    %v1302 = vadd.f32 %v1062, %v811
    %v1303 = vadd.f32 %v1063, %v812
    %v1304 = vadd.f32 %v1064, %v813
    %v1305 = vadd.f32 %v1065, %v814
    %v1306 = vadd.f32 %v1066, %v815
    %v1307 = vadd.f32 %v1067, %v816
    %v1308 = vadd.f32 %v1068, %v817
    %v1309 = vadd.f32 %v1069, %v818
    %v1310 = vadd.f32 %v1070, %v819
    %v1311 = vadd.f32 %v1071, %v820
    %v1312 = vadd.f32 %v1072, %v821
    %v1313 = vadd.f32 %v1073, %v822
    %v1314 = vadd.f32 %v1074, %v824
    %v1315 = vadd.f32 %v1075, %v825
    %v1316 = vadd.f32 %v1076, %v826
    %v1317 = vadd.f32 %v1077, %v827
    %v1318 = vadd.f32 %v1078, %v828
    %v1319 = vadd.f32 %v1079, %v829
    %v1320 = vadd.f32 %v1080, %v830
    %v1321 = vadd.f32 %v1081, %v831
    %v1322 = vadd.f32 %v1082, %v832
    %v1323 = vadd.f32 %v1083, %v833
    %v1324 = vadd.f32 %v1084, %v834
    %v1325 = vadd.f32 %v1085, %v835
    %v1326 = vadd.f32 %v1086, %v836
    %v1327 = vadd.f32 %v1087, %v837
    %v1328 = vadd.f32 %v1088, %v838
    %v1329 = vadd.f32 %v1089, %v840
    %v1330 = vadd.f32 %v1090, %v841
    %v1331 = vadd.f32 %v1091, %v842
    %v1332 = vadd.f32 %v1092, %v843
    %v1333 = vadd.f32 %v1093, %v844
    %v1334 = vadd.f32 %v1094, %v845
    %v1335 = vadd.f32 %v1095, %v846
    %v1336 = vadd.f32 %v1096, %v847
    %v1337 = vadd.f32 %v1097, %v848
    %v1338 = vadd.f32 %v1098, %v849
    %v1339 = vadd.f32 %v1099, %v850
    %v1340 = vadd.f32 %v1100, %v851
    %v1341 = vadd.f32 %v1101, %v852
    %v1342 = vadd.f32 %v1102, %v853
    %v1343 = vadd.f32 %v1103, %v854
    %v1344 = vadd.f32 %v1104, %v856
    %v1345 = vadd.f32 %v1105, %v857
    %v1346 = vadd.f32 %v1106, %v858
    %v1347 = vadd.f32 %v1107, %v859
    %v1348 = vadd.f32 %v1108, %v860
    %v1349 = vadd.f32 %v1109, %v861
    %v1350 = vadd.f32 %v1110, %v862
    %v1351 = vadd.f32 %v1111, %v863
    %v1352 = vadd.f32 %v1112, %v864
    %v1353 = vadd.f32 %v1113, %v865
    %v1354 = vadd.f32 %v1114, %v866
    %v1355 = vadd.f32 %v1115, %v867
    %v1356 = vadd.f32 %v1116, %v868
    %v1357 = vadd.f32 %v1117, %v869
    %v1358 = vadd.f32 %v1118, %v870
    %v1359 = vadd.f32 %v1119, %v872
    %v1360 = vadd.f32 %v1120, %v873
    %v1361 = vadd.f32 %v1121, %v874
    %v1362 = vadd.f32 %v1122, %v875
    %v1363 = vadd.f32 %v1123, %v876
    %v1364 = vadd.f32 %v1124, %v877
    %v1365 = vadd.f32 %v1125, %v878
    %v1366 = vadd.f32 %v1126, %v879
    %v1367 = vadd.f32 %v1127, %v880
    %v1368 = vadd.f32 %v1128, %v881
    %v1369 = vadd.f32 %v1129, %v882
    %v1370 = vadd.f32 %v1130, %v883
    %v1371 = vadd.f32 %v1131, %v884
    %v1372 = vadd.f32 %v1132, %v885
    %v1373 = vadd.f32 %v1133, %v886
    %v1374 = vadd.f32 %v1134, %v888
    %v1375 = vadd.f32 %v1135, %v889
    %v1376 = vadd.f32 %v1136, %v890
    %v1377 = vadd.f32 %v1137, %v891
    %v1378 = vadd.f32 %v1138, %v892
    %v1379 = vadd.f32 %v1139, %v893
    %v1380 = vadd.f32 %v1140, %v894
    %v1381 = vadd.f32 %v1141, %v895
    %v1382 = vadd.f32 %v1142, %v896
    %v1383 = vadd.f32 %v1143, %v897
    %v1384 = vadd.f32 %v1144, %v898
    %v1385 = vadd.f32 %v1145, %v899
    %v1386 = vadd.f32 %v1146, %v900
    %v1387 = vadd.f32 %v1147, %v901
    %v1388 = vadd.f32 %v1148, %v902
    %v1389 = vadd.f32 %v1149, %v904
    %v1390 = vadd.f32 %v1150, %v905
    %v1391 = vadd.f32 %v1151, %v906
    %v1392 = vadd.f32 %v1152, %v907
    %v1393 = vadd.f32 %v1153, %v908
    %v1394 = vadd.f32 %v1154, %v909
    %v1395 = vadd.f32 %v1155, %v910
    %v1396 = vadd.f32 %v1156, %v911
    %v1397 = vadd.f32 %v1157, %v912
    %v1398 = vadd.f32 %v1158, %v913
    %v1399 = vadd.f32 %v1159, %v914
    %v1400 = vadd.f32 %v1160, %v915
    %v1401 = vadd.f32 %v1161, %v916
    %v1402 = vadd.f32 %v1162, %v917
    %v1403 = vadd.f32 %v1163, %v918
    %v1404 = vadd.f32 %v1164, %v920
    %v1405 = vadd.f32 %v1165, %v921
    %v1406 = vadd.f32 %v1166, %v922
    %v1407 = vadd.f32 %v1167, %v923
    %v1408 = vadd.f32 %v1168, %v924
    %v1409 = vadd.f32 %v1169, %v925
    %v1410 = vadd.f32 %v1170, %v926
    %v1411 = vadd.f32 %v1171, %v927
    %v1412 = vadd.f32 %v1172, %v928
    %v1413 = vadd.f32 %v1173, %v929
    %v1414 = vadd.f32 %v1174, %v930
    %v1415 = vadd.f32 %v1175, %v931
    %v1416 = vadd.f32 %v1176, %v932
    %v1417 = vadd.f32 %v1177, %v933
    %v1418 = vadd.f32 %v1178, %v934
    %v1419 = vadd.f32 %v1179, %v936
    %v1420 = vadd.f32 %v1180, %v937
    %v1421 = vadd.f32 %v1181, %v938
    %v1422 = vadd.f32 %v1182, %v939
    %v1423 = vadd.f32 %v1183, %v940
    %v1424 = vadd.f32 %v1184, %v941
    %v1425 = vadd.f32 %v1185, %v942
    %v1426 = vadd.f32 %v1186, %v943
    %v1427 = vadd.f32 %v1187, %v944
    %v1428 = vadd.f32 %v1188, %v945
    %v1429 = vadd.f32 %v1189, %v946
    %v1430 = vadd.f32 %v1190, %v947
    %v1431 = vadd.f32 %v1191, %v948
    %v1432 = vadd.f32 %v1192, %v949
    %v1433 = vadd.f32 %v1193, %v950
    %v1434 = vadd.f32 %v1194, %v952
    %v1435 = vadd.f32 %v1195, %v953
    %v1436 = vadd.f32 %v1196, %v954
    %v1437 = vadd.f32 %v1197, %v955
    %v1438 = vadd.f32 %v1198, %v956
    %v1439 = vadd.f32 %v1199, %v957
    %v1440 = vadd.f32 %v1200, %v958
    %v1441 = vadd.f32 %v1201, %v959
    %v1442 = vadd.f32 %v1202, %v960
    %v1443 = vadd.f32 %v1203, %v961
    %v1444 = vadd.f32 %v1204, %v962
    %v1445 = vadd.f32 %v1205, %v963
    %v1446 = vadd.f32 %v1206, %v964
    %v1447 = vadd.f32 %v1207, %v965
    %v1448 = vadd.f32 %v1208, %v966
    %v1449 = vadd.f32 %v1209, %v968
    %v1450 = vadd.f32 %v1210, %v969
    %v1451 = vadd.f32 %v1211, %v970
    %v1452 = vadd.f32 %v1212, %v971
    %v1453 = vadd.f32 %v1213, %v972
    %v1454 = vadd.f32 %v1214, %v973
    %v1455 = vadd.f32 %v1215, %v974
    %v1456 = vadd.f32 %v1216, %v975
    %v1457 = vadd.f32 %v1217, %v976
    %v1458 = vadd.f32 %v1218, %v977
    %v1459 = vadd.f32 %v1219, %v978
    %v1460 = vadd.f32 %v1220, %v979
    %v1461 = vadd.f32 %v1221, %v980
    %v1462 = vadd.f32 %v1222, %v981
    %v1463 = vadd.f32 %v1223, %v982
    %v1464 = vadd.f32 %v1224, %v984
    %v1465 = vadd.f32 %v1225, %v985
    %v1466 = vadd.f32 %v1226, %v986
    %v1467 = vadd.f32 %v1227, %v987
    %v1468 = vadd.f32 %v1228, %v988
    %v1469 = vadd.f32 %v1229, %v989
    %v1470 = vadd.f32 %v1230, %v990
    %v1471 = vadd.f32 %v1231, %v991
    %v1472 = vadd.f32 %v1232, %v992
    %v1473 = vadd.f32 %v1233, %v993
    %v1474 = vadd.f32 %v1234, %v994
    %v1475 = vadd.f32 %v1235, %v995
    %v1476 = vadd.f32 %v1236, %v996
    %v1477 = vadd.f32 %v1237, %v997
    %v1478 = vadd.f32 %v1238, %v998
    %v1479 = vadd.f32 %v1239, %v521
    %v1480 = vadd.f32 %v1240, %v522
    %v1481 = vadd.f32 %v1241, %v523
    %v1482 = vadd.f32 %v1242, %v524
    %v1483 = vadd.f32 %v1243, %v525
    %v1484 = vadd.f32 %v1244, %v526
    %v1485 = vadd.f32 %v1245, %v527
    %v1486 = vadd.f32 %v1246, %v528
    %v1487 = vadd.f32 %v1247, %v529
    %v1488 = vadd.f32 %v1248, %v530
    %v1489 = vadd.f32 %v1249, %v531
    %v1490 = vadd.f32 %v1250, %v532
    %v1491 = vadd.f32 %v1251, %v533
    %v1492 = vadd.f32 %v1252, %v534
    %v1493 = vadd.f32 %v1253, 0.0
    %v1494 = vadd.f32 %v1254, %v761
    %v1495 = vadd.f32 %v1255, %v762
    %v1496 = vadd.f32 %v1256, %v763
    %v1497 = vadd.f32 %v1257, %v764
    %v1498 = vadd.f32 %v1258, %v765
    %v1499 = vadd.f32 %v1259, %v766
    %v1500 = vadd.f32 %v1260, %v767
    %v1501 = vadd.f32 %v1261, %v768
    %v1502 = vadd.f32 %v1262, %v769
    %v1503 = vadd.f32 %v1263, %v770
    %v1504 = vadd.f32 %v1264, %v771
    %v1505 = vadd.f32 %v1265, %v772
    %v1506 = vadd.f32 %v1266, %v773
    %v1507 = vadd.f32 %v1267, %v774
    %v1508 = vadd.f32 %v1268, 0.0
    %v1509 = vadd.f32 %v1269, %v777
    %v1510 = vadd.f32 %v1270, %v778
    %v1511 = vadd.f32 %v1271, %v779
    %v1512 = vadd.f32 %v1272, %v780
    %v1513 = vadd.f32 %v1273, %v781
    %v1514 = vadd.f32 %v1274, %v782
    %v1515 = vadd.f32 %v1275, %v783
    %v1516 = vadd.f32 %v1276, %v784
    %v1517 = vadd.f32 %v1277, %v785
    %v1518 = vadd.f32 %v1278, %v786
    %v1519 = vadd.f32 %v1279, %v787
    %v1520 = vadd.f32 %v1280, %v788
    %v1521 = vadd.f32 %v1281, %v789
    %v1522 = vadd.f32 %v1282, %v790
    %v1523 = vadd.f32 %v1283, 0.0
    %v1524 = vadd.f32 %v1284, %v793
    %v1525 = vadd.f32 %v1285, %v794
    %v1526 = vadd.f32 %v1286, %v795
    %v1527 = vadd.f32 %v1287, %v796
    %v1528 = vadd.f32 %v1288, %v797
    %v1529 = vadd.f32 %v1289, %v798
    %v1530 = vadd.f32 %v1290, %v799
    %v1531 = vadd.f32 %v1291, %v800
    %v1532 = vadd.f32 %v1292, %v801
    %v1533 = vadd.f32 %v1293, %v802
    %v1534 = vadd.f32 %v1294, %v803
    %v1535 = vadd.f32 %v1295, %v804
    %v1536 = vadd.f32 %v1296, %v805
    %v1537 = vadd.f32 %v1297, %v806
    %v1538 = vadd.f32 %v1298, 0.0
    %v1539 = vadd.f32 %v1299, %v809
    %v1540 = vadd.f32 %v1300, %v810
    %v1541 = vadd.f32 %v1301, %v811
    %v1542 = vadd.f32 %v1302, %v812
    %v1543 = vadd.f32 %v1303, %v813
    %v1544 = vadd.f32 %v1304, %v814
    %v1545 = vadd.f32 %v1305, %v815
    %v1546 = vadd.f32 %v1306, %v816
    %v1547 = vadd.f32 %v1307, %v817
    %v1548 = vadd.f32 %v1308, %v818
    %v1549 = vadd.f32 %v1309, %v819
    %v1550 = vadd.f32 %v1310, %v820
    %v1551 = vadd.f32 %v1311, %v821
    %v1552 = vadd.f32 %v1312, %v822
    %v1553 = vadd.f32 %v1313, 0.0
    %v1554 = vadd.f32 %v1314, %v825
    %v1555 = vadd.f32 %v1315, %v826
    %v1556 = vadd.f32 %v1316, %v827
    %v1557 = vadd.f32 %v1317, %v828
    %v1558 = vadd.f32 %v1318, %v829
    %v1559 = vadd.f32 %v1319, %v830
    %v1560 = vadd.f32 %v1320, %v831
    %v1561 = vadd.f32 %v1321, %v832
    %v1562 = vadd.f32 %v1322, %v833
    %v1563 = vadd.f32 %v1323, %v834
    %v1564 = vadd.f32 %v1324, %v835
    %v1565 = vadd.f32 %v1325, %v836
    %v1566 = vadd.f32 %v1326, %v837
    %v1567 = vadd.f32 %v1327, %v838
    %v1568 = vadd.f32 %v1328, 0.0
    %v1569 = vadd.f32 %v1329, %v841
    %v1570 = vadd.f32 %v1330, %v842
    %v1571 = vadd.f32 %v1331, %v843
    %v1572 = vadd.f32 %v1332, %v844
    %v1573 = vadd.f32 %v1333, %v845
    %v1574 = vadd.f32 %v1334, %v846
    %v1575 = vadd.f32 %v1335, %v847
    %v1576 = vadd.f32 %v1336, %v848
    %v1577 = vadd.f32 %v1337, %v849
    %v1578 = vadd.f32 %v1338, %v850
    %v1579 = vadd.f32 %v1339, %v851
    %v1580 = vadd.f32 %v1340, %v852
    %v1581 = vadd.f32 %v1341, %v853
    %v1582 = vadd.f32 %v1342, %v854
    %v1583 = vadd.f32 %v1343, 0.0
    %v1584 = vadd.f32 %v1344, %v857
    %v1585 = vadd.f32 %v1345, %v858
    %v1586 = vadd.f32 %v1346, %v859
    %v1587 = vadd.f32 %v1347, %v860
    %v1588 = vadd.f32 %v1348, %v861
    %v1589 = vadd.f32 %v1349, %v862
    %v1590 = vadd.f32 %v1350, %v863
    %v1591 = vadd.f32 %v1351, %v864
    %v1592 = vadd.f32 %v1352, %v865
    %v1593 = vadd.f32 %v1353, %v866
    %v1594 = vadd.f32 %v1354, %v867
    %v1595 = vadd.f32 %v1355, %v868
    %v1596 = vadd.f32 %v1356, %v869
    %v1597 = vadd.f32 %v1357, %v870
    %v1598 = vadd.f32 %v1358, 0.0
    %v1599 = vadd.f32 %v1359, %v873
    %v1600 = vadd.f32 %v1360, %v874
    %v1601 = vadd.f32 %v1361, %v875
    %v1602 = vadd.f32 %v1362, %v876
    %v1603 = vadd.f32 %v1363, %v877
    %v1604 = vadd.f32 %v1364, %v878
    %v1605 = vadd.f32 %v1365, %v879
    %v1606 = vadd.f32 %v1366, %v880
    %v1607 = vadd.f32 %v1367, %v881
    %v1608 = vadd.f32 %v1368, %v882
    %v1609 = vadd.f32 %v1369, %v883
    %v1610 = vadd.f32 %v1370, %v884
    %v1611 = vadd.f32 %v1371, %v885
    %v1612 = vadd.f32 %v1372, %v886
    %v1613 = vadd.f32 %v1373, 0.0
    %v1614 = vadd.f32 %v1374, %v889
    %v1615 = vadd.f32 %v1375, %v890
    %v1616 = vadd.f32 %v1376, %v891
    %v1617 = vadd.f32 %v1377, %v892
    %v1618 = vadd.f32 %v1378, %v893
    %v1619 = vadd.f32 %v1379, %v894
    %v1620 = vadd.f32 %v1380, %v895
    %v1621 = vadd.f32 %v1381, %v896
    %v1622 = vadd.f32 %v1382, %v897
    %v1623 = vadd.f32 %v1383, %v898
    %v1624 = vadd.f32 %v1384, %v899
    %v1625 = vadd.f32 %v1385, %v900
    %v1626 = vadd.f32 %v1386, %v901
    %v1627 = vadd.f32 %v1387, %v902
    %v1628 = vadd.f32 %v1388, 0.0
    %v1629 = vadd.f32 %v1389, %v905
    %v1630 = vadd.f32 %v1390, %v906
    %v1631 = vadd.f32 %v1391, %v907
    %v1632 = vadd.f32 %v1392, %v908
    %v1633 = vadd.f32 %v1393, %v909
    %v1634 = vadd.f32 %v1394, %v910
    %v1635 = vadd.f32 %v1395, %v911
    %v1636 = vadd.f32 %v1396, %v912
    %v1637 = vadd.f32 %v1397, %v913
    %v1638 = vadd.f32 %v1398, %v914
    %v1639 = vadd.f32 %v1399, %v915
    %v1640 = vadd.f32 %v1400, %v916
    %v1641 = vadd.f32 %v1401, %v917
    %v1642 = vadd.f32 %v1402, %v918
    %v1643 = vadd.f32 %v1403, 0.0
    %v1644 = vadd.f32 %v1404, %v921
    %v1645 = vadd.f32 %v1405, %v922
    %v1646 = vadd.f32 %v1406, %v923
    %v1647 = vadd.f32 %v1407, %v924
    %v1648 = vadd.f32 %v1408, %v925
    %v1649 = vadd.f32 %v1409, %v926
    %v1650 = vadd.f32 %v1410, %v927
    %v1651 = vadd.f32 %v1411, %v928
    %v1652 = vadd.f32 %v1412, %v929
    %v1653 = vadd.f32 %v1413, %v930
    %v1654 = vadd.f32 %v1414, %v931
    %v1655 = vadd.f32 %v1415, %v932
    %v1656 = vadd.f32 %v1416, %v933
    %v1657 = vadd.f32 %v1417, %v934
    %v1658 = vadd.f32 %v1418, 0.0
    %v1659 = vadd.f32 %v1419, %v937
    %v1660 = vadd.f32 %v1420, %v938
    %v1661 = vadd.f32 %v1421, %v939
    %v1662 = vadd.f32 %v1422, %v940
    %v1663 = vadd.f32 %v1423, %v941
    %v1664 = vadd.f32 %v1424, %v942
    %v1665 = vadd.f32 %v1425, %v943
    %v1666 = vadd.f32 %v1426, %v944
    %v1667 = vadd.f32 %v1427, %v945
    %v1668 = vadd.f32 %v1428, %v946
    %v1669 = vadd.f32 %v1429, %v947
    %v1670 = vadd.f32 %v1430, %v948
    %v1671 = vadd.f32 %v1431, %v949
    %v1672 = vadd.f32 %v1432, %v950
    %v1673 = vadd.f32 %v1433, 0.0
    %v1674 = vadd.f32 %v1434, %v953
    %v1675 = vadd.f32 %v1435, %v954
    %v1676 = vadd.f32 %v1436, %v955
    %v1677 = vadd.f32 %v1437, %v956
    %v1678 = vadd.f32 %v1438, %v957
    %v1679 = vadd.f32 %v1439, %v958
    %v1680 = vadd.f32 %v1440, %v959
    %v1681 = vadd.f32 %v1441, %v960
    %v1682 = vadd.f32 %v1442, %v961
    %v1683 = vadd.f32 %v1443, %v962
    %v1684 = vadd.f32 %v1444, %v963
    %v1685 = vadd.f32 %v1445, %v964
    %v1686 = vadd.f32 %v1446, %v965
    %v1687 = vadd.f32 %v1447, %v966
    %v1688 = vadd.f32 %v1448, 0.0
    %v1689 = vadd.f32 %v1449, %v969
    %v1690 = vadd.f32 %v1450, %v970
    %v1691 = vadd.f32 %v1451, %v971
    %v1692 = vadd.f32 %v1452, %v972
    %v1693 = vadd.f32 %v1453, %v973
    %v1694 = vadd.f32 %v1454, %v974
    %v1695 = vadd.f32 %v1455, %v975
    %v1696 = vadd.f32 %v1456, %v976
    %v1697 = vadd.f32 %v1457, %v977
    %v1698 = vadd.f32 %v1458, %v978
    %v1699 = vadd.f32 %v1459, %v979
    %v1700 = vadd.f32 %v1460, %v980
    %v1701 = vadd.f32 %v1461, %v981
    %v1702 = vadd.f32 %v1462, %v982
    %v1703 = vadd.f32 %v1463, 0.0
    %v1704 = vadd.f32 %v1464, %v985
    %v1705 = vadd.f32 %v1465, %v986
    %v1706 = vadd.f32 %v1466, %v987
    %v1707 = vadd.f32 %v1467, %v988
    %v1708 = vadd.f32 %v1468, %v989
    %v1709 = vadd.f32 %v1469, %v990
    %v1710 = vadd.f32 %v1470, %v991
    %v1711 = vadd.f32 %v1471, %v992
    %v1712 = vadd.f32 %v1472, %v993
    %v1713 = vadd.f32 %v1473, %v994
    %v1714 = vadd.f32 %v1474, %v995
    %v1715 = vadd.f32 %v1475, %v996
    %v1716 = vadd.f32 %v1476, %v997
    %v1717 = vadd.f32 %v1477, %v998
    %v1718 = vadd.f32 %v1478, 0.0
    %vm1719 = vcmask 1040384
    %v1720 = vsel %vm1719, %v1239, -inf
    %v1721 = vsel %vm1719, %v1479, -inf
    %v1722 = vsel %vm1719, %v1480, -inf
    %v1723 = vsel %vm1719, %v1481, -inf
    %v1724 = vsel %vm1719, %v1482, -inf
    %v1725 = vmax.f32 %v1720, %v1724
    %v1726 = vsel %vm1719, %v1483, -inf
    %v1727 = vmax.f32 %v1721, %v1726
    %v1728 = vsel %vm1719, %v1484, -inf
    %v1729 = vmax.f32 %v1722, %v1728
    %v1730 = vsel %vm1719, %v1485, -inf
    %v1731 = vmax.f32 %v1723, %v1730
    %v1732 = vsel %vm1719, %v1486, -inf
    %v1733 = vmax.f32 %v1725, %v1732
    %v1734 = vsel %vm1719, %v1487, -inf
    %v1735 = vmax.f32 %v1727, %v1734
    %v1736 = vsel %vm1719, %v1488, -inf
    %v1737 = vmax.f32 %v1729, %v1736
    %v1738 = vsel %vm1719, %v1489, -inf
    %v1739 = vmax.f32 %v1731, %v1738
    %v1740 = vsel %vm1719, %v1490, -inf
    %v1741 = vmax.f32 %v1733, %v1740
    %v1742 = vsel %vm1719, %v1491, -inf
    %v1743 = vmax.f32 %v1735, %v1742
    %v1744 = vsel %vm1719, %v1492, -inf
    %v1745 = vmax.f32 %v1737, %v1744
    %v1746 = vsel %vm1719, %v1493, -inf
    %v1747 = vmax.f32 %v1739, %v1746
    %v1748 = vsel %vm1719, %v1254, -inf
    %v1749 = vmax.f32 %v1741, %v1748
    %v1750 = vsel %vm1719, %v1494, -inf
    %v1751 = vmax.f32 %v1743, %v1750
    %v1752 = vsel %vm1719, %v1495, -inf
    %v1753 = vmax.f32 %v1745, %v1752
    %v1754 = vsel %vm1719, %v1496, -inf
    %v1755 = vmax.f32 %v1747, %v1754
    %v1756 = vsel %vm1719, %v1497, -inf
    %v1757 = vmax.f32 %v1749, %v1756
    %v1758 = vsel %vm1719, %v1498, -inf
    %v1759 = vmax.f32 %v1751, %v1758
    %v1760 = vsel %vm1719, %v1499, -inf
    %v1761 = vmax.f32 %v1753, %v1760
    %v1762 = vsel %vm1719, %v1500, -inf
    %v1763 = vmax.f32 %v1755, %v1762
    %v1764 = vsel %vm1719, %v1501, -inf
    %v1765 = vmax.f32 %v1757, %v1764
    %v1766 = vsel %vm1719, %v1502, -inf
    %v1767 = vmax.f32 %v1759, %v1766
    %v1768 = vsel %vm1719, %v1503, -inf
    %v1769 = vmax.f32 %v1761, %v1768
    %v1770 = vsel %vm1719, %v1504, -inf
    %v1771 = vmax.f32 %v1763, %v1770
    %v1772 = vsel %vm1719, %v1505, -inf
    %v1773 = vmax.f32 %v1765, %v1772
    %v1774 = vsel %vm1719, %v1506, -inf
    %v1775 = vmax.f32 %v1767, %v1774
    %v1776 = vsel %vm1719, %v1507, -inf
    %v1777 = vmax.f32 %v1769, %v1776
    %v1778 = vsel %vm1719, %v1508, -inf
    %v1779 = vmax.f32 %v1771, %v1778
    %v1780 = vsel %vm1719, %v1269, -inf
    %v1781 = vmax.f32 %v1773, %v1780
    %v1782 = vsel %vm1719, %v1509, -inf
    %v1783 = vmax.f32 %v1775, %v1782
    %v1784 = vsel %vm1719, %v1510, -inf
    %v1785 = vmax.f32 %v1777, %v1784
    %v1786 = vsel %vm1719, %v1511, -inf
    %v1787 = vmax.f32 %v1779, %v1786
    %v1788 = vsel %vm1719, %v1512, -inf
    %v1789 = vmax.f32 %v1781, %v1788
    %v1790 = vsel %vm1719, %v1513, -inf
    %v1791 = vmax.f32 %v1783, %v1790
    %v1792 = vsel %vm1719, %v1514, -inf
    %v1793 = vmax.f32 %v1785, %v1792
    %v1794 = vsel %vm1719, %v1515, -inf
    %v1795 = vmax.f32 %v1787, %v1794
    %v1796 = vsel %vm1719, %v1516, -inf
    %v1797 = vmax.f32 %v1789, %v1796
    %v1798 = vsel %vm1719, %v1517, -inf
    %v1799 = vmax.f32 %v1791, %v1798
    %v1800 = vsel %vm1719, %v1518, -inf
    %v1801 = vmax.f32 %v1793, %v1800
    %v1802 = vsel %vm1719, %v1519, -inf
    %v1803 = vmax.f32 %v1795, %v1802
    %v1804 = vsel %vm1719, %v1520, -inf
    %v1805 = vmax.f32 %v1797, %v1804
    %v1806 = vsel %vm1719, %v1521, -inf
    %v1807 = vmax.f32 %v1799, %v1806
    %v1808 = vsel %vm1719, %v1522, -inf
    %v1809 = vmax.f32 %v1801, %v1808
    %v1810 = vsel %vm1719, %v1523, -inf
    %v1811 = vmax.f32 %v1803, %v1810
    %v1812 = vsel %vm1719, %v1284, -inf
    %v1813 = vmax.f32 %v1805, %v1812
    %v1814 = vsel %vm1719, %v1524, -inf
    %v1815 = vmax.f32 %v1807, %v1814
    %v1816 = vsel %vm1719, %v1525, -inf
    %v1817 = vmax.f32 %v1809, %v1816
    %v1818 = vsel %vm1719, %v1526, -inf
    %v1819 = vmax.f32 %v1811, %v1818
    %v1820 = vsel %vm1719, %v1527, -inf
    %v1821 = vmax.f32 %v1813, %v1820
    %v1822 = vsel %vm1719, %v1528, -inf
    %v1823 = vmax.f32 %v1815, %v1822
    %v1824 = vsel %vm1719, %v1529, -inf
    %v1825 = vmax.f32 %v1817, %v1824
    %v1826 = vsel %vm1719, %v1530, -inf
    %v1827 = vmax.f32 %v1819, %v1826
    %v1828 = vsel %vm1719, %v1531, -inf
    %v1829 = vmax.f32 %v1821, %v1828
    %v1830 = vsel %vm1719, %v1532, -inf
    %v1831 = vmax.f32 %v1823, %v1830
    %v1832 = vsel %vm1719, %v1533, -inf
    %v1833 = vmax.f32 %v1825, %v1832
    %v1834 = vsel %vm1719, %v1534, -inf
    %v1835 = vmax.f32 %v1827, %v1834
    %v1836 = vsel %vm1719, %v1535, -inf
    %v1837 = vmax.f32 %v1829, %v1836
    %v1838 = vsel %vm1719, %v1536, -inf
    %v1839 = vmax.f32 %v1831, %v1838
    %v1840 = vsel %vm1719, %v1537, -inf
    %v1841 = vmax.f32 %v1833, %v1840
    %v1842 = vsel %vm1719, %v1538, -inf
    %v1843 = vmax.f32 %v1835, %v1842
    %v1844 = vsel %vm1719, %v1299, -inf
    %v1845 = vmax.f32 %v1837, %v1844
    %v1846 = vsel %vm1719, %v1539, -inf
    %v1847 = vmax.f32 %v1839, %v1846
    %v1848 = vsel %vm1719, %v1540, -inf
    %v1849 = vmax.f32 %v1841, %v1848
    %v1850 = vsel %vm1719, %v1541, -inf
    %v1851 = vmax.f32 %v1843, %v1850
    %v1852 = vsel %vm1719, %v1542, -inf
    %v1853 = vmax.f32 %v1845, %v1852
    %v1854 = vsel %vm1719, %v1543, -inf
    %v1855 = vmax.f32 %v1847, %v1854
    %v1856 = vsel %vm1719, %v1544, -inf
    %v1857 = vmax.f32 %v1849, %v1856
    %v1858 = vsel %vm1719, %v1545, -inf
    %v1859 = vmax.f32 %v1851, %v1858
    %v1860 = vsel %vm1719, %v1546, -inf
    %v1861 = vmax.f32 %v1853, %v1860
    %v1862 = vsel %vm1719, %v1547, -inf
    %v1863 = vmax.f32 %v1855, %v1862
    %v1864 = vsel %vm1719, %v1548, -inf
    %v1865 = vmax.f32 %v1857, %v1864
    %v1866 = vsel %vm1719, %v1549, -inf
    %v1867 = vmax.f32 %v1859, %v1866
    %v1868 = vsel %vm1719, %v1550, -inf
    %v1869 = vmax.f32 %v1861, %v1868
    %v1870 = vsel %vm1719, %v1551, -inf
    %v1871 = vmax.f32 %v1863, %v1870
    %v1872 = vsel %vm1719, %v1552, -inf
    %v1873 = vmax.f32 %v1865, %v1872
    %v1874 = vsel %vm1719, %v1553, -inf
    %v1875 = vmax.f32 %v1867, %v1874
    %v1876 = vsel %vm1719, %v1314, -inf
    %v1877 = vmax.f32 %v1869, %v1876
    %v1878 = vsel %vm1719, %v1554, -inf
    %v1879 = vmax.f32 %v1871, %v1878
    %v1880 = vsel %vm1719, %v1555, -inf
    %v1881 = vmax.f32 %v1873, %v1880
    %v1882 = vsel %vm1719, %v1556, -inf
    %v1883 = vmax.f32 %v1875, %v1882
    %v1884 = vsel %vm1719, %v1557, -inf
    %v1885 = vmax.f32 %v1877, %v1884
    %v1886 = vsel %vm1719, %v1558, -inf
    %v1887 = vmax.f32 %v1879, %v1886
    %v1888 = vsel %vm1719, %v1559, -inf
    %v1889 = vmax.f32 %v1881, %v1888
    %v1890 = vsel %vm1719, %v1560, -inf
    %v1891 = vmax.f32 %v1883, %v1890
    %v1892 = vsel %vm1719, %v1561, -inf
    %v1893 = vmax.f32 %v1885, %v1892
    %v1894 = vsel %vm1719, %v1562, -inf
    %v1895 = vmax.f32 %v1887, %v1894
    %v1896 = vsel %vm1719, %v1563, -inf
    %v1897 = vmax.f32 %v1889, %v1896
    %v1898 = vsel %vm1719, %v1564, -inf
    %v1899 = vmax.f32 %v1891, %v1898
    %v1900 = vsel %vm1719, %v1565, -inf
    %v1901 = vmax.f32 %v1893, %v1900
    %v1902 = vsel %vm1719, %v1566, -inf
    %v1903 = vmax.f32 %v1895, %v1902
    %v1904 = vsel %vm1719, %v1567, -inf
    %v1905 = vmax.f32 %v1897, %v1904
    %v1906 = vsel %vm1719, %v1568, -inf
    %v1907 = vmax.f32 %v1899, %v1906
    %v1908 = vsel %vm1719, %v1329, -inf
    %v1909 = vmax.f32 %v1901, %v1908
    %v1910 = vsel %vm1719, %v1569, -inf
    %v1911 = vmax.f32 %v1903, %v1910
    %v1912 = vsel %vm1719, %v1570, -inf
    %v1913 = vmax.f32 %v1905, %v1912
    %v1914 = vsel %vm1719, %v1571, -inf
    %v1915 = vmax.f32 %v1907, %v1914
    %v1916 = vsel %vm1719, %v1572, -inf
    %v1917 = vmax.f32 %v1909, %v1916
    %v1918 = vsel %vm1719, %v1573, -inf
    %v1919 = vmax.f32 %v1911, %v1918
    %v1920 = vsel %vm1719, %v1574, -inf
    %v1921 = vmax.f32 %v1913, %v1920
    %v1922 = vsel %vm1719, %v1575, -inf
    %v1923 = vmax.f32 %v1915, %v1922
    %v1924 = vsel %vm1719, %v1576, -inf
    %v1925 = vmax.f32 %v1917, %v1924
    %v1926 = vsel %vm1719, %v1577, -inf
    %v1927 = vmax.f32 %v1919, %v1926
    %v1928 = vsel %vm1719, %v1578, -inf
    %v1929 = vmax.f32 %v1921, %v1928
    %v1930 = vsel %vm1719, %v1579, -inf
    %v1931 = vmax.f32 %v1923, %v1930
    %v1932 = vsel %vm1719, %v1580, -inf
    %v1933 = vmax.f32 %v1925, %v1932
    %v1934 = vsel %vm1719, %v1581, -inf
    %v1935 = vmax.f32 %v1927, %v1934
    %v1936 = vsel %vm1719, %v1582, -inf
    %v1937 = vmax.f32 %v1929, %v1936
    %v1938 = vsel %vm1719, %v1583, -inf
    %v1939 = vmax.f32 %v1931, %v1938
    %v1940 = vsel %vm1719, %v1344, -inf
    %v1941 = vmax.f32 %v1933, %v1940
    %v1942 = vsel %vm1719, %v1584, -inf
    %v1943 = vmax.f32 %v1935, %v1942
    %v1944 = vsel %vm1719, %v1585, -inf
    %v1945 = vmax.f32 %v1937, %v1944
    %v1946 = vsel %vm1719, %v1586, -inf
    %v1947 = vmax.f32 %v1939, %v1946
    %v1948 = vsel %vm1719, %v1587, -inf
    %v1949 = vmax.f32 %v1941, %v1948
    %v1950 = vsel %vm1719, %v1588, -inf
    %v1951 = vmax.f32 %v1943, %v1950
    %v1952 = vsel %vm1719, %v1589, -inf
    %v1953 = vmax.f32 %v1945, %v1952
    %v1954 = vsel %vm1719, %v1590, -inf
    %v1955 = vmax.f32 %v1947, %v1954
    %v1956 = vsel %vm1719, %v1591, -inf
    %v1957 = vmax.f32 %v1949, %v1956
    %v1958 = vsel %vm1719, %v1592, -inf
    %v1959 = vmax.f32 %v1951, %v1958
    %v1960 = vsel %vm1719, %v1593, -inf
    %v1961 = vmax.f32 %v1953, %v1960
    %v1962 = vsel %vm1719, %v1594, -inf
    %v1963 = vmax.f32 %v1955, %v1962
    %v1964 = vsel %vm1719, %v1595, -inf
    %v1965 = vmax.f32 %v1957, %v1964
    %v1966 = vsel %vm1719, %v1596, -inf
    %v1967 = vmax.f32 %v1959, %v1966
    %v1968 = vsel %vm1719, %v1597, -inf
    %v1969 = vmax.f32 %v1961, %v1968
    %v1970 = vsel %vm1719, %v1598, -inf
    %v1971 = vmax.f32 %v1963, %v1970
    %v1972 = vsel %vm1719, %v1359, -inf
    %v1973 = vmax.f32 %v1965, %v1972
    %v1974 = vsel %vm1719, %v1599, -inf
    %v1975 = vmax.f32 %v1967, %v1974
    %v1976 = vsel %vm1719, %v1600, -inf
    %v1977 = vmax.f32 %v1969, %v1976
    %v1978 = vsel %vm1719, %v1601, -inf
    %v1979 = vmax.f32 %v1971, %v1978
    %v1980 = vsel %vm1719, %v1602, -inf
    %v1981 = vmax.f32 %v1973, %v1980
    %v1982 = vsel %vm1719, %v1603, -inf
    %v1983 = vmax.f32 %v1975, %v1982
    %v1984 = vsel %vm1719, %v1604, -inf
    %v1985 = vmax.f32 %v1977, %v1984
    %v1986 = vsel %vm1719, %v1605, -inf
    %v1987 = vmax.f32 %v1979, %v1986
    %v1988 = vsel %vm1719, %v1606, -inf
    %v1989 = vmax.f32 %v1981, %v1988
    %v1990 = vsel %vm1719, %v1607, -inf
    %v1991 = vmax.f32 %v1983, %v1990
    %v1992 = vsel %vm1719, %v1608, -inf
    %v1993 = vmax.f32 %v1985, %v1992
    %v1994 = vsel %vm1719, %v1609, -inf
    %v1995 = vmax.f32 %v1987, %v1994
    %v1996 = vsel %vm1719, %v1610, -inf
    %v1997 = vmax.f32 %v1989, %v1996
    %v1998 = vsel %vm1719, %v1611, -inf
    %v1999 = vmax.f32 %v1991, %v1998
    %v2000 = vsel %vm1719, %v1612, -inf
    %v2001 = vmax.f32 %v1993, %v2000
    %v2002 = vsel %vm1719, %v1613, -inf
    %v2003 = vmax.f32 %v1995, %v2002
    %v2004 = vsel %vm1719, %v1374, -inf
    %v2005 = vmax.f32 %v1997, %v2004
    %v2006 = vsel %vm1719, %v1614, -inf
    %v2007 = vmax.f32 %v1999, %v2006
    %v2008 = vsel %vm1719, %v1615, -inf
    %v2009 = vmax.f32 %v2001, %v2008
    %v2010 = vsel %vm1719, %v1616, -inf
    %v2011 = vmax.f32 %v2003, %v2010
    %v2012 = vsel %vm1719, %v1617, -inf
    %v2013 = vmax.f32 %v2005, %v2012
    %v2014 = vsel %vm1719, %v1618, -inf
    %v2015 = vmax.f32 %v2007, %v2014
    %v2016 = vsel %vm1719, %v1619, -inf
    %v2017 = vmax.f32 %v2009, %v2016
    %v2018 = vsel %vm1719, %v1620, -inf
    %v2019 = vmax.f32 %v2011, %v2018
    %v2020 = vsel %vm1719, %v1621, -inf
    %v2021 = vmax.f32 %v2013, %v2020
    %v2022 = vsel %vm1719, %v1622, -inf
    %v2023 = vmax.f32 %v2015, %v2022
    %v2024 = vsel %vm1719, %v1623, -inf
    %v2025 = vmax.f32 %v2017, %v2024
    %v2026 = vsel %vm1719, %v1624, -inf
    %v2027 = vmax.f32 %v2019, %v2026
    %v2028 = vsel %vm1719, %v1625, -inf
    %v2029 = vmax.f32 %v2021, %v2028
    %v2030 = vsel %vm1719, %v1626, -inf
    %v2031 = vmax.f32 %v2023, %v2030
    %v2032 = vsel %vm1719, %v1627, -inf
    %v2033 = vmax.f32 %v2025, %v2032
    %v2034 = vsel %vm1719, %v1628, -inf
    %v2035 = vmax.f32 %v2027, %v2034
    %v2036 = vsel %vm1719, %v1389, -inf
    %v2037 = vmax.f32 %v2029, %v2036
    %v2038 = vsel %vm1719, %v1629, -inf
    %v2039 = vmax.f32 %v2031, %v2038
    %v2040 = vsel %vm1719, %v1630, -inf
    %v2041 = vmax.f32 %v2033, %v2040
    %v2042 = vsel %vm1719, %v1631, -inf
    %v2043 = vmax.f32 %v2035, %v2042
    %v2044 = vsel %vm1719, %v1632, -inf
    %v2045 = vmax.f32 %v2037, %v2044
    %v2046 = vsel %vm1719, %v1633, -inf
    %v2047 = vmax.f32 %v2039, %v2046
    %v2048 = vsel %vm1719, %v1634, -inf
    %v2049 = vmax.f32 %v2041, %v2048
    %v2050 = vsel %vm1719, %v1635, -inf
    %v2051 = vmax.f32 %v2043, %v2050
    %v2052 = vsel %vm1719, %v1636, -inf
    %v2053 = vmax.f32 %v2045, %v2052
    %v2054 = vsel %vm1719, %v1637, -inf
    %v2055 = vmax.f32 %v2047, %v2054
    %v2056 = vsel %vm1719, %v1638, -inf
    %v2057 = vmax.f32 %v2049, %v2056
    %v2058 = vsel %vm1719, %v1639, -inf
    %v2059 = vmax.f32 %v2051, %v2058
    %v2060 = vsel %vm1719, %v1640, -inf
    %v2061 = vmax.f32 %v2053, %v2060
    %v2062 = vsel %vm1719, %v1641, -inf
    %v2063 = vmax.f32 %v2055, %v2062
    %v2064 = vsel %vm1719, %v1642, -inf
    %v2065 = vmax.f32 %v2057, %v2064
    %v2066 = vsel %vm1719, %v1643, -inf
    %v2067 = vmax.f32 %v2059, %v2066
    %v2068 = vsel %vm1719, %v1404, -inf
    %v2069 = vmax.f32 %v2061, %v2068
    %v2070 = vsel %vm1719, %v1644, -inf
    %v2071 = vmax.f32 %v2063, %v2070
    %v2072 = vsel %vm1719, %v1645, -inf
    %v2073 = vmax.f32 %v2065, %v2072
    %v2074 = vsel %vm1719, %v1646, -inf
    %v2075 = vmax.f32 %v2067, %v2074
    %v2076 = vsel %vm1719, %v1647, -inf
    %v2077 = vmax.f32 %v2069, %v2076
    %v2078 = vsel %vm1719, %v1648, -inf
    %v2079 = vmax.f32 %v2071, %v2078
    %v2080 = vsel %vm1719, %v1649, -inf
    %v2081 = vmax.f32 %v2073, %v2080
    %v2082 = vsel %vm1719, %v1650, -inf
    %v2083 = vmax.f32 %v2075, %v2082
    %v2084 = vsel %vm1719, %v1651, -inf
    %v2085 = vmax.f32 %v2077, %v2084
    %v2086 = vsel %vm1719, %v1652, -inf
    %v2087 = vmax.f32 %v2079, %v2086
    %v2088 = vsel %vm1719, %v1653, -inf
    %v2089 = vmax.f32 %v2081, %v2088
    %v2090 = vsel %vm1719, %v1654, -inf
    %v2091 = vmax.f32 %v2083, %v2090
    %v2092 = vsel %vm1719, %v1655, -inf
    %v2093 = vmax.f32 %v2085, %v2092
    %v2094 = vsel %vm1719, %v1656, -inf
    %v2095 = vmax.f32 %v2087, %v2094
    %v2096 = vsel %vm1719, %v1657, -inf
    %v2097 = vmax.f32 %v2089, %v2096
    %v2098 = vsel %vm1719, %v1658, -inf
    %v2099 = vmax.f32 %v2091, %v2098
    %v2100 = vsel %vm1719, %v1419, -inf
    %v2101 = vmax.f32 %v2093, %v2100
    %v2102 = vsel %vm1719, %v1659, -inf
    %v2103 = vmax.f32 %v2095, %v2102
    %v2104 = vsel %vm1719, %v1660, -inf
    %v2105 = vmax.f32 %v2097, %v2104
    %v2106 = vsel %vm1719, %v1661, -inf
    %v2107 = vmax.f32 %v2099, %v2106
    %v2108 = vsel %vm1719, %v1662, -inf
    %v2109 = vmax.f32 %v2101, %v2108
    %v2110 = vsel %vm1719, %v1663, -inf
    %v2111 = vmax.f32 %v2103, %v2110
    %v2112 = vsel %vm1719, %v1664, -inf
    %v2113 = vmax.f32 %v2105, %v2112
    %v2114 = vsel %vm1719, %v1665, -inf
    %v2115 = vmax.f32 %v2107, %v2114
    %v2116 = vsel %vm1719, %v1666, -inf
    %v2117 = vmax.f32 %v2109, %v2116
    %v2118 = vsel %vm1719, %v1667, -inf
    %v2119 = vmax.f32 %v2111, %v2118
    %v2120 = vsel %vm1719, %v1668, -inf
    %v2121 = vmax.f32 %v2113, %v2120
    %v2122 = vsel %vm1719, %v1669, -inf
    %v2123 = vmax.f32 %v2115, %v2122
    %v2124 = vsel %vm1719, %v1670, -inf
    %v2125 = vmax.f32 %v2117, %v2124
    %v2126 = vsel %vm1719, %v1671, -inf
    %v2127 = vmax.f32 %v2119, %v2126
    %v2128 = vsel %vm1719, %v1672, -inf
    %v2129 = vmax.f32 %v2121, %v2128
    %v2130 = vsel %vm1719, %v1673, -inf
    %v2131 = vmax.f32 %v2123, %v2130
    %v2132 = vsel %vm1719, %v1434, -inf
    %v2133 = vmax.f32 %v2125, %v2132
    %v2134 = vsel %vm1719, %v1674, -inf
    %v2135 = vmax.f32 %v2127, %v2134
    %v2136 = vsel %vm1719, %v1675, -inf
    %v2137 = vmax.f32 %v2129, %v2136
    %v2138 = vsel %vm1719, %v1676, -inf
    %v2139 = vmax.f32 %v2131, %v2138
    %v2140 = vsel %vm1719, %v1677, -inf
    %v2141 = vmax.f32 %v2133, %v2140
    %v2142 = vsel %vm1719, %v1678, -inf
    %v2143 = vmax.f32 %v2135, %v2142
    %v2144 = vsel %vm1719, %v1679, -inf
    %v2145 = vmax.f32 %v2137, %v2144
    %v2146 = vsel %vm1719, %v1680, -inf
    %v2147 = vmax.f32 %v2139, %v2146
    %v2148 = vsel %vm1719, %v1681, -inf
    %v2149 = vmax.f32 %v2141, %v2148
    %v2150 = vsel %vm1719, %v1682, -inf
    %v2151 = vmax.f32 %v2143, %v2150
    %v2152 = vsel %vm1719, %v1683, -inf
    %v2153 = vmax.f32 %v2145, %v2152
    %v2154 = vsel %vm1719, %v1684, -inf
    %v2155 = vmax.f32 %v2147, %v2154
    %v2156 = vsel %vm1719, %v1685, -inf
    %v2157 = vmax.f32 %v2149, %v2156
    %v2158 = vsel %vm1719, %v1686, -inf
    %v2159 = vmax.f32 %v2151, %v2158
    %v2160 = vsel %vm1719, %v1687, -inf
    %v2161 = vmax.f32 %v2153, %v2160
    %v2162 = vsel %vm1719, %v1688, -inf
    %v2163 = vmax.f32 %v2155, %v2162
    %v2164 = vsel %vm1719, %v1449, -inf
    %v2165 = vmax.f32 %v2157, %v2164
    %v2166 = vsel %vm1719, %v1689, -inf
    %v2167 = vmax.f32 %v2159, %v2166
    %v2168 = vsel %vm1719, %v1690, -inf
    %v2169 = vmax.f32 %v2161, %v2168
    %v2170 = vsel %vm1719, %v1691, -inf
    %v2171 = vmax.f32 %v2163, %v2170
    %v2172 = vsel %vm1719, %v1692, -inf
    %v2173 = vmax.f32 %v2165, %v2172
    %v2174 = vsel %vm1719, %v1693, -inf
    %v2175 = vmax.f32 %v2167, %v2174
    %v2176 = vsel %vm1719, %v1694, -inf
    %v2177 = vmax.f32 %v2169, %v2176
    %v2178 = vsel %vm1719, %v1695, -inf
    %v2179 = vmax.f32 %v2171, %v2178
    %v2180 = vsel %vm1719, %v1696, -inf
    %v2181 = vmax.f32 %v2173, %v2180
    %v2182 = vsel %vm1719, %v1697, -inf
    %v2183 = vmax.f32 %v2175, %v2182
    %v2184 = vsel %vm1719, %v1698, -inf
    %v2185 = vmax.f32 %v2177, %v2184
    %v2186 = vsel %vm1719, %v1699, -inf
    %v2187 = vmax.f32 %v2179, %v2186
    %v2188 = vsel %vm1719, %v1700, -inf
    %v2189 = vmax.f32 %v2181, %v2188
    %v2190 = vsel %vm1719, %v1701, -inf
    %v2191 = vmax.f32 %v2183, %v2190
    %v2192 = vsel %vm1719, %v1702, -inf
    %v2193 = vmax.f32 %v2185, %v2192
    %v2194 = vsel %vm1719, %v1703, -inf
    %v2195 = vmax.f32 %v2187, %v2194
    %v2196 = vsel %vm1719, %v1464, -inf
    %v2197 = vmax.f32 %v2189, %v2196
    %v2198 = vsel %vm1719, %v1704, -inf
    %v2199 = vmax.f32 %v2191, %v2198
    %v2200 = vsel %vm1719, %v1705, -inf
    %v2201 = vmax.f32 %v2193, %v2200
    %v2202 = vsel %vm1719, %v1706, -inf
    %v2203 = vmax.f32 %v2195, %v2202
    %v2204 = vsel %vm1719, %v1707, -inf
    %v2205 = vmax.f32 %v2197, %v2204
    %v2206 = vsel %vm1719, %v1708, -inf
    %v2207 = vmax.f32 %v2199, %v2206
    %v2208 = vsel %vm1719, %v1709, -inf
    %v2209 = vmax.f32 %v2201, %v2208
    %v2210 = vsel %vm1719, %v1710, -inf
    %v2211 = vmax.f32 %v2203, %v2210
    %v2212 = vsel %vm1719, %v1711, -inf
    %v2213 = vmax.f32 %v2205, %v2212
    %v2214 = vsel %vm1719, %v1712, -inf
    %v2215 = vmax.f32 %v2207, %v2214
    %v2216 = vsel %vm1719, %v1713, -inf
    %v2217 = vmax.f32 %v2209, %v2216
    %v2218 = vsel %vm1719, %v1714, -inf
    %v2219 = vmax.f32 %v2211, %v2218
    %v2220 = vsel %vm1719, %v1715, -inf
    %v2221 = vmax.f32 %v2213, %v2220
    %v2222 = vsel %vm1719, %v1716, -inf
    %v2223 = vmax.f32 %v2215, %v2222
    %v2224 = vsel %vm1719, %v1717, -inf
    %v2225 = vmax.f32 %v2217, %v2224
    %v2226 = vsel %vm1719, %v1718, -inf
    %v2227 = vmax.f32 %v2219, %v2226
    %v2228 = vmax.f32 %v2221, %v2223
    %v2229 = vmax.f32 %v2225, %v2227
    %v2230 = vmax.f32 %v2228, %v2229
    %vm2231 = vcmp.eq.f32.partialorder %v1239, %v2230
    %vm2232 = vcmp.eq.f32.partialorder %v1479, %v2230
    %vm2233 = vcmp.eq.f32.partialorder %v1480, %v2230
    %vm2234 = vcmp.eq.f32.partialorder %v1481, %v2230
    %vm2235 = vcmp.eq.f32.partialorder %v1482, %v2230
    %vm2236 = vcmp.eq.f32.partialorder %v1483, %v2230
    %vm2237 = vcmp.eq.f32.partialorder %v1484, %v2230
    %vm2238 = vcmp.eq.f32.partialorder %v1485, %v2230
    %vm2239 = vcmp.eq.f32.partialorder %v1486, %v2230
    %vm2240 = vcmp.eq.f32.partialorder %v1487, %v2230
    %vm2241 = vcmp.eq.f32.partialorder %v1488, %v2230
    %vm2242 = vcmp.eq.f32.partialorder %v1489, %v2230
    %vm2243 = vcmp.eq.f32.partialorder %v1490, %v2230
    %vm2244 = vcmp.eq.f32.partialorder %v1491, %v2230
    %vm2245 = vcmp.eq.f32.partialorder %v1492, %v2230
    %vm2246 = vcmp.eq.f32.partialorder %v1493, %v2230
    %vm2247 = vcmp.eq.f32.partialorder %v1254, %v2230
    %vm2248 = vcmp.eq.f32.partialorder %v1494, %v2230
    %vm2249 = vcmp.eq.f32.partialorder %v1495, %v2230
    %vm2250 = vcmp.eq.f32.partialorder %v1496, %v2230
    %vm2251 = vcmp.eq.f32.partialorder %v1497, %v2230
    %vm2252 = vcmp.eq.f32.partialorder %v1498, %v2230
    %vm2253 = vcmp.eq.f32.partialorder %v1499, %v2230
    %vm2254 = vcmp.eq.f32.partialorder %v1500, %v2230
    %vm2255 = vcmp.eq.f32.partialorder %v1501, %v2230
    %vm2256 = vcmp.eq.f32.partialorder %v1502, %v2230
    %vm2257 = vcmp.eq.f32.partialorder %v1503, %v2230
    %vm2258 = vcmp.eq.f32.partialorder %v1504, %v2230
    %vm2259 = vcmp.eq.f32.partialorder %v1505, %v2230
    %vm2260 = vcmp.eq.f32.partialorder %v1506, %v2230
    %vm2261 = vcmp.eq.f32.partialorder %v1507, %v2230
    %vm2262 = vcmp.eq.f32.partialorder %v1508, %v2230
    %vm2263 = vcmp.eq.f32.partialorder %v1269, %v2230
    %vm2264 = vcmp.eq.f32.partialorder %v1509, %v2230
    %vm2265 = vcmp.eq.f32.partialorder %v1510, %v2230
    %vm2266 = vcmp.eq.f32.partialorder %v1511, %v2230
    %vm2267 = vcmp.eq.f32.partialorder %v1512, %v2230
    %vm2268 = vcmp.eq.f32.partialorder %v1513, %v2230
    %vm2269 = vcmp.eq.f32.partialorder %v1514, %v2230
    %vm2270 = vcmp.eq.f32.partialorder %v1515, %v2230
    %vm2271 = vcmp.eq.f32.partialorder %v1516, %v2230
    %vm2272 = vcmp.eq.f32.partialorder %v1517, %v2230
    %vm2273 = vcmp.eq.f32.partialorder %v1518, %v2230
    %vm2274 = vcmp.eq.f32.partialorder %v1519, %v2230
    %vm2275 = vcmp.eq.f32.partialorder %v1520, %v2230
    %vm2276 = vcmp.eq.f32.partialorder %v1521, %v2230
    %vm2277 = vcmp.eq.f32.partialorder %v1522, %v2230
    %vm2278 = vcmp.eq.f32.partialorder %v1523, %v2230
    %vm2279 = vcmp.eq.f32.partialorder %v1284, %v2230
    %vm2280 = vcmp.eq.f32.partialorder %v1524, %v2230
    %vm2281 = vcmp.eq.f32.partialorder %v1525, %v2230
    %vm2282 = vcmp.eq.f32.partialorder %v1526, %v2230
    %vm2283 = vcmp.eq.f32.partialorder %v1527, %v2230
    %vm2284 = vcmp.eq.f32.partialorder %v1528, %v2230
    %vm2285 = vcmp.eq.f32.partialorder %v1529, %v2230
    %vm2286 = vcmp.eq.f32.partialorder %v1530, %v2230
    %vm2287 = vcmp.eq.f32.partialorder %v1531, %v2230
    %vm2288 = vcmp.eq.f32.partialorder %v1532, %v2230
    %vm2289 = vcmp.eq.f32.partialorder %v1533, %v2230
    %vm2290 = vcmp.eq.f32.partialorder %v1534, %v2230
    %vm2291 = vcmp.eq.f32.partialorder %v1535, %v2230
    %vm2292 = vcmp.eq.f32.partialorder %v1536, %v2230
    %vm2293 = vcmp.eq.f32.partialorder %v1537, %v2230
    %vm2294 = vcmp.eq.f32.partialorder %v1538, %v2230
    %vm2295 = vcmp.eq.f32.partialorder %v1299, %v2230
    %vm2296 = vcmp.eq.f32.partialorder %v1539, %v2230
    %vm2297 = vcmp.eq.f32.partialorder %v1540, %v2230
    %vm2298 = vcmp.eq.f32.partialorder %v1541, %v2230
    %vm2299 = vcmp.eq.f32.partialorder %v1542, %v2230
    %vm2300 = vcmp.eq.f32.partialorder %v1543, %v2230
    %vm2301 = vcmp.eq.f32.partialorder %v1544, %v2230
    %vm2302 = vcmp.eq.f32.partialorder %v1545, %v2230
    %vm2303 = vcmp.eq.f32.partialorder %v1546, %v2230
    %vm2304 = vcmp.eq.f32.partialorder %v1547, %v2230
    %vm2305 = vcmp.eq.f32.partialorder %v1548, %v2230
    %vm2306 = vcmp.eq.f32.partialorder %v1549, %v2230
    %vm2307 = vcmp.eq.f32.partialorder %v1550, %v2230
    %vm2308 = vcmp.eq.f32.partialorder %v1551, %v2230
    %vm2309 = vcmp.eq.f32.partialorder %v1552, %v2230
    %vm2310 = vcmp.eq.f32.partialorder %v1553, %v2230
    %vm2311 = vcmp.eq.f32.partialorder %v1314, %v2230
    %vm2312 = vcmp.eq.f32.partialorder %v1554, %v2230
    %vm2313 = vcmp.eq.f32.partialorder %v1555, %v2230
    %vm2314 = vcmp.eq.f32.partialorder %v1556, %v2230
    %vm2315 = vcmp.eq.f32.partialorder %v1557, %v2230
    %vm2316 = vcmp.eq.f32.partialorder %v1558, %v2230
    %vm2317 = vcmp.eq.f32.partialorder %v1559, %v2230
    %vm2318 = vcmp.eq.f32.partialorder %v1560, %v2230
    %vm2319 = vcmp.eq.f32.partialorder %v1561, %v2230
    %vm2320 = vcmp.eq.f32.partialorder %v1562, %v2230
    %vm2321 = vcmp.eq.f32.partialorder %v1563, %v2230
    %vm2322 = vcmp.eq.f32.partialorder %v1564, %v2230
    %vm2323 = vcmp.eq.f32.partialorder %v1565, %v2230
    %vm2324 = vcmp.eq.f32.partialorder %v1566, %v2230
    %vm2325 = vcmp.eq.f32.partialorder %v1567, %v2230
    %vm2326 = vcmp.eq.f32.partialorder %v1568, %v2230
    %vm2327 = vcmp.eq.f32.partialorder %v1329, %v2230
    %vm2328 = vcmp.eq.f32.partialorder %v1569, %v2230
    %vm2329 = vcmp.eq.f32.partialorder %v1570, %v2230
    %vm2330 = vcmp.eq.f32.partialorder %v1571, %v2230
    %vm2331 = vcmp.eq.f32.partialorder %v1572, %v2230
    %vm2332 = vcmp.eq.f32.partialorder %v1573, %v2230
    %vm2333 = vcmp.eq.f32.partialorder %v1574, %v2230
    %vm2334 = vcmp.eq.f32.partialorder %v1575, %v2230
    %vm2335 = vcmp.eq.f32.partialorder %v1576, %v2230
    %vm2336 = vcmp.eq.f32.partialorder %v1577, %v2230
    %vm2337 = vcmp.eq.f32.partialorder %v1578, %v2230
    %vm2338 = vcmp.eq.f32.partialorder %v1579, %v2230
    %vm2339 = vcmp.eq.f32.partialorder %v1580, %v2230
    %vm2340 = vcmp.eq.f32.partialorder %v1581, %v2230
    %vm2341 = vcmp.eq.f32.partialorder %v1582, %v2230
    %vm2342 = vcmp.eq.f32.partialorder %v1583, %v2230
    %vm2343 = vcmp.eq.f32.partialorder %v1344, %v2230
    %vm2344 = vcmp.eq.f32.partialorder %v1584, %v2230
    %vm2345 = vcmp.eq.f32.partialorder %v1585, %v2230
    %vm2346 = vcmp.eq.f32.partialorder %v1586, %v2230
    %vm2347 = vcmp.eq.f32.partialorder %v1587, %v2230
    %vm2348 = vcmp.eq.f32.partialorder %v1588, %v2230
    %vm2349 = vcmp.eq.f32.partialorder %v1589, %v2230
    %vm2350 = vcmp.eq.f32.partialorder %v1590, %v2230
    %vm2351 = vcmp.eq.f32.partialorder %v1591, %v2230
    %vm2352 = vcmp.eq.f32.partialorder %v1592, %v2230
    %vm2353 = vcmp.eq.f32.partialorder %v1593, %v2230
    %vm2354 = vcmp.eq.f32.partialorder %v1594, %v2230
    %vm2355 = vcmp.eq.f32.partialorder %v1595, %v2230
    %vm2356 = vcmp.eq.f32.partialorder %v1596, %v2230
    %vm2357 = vcmp.eq.f32.partialorder %v1597, %v2230
    %vm2358 = vcmp.eq.f32.partialorder %v1598, %v2230
    %vm2359 = vcmp.eq.f32.partialorder %v1359, %v2230
    %vm2360 = vcmp.eq.f32.partialorder %v1599, %v2230
    %vm2361 = vcmp.eq.f32.partialorder %v1600, %v2230
    %vm2362 = vcmp.eq.f32.partialorder %v1601, %v2230
    %vm2363 = vcmp.eq.f32.partialorder %v1602, %v2230
    %vm2364 = vcmp.eq.f32.partialorder %v1603, %v2230
    %vm2365 = vcmp.eq.f32.partialorder %v1604, %v2230
    %vm2366 = vcmp.eq.f32.partialorder %v1605, %v2230
    %vm2367 = vcmp.eq.f32.partialorder %v1606, %v2230
    %vm2368 = vcmp.eq.f32.partialorder %v1607, %v2230
    %vm2369 = vcmp.eq.f32.partialorder %v1608, %v2230
    %vm2370 = vcmp.eq.f32.partialorder %v1609, %v2230
    %vm2371 = vcmp.eq.f32.partialorder %v1610, %v2230
    %vm2372 = vcmp.eq.f32.partialorder %v1611, %v2230
    %vm2373 = vcmp.eq.f32.partialorder %v1612, %v2230
    %vm2374 = vcmp.eq.f32.partialorder %v1613, %v2230
    %vm2375 = vcmp.eq.f32.partialorder %v1374, %v2230
    %vm2376 = vcmp.eq.f32.partialorder %v1614, %v2230
    %vm2377 = vcmp.eq.f32.partialorder %v1615, %v2230
    %vm2378 = vcmp.eq.f32.partialorder %v1616, %v2230
    %vm2379 = vcmp.eq.f32.partialorder %v1617, %v2230
    %vm2380 = vcmp.eq.f32.partialorder %v1618, %v2230
    %vm2381 = vcmp.eq.f32.partialorder %v1619, %v2230
    %vm2382 = vcmp.eq.f32.partialorder %v1620, %v2230
    %vm2383 = vcmp.eq.f32.partialorder %v1621, %v2230
    %vm2384 = vcmp.eq.f32.partialorder %v1622, %v2230
    %vm2385 = vcmp.eq.f32.partialorder %v1623, %v2230
    %vm2386 = vcmp.eq.f32.partialorder %v1624, %v2230
    %vm2387 = vcmp.eq.f32.partialorder %v1625, %v2230
    %vm2388 = vcmp.eq.f32.partialorder %v1626, %v2230
    %vm2389 = vcmp.eq.f32.partialorder %v1627, %v2230
    %vm2390 = vcmp.eq.f32.partialorder %v1628, %v2230
    %vm2391 = vcmp.eq.f32.partialorder %v1389, %v2230
    %vm2392 = vcmp.eq.f32.partialorder %v1629, %v2230
    %vm2393 = vcmp.eq.f32.partialorder %v1630, %v2230
    %vm2394 = vcmp.eq.f32.partialorder %v1631, %v2230
    %vm2395 = vcmp.eq.f32.partialorder %v1632, %v2230
    %vm2396 = vcmp.eq.f32.partialorder %v1633, %v2230
    %vm2397 = vcmp.eq.f32.partialorder %v1634, %v2230
    %vm2398 = vcmp.eq.f32.partialorder %v1635, %v2230
    %vm2399 = vcmp.eq.f32.partialorder %v1636, %v2230
    %vm2400 = vcmp.eq.f32.partialorder %v1637, %v2230
    %vm2401 = vcmp.eq.f32.partialorder %v1638, %v2230
    %vm2402 = vcmp.eq.f32.partialorder %v1639, %v2230
    %vm2403 = vcmp.eq.f32.partialorder %v1640, %v2230
    %vm2404 = vcmp.eq.f32.partialorder %v1641, %v2230
    %vm2405 = vcmp.eq.f32.partialorder %v1642, %v2230
    %vm2406 = vcmp.eq.f32.partialorder %v1643, %v2230
    %vm2407 = vcmp.eq.f32.partialorder %v1404, %v2230
    %vm2408 = vcmp.eq.f32.partialorder %v1644, %v2230
    %vm2409 = vcmp.eq.f32.partialorder %v1645, %v2230
    %vm2410 = vcmp.eq.f32.partialorder %v1646, %v2230
    %vm2411 = vcmp.eq.f32.partialorder %v1647, %v2230
    %vm2412 = vcmp.eq.f32.partialorder %v1648, %v2230
    %vm2413 = vcmp.eq.f32.partialorder %v1649, %v2230
    %vm2414 = vcmp.eq.f32.partialorder %v1650, %v2230
    %vm2415 = vcmp.eq.f32.partialorder %v1651, %v2230
    %vm2416 = vcmp.eq.f32.partialorder %v1652, %v2230
    %vm2417 = vcmp.eq.f32.partialorder %v1653, %v2230
    %vm2418 = vcmp.eq.f32.partialorder %v1654, %v2230
    %vm2419 = vcmp.eq.f32.partialorder %v1655, %v2230
    %vm2420 = vcmp.eq.f32.partialorder %v1656, %v2230
    %vm2421 = vcmp.eq.f32.partialorder %v1657, %v2230
    %vm2422 = vcmp.eq.f32.partialorder %v1658, %v2230
    %vm2423 = vcmp.eq.f32.partialorder %v1419, %v2230
    %vm2424 = vcmp.eq.f32.partialorder %v1659, %v2230
    %vm2425 = vcmp.eq.f32.partialorder %v1660, %v2230
    %vm2426 = vcmp.eq.f32.partialorder %v1661, %v2230
    %vm2427 = vcmp.eq.f32.partialorder %v1662, %v2230
    %vm2428 = vcmp.eq.f32.partialorder %v1663, %v2230
    %vm2429 = vcmp.eq.f32.partialorder %v1664, %v2230
    %vm2430 = vcmp.eq.f32.partialorder %v1665, %v2230
    %vm2431 = vcmp.eq.f32.partialorder %v1666, %v2230
    %vm2432 = vcmp.eq.f32.partialorder %v1667, %v2230
    %vm2433 = vcmp.eq.f32.partialorder %v1668, %v2230
    %vm2434 = vcmp.eq.f32.partialorder %v1669, %v2230
    %vm2435 = vcmp.eq.f32.partialorder %v1670, %v2230
    %vm2436 = vcmp.eq.f32.partialorder %v1671, %v2230
    %vm2437 = vcmp.eq.f32.partialorder %v1672, %v2230
    %vm2438 = vcmp.eq.f32.partialorder %v1673, %v2230
    %vm2439 = vcmp.eq.f32.partialorder %v1434, %v2230
    %vm2440 = vcmp.eq.f32.partialorder %v1674, %v2230
    %vm2441 = vcmp.eq.f32.partialorder %v1675, %v2230
    %vm2442 = vcmp.eq.f32.partialorder %v1676, %v2230
    %vm2443 = vcmp.eq.f32.partialorder %v1677, %v2230
    %vm2444 = vcmp.eq.f32.partialorder %v1678, %v2230
    %vm2445 = vcmp.eq.f32.partialorder %v1679, %v2230
    %vm2446 = vcmp.eq.f32.partialorder %v1680, %v2230
    %vm2447 = vcmp.eq.f32.partialorder %v1681, %v2230
    %vm2448 = vcmp.eq.f32.partialorder %v1682, %v2230
    %vm2449 = vcmp.eq.f32.partialorder %v1683, %v2230
    %vm2450 = vcmp.eq.f32.partialorder %v1684, %v2230
    %vm2451 = vcmp.eq.f32.partialorder %v1685, %v2230
    %vm2452 = vcmp.eq.f32.partialorder %v1686, %v2230
    %vm2453 = vcmp.eq.f32.partialorder %v1687, %v2230
    %vm2454 = vcmp.eq.f32.partialorder %v1688, %v2230
    %vm2455 = vcmp.eq.f32.partialorder %v1449, %v2230
    %vm2456 = vcmp.eq.f32.partialorder %v1689, %v2230
    %vm2457 = vcmp.eq.f32.partialorder %v1690, %v2230
    %vm2458 = vcmp.eq.f32.partialorder %v1691, %v2230
    %vm2459 = vcmp.eq.f32.partialorder %v1692, %v2230
    %vm2460 = vcmp.eq.f32.partialorder %v1693, %v2230
    %vm2461 = vcmp.eq.f32.partialorder %v1694, %v2230
    %vm2462 = vcmp.eq.f32.partialorder %v1695, %v2230
    %vm2463 = vcmp.eq.f32.partialorder %v1696, %v2230
    %vm2464 = vcmp.eq.f32.partialorder %v1697, %v2230
    %vm2465 = vcmp.eq.f32.partialorder %v1698, %v2230
    %vm2466 = vcmp.eq.f32.partialorder %v1699, %v2230
    %vm2467 = vcmp.eq.f32.partialorder %v1700, %v2230
    %vm2468 = vcmp.eq.f32.partialorder %v1701, %v2230
    %vm2469 = vcmp.eq.f32.partialorder %v1702, %v2230
    %vm2470 = vcmp.eq.f32.partialorder %v1703, %v2230
    %vm2471 = vcmp.eq.f32.partialorder %v1464, %v2230
    %vm2472 = vcmp.eq.f32.partialorder %v1704, %v2230
    %vm2473 = vcmp.eq.f32.partialorder %v1705, %v2230
    %vm2474 = vcmp.eq.f32.partialorder %v1706, %v2230
    %vm2475 = vcmp.eq.f32.partialorder %v1707, %v2230
    %vm2476 = vcmp.eq.f32.partialorder %v1708, %v2230
    %vm2477 = vcmp.eq.f32.partialorder %v1709, %v2230
    %vm2478 = vcmp.eq.f32.partialorder %v1710, %v2230
    %vm2479 = vcmp.eq.f32.partialorder %v1711, %v2230
    %vm2480 = vcmp.eq.f32.partialorder %v1712, %v2230
    %vm2481 = vcmp.eq.f32.partialorder %v1713, %v2230
    %vm2482 = vcmp.eq.f32.partialorder %v1714, %v2230
    %vm2483 = vcmp.eq.f32.partialorder %v1715, %v2230
    %vm2484 = vcmp.eq.f32.partialorder %v1716, %v2230
    %vm2485 = vcmp.eq.f32.partialorder %v1717, %v2230
    %vm2486 = vcmp.eq.f32.partialorder %v1718, %v2230
    %v2487 = vsel %vm2231, 0, 256
    %v2488 = vsel %vm2232, 1, 256
    %v2489 = vsel %vm2233, 2, 256
    %v2490 = vsel %vm2234, 3, 256
    %v2491 = vsel %vm2235, 4, 256
    %v2492 = vsel %vm2236, 5, 256
    %v2493 = vsel %vm2237, 6, 256
    %v2494 = vsel %vm2238, 7, 256
    %v2495 = vsel %vm2239, 8, 256
    %v2496 = vsel %vm2240, 9, 256
    %v2497 = vsel %vm2241, 10, 256
    %v2498 = vsel %vm2242, 11, 256
    %v2499 = vsel %vm2243, 12, 256
    %v2500 = vsel %vm2244, 13, 256
    %v2501 = vsel %vm2245, 14, 256
    %v2502 = vsel %vm2246, 15, 256
    %v2503 = vsel %vm2247, 16, 256
    %v2504 = vsel %vm2248, 17, 256
    %v2505 = vsel %vm2249, 18, 256
    %v2506 = vsel %vm2250, 19, 256
    %v2507 = vsel %vm2251, 20, 256
    %v2508 = vsel %vm2252, 21, 256
    %v2509 = vsel %vm2253, 22, 256
    %v2510 = vsel %vm2254, 23, 256
    %v2511 = vsel %vm2255, 24, 256
    %v2512 = vsel %vm2256, 25, 256
    %v2513 = vsel %vm2257, 26, 256
    %v2514 = vsel %vm2258, 27, 256
    %v2515 = vsel %vm2259, 28, 256
    %v2516 = vsel %vm2260, 29, 256
    %v2517 = vsel %vm2261, 30, 256
    %v2518 = vsel %vm2262, 31, 256
    %v2519 = vsel %vm2263, 32, 256
    %v2520 = vsel %vm2264, 33, 256
    %v2521 = vsel %vm2265, 34, 256
    %v2522 = vsel %vm2266, 35, 256
    %v2523 = vsel %vm2267, 36, 256
    %v2524 = vsel %vm2268, 37, 256
    %v2525 = vsel %vm2269, 38, 256
    %v2526 = vsel %vm2270, 39, 256
    %v2527 = vsel %vm2271, 40, 256
    %v2528 = vsel %vm2272, 41, 256
    %v2529 = vsel %vm2273, 42, 256
    %v2530 = vsel %vm2274, 43, 256
    %v2531 = vsel %vm2275, 44, 256
    %v2532 = vsel %vm2276, 45, 256
    %v2533 = vsel %vm2277, 46, 256
    %v2534 = vsel %vm2278, 47, 256
    %v2535 = vsel %vm2279, 48, 256
    %v2536 = vsel %vm2280, 49, 256
    %v2537 = vsel %vm2281, 50, 256
    %v2538 = vsel %vm2282, 51, 256
    %v2539 = vsel %vm2283, 52, 256
    %v2540 = vsel %vm2284, 53, 256
    %v2541 = vsel %vm2285, 54, 256
    %v2542 = vsel %vm2286, 55, 256
    %v2543 = vsel %vm2287, 56, 256
    %v2544 = vsel %vm2288, 57, 256
    %v2545 = vsel %vm2289, 58, 256
    %v2546 = vsel %vm2290, 59, 256
    %v2547 = vsel %vm2291, 60, 256
    %v2548 = vsel %vm2292, 61, 256
    %v2549 = vsel %vm2293, 62, 256
    %v2550 = vsel %vm2294, 63, 256
    %v2551 = vsel %vm2295, 64, 256
    %v2552 = vsel %vm2296, 65, 256
    %v2553 = vsel %vm2297, 66, 256
    %v2554 = vsel %vm2298, 67, 256
    %v2555 = vsel %vm2299, 68, 256
    %v2556 = vsel %vm2300, 69, 256
    %v2557 = vsel %vm2301, 70, 256
    %v2558 = vsel %vm2302, 71, 256
    %v2559 = vsel %vm2303, 72, 256
    %v2560 = vsel %vm2304, 73, 256
    %v2561 = vsel %vm2305, 74, 256
    %v2562 = vsel %vm2306, 75, 256
    %v2563 = vsel %vm2307, 76, 256
    %v2564 = vsel %vm2308, 77, 256
    %v2565 = vsel %vm2309, 78, 256
    %v2566 = vsel %vm2310, 79, 256
    %v2567 = vsel %vm2311, 80, 256
    %v2568 = vsel %vm2312, 81, 256
    %v2569 = vsel %vm2313, 82, 256
    %v2570 = vsel %vm2314, 83, 256
    %v2571 = vsel %vm2315, 84, 256
    %v2572 = vsel %vm2316, 85, 256
    %v2573 = vsel %vm2317, 86, 256
    %v2574 = vsel %vm2318, 87, 256
    %v2575 = vsel %vm2319, 88, 256
    %v2576 = vsel %vm2320, 89, 256
    %v2577 = vsel %vm2321, 90, 256
    %v2578 = vsel %vm2322, 91, 256
    %v2579 = vsel %vm2323, 92, 256
    %v2580 = vsel %vm2324, 93, 256
    %v2581 = vsel %vm2325, 94, 256
    %v2582 = vsel %vm2326, 95, 256
    %v2583 = vsel %vm2327, 96, 256
    %v2584 = vsel %vm2328, 97, 256
    %v2585 = vsel %vm2329, 98, 256
    %v2586 = vsel %vm2330, 99, 256
    %v2587 = vsel %vm2331, 100, 256
    %v2588 = vsel %vm2332, 101, 256
    %v2589 = vsel %vm2333, 102, 256
    %v2590 = vsel %vm2334, 103, 256
    %v2591 = vsel %vm2335, 104, 256
    %v2592 = vsel %vm2336, 105, 256
    %v2593 = vsel %vm2337, 106, 256
    %v2594 = vsel %vm2338, 107, 256
    %v2595 = vsel %vm2339, 108, 256
    %v2596 = vsel %vm2340, 109, 256
    %v2597 = vsel %vm2341, 110, 256
    %v2598 = vsel %vm2342, 111, 256
    %v2599 = vsel %vm2343, 112, 256
    %v2600 = vsel %vm2344, 113, 256
    %v2601 = vsel %vm2345, 114, 256
    %v2602 = vsel %vm2346, 115, 256
    %v2603 = vsel %vm2347, 116, 256
    %v2604 = vsel %vm2348, 117, 256
    %v2605 = vsel %vm2349, 118, 256
    %v2606 = vsel %vm2350, 119, 256
    %v2607 = vsel %vm2351, 120, 256
    %v2608 = vsel %vm2352, 121, 256
    %v2609 = vsel %vm2353, 122, 256
    %v2610 = vsel %vm2354, 123, 256
    %v2611 = vsel %vm2355, 124, 256
    %v2612 = vsel %vm2356, 125, 256
    %v2613 = vsel %vm2357, 126, 256
    %v2614 = vsel %vm2358, 127, 256
    %v2615 = vsel %vm2359, 128, 256
    %v2616 = vsel %vm2360, 129, 256
    %v2617 = vsel %vm2361, 130, 256
    %v2618 = vsel %vm2362, 131, 256
    %v2619 = vsel %vm2363, 132, 256
    %v2620 = vsel %vm2364, 133, 256
    %v2621 = vsel %vm2365, 134, 256
    %v2622 = vsel %vm2366, 135, 256
    %v2623 = vsel %vm2367, 136, 256
    %v2624 = vsel %vm2368, 137, 256
    %v2625 = vsel %vm2369, 138, 256
    %v2626 = vsel %vm2370, 139, 256
    %v2627 = vsel %vm2371, 140, 256
    %v2628 = vsel %vm2372, 141, 256
    %v2629 = vsel %vm2373, 142, 256
    %v2630 = vsel %vm2374, 143, 256
    %v2631 = vsel %vm2375, 144, 256
    %v2632 = vsel %vm2376, 145, 256
    %v2633 = vsel %vm2377, 146, 256
    %v2634 = vsel %vm2378, 147, 256
    %v2635 = vsel %vm2379, 148, 256
    %v2636 = vsel %vm2380, 149, 256
    %v2637 = vsel %vm2381, 150, 256
    %v2638 = vsel %vm2382, 151, 256
    %v2639 = vsel %vm2383, 152, 256
    %v2640 = vsel %vm2384, 153, 256
    %v2641 = vsel %vm2385, 154, 256
    %v2642 = vsel %vm2386, 155, 256
    %v2643 = vsel %vm2387, 156, 256
    %v2644 = vsel %vm2388, 157, 256
    %v2645 = vsel %vm2389, 158, 256
    %v2646 = vsel %vm2390, 159, 256
    %v2647 = vsel %vm2391, 160, 256
    %v2648 = vsel %vm2392, 161, 256
    %v2649 = vsel %vm2393, 162, 256
    %v2650 = vsel %vm2394, 163, 256
    %v2651 = vsel %vm2395, 164, 256
    %v2652 = vsel %vm2396, 165, 256
    %v2653 = vsel %vm2397, 166, 256
    %v2654 = vsel %vm2398, 167, 256
    %v2655 = vsel %vm2399, 168, 256
    %v2656 = vsel %vm2400, 169, 256
    %v2657 = vsel %vm2401, 170, 256
    %v2658 = vsel %vm2402, 171, 256
    %v2659 = vsel %vm2403, 172, 256
    %v2660 = vsel %vm2404, 173, 256
    %v2661 = vsel %vm2405, 174, 256
    %v2662 = vsel %vm2406, 175, 256
    %v2663 = vsel %vm2407, 176, 256
    %v2664 = vsel %vm2408, 177, 256
    %v2665 = vsel %vm2409, 178, 256
    %v2666 = vsel %vm2410, 179, 256
    %v2667 = vsel %vm2411, 180, 256
    %v2668 = vsel %vm2412, 181, 256
    %v2669 = vsel %vm2413, 182, 256
    %v2670 = vsel %vm2414, 183, 256
    %v2671 = vsel %vm2415, 184, 256
    %v2672 = vsel %vm2416, 185, 256
    %v2673 = vsel %vm2417, 186, 256
    %v2674 = vsel %vm2418, 187, 256
    %v2675 = vsel %vm2419, 188, 256
    %v2676 = vsel %vm2420, 189, 256
    %v2677 = vsel %vm2421, 190, 256
    %v2678 = vsel %vm2422, 191, 256
    %v2679 = vsel %vm2423, 192, 256
    %v2680 = vsel %vm2424, 193, 256
    %v2681 = vsel %vm2425, 194, 256
    %v2682 = vsel %vm2426, 195, 256
    %v2683 = vsel %vm2427, 196, 256
    %v2684 = vsel %vm2428, 197, 256
    %v2685 = vsel %vm2429, 198, 256
    %v2686 = vsel %vm2430, 199, 256
    %v2687 = vsel %vm2431, 200, 256
    %v2688 = vsel %vm2432, 201, 256
    %v2689 = vsel %vm2433, 202, 256
    %v2690 = vsel %vm2434, 203, 256
    %v2691 = vsel %vm2435, 204, 256
    %v2692 = vsel %vm2436, 205, 256
    %v2693 = vsel %vm2437, 206, 256
    %v2694 = vsel %vm2438, 207, 256
    %v2695 = vsel %vm2439, 208, 256
    %v2696 = vsel %vm2440, 209, 256
    %v2697 = vsel %vm2441, 210, 256
    %v2698 = vsel %vm2442, 211, 256
    %v2699 = vsel %vm2443, 212, 256
    %v2700 = vsel %vm2444, 213, 256
    %v2701 = vsel %vm2445, 214, 256
    %v2702 = vsel %vm2446, 215, 256
    %v2703 = vsel %vm2447, 216, 256
    %v2704 = vsel %vm2448, 217, 256
    %v2705 = vsel %vm2449, 218, 256
    %v2706 = vsel %vm2450, 219, 256
    %v2707 = vsel %vm2451, 220, 256
    %v2708 = vsel %vm2452, 221, 256
    %v2709 = vsel %vm2453, 222, 256
    %v2710 = vsel %vm2454, 223, 256
    %v2711 = vsel %vm2455, 224, 256
    %v2712 = vsel %vm2456, 225, 256
    %v2713 = vsel %vm2457, 226, 256
    %v2714 = vsel %vm2458, 227, 256
    %v2715 = vsel %vm2459, 228, 256
    %v2716 = vsel %vm2460, 229, 256
    %v2717 = vsel %vm2461, 230, 256
    %v2718 = vsel %vm2462, 231, 256
    %v2719 = vsel %vm2463, 232, 256
    %v2720 = vsel %vm2464, 233, 256
    %v2721 = vsel %vm2465, 234, 256
    %v2722 = vsel %vm2466, 235, 256
    %v2723 = vsel %vm2467, 236, 256
    %v2724 = vsel %vm2468, 237, 256
    %v2725 = vsel %vm2469, 238, 256
    %v2726 = vsel %vm2470, 239, 256
    %v2727 = vsel %vm2471, 240, 256
    %v2728 = vsel %vm2472, 241, 256
    %v2729 = vsel %vm2473, 242, 256
    %v2730 = vsel %vm2474, 243, 256
    %v2731 = vsel %vm2475, 244, 256
    %v2732 = vsel %vm2476, 245, 256
    %v2733 = vsel %vm2477, 246, 256
    %v2734 = vsel %vm2478, 247, 256
    %v2735 = vsel %vm2479, 248, 256
    %v2736 = vsel %vm2480, 249, 256
    %v2737 = vsel %vm2481, 250, 256
    %v2738 = vsel %vm2482, 251, 256
    %v2739 = vsel %vm2483, 252, 256
    %v2740 = vsel %vm2484, 253, 256
    %v2741 = vsel %vm2485, 254, 256
    %v2742 = vsel %vm2486, 255, 256
    %v2743 = vsel %vm1719, %v2487, 2147483647
    %v2744 = vsel %vm1719, %v2488, 2147483647
    %v2745 = vsel %vm1719, %v2489, 2147483647
    %v2746 = vsel %vm1719, %v2490, 2147483647
    %v2747 = vsel %vm1719, %v2491, 2147483647
    %vm2748 = vcmp.lt.s32.totalorder %v2743, %v2747
    %v2749 = vsel %vm2748, %v2743, %v2747
    %v2750 = vsel %vm1719, %v2492, 2147483647
    %vm2751 = vcmp.lt.s32.totalorder %v2744, %v2750
    %v2752 = vsel %vm2751, %v2744, %v2750
    %v2753 = vsel %vm1719, %v2493, 2147483647
    %vm2754 = vcmp.lt.s32.totalorder %v2745, %v2753
    %v2755 = vsel %vm2754, %v2745, %v2753
    %v2756 = vsel %vm1719, %v2494, 2147483647
    %vm2757 = vcmp.lt.s32.totalorder %v2746, %v2756
    %v2758 = vsel %vm2757, %v2746, %v2756
    %v2759 = vsel %vm1719, %v2495, 2147483647
    %vm2760 = vcmp.lt.s32.totalorder %v2749, %v2759
    %v2761 = vsel %vm2760, %v2749, %v2759
    %v2762 = vsel %vm1719, %v2496, 2147483647
    %vm2763 = vcmp.lt.s32.totalorder %v2752, %v2762
    %v2764 = vsel %vm2763, %v2752, %v2762
    %v2765 = vsel %vm1719, %v2497, 2147483647
    %vm2766 = vcmp.lt.s32.totalorder %v2755, %v2765
    %v2767 = vsel %vm2766, %v2755, %v2765
    %v2768 = vsel %vm1719, %v2498, 2147483647
    %vm2769 = vcmp.lt.s32.totalorder %v2758, %v2768
    %v2770 = vsel %vm2769, %v2758, %v2768
    %v2771 = vsel %vm1719, %v2499, 2147483647
    %vm2772 = vcmp.lt.s32.totalorder %v2761, %v2771
    %v2773 = vsel %vm2772, %v2761, %v2771
    %v2774 = vsel %vm1719, %v2500, 2147483647
    %vm2775 = vcmp.lt.s32.totalorder %v2764, %v2774
    %v2776 = vsel %vm2775, %v2764, %v2774
    %v2777 = vsel %vm1719, %v2501, 2147483647
    %vm2778 = vcmp.lt.s32.totalorder %v2767, %v2777
    %v2779 = vsel %vm2778, %v2767, %v2777
    %v2780 = vsel %vm1719, %v2502, 2147483647
    %vm2781 = vcmp.lt.s32.totalorder %v2770, %v2780
    %v2782 = vsel %vm2781, %v2770, %v2780
    %v2783 = vsel %vm1719, %v2503, 2147483647
    %vm2784 = vcmp.lt.s32.totalorder %v2773, %v2783
    %v2785 = vsel %vm2784, %v2773, %v2783
    %v2786 = vsel %vm1719, %v2504, 2147483647
    %vm2787 = vcmp.lt.s32.totalorder %v2776, %v2786
    %v2788 = vsel %vm2787, %v2776, %v2786
    %v2789 = vsel %vm1719, %v2505, 2147483647
    %vm2790 = vcmp.lt.s32.totalorder %v2779, %v2789
    %v2791 = vsel %vm2790, %v2779, %v2789
    %v2792 = vsel %vm1719, %v2506, 2147483647
    %vm2793 = vcmp.lt.s32.totalorder %v2782, %v2792
    %v2794 = vsel %vm2793, %v2782, %v2792
    %v2795 = vsel %vm1719, %v2507, 2147483647
    %vm2796 = vcmp.lt.s32.totalorder %v2785, %v2795
    %v2797 = vsel %vm2796, %v2785, %v2795
    %v2798 = vsel %vm1719, %v2508, 2147483647
    %vm2799 = vcmp.lt.s32.totalorder %v2788, %v2798
    %v2800 = vsel %vm2799, %v2788, %v2798
    %v2801 = vsel %vm1719, %v2509, 2147483647
    %vm2802 = vcmp.lt.s32.totalorder %v2791, %v2801
    %v2803 = vsel %vm2802, %v2791, %v2801
    %v2804 = vsel %vm1719, %v2510, 2147483647
    %vm2805 = vcmp.lt.s32.totalorder %v2794, %v2804
    %v2806 = vsel %vm2805, %v2794, %v2804
    %v2807 = vsel %vm1719, %v2511, 2147483647
    %vm2808 = vcmp.lt.s32.totalorder %v2797, %v2807
    %v2809 = vsel %vm2808, %v2797, %v2807
    %v2810 = vsel %vm1719, %v2512, 2147483647
    %vm2811 = vcmp.lt.s32.totalorder %v2800, %v2810
    %v2812 = vsel %vm2811, %v2800, %v2810
    %v2813 = vsel %vm1719, %v2513, 2147483647
    %vm2814 = vcmp.lt.s32.totalorder %v2803, %v2813
    %v2815 = vsel %vm2814, %v2803, %v2813
    %v2816 = vsel %vm1719, %v2514, 2147483647
    %vm2817 = vcmp.lt.s32.totalorder %v2806, %v2816
    %v2818 = vsel %vm2817, %v2806, %v2816
    %v2819 = vsel %vm1719, %v2515, 2147483647
    %vm2820 = vcmp.lt.s32.totalorder %v2809, %v2819
    %v2821 = vsel %vm2820, %v2809, %v2819
    %v2822 = vsel %vm1719, %v2516, 2147483647
    %vm2823 = vcmp.lt.s32.totalorder %v2812, %v2822
    %v2824 = vsel %vm2823, %v2812, %v2822
    %v2825 = vsel %vm1719, %v2517, 2147483647
    %vm2826 = vcmp.lt.s32.totalorder %v2815, %v2825
    %v2827 = vsel %vm2826, %v2815, %v2825
    %v2828 = vsel %vm1719, %v2518, 2147483647
    %vm2829 = vcmp.lt.s32.totalorder %v2818, %v2828
    %v2830 = vsel %vm2829, %v2818, %v2828
    %v2831 = vsel %vm1719, %v2519, 2147483647
    %vm2832 = vcmp.lt.s32.totalorder %v2821, %v2831
    %v2833 = vsel %vm2832, %v2821, %v2831
    %v2834 = vsel %vm1719, %v2520, 2147483647
    %vm2835 = vcmp.lt.s32.totalorder %v2824, %v2834
    %v2836 = vsel %vm2835, %v2824, %v2834
    %v2837 = vsel %vm1719, %v2521, 2147483647
    %vm2838 = vcmp.lt.s32.totalorder %v2827, %v2837
    %v2839 = vsel %vm2838, %v2827, %v2837
    %v2840 = vsel %vm1719, %v2522, 2147483647
    %vm2841 = vcmp.lt.s32.totalorder %v2830, %v2840
    %v2842 = vsel %vm2841, %v2830, %v2840
    %v2843 = vsel %vm1719, %v2523, 2147483647
    %vm2844 = vcmp.lt.s32.totalorder %v2833, %v2843
    %v2845 = vsel %vm2844, %v2833, %v2843
    %v2846 = vsel %vm1719, %v2524, 2147483647
    %vm2847 = vcmp.lt.s32.totalorder %v2836, %v2846
    %v2848 = vsel %vm2847, %v2836, %v2846
    %v2849 = vsel %vm1719, %v2525, 2147483647
    %vm2850 = vcmp.lt.s32.totalorder %v2839, %v2849
    %v2851 = vsel %vm2850, %v2839, %v2849
    %v2852 = vsel %vm1719, %v2526, 2147483647
    %vm2853 = vcmp.lt.s32.totalorder %v2842, %v2852
    %v2854 = vsel %vm2853, %v2842, %v2852
    %v2855 = vsel %vm1719, %v2527, 2147483647
    %vm2856 = vcmp.lt.s32.totalorder %v2845, %v2855
    %v2857 = vsel %vm2856, %v2845, %v2855
    %v2858 = vsel %vm1719, %v2528, 2147483647
    %vm2859 = vcmp.lt.s32.totalorder %v2848, %v2858
    %v2860 = vsel %vm2859, %v2848, %v2858
    %v2861 = vsel %vm1719, %v2529, 2147483647
    %vm2862 = vcmp.lt.s32.totalorder %v2851, %v2861
    %v2863 = vsel %vm2862, %v2851, %v2861
    %v2864 = vsel %vm1719, %v2530, 2147483647
    %vm2865 = vcmp.lt.s32.totalorder %v2854, %v2864
    %v2866 = vsel %vm2865, %v2854, %v2864
    %v2867 = vsel %vm1719, %v2531, 2147483647
    %vm2868 = vcmp.lt.s32.totalorder %v2857, %v2867
    %v2869 = vsel %vm2868, %v2857, %v2867
    %v2870 = vsel %vm1719, %v2532, 2147483647
    %vm2871 = vcmp.lt.s32.totalorder %v2860, %v2870
    %v2872 = vsel %vm2871, %v2860, %v2870
    %v2873 = vsel %vm1719, %v2533, 2147483647
    %vm2874 = vcmp.lt.s32.totalorder %v2863, %v2873
    %v2875 = vsel %vm2874, %v2863, %v2873
    %v2876 = vsel %vm1719, %v2534, 2147483647
    %vm2877 = vcmp.lt.s32.totalorder %v2866, %v2876
    %v2878 = vsel %vm2877, %v2866, %v2876
    %v2879 = vsel %vm1719, %v2535, 2147483647
    %vm2880 = vcmp.lt.s32.totalorder %v2869, %v2879
    %v2881 = vsel %vm2880, %v2869, %v2879
    %v2882 = vsel %vm1719, %v2536, 2147483647
    %vm2883 = vcmp.lt.s32.totalorder %v2872, %v2882
    %v2884 = vsel %vm2883, %v2872, %v2882
    %v2885 = vsel %vm1719, %v2537, 2147483647
    %vm2886 = vcmp.lt.s32.totalorder %v2875, %v2885
    %v2887 = vsel %vm2886, %v2875, %v2885
    %v2888 = vsel %vm1719, %v2538, 2147483647
    %vm2889 = vcmp.lt.s32.totalorder %v2878, %v2888
    %v2890 = vsel %vm2889, %v2878, %v2888
    %v2891 = vsel %vm1719, %v2539, 2147483647
    %vm2892 = vcmp.lt.s32.totalorder %v2881, %v2891
    %v2893 = vsel %vm2892, %v2881, %v2891
    %v2894 = vsel %vm1719, %v2540, 2147483647
    %vm2895 = vcmp.lt.s32.totalorder %v2884, %v2894
    %v2896 = vsel %vm2895, %v2884, %v2894
    %v2897 = vsel %vm1719, %v2541, 2147483647
    %vm2898 = vcmp.lt.s32.totalorder %v2887, %v2897
    %v2899 = vsel %vm2898, %v2887, %v2897
    %v2900 = vsel %vm1719, %v2542, 2147483647
    %vm2901 = vcmp.lt.s32.totalorder %v2890, %v2900
    %v2902 = vsel %vm2901, %v2890, %v2900
    %v2903 = vsel %vm1719, %v2543, 2147483647
    %vm2904 = vcmp.lt.s32.totalorder %v2893, %v2903
    %v2905 = vsel %vm2904, %v2893, %v2903
    %v2906 = vsel %vm1719, %v2544, 2147483647
    %vm2907 = vcmp.lt.s32.totalorder %v2896, %v2906
    %v2908 = vsel %vm2907, %v2896, %v2906
    %v2909 = vsel %vm1719, %v2545, 2147483647
    %vm2910 = vcmp.lt.s32.totalorder %v2899, %v2909
    %v2911 = vsel %vm2910, %v2899, %v2909
    %v2912 = vsel %vm1719, %v2546, 2147483647
    %vm2913 = vcmp.lt.s32.totalorder %v2902, %v2912
    %v2914 = vsel %vm2913, %v2902, %v2912
    %v2915 = vsel %vm1719, %v2547, 2147483647
    %vm2916 = vcmp.lt.s32.totalorder %v2905, %v2915
    %v2917 = vsel %vm2916, %v2905, %v2915
    %v2918 = vsel %vm1719, %v2548, 2147483647
    %vm2919 = vcmp.lt.s32.totalorder %v2908, %v2918
    %v2920 = vsel %vm2919, %v2908, %v2918
    %v2921 = vsel %vm1719, %v2549, 2147483647
    %vm2922 = vcmp.lt.s32.totalorder %v2911, %v2921
    %v2923 = vsel %vm2922, %v2911, %v2921
    %v2924 = vsel %vm1719, %v2550, 2147483647
    %vm2925 = vcmp.lt.s32.totalorder %v2914, %v2924
    %v2926 = vsel %vm2925, %v2914, %v2924
    %v2927 = vsel %vm1719, %v2551, 2147483647
    %vm2928 = vcmp.lt.s32.totalorder %v2917, %v2927
    %v2929 = vsel %vm2928, %v2917, %v2927
    %v2930 = vsel %vm1719, %v2552, 2147483647
    %vm2931 = vcmp.lt.s32.totalorder %v2920, %v2930
    %v2932 = vsel %vm2931, %v2920, %v2930
    %v2933 = vsel %vm1719, %v2553, 2147483647
    %vm2934 = vcmp.lt.s32.totalorder %v2923, %v2933
    %v2935 = vsel %vm2934, %v2923, %v2933
    %v2936 = vsel %vm1719, %v2554, 2147483647
    %vm2937 = vcmp.lt.s32.totalorder %v2926, %v2936
    %v2938 = vsel %vm2937, %v2926, %v2936
    %v2939 = vsel %vm1719, %v2555, 2147483647
    %vm2940 = vcmp.lt.s32.totalorder %v2929, %v2939
    %v2941 = vsel %vm2940, %v2929, %v2939
    %v2942 = vsel %vm1719, %v2556, 2147483647
    %vm2943 = vcmp.lt.s32.totalorder %v2932, %v2942
    %v2944 = vsel %vm2943, %v2932, %v2942
    %v2945 = vsel %vm1719, %v2557, 2147483647
    %vm2946 = vcmp.lt.s32.totalorder %v2935, %v2945
    %v2947 = vsel %vm2946, %v2935, %v2945
    %v2948 = vsel %vm1719, %v2558, 2147483647
    %vm2949 = vcmp.lt.s32.totalorder %v2938, %v2948
    %v2950 = vsel %vm2949, %v2938, %v2948
    %v2951 = vsel %vm1719, %v2559, 2147483647
    %vm2952 = vcmp.lt.s32.totalorder %v2941, %v2951
    %v2953 = vsel %vm2952, %v2941, %v2951
    %v2954 = vsel %vm1719, %v2560, 2147483647
    %vm2955 = vcmp.lt.s32.totalorder %v2944, %v2954
    %v2956 = vsel %vm2955, %v2944, %v2954
    %v2957 = vsel %vm1719, %v2561, 2147483647
    %vm2958 = vcmp.lt.s32.totalorder %v2947, %v2957
    %v2959 = vsel %vm2958, %v2947, %v2957
    %v2960 = vsel %vm1719, %v2562, 2147483647
    %vm2961 = vcmp.lt.s32.totalorder %v2950, %v2960
    %v2962 = vsel %vm2961, %v2950, %v2960
    %v2963 = vsel %vm1719, %v2563, 2147483647
    %vm2964 = vcmp.lt.s32.totalorder %v2953, %v2963
    %v2965 = vsel %vm2964, %v2953, %v2963
    %v2966 = vsel %vm1719, %v2564, 2147483647
    %vm2967 = vcmp.lt.s32.totalorder %v2956, %v2966
    %v2968 = vsel %vm2967, %v2956, %v2966
    %v2969 = vsel %vm1719, %v2565, 2147483647
    %vm2970 = vcmp.lt.s32.totalorder %v2959, %v2969
    %v2971 = vsel %vm2970, %v2959, %v2969
    %v2972 = vsel %vm1719, %v2566, 2147483647
    %vm2973 = vcmp.lt.s32.totalorder %v2962, %v2972
    %v2974 = vsel %vm2973, %v2962, %v2972
    %v2975 = vsel %vm1719, %v2567, 2147483647
    %vm2976 = vcmp.lt.s32.totalorder %v2965, %v2975
    %v2977 = vsel %vm2976, %v2965, %v2975
    %v2978 = vsel %vm1719, %v2568, 2147483647
    %vm2979 = vcmp.lt.s32.totalorder %v2968, %v2978
    %v2980 = vsel %vm2979, %v2968, %v2978
    %v2981 = vsel %vm1719, %v2569, 2147483647
    %vm2982 = vcmp.lt.s32.totalorder %v2971, %v2981
    %v2983 = vsel %vm2982, %v2971, %v2981
    %v2984 = vsel %vm1719, %v2570, 2147483647
    %vm2985 = vcmp.lt.s32.totalorder %v2974, %v2984
    %v2986 = vsel %vm2985, %v2974, %v2984
    %v2987 = vsel %vm1719, %v2571, 2147483647
    %vm2988 = vcmp.lt.s32.totalorder %v2977, %v2987
    %v2989 = vsel %vm2988, %v2977, %v2987
    %v2990 = vsel %vm1719, %v2572, 2147483647
    %vm2991 = vcmp.lt.s32.totalorder %v2980, %v2990
    %v2992 = vsel %vm2991, %v2980, %v2990
    %v2993 = vsel %vm1719, %v2573, 2147483647
    %vm2994 = vcmp.lt.s32.totalorder %v2983, %v2993
    %v2995 = vsel %vm2994, %v2983, %v2993
    %v2996 = vsel %vm1719, %v2574, 2147483647
    %vm2997 = vcmp.lt.s32.totalorder %v2986, %v2996
    %v2998 = vsel %vm2997, %v2986, %v2996
    %v2999 = vsel %vm1719, %v2575, 2147483647
    %vm3000 = vcmp.lt.s32.totalorder %v2989, %v2999
    %v3001 = vsel %vm3000, %v2989, %v2999
    %v3002 = vsel %vm1719, %v2576, 2147483647
    %vm3003 = vcmp.lt.s32.totalorder %v2992, %v3002
    %v3004 = vsel %vm3003, %v2992, %v3002
    %v3005 = vsel %vm1719, %v2577, 2147483647
    %vm3006 = vcmp.lt.s32.totalorder %v2995, %v3005
    %v3007 = vsel %vm3006, %v2995, %v3005
    %v3008 = vsel %vm1719, %v2578, 2147483647
    %vm3009 = vcmp.lt.s32.totalorder %v2998, %v3008
    %v3010 = vsel %vm3009, %v2998, %v3008
    %v3011 = vsel %vm1719, %v2579, 2147483647
    %vm3012 = vcmp.lt.s32.totalorder %v3001, %v3011
    %v3013 = vsel %vm3012, %v3001, %v3011
    %v3014 = vsel %vm1719, %v2580, 2147483647
    %vm3015 = vcmp.lt.s32.totalorder %v3004, %v3014
    %v3016 = vsel %vm3015, %v3004, %v3014
    %v3017 = vsel %vm1719, %v2581, 2147483647
    %vm3018 = vcmp.lt.s32.totalorder %v3007, %v3017
    %v3019 = vsel %vm3018, %v3007, %v3017
    %v3020 = vsel %vm1719, %v2582, 2147483647
    %vm3021 = vcmp.lt.s32.totalorder %v3010, %v3020
    %v3022 = vsel %vm3021, %v3010, %v3020
    %v3023 = vsel %vm1719, %v2583, 2147483647
    %vm3024 = vcmp.lt.s32.totalorder %v3013, %v3023
    %v3025 = vsel %vm3024, %v3013, %v3023
    %v3026 = vsel %vm1719, %v2584, 2147483647
    %vm3027 = vcmp.lt.s32.totalorder %v3016, %v3026
    %v3028 = vsel %vm3027, %v3016, %v3026
    %v3029 = vsel %vm1719, %v2585, 2147483647
    %vm3030 = vcmp.lt.s32.totalorder %v3019, %v3029
    %v3031 = vsel %vm3030, %v3019, %v3029
    %v3032 = vsel %vm1719, %v2586, 2147483647
    %vm3033 = vcmp.lt.s32.totalorder %v3022, %v3032
    %v3034 = vsel %vm3033, %v3022, %v3032
    %v3035 = vsel %vm1719, %v2587, 2147483647
    %vm3036 = vcmp.lt.s32.totalorder %v3025, %v3035
    %v3037 = vsel %vm3036, %v3025, %v3035
    %v3038 = vsel %vm1719, %v2588, 2147483647
    %vm3039 = vcmp.lt.s32.totalorder %v3028, %v3038
    %v3040 = vsel %vm3039, %v3028, %v3038
    %v3041 = vsel %vm1719, %v2589, 2147483647
    %vm3042 = vcmp.lt.s32.totalorder %v3031, %v3041
    %v3043 = vsel %vm3042, %v3031, %v3041
    %v3044 = vsel %vm1719, %v2590, 2147483647
    %vm3045 = vcmp.lt.s32.totalorder %v3034, %v3044
    %v3046 = vsel %vm3045, %v3034, %v3044
    %v3047 = vsel %vm1719, %v2591, 2147483647
    %vm3048 = vcmp.lt.s32.totalorder %v3037, %v3047
    %v3049 = vsel %vm3048, %v3037, %v3047
    %v3050 = vsel %vm1719, %v2592, 2147483647
    %vm3051 = vcmp.lt.s32.totalorder %v3040, %v3050
    %v3052 = vsel %vm3051, %v3040, %v3050
    %v3053 = vsel %vm1719, %v2593, 2147483647
    %vm3054 = vcmp.lt.s32.totalorder %v3043, %v3053
    %v3055 = vsel %vm3054, %v3043, %v3053
    %v3056 = vsel %vm1719, %v2594, 2147483647
    %vm3057 = vcmp.lt.s32.totalorder %v3046, %v3056
    %v3058 = vsel %vm3057, %v3046, %v3056
    %v3059 = vsel %vm1719, %v2595, 2147483647
    %vm3060 = vcmp.lt.s32.totalorder %v3049, %v3059
    %v3061 = vsel %vm3060, %v3049, %v3059
    %v3062 = vsel %vm1719, %v2596, 2147483647
    %vm3063 = vcmp.lt.s32.totalorder %v3052, %v3062
    %v3064 = vsel %vm3063, %v3052, %v3062
    %v3065 = vsel %vm1719, %v2597, 2147483647
    %vm3066 = vcmp.lt.s32.totalorder %v3055, %v3065
    %v3067 = vsel %vm3066, %v3055, %v3065
    %v3068 = vsel %vm1719, %v2598, 2147483647
    %vm3069 = vcmp.lt.s32.totalorder %v3058, %v3068
    %v3070 = vsel %vm3069, %v3058, %v3068
    %v3071 = vsel %vm1719, %v2599, 2147483647
    %vm3072 = vcmp.lt.s32.totalorder %v3061, %v3071
    %v3073 = vsel %vm3072, %v3061, %v3071
    %v3074 = vsel %vm1719, %v2600, 2147483647
    %vm3075 = vcmp.lt.s32.totalorder %v3064, %v3074
    %v3076 = vsel %vm3075, %v3064, %v3074
    %v3077 = vsel %vm1719, %v2601, 2147483647
    %vm3078 = vcmp.lt.s32.totalorder %v3067, %v3077
    %v3079 = vsel %vm3078, %v3067, %v3077
    %v3080 = vsel %vm1719, %v2602, 2147483647
    %vm3081 = vcmp.lt.s32.totalorder %v3070, %v3080
    %v3082 = vsel %vm3081, %v3070, %v3080
    %v3083 = vsel %vm1719, %v2603, 2147483647
    %vm3084 = vcmp.lt.s32.totalorder %v3073, %v3083
    %v3085 = vsel %vm3084, %v3073, %v3083
    %v3086 = vsel %vm1719, %v2604, 2147483647
    %vm3087 = vcmp.lt.s32.totalorder %v3076, %v3086
    %v3088 = vsel %vm3087, %v3076, %v3086
    %v3089 = vsel %vm1719, %v2605, 2147483647
    %vm3090 = vcmp.lt.s32.totalorder %v3079, %v3089
    %v3091 = vsel %vm3090, %v3079, %v3089
    %v3092 = vsel %vm1719, %v2606, 2147483647
    %vm3093 = vcmp.lt.s32.totalorder %v3082, %v3092
    %v3094 = vsel %vm3093, %v3082, %v3092
    %v3095 = vsel %vm1719, %v2607, 2147483647
    %vm3096 = vcmp.lt.s32.totalorder %v3085, %v3095
    %v3097 = vsel %vm3096, %v3085, %v3095
    %v3098 = vsel %vm1719, %v2608, 2147483647
    %vm3099 = vcmp.lt.s32.totalorder %v3088, %v3098
    %v3100 = vsel %vm3099, %v3088, %v3098
    %v3101 = vsel %vm1719, %v2609, 2147483647
    %vm3102 = vcmp.lt.s32.totalorder %v3091, %v3101
    %v3103 = vsel %vm3102, %v3091, %v3101
    %v3104 = vsel %vm1719, %v2610, 2147483647
    %vm3105 = vcmp.lt.s32.totalorder %v3094, %v3104
    %v3106 = vsel %vm3105, %v3094, %v3104
    %v3107 = vsel %vm1719, %v2611, 2147483647
    %vm3108 = vcmp.lt.s32.totalorder %v3097, %v3107
    %v3109 = vsel %vm3108, %v3097, %v3107
    %v3110 = vsel %vm1719, %v2612, 2147483647
    %vm3111 = vcmp.lt.s32.totalorder %v3100, %v3110
    %v3112 = vsel %vm3111, %v3100, %v3110
    %v3113 = vsel %vm1719, %v2613, 2147483647
    %vm3114 = vcmp.lt.s32.totalorder %v3103, %v3113
    %v3115 = vsel %vm3114, %v3103, %v3113
    %v3116 = vsel %vm1719, %v2614, 2147483647
    %vm3117 = vcmp.lt.s32.totalorder %v3106, %v3116
    %v3118 = vsel %vm3117, %v3106, %v3116
    %v3119 = vsel %vm1719, %v2615, 2147483647
    %vm3120 = vcmp.lt.s32.totalorder %v3109, %v3119
    %v3121 = vsel %vm3120, %v3109, %v3119
    %v3122 = vsel %vm1719, %v2616, 2147483647
    %vm3123 = vcmp.lt.s32.totalorder %v3112, %v3122
    %v3124 = vsel %vm3123, %v3112, %v3122
    %v3125 = vsel %vm1719, %v2617, 2147483647
    %vm3126 = vcmp.lt.s32.totalorder %v3115, %v3125
    %v3127 = vsel %vm3126, %v3115, %v3125
    %v3128 = vsel %vm1719, %v2618, 2147483647
    %vm3129 = vcmp.lt.s32.totalorder %v3118, %v3128
    %v3130 = vsel %vm3129, %v3118, %v3128
    %v3131 = vsel %vm1719, %v2619, 2147483647
    %vm3132 = vcmp.lt.s32.totalorder %v3121, %v3131
    %v3133 = vsel %vm3132, %v3121, %v3131
    %v3134 = vsel %vm1719, %v2620, 2147483647
    %vm3135 = vcmp.lt.s32.totalorder %v3124, %v3134
    %v3136 = vsel %vm3135, %v3124, %v3134
    %v3137 = vsel %vm1719, %v2621, 2147483647
    %vm3138 = vcmp.lt.s32.totalorder %v3127, %v3137
    %v3139 = vsel %vm3138, %v3127, %v3137
    %v3140 = vsel %vm1719, %v2622, 2147483647
    %vm3141 = vcmp.lt.s32.totalorder %v3130, %v3140
    %v3142 = vsel %vm3141, %v3130, %v3140
    %v3143 = vsel %vm1719, %v2623, 2147483647
    %vm3144 = vcmp.lt.s32.totalorder %v3133, %v3143
    %v3145 = vsel %vm3144, %v3133, %v3143
    %v3146 = vsel %vm1719, %v2624, 2147483647
    %vm3147 = vcmp.lt.s32.totalorder %v3136, %v3146
    %v3148 = vsel %vm3147, %v3136, %v3146
    %v3149 = vsel %vm1719, %v2625, 2147483647
    %vm3150 = vcmp.lt.s32.totalorder %v3139, %v3149
    %v3151 = vsel %vm3150, %v3139, %v3149
    %v3152 = vsel %vm1719, %v2626, 2147483647
    %vm3153 = vcmp.lt.s32.totalorder %v3142, %v3152
    %v3154 = vsel %vm3153, %v3142, %v3152
    %v3155 = vsel %vm1719, %v2627, 2147483647
    %vm3156 = vcmp.lt.s32.totalorder %v3145, %v3155
    %v3157 = vsel %vm3156, %v3145, %v3155
    %v3158 = vsel %vm1719, %v2628, 2147483647
    %vm3159 = vcmp.lt.s32.totalorder %v3148, %v3158
    %v3160 = vsel %vm3159, %v3148, %v3158
    %v3161 = vsel %vm1719, %v2629, 2147483647
    %vm3162 = vcmp.lt.s32.totalorder %v3151, %v3161
    %v3163 = vsel %vm3162, %v3151, %v3161
    %v3164 = vsel %vm1719, %v2630, 2147483647
    %vm3165 = vcmp.lt.s32.totalorder %v3154, %v3164
    %v3166 = vsel %vm3165, %v3154, %v3164
    %v3167 = vsel %vm1719, %v2631, 2147483647
    %vm3168 = vcmp.lt.s32.totalorder %v3157, %v3167
    %v3169 = vsel %vm3168, %v3157, %v3167
    %v3170 = vsel %vm1719, %v2632, 2147483647
    %vm3171 = vcmp.lt.s32.totalorder %v3160, %v3170
    %v3172 = vsel %vm3171, %v3160, %v3170
    %v3173 = vsel %vm1719, %v2633, 2147483647
    %vm3174 = vcmp.lt.s32.totalorder %v3163, %v3173
    %v3175 = vsel %vm3174, %v3163, %v3173
    %v3176 = vsel %vm1719, %v2634, 2147483647
    %vm3177 = vcmp.lt.s32.totalorder %v3166, %v3176
    %v3178 = vsel %vm3177, %v3166, %v3176
    %v3179 = vsel %vm1719, %v2635, 2147483647
    %vm3180 = vcmp.lt.s32.totalorder %v3169, %v3179
    %v3181 = vsel %vm3180, %v3169, %v3179
    %v3182 = vsel %vm1719, %v2636, 2147483647
    %vm3183 = vcmp.lt.s32.totalorder %v3172, %v3182
    %v3184 = vsel %vm3183, %v3172, %v3182
    %v3185 = vsel %vm1719, %v2637, 2147483647
    %vm3186 = vcmp.lt.s32.totalorder %v3175, %v3185
    %v3187 = vsel %vm3186, %v3175, %v3185
    %v3188 = vsel %vm1719, %v2638, 2147483647
    %vm3189 = vcmp.lt.s32.totalorder %v3178, %v3188
    %v3190 = vsel %vm3189, %v3178, %v3188
    %v3191 = vsel %vm1719, %v2639, 2147483647
    %vm3192 = vcmp.lt.s32.totalorder %v3181, %v3191
    %v3193 = vsel %vm3192, %v3181, %v3191
    %v3194 = vsel %vm1719, %v2640, 2147483647
    %vm3195 = vcmp.lt.s32.totalorder %v3184, %v3194
    %v3196 = vsel %vm3195, %v3184, %v3194
    %v3197 = vsel %vm1719, %v2641, 2147483647
    %vm3198 = vcmp.lt.s32.totalorder %v3187, %v3197
    %v3199 = vsel %vm3198, %v3187, %v3197
    %v3200 = vsel %vm1719, %v2642, 2147483647
    %vm3201 = vcmp.lt.s32.totalorder %v3190, %v3200
    %v3202 = vsel %vm3201, %v3190, %v3200
    %v3203 = vsel %vm1719, %v2643, 2147483647
    %vm3204 = vcmp.lt.s32.totalorder %v3193, %v3203
    %v3205 = vsel %vm3204, %v3193, %v3203
    %v3206 = vsel %vm1719, %v2644, 2147483647
    %vm3207 = vcmp.lt.s32.totalorder %v3196, %v3206
    %v3208 = vsel %vm3207, %v3196, %v3206
    %v3209 = vsel %vm1719, %v2645, 2147483647
    %vm3210 = vcmp.lt.s32.totalorder %v3199, %v3209
    %v3211 = vsel %vm3210, %v3199, %v3209
    %v3212 = vsel %vm1719, %v2646, 2147483647
    %vm3213 = vcmp.lt.s32.totalorder %v3202, %v3212
    %v3214 = vsel %vm3213, %v3202, %v3212
    %v3215 = vsel %vm1719, %v2647, 2147483647
    %vm3216 = vcmp.lt.s32.totalorder %v3205, %v3215
    %v3217 = vsel %vm3216, %v3205, %v3215
    %v3218 = vsel %vm1719, %v2648, 2147483647
    %vm3219 = vcmp.lt.s32.totalorder %v3208, %v3218
    %v3220 = vsel %vm3219, %v3208, %v3218
    %v3221 = vsel %vm1719, %v2649, 2147483647
    %vm3222 = vcmp.lt.s32.totalorder %v3211, %v3221
    %v3223 = vsel %vm3222, %v3211, %v3221
    %v3224 = vsel %vm1719, %v2650, 2147483647
    %vm3225 = vcmp.lt.s32.totalorder %v3214, %v3224
    %v3226 = vsel %vm3225, %v3214, %v3224
    %v3227 = vsel %vm1719, %v2651, 2147483647
    %vm3228 = vcmp.lt.s32.totalorder %v3217, %v3227
    %v3229 = vsel %vm3228, %v3217, %v3227
    %v3230 = vsel %vm1719, %v2652, 2147483647
    %vm3231 = vcmp.lt.s32.totalorder %v3220, %v3230
    %v3232 = vsel %vm3231, %v3220, %v3230
    %v3233 = vsel %vm1719, %v2653, 2147483647
    %vm3234 = vcmp.lt.s32.totalorder %v3223, %v3233
    %v3235 = vsel %vm3234, %v3223, %v3233
    %v3236 = vsel %vm1719, %v2654, 2147483647
    %vm3237 = vcmp.lt.s32.totalorder %v3226, %v3236
    %v3238 = vsel %vm3237, %v3226, %v3236
    %v3239 = vsel %vm1719, %v2655, 2147483647
    %vm3240 = vcmp.lt.s32.totalorder %v3229, %v3239
    %v3241 = vsel %vm3240, %v3229, %v3239
    %v3242 = vsel %vm1719, %v2656, 2147483647
    %vm3243 = vcmp.lt.s32.totalorder %v3232, %v3242
    %v3244 = vsel %vm3243, %v3232, %v3242
    %v3245 = vsel %vm1719, %v2657, 2147483647
    %vm3246 = vcmp.lt.s32.totalorder %v3235, %v3245
    %v3247 = vsel %vm3246, %v3235, %v3245
    %v3248 = vsel %vm1719, %v2658, 2147483647
    %vm3249 = vcmp.lt.s32.totalorder %v3238, %v3248
    %v3250 = vsel %vm3249, %v3238, %v3248
    %v3251 = vsel %vm1719, %v2659, 2147483647
    %vm3252 = vcmp.lt.s32.totalorder %v3241, %v3251
    %v3253 = vsel %vm3252, %v3241, %v3251
    %v3254 = vsel %vm1719, %v2660, 2147483647
    %vm3255 = vcmp.lt.s32.totalorder %v3244, %v3254
    %v3256 = vsel %vm3255, %v3244, %v3254
    %v3257 = vsel %vm1719, %v2661, 2147483647
    %vm3258 = vcmp.lt.s32.totalorder %v3247, %v3257
    %v3259 = vsel %vm3258, %v3247, %v3257
    %v3260 = vsel %vm1719, %v2662, 2147483647
    %vm3261 = vcmp.lt.s32.totalorder %v3250, %v3260
    %v3262 = vsel %vm3261, %v3250, %v3260
    %v3263 = vsel %vm1719, %v2663, 2147483647
    %vm3264 = vcmp.lt.s32.totalorder %v3253, %v3263
    %v3265 = vsel %vm3264, %v3253, %v3263
    %v3266 = vsel %vm1719, %v2664, 2147483647
    %vm3267 = vcmp.lt.s32.totalorder %v3256, %v3266
    %v3268 = vsel %vm3267, %v3256, %v3266
    %v3269 = vsel %vm1719, %v2665, 2147483647
    %vm3270 = vcmp.lt.s32.totalorder %v3259, %v3269
    %v3271 = vsel %vm3270, %v3259, %v3269
    %v3272 = vsel %vm1719, %v2666, 2147483647
    %vm3273 = vcmp.lt.s32.totalorder %v3262, %v3272
    %v3274 = vsel %vm3273, %v3262, %v3272
    %v3275 = vsel %vm1719, %v2667, 2147483647
    %vm3276 = vcmp.lt.s32.totalorder %v3265, %v3275
    %v3277 = vsel %vm3276, %v3265, %v3275
    %v3278 = vsel %vm1719, %v2668, 2147483647
    %vm3279 = vcmp.lt.s32.totalorder %v3268, %v3278
    %v3280 = vsel %vm3279, %v3268, %v3278
    %v3281 = vsel %vm1719, %v2669, 2147483647
    %vm3282 = vcmp.lt.s32.totalorder %v3271, %v3281
    %v3283 = vsel %vm3282, %v3271, %v3281
    %v3284 = vsel %vm1719, %v2670, 2147483647
    %vm3285 = vcmp.lt.s32.totalorder %v3274, %v3284
    %v3286 = vsel %vm3285, %v3274, %v3284
    %v3287 = vsel %vm1719, %v2671, 2147483647
    %vm3288 = vcmp.lt.s32.totalorder %v3277, %v3287
    %v3289 = vsel %vm3288, %v3277, %v3287
    %v3290 = vsel %vm1719, %v2672, 2147483647
    %vm3291 = vcmp.lt.s32.totalorder %v3280, %v3290
    %v3292 = vsel %vm3291, %v3280, %v3290
    %v3293 = vsel %vm1719, %v2673, 2147483647
    %vm3294 = vcmp.lt.s32.totalorder %v3283, %v3293
    %v3295 = vsel %vm3294, %v3283, %v3293
    %v3296 = vsel %vm1719, %v2674, 2147483647
    %vm3297 = vcmp.lt.s32.totalorder %v3286, %v3296
    %v3298 = vsel %vm3297, %v3286, %v3296
    %v3299 = vsel %vm1719, %v2675, 2147483647
    %vm3300 = vcmp.lt.s32.totalorder %v3289, %v3299
    %v3301 = vsel %vm3300, %v3289, %v3299
    %v3302 = vsel %vm1719, %v2676, 2147483647
    %vm3303 = vcmp.lt.s32.totalorder %v3292, %v3302
    %v3304 = vsel %vm3303, %v3292, %v3302
    %v3305 = vsel %vm1719, %v2677, 2147483647
    %vm3306 = vcmp.lt.s32.totalorder %v3295, %v3305
    %v3307 = vsel %vm3306, %v3295, %v3305
    %v3308 = vsel %vm1719, %v2678, 2147483647
    %vm3309 = vcmp.lt.s32.totalorder %v3298, %v3308
    %v3310 = vsel %vm3309, %v3298, %v3308
    %v3311 = vsel %vm1719, %v2679, 2147483647
    %vm3312 = vcmp.lt.s32.totalorder %v3301, %v3311
    %v3313 = vsel %vm3312, %v3301, %v3311
    %v3314 = vsel %vm1719, %v2680, 2147483647
    %vm3315 = vcmp.lt.s32.totalorder %v3304, %v3314
    %v3316 = vsel %vm3315, %v3304, %v3314
    %v3317 = vsel %vm1719, %v2681, 2147483647
    %vm3318 = vcmp.lt.s32.totalorder %v3307, %v3317
    %v3319 = vsel %vm3318, %v3307, %v3317
    %v3320 = vsel %vm1719, %v2682, 2147483647
    %vm3321 = vcmp.lt.s32.totalorder %v3310, %v3320
    %v3322 = vsel %vm3321, %v3310, %v3320
    %v3323 = vsel %vm1719, %v2683, 2147483647
    %vm3324 = vcmp.lt.s32.totalorder %v3313, %v3323
    %v3325 = vsel %vm3324, %v3313, %v3323
    %v3326 = vsel %vm1719, %v2684, 2147483647
    %vm3327 = vcmp.lt.s32.totalorder %v3316, %v3326
    %v3328 = vsel %vm3327, %v3316, %v3326
    %v3329 = vsel %vm1719, %v2685, 2147483647
    %vm3330 = vcmp.lt.s32.totalorder %v3319, %v3329
    %v3331 = vsel %vm3330, %v3319, %v3329
    %v3332 = vsel %vm1719, %v2686, 2147483647
    %vm3333 = vcmp.lt.s32.totalorder %v3322, %v3332
    %v3334 = vsel %vm3333, %v3322, %v3332
    %v3335 = vsel %vm1719, %v2687, 2147483647
    %vm3336 = vcmp.lt.s32.totalorder %v3325, %v3335
    %v3337 = vsel %vm3336, %v3325, %v3335
    %v3338 = vsel %vm1719, %v2688, 2147483647
    %vm3339 = vcmp.lt.s32.totalorder %v3328, %v3338
    %v3340 = vsel %vm3339, %v3328, %v3338
    %v3341 = vsel %vm1719, %v2689, 2147483647
    %vm3342 = vcmp.lt.s32.totalorder %v3331, %v3341
    %v3343 = vsel %vm3342, %v3331, %v3341
    %v3344 = vsel %vm1719, %v2690, 2147483647
    %vm3345 = vcmp.lt.s32.totalorder %v3334, %v3344
    %v3346 = vsel %vm3345, %v3334, %v3344
    %v3347 = vsel %vm1719, %v2691, 2147483647
    %vm3348 = vcmp.lt.s32.totalorder %v3337, %v3347
    %v3349 = vsel %vm3348, %v3337, %v3347
    %v3350 = vsel %vm1719, %v2692, 2147483647
    %vm3351 = vcmp.lt.s32.totalorder %v3340, %v3350
    %v3352 = vsel %vm3351, %v3340, %v3350
    %v3353 = vsel %vm1719, %v2693, 2147483647
    %vm3354 = vcmp.lt.s32.totalorder %v3343, %v3353
    %v3355 = vsel %vm3354, %v3343, %v3353
    %v3356 = vsel %vm1719, %v2694, 2147483647
    %vm3357 = vcmp.lt.s32.totalorder %v3346, %v3356
    %v3358 = vsel %vm3357, %v3346, %v3356
    %v3359 = vsel %vm1719, %v2695, 2147483647
    %vm3360 = vcmp.lt.s32.totalorder %v3349, %v3359
    %v3361 = vsel %vm3360, %v3349, %v3359
    %v3362 = vsel %vm1719, %v2696, 2147483647
    %vm3363 = vcmp.lt.s32.totalorder %v3352, %v3362
    %v3364 = vsel %vm3363, %v3352, %v3362
    %v3365 = vsel %vm1719, %v2697, 2147483647
    %vm3366 = vcmp.lt.s32.totalorder %v3355, %v3365
    %v3367 = vsel %vm3366, %v3355, %v3365
    %v3368 = vsel %vm1719, %v2698, 2147483647
    %vm3369 = vcmp.lt.s32.totalorder %v3358, %v3368
    %v3370 = vsel %vm3369, %v3358, %v3368
    %v3371 = vsel %vm1719, %v2699, 2147483647
    %vm3372 = vcmp.lt.s32.totalorder %v3361, %v3371
    %v3373 = vsel %vm3372, %v3361, %v3371
    %v3374 = vsel %vm1719, %v2700, 2147483647
    %vm3375 = vcmp.lt.s32.totalorder %v3364, %v3374
    %v3376 = vsel %vm3375, %v3364, %v3374
    %v3377 = vsel %vm1719, %v2701, 2147483647
    %vm3378 = vcmp.lt.s32.totalorder %v3367, %v3377
    %v3379 = vsel %vm3378, %v3367, %v3377
    %v3380 = vsel %vm1719, %v2702, 2147483647
    %vm3381 = vcmp.lt.s32.totalorder %v3370, %v3380
    %v3382 = vsel %vm3381, %v3370, %v3380
    %v3383 = vsel %vm1719, %v2703, 2147483647
    %vm3384 = vcmp.lt.s32.totalorder %v3373, %v3383
    %v3385 = vsel %vm3384, %v3373, %v3383
    %v3386 = vsel %vm1719, %v2704, 2147483647
    %vm3387 = vcmp.lt.s32.totalorder %v3376, %v3386
    %v3388 = vsel %vm3387, %v3376, %v3386
    %v3389 = vsel %vm1719, %v2705, 2147483647
    %vm3390 = vcmp.lt.s32.totalorder %v3379, %v3389
    %v3391 = vsel %vm3390, %v3379, %v3389
    %v3392 = vsel %vm1719, %v2706, 2147483647
    %vm3393 = vcmp.lt.s32.totalorder %v3382, %v3392
    %v3394 = vsel %vm3393, %v3382, %v3392
    %v3395 = vsel %vm1719, %v2707, 2147483647
    %vm3396 = vcmp.lt.s32.totalorder %v3385, %v3395
    %v3397 = vsel %vm3396, %v3385, %v3395
    %v3398 = vsel %vm1719, %v2708, 2147483647
    %vm3399 = vcmp.lt.s32.totalorder %v3388, %v3398
    %v3400 = vsel %vm3399, %v3388, %v3398
    %v3401 = vsel %vm1719, %v2709, 2147483647
    %vm3402 = vcmp.lt.s32.totalorder %v3391, %v3401
    %v3403 = vsel %vm3402, %v3391, %v3401
    %v3404 = vsel %vm1719, %v2710, 2147483647
    %vm3405 = vcmp.lt.s32.totalorder %v3394, %v3404
    %v3406 = vsel %vm3405, %v3394, %v3404
    %v3407 = vsel %vm1719, %v2711, 2147483647
    %vm3408 = vcmp.lt.s32.totalorder %v3397, %v3407
    %v3409 = vsel %vm3408, %v3397, %v3407
    %v3410 = vsel %vm1719, %v2712, 2147483647
    %vm3411 = vcmp.lt.s32.totalorder %v3400, %v3410
    %v3412 = vsel %vm3411, %v3400, %v3410
    %v3413 = vsel %vm1719, %v2713, 2147483647
    %vm3414 = vcmp.lt.s32.totalorder %v3403, %v3413
    %v3415 = vsel %vm3414, %v3403, %v3413
    %v3416 = vsel %vm1719, %v2714, 2147483647
    %vm3417 = vcmp.lt.s32.totalorder %v3406, %v3416
    %v3418 = vsel %vm3417, %v3406, %v3416
    %v3419 = vsel %vm1719, %v2715, 2147483647
    %vm3420 = vcmp.lt.s32.totalorder %v3409, %v3419
    %v3421 = vsel %vm3420, %v3409, %v3419
    %v3422 = vsel %vm1719, %v2716, 2147483647
    %vm3423 = vcmp.lt.s32.totalorder %v3412, %v3422
    %v3424 = vsel %vm3423, %v3412, %v3422
    %v3425 = vsel %vm1719, %v2717, 2147483647
    %vm3426 = vcmp.lt.s32.totalorder %v3415, %v3425
    %v3427 = vsel %vm3426, %v3415, %v3425
    %v3428 = vsel %vm1719, %v2718, 2147483647
    %vm3429 = vcmp.lt.s32.totalorder %v3418, %v3428
    %v3430 = vsel %vm3429, %v3418, %v3428
    %v3431 = vsel %vm1719, %v2719, 2147483647
    %vm3432 = vcmp.lt.s32.totalorder %v3421, %v3431
    %v3433 = vsel %vm3432, %v3421, %v3431
    %v3434 = vsel %vm1719, %v2720, 2147483647
    %vm3435 = vcmp.lt.s32.totalorder %v3424, %v3434
    %v3436 = vsel %vm3435, %v3424, %v3434
    %v3437 = vsel %vm1719, %v2721, 2147483647
    %vm3438 = vcmp.lt.s32.totalorder %v3427, %v3437
    %v3439 = vsel %vm3438, %v3427, %v3437
    %v3440 = vsel %vm1719, %v2722, 2147483647
    %vm3441 = vcmp.lt.s32.totalorder %v3430, %v3440
    %v3442 = vsel %vm3441, %v3430, %v3440
    %v3443 = vsel %vm1719, %v2723, 2147483647
    %vm3444 = vcmp.lt.s32.totalorder %v3433, %v3443
    %v3445 = vsel %vm3444, %v3433, %v3443
    %v3446 = vsel %vm1719, %v2724, 2147483647
    %vm3447 = vcmp.lt.s32.totalorder %v3436, %v3446
    %v3448 = vsel %vm3447, %v3436, %v3446
    %v3449 = vsel %vm1719, %v2725, 2147483647
    %vm3450 = vcmp.lt.s32.totalorder %v3439, %v3449
    %v3451 = vsel %vm3450, %v3439, %v3449
    %v3452 = vsel %vm1719, %v2726, 2147483647
    %vm3453 = vcmp.lt.s32.totalorder %v3442, %v3452
    %v3454 = vsel %vm3453, %v3442, %v3452
    %v3455 = vsel %vm1719, %v2727, 2147483647
    %vm3456 = vcmp.lt.s32.totalorder %v3445, %v3455
    %v3457 = vsel %vm3456, %v3445, %v3455
    %v3458 = vsel %vm1719, %v2728, 2147483647
    %vm3459 = vcmp.lt.s32.totalorder %v3448, %v3458
    %v3460 = vsel %vm3459, %v3448, %v3458
    %v3461 = vsel %vm1719, %v2729, 2147483647
    %vm3462 = vcmp.lt.s32.totalorder %v3451, %v3461
    %v3463 = vsel %vm3462, %v3451, %v3461
    %v3464 = vsel %vm1719, %v2730, 2147483647
    %vm3465 = vcmp.lt.s32.totalorder %v3454, %v3464
    %v3466 = vsel %vm3465, %v3454, %v3464
    %v3467 = vsel %vm1719, %v2731, 2147483647
    %vm3468 = vcmp.lt.s32.totalorder %v3457, %v3467
    %v3469 = vsel %vm3468, %v3457, %v3467
    %v3470 = vsel %vm1719, %v2732, 2147483647
    %vm3471 = vcmp.lt.s32.totalorder %v3460, %v3470
    %v3472 = vsel %vm3471, %v3460, %v3470
    %v3473 = vsel %vm1719, %v2733, 2147483647
    %vm3474 = vcmp.lt.s32.totalorder %v3463, %v3473
    %v3475 = vsel %vm3474, %v3463, %v3473
    %v3476 = vsel %vm1719, %v2734, 2147483647
    %vm3477 = vcmp.lt.s32.totalorder %v3466, %v3476
    %v3478 = vsel %vm3477, %v3466, %v3476
    %v3479 = vsel %vm1719, %v2735, 2147483647
    %vm3480 = vcmp.lt.s32.totalorder %v3469, %v3479
    %v3481 = vsel %vm3480, %v3469, %v3479
    %v3482 = vsel %vm1719, %v2736, 2147483647
    %vm3483 = vcmp.lt.s32.totalorder %v3472, %v3482
    %v3484 = vsel %vm3483, %v3472, %v3482
    %v3485 = vsel %vm1719, %v2737, 2147483647
    %vm3486 = vcmp.lt.s32.totalorder %v3475, %v3485
    %v3487 = vsel %vm3486, %v3475, %v3485
    %v3488 = vsel %vm1719, %v2738, 2147483647
    %vm3489 = vcmp.lt.s32.totalorder %v3478, %v3488
    %v3490 = vsel %vm3489, %v3478, %v3488
    %v3491 = vsel %vm1719, %v2739, 2147483647
    %vm3492 = vcmp.lt.s32.totalorder %v3481, %v3491
    %v3493 = vsel %vm3492, %v3481, %v3491
    %v3494 = vsel %vm1719, %v2740, 2147483647
    %vm3495 = vcmp.lt.s32.totalorder %v3484, %v3494
    %v3496 = vsel %vm3495, %v3484, %v3494
    %v3497 = vsel %vm1719, %v2741, 2147483647
    %vm3498 = vcmp.lt.s32.totalorder %v3487, %v3497
    %v3499 = vsel %vm3498, %v3487, %v3497
    %v3500 = vsel %vm1719, %v2742, 2147483647
    %vm3501 = vcmp.lt.s32.totalorder %v3490, %v3500
    %v3502 = vsel %vm3501, %v3490, %v3500
    %vm3503 = vcmp.lt.s32.totalorder %v3493, %v3496
    %v3504 = vsel %vm3503, %v3493, %v3496
    %vm3505 = vcmp.lt.s32.totalorder %v3499, %v3502
    %v3506 = vsel %vm3505, %v3499, %v3502
    %vm3507 = vcmp.lt.s32.totalorder %v3504, %v3506
    %v3508 = vsel %vm3507, %v3504, %v3506
    %vm3509 = vcmp.ge.s32.totalorder %v3508, 16
    %v3510 = vsel %vm3509, 1, 0
    %vm3511 = vcmp.ge.s32.totalorder %v3508, 32
    %v3512 = vsel %vm3511, 1, 0
    %v3513 = vadd.s32 %v3510, %v3512
    %vm3514 = vcmp.ge.s32.totalorder %v3508, 48
    %v3515 = vsel %vm3514, 1, 0
    %v3516 = vadd.s32 %v3513, %v3515
    %vm3517 = vcmp.ge.s32.totalorder %v3508, 64
    %v3518 = vsel %vm3517, 1, 0
    %v3519 = vadd.s32 %v3516, %v3518
    %vm3520 = vcmp.ge.s32.totalorder %v3508, 80
    %v3521 = vsel %vm3520, 1, 0
    %v3522 = vadd.s32 %v3519, %v3521
    %vm3523 = vcmp.ge.s32.totalorder %v3508, 96
    %v3524 = vsel %vm3523, 1, 0
    %v3525 = vadd.s32 %v3522, %v3524
    %vm3526 = vcmp.ge.s32.totalorder %v3508, 112
    %v3527 = vsel %vm3526, 1, 0
    %v3528 = vadd.s32 %v3525, %v3527
    %vm3529 = vcmp.ge.s32.totalorder %v3508, 128
    %v3530 = vsel %vm3529, 1, 0
    %v3531 = vadd.s32 %v3528, %v3530
    %vm3532 = vcmp.ge.s32.totalorder %v3508, 144
    %v3533 = vsel %vm3532, 1, 0
    %v3534 = vadd.s32 %v3531, %v3533
    %vm3535 = vcmp.ge.s32.totalorder %v3508, 160
    %v3536 = vsel %vm3535, 1, 0
    %v3537 = vadd.s32 %v3534, %v3536
    %vm3538 = vcmp.ge.s32.totalorder %v3508, 176
    %v3539 = vsel %vm3538, 1, 0
    %v3540 = vadd.s32 %v3537, %v3539
    %vm3541 = vcmp.ge.s32.totalorder %v3508, 192
    %v3542 = vsel %vm3541, 1, 0
    %v3543 = vadd.s32 %v3540, %v3542
    %vm3544 = vcmp.ge.s32.totalorder %v3508, 208
    %v3545 = vsel %vm3544, 1, 0
    %v3546 = vadd.s32 %v3543, %v3545
    %vm3547 = vcmp.ge.s32.totalorder %v3508, 224
    %v3548 = vsel %vm3547, 1, 0
    %v3549 = vadd.s32 %v3546, %v3548
    %vm3550 = vcmp.ge.s32.totalorder %v3508, 240
    %v3551 = vsel %vm3550, 1, 0
    %v3552 = vadd.s32 %v3549, %v3551
    %v3553 = vmul.u32 %v3552, 16
    %v3554 = vsub.s32 %v3508, %v3553
    %v3555 = vadd.s32 %v3552, 4294967294
    %v3556 = vadd.s32 %v3554, 4294967294
    %vm3557 = vcmp.eq.s32.totalorder %v3556, 0
    %vm3558 = vcmp.eq.s32.totalorder %v3556, 1
    %vm3559 = vcmp.eq.s32.totalorder %v3556, 2
    %vm3560 = vcmp.eq.s32.totalorder %v3556, 3
    %vm3561 = vcmp.eq.s32.totalorder %v3556, 4
    %vm3562 = vcmp.eq.s32.totalorder %v3556, 5
    %vm3563 = vcmp.eq.s32.totalorder %v3556, 6
    %vm3564 = vcmp.eq.s32.totalorder %v3556, 7
    %vm3565 = vcmp.eq.s32.totalorder %v3556, 8
    %vm3566 = vcmp.eq.s32.totalorder %v3556, 9
    %vm3567 = vcmp.eq.s32.totalorder %v3556, 10
    %vm3568 = vcmp.eq.s32.totalorder %v3556, 11
    %vm3569 = vcmp.eq.s32.totalorder %v3556, 12
    %vm3570 = vcmp.eq.s32.totalorder %v3556, 13
    %vm3571 = vcmp.eq.s32.totalorder %v3556, 14
    %vm3572 = vcmp.eq.s32.totalorder %v3556, 15
    %v3573 = vadd.s32 %v3556, 1
    %vm3574 = vcmp.eq.s32.totalorder %v3573, 0
    %vm3575 = vcmp.eq.s32.totalorder %v3573, 1
    %vm3576 = vcmp.eq.s32.totalorder %v3573, 2
    %vm3577 = vcmp.eq.s32.totalorder %v3573, 3
    %vm3578 = vcmp.eq.s32.totalorder %v3573, 4
    %vm3579 = vcmp.eq.s32.totalorder %v3573, 5
    %vm3580 = vcmp.eq.s32.totalorder %v3573, 6
    %vm3581 = vcmp.eq.s32.totalorder %v3573, 7
    %vm3582 = vcmp.eq.s32.totalorder %v3573, 8
    %vm3583 = vcmp.eq.s32.totalorder %v3573, 9
    %vm3584 = vcmp.eq.s32.totalorder %v3573, 10
    %vm3585 = vcmp.eq.s32.totalorder %v3573, 11
    %vm3586 = vcmp.eq.s32.totalorder %v3573, 12
    %vm3587 = vcmp.eq.s32.totalorder %v3573, 13
    %vm3588 = vcmp.eq.s32.totalorder %v3573, 14
    %vm3589 = vcmp.eq.s32.totalorder %v3573, 15
    %v3590 = vadd.s32 %v3556, 2
    %vm3591 = vcmp.eq.s32.totalorder %v3590, 0
    %vm3592 = vcmp.eq.s32.totalorder %v3590, 1
    %vm3593 = vcmp.eq.s32.totalorder %v3590, 2
    %vm3594 = vcmp.eq.s32.totalorder %v3590, 3
    %vm3595 = vcmp.eq.s32.totalorder %v3590, 4
    %vm3596 = vcmp.eq.s32.totalorder %v3590, 5
    %vm3597 = vcmp.eq.s32.totalorder %v3590, 6
    %vm3598 = vcmp.eq.s32.totalorder %v3590, 7
    %vm3599 = vcmp.eq.s32.totalorder %v3590, 8
    %vm3600 = vcmp.eq.s32.totalorder %v3590, 9
    %vm3601 = vcmp.eq.s32.totalorder %v3590, 10
    %vm3602 = vcmp.eq.s32.totalorder %v3590, 11
    %vm3603 = vcmp.eq.s32.totalorder %v3590, 12
    %vm3604 = vcmp.eq.s32.totalorder %v3590, 13
    %vm3605 = vcmp.eq.s32.totalorder %v3590, 14
    %vm3606 = vcmp.eq.s32.totalorder %v3590, 15
    %v3607 = vadd.s32 %v3556, 3
    %vm3608 = vcmp.eq.s32.totalorder %v3607, 0
    %vm3609 = vcmp.eq.s32.totalorder %v3607, 1
    %vm3610 = vcmp.eq.s32.totalorder %v3607, 2
    %vm3611 = vcmp.eq.s32.totalorder %v3607, 3
    %vm3612 = vcmp.eq.s32.totalorder %v3607, 4
    %vm3613 = vcmp.eq.s32.totalorder %v3607, 5
    %vm3614 = vcmp.eq.s32.totalorder %v3607, 6
    %vm3615 = vcmp.eq.s32.totalorder %v3607, 7
    %vm3616 = vcmp.eq.s32.totalorder %v3607, 8
    %vm3617 = vcmp.eq.s32.totalorder %v3607, 9
    %vm3618 = vcmp.eq.s32.totalorder %v3607, 10
    %vm3619 = vcmp.eq.s32.totalorder %v3607, 11
    %vm3620 = vcmp.eq.s32.totalorder %v3607, 12
    %vm3621 = vcmp.eq.s32.totalorder %v3607, 13
    %vm3622 = vcmp.eq.s32.totalorder %v3607, 14
    %vm3623 = vcmp.eq.s32.totalorder %v3607, 15
    %vm3624 = vcmp.eq.s32.totalorder %v3555, 0
    %vm3625 = vcmp.eq.s32.totalorder %v3555, 1
    %vm3626 = vcmp.eq.s32.totalorder %v3555, 2
    %vm3627 = vcmp.eq.s32.totalorder %v3555, 3
    %vm3628 = vcmp.eq.s32.totalorder %v3555, 4
    %vm3629 = vcmp.eq.s32.totalorder %v3555, 5
    %vm3630 = vcmp.eq.s32.totalorder %v3555, 6
    %vm3631 = vcmp.eq.s32.totalorder %v3555, 7
    %vm3632 = vcmp.eq.s32.totalorder %v3555, 8
    %vm3633 = vcmp.eq.s32.totalorder %v3555, 9
    %vm3634 = vcmp.eq.s32.totalorder %v3555, 10
    %vm3635 = vcmp.eq.s32.totalorder %v3555, 11
    %vm3636 = vcmp.eq.s32.totalorder %v3555, 12
    %vm3637 = vcmp.eq.s32.totalorder %v3555, 13
    %vm3638 = vcmp.eq.s32.totalorder %v3555, 14
    %vm3639 = vcmp.eq.s32.totalorder %v3555, 15
    %v3640 = vsel %vm3624, 1, 0
    %v3641 = vsel %vm3625, 1, 0
    %v3642 = vsel %vm3626, 1, 0
    %v3643 = vsel %vm3627, 1, 0
    %v3644 = vsel %vm3628, 1, 0
    %v3645 = vsel %vm3629, 1, 0
    %v3646 = vsel %vm3630, 1, 0
    %v3647 = vsel %vm3631, 1, 0
    %v3648 = vsel %vm3632, 1, 0
    %v3649 = vsel %vm3633, 1, 0
    %v3650 = vsel %vm3634, 1, 0
    %v3651 = vsel %vm3635, 1, 0
    %v3652 = vsel %vm3636, 1, 0
    %v3653 = vsel %vm3637, 1, 0
    %v3654 = vsel %vm3638, 1, 0
    %v3655 = vsel %vm3639, 1, 0
    %vm3656 = vcmp.eq.s32.totalorder %v3640, 1
    %vm3657 = vcmp.eq.s32.totalorder %v3641, 1
    %vm3658 = vcmp.eq.s32.totalorder %v3642, 1
    %vm3659 = vcmp.eq.s32.totalorder %v3643, 1
    %vm3660 = vcmp.eq.s32.totalorder %v3644, 1
    %vm3661 = vcmp.eq.s32.totalorder %v3645, 1
    %vm3662 = vcmp.eq.s32.totalorder %v3646, 1
    %vm3663 = vcmp.eq.s32.totalorder %v3647, 1
    %vm3664 = vcmp.eq.s32.totalorder %v3648, 1
    %vm3665 = vcmp.eq.s32.totalorder %v3649, 1
    %vm3666 = vcmp.eq.s32.totalorder %v3650, 1
    %vm3667 = vcmp.eq.s32.totalorder %v3651, 1
    %vm3668 = vcmp.eq.s32.totalorder %v3652, 1
    %vm3669 = vcmp.eq.s32.totalorder %v3653, 1
    %vm3670 = vcmp.eq.s32.totalorder %v3654, 1
    %vm3671 = vcmp.eq.s32.totalorder %v3655, 1
    %v3672 = vsel %vm3656, %v23, 0.0
    %v3673 = vsel %vm3656, %v24, 0.0
    %v3674 = vsel %vm3656, %v25, 0.0
    %v3675 = vsel %vm3656, %v26, 0.0
    %v3676 = vsel %vm3656, %v27, 0.0
    %v3677 = vsel %vm3656, %v28, 0.0
    %v3678 = vsel %vm3656, %v29, 0.0
    %v3679 = vsel %vm3656, %v30, 0.0
    %v3680 = vsel %vm3656, %v31, 0.0
    %v3681 = vsel %vm3656, %v32, 0.0
    %v3682 = vsel %vm3656, %v33, 0.0
    %v3683 = vsel %vm3656, %v34, 0.0
    %v3684 = vsel %vm3656, %v35, 0.0
    %v3685 = vsel %vm3656, %v36, 0.0
    %v3686 = vsel %vm3656, %v37, 0.0
    %v3687 = vsel %vm3656, %v38, 0.0
    %v3688 = vsel %vm3657, %v39, 0.0
    %v3689 = vsel %vm3657, %v40, 0.0
    %v3690 = vsel %vm3657, %v41, 0.0
    %v3691 = vsel %vm3657, %v42, 0.0
    %v3692 = vsel %vm3657, %v43, 0.0
    %v3693 = vsel %vm3657, %v44, 0.0
    %v3694 = vsel %vm3657, %v45, 0.0
    %v3695 = vsel %vm3657, %v46, 0.0
    %v3696 = vsel %vm3657, %v47, 0.0
    %v3697 = vsel %vm3657, %v48, 0.0
    %v3698 = vsel %vm3657, %v49, 0.0
    %v3699 = vsel %vm3657, %v50, 0.0
    %v3700 = vsel %vm3657, %v51, 0.0
    %v3701 = vsel %vm3657, %v52, 0.0
    %v3702 = vsel %vm3657, %v53, 0.0
    %v3703 = vsel %vm3657, %v54, 0.0
    %v3704 = vsel %vm3658, %v55, 0.0
    %v3705 = vsel %vm3658, %v56, 0.0
    %v3706 = vsel %vm3658, %v57, 0.0
    %v3707 = vsel %vm3658, %v58, 0.0
    %v3708 = vsel %vm3658, %v59, 0.0
    %v3709 = vsel %vm3658, %v60, 0.0
    %v3710 = vsel %vm3658, %v61, 0.0
    %v3711 = vsel %vm3658, %v62, 0.0
    %v3712 = vsel %vm3658, %v63, 0.0
    %v3713 = vsel %vm3658, %v64, 0.0
    %v3714 = vsel %vm3658, %v65, 0.0
    %v3715 = vsel %vm3658, %v66, 0.0
    %v3716 = vsel %vm3658, %v67, 0.0
    %v3717 = vsel %vm3658, %v68, 0.0
    %v3718 = vsel %vm3658, %v69, 0.0
    %v3719 = vsel %vm3658, %v70, 0.0
    %v3720 = vsel %vm3659, %v71, 0.0
    %v3721 = vsel %vm3659, %v72, 0.0
    %v3722 = vsel %vm3659, %v73, 0.0
    %v3723 = vsel %vm3659, %v74, 0.0
    %v3724 = vsel %vm3659, %v75, 0.0
    %v3725 = vsel %vm3659, %v76, 0.0
    %v3726 = vsel %vm3659, %v77, 0.0
    %v3727 = vsel %vm3659, %v78, 0.0
    %v3728 = vsel %vm3659, %v79, 0.0
    %v3729 = vsel %vm3659, %v80, 0.0
    %v3730 = vsel %vm3659, %v81, 0.0
    %v3731 = vsel %vm3659, %v82, 0.0
    %v3732 = vsel %vm3659, %v83, 0.0
    %v3733 = vsel %vm3659, %v84, 0.0
    %v3734 = vsel %vm3659, %v85, 0.0
    %v3735 = vsel %vm3659, %v86, 0.0
    %v3736 = vsel %vm3660, %v87, 0.0
    %v3737 = vsel %vm3660, %v88, 0.0
    %v3738 = vsel %vm3660, %v89, 0.0
    %v3739 = vsel %vm3660, %v90, 0.0
    %v3740 = vsel %vm3660, %v91, 0.0
    %v3741 = vsel %vm3660, %v92, 0.0
    %v3742 = vsel %vm3660, %v93, 0.0
    %v3743 = vsel %vm3660, %v94, 0.0
    %v3744 = vsel %vm3660, %v95, 0.0
    %v3745 = vsel %vm3660, %v96, 0.0
    %v3746 = vsel %vm3660, %v97, 0.0
    %v3747 = vsel %vm3660, %v98, 0.0
    %v3748 = vsel %vm3660, %v99, 0.0
    %v3749 = vsel %vm3660, %v100, 0.0
    %v3750 = vsel %vm3660, %v101, 0.0
    %v3751 = vsel %vm3660, %v102, 0.0
    %v3752 = vsel %vm3661, %v103, 0.0
    %v3753 = vsel %vm3661, %v104, 0.0
    %v3754 = vsel %vm3661, %v105, 0.0
    %v3755 = vsel %vm3661, %v106, 0.0
    %v3756 = vsel %vm3661, %v107, 0.0
    %v3757 = vsel %vm3661, %v108, 0.0
    %v3758 = vsel %vm3661, %v109, 0.0
    %v3759 = vsel %vm3661, %v110, 0.0
    %v3760 = vsel %vm3661, %v111, 0.0
    %v3761 = vsel %vm3661, %v112, 0.0
    %v3762 = vsel %vm3661, %v113, 0.0
    %v3763 = vsel %vm3661, %v114, 0.0
    %v3764 = vsel %vm3661, %v115, 0.0
    %v3765 = vsel %vm3661, %v116, 0.0
    %v3766 = vsel %vm3661, %v117, 0.0
    %v3767 = vsel %vm3661, %v118, 0.0
    %v3768 = vsel %vm3662, %v119, 0.0
    %v3769 = vsel %vm3662, %v120, 0.0
    %v3770 = vsel %vm3662, %v121, 0.0
    %v3771 = vsel %vm3662, %v122, 0.0
    %v3772 = vsel %vm3662, %v123, 0.0
    %v3773 = vsel %vm3662, %v124, 0.0
    %v3774 = vsel %vm3662, %v125, 0.0
    %v3775 = vsel %vm3662, %v126, 0.0
    %v3776 = vsel %vm3662, %v127, 0.0
    %v3777 = vsel %vm3662, %v128, 0.0
    %v3778 = vsel %vm3662, %v129, 0.0
    %v3779 = vsel %vm3662, %v130, 0.0
    %v3780 = vsel %vm3662, %v131, 0.0
    %v3781 = vsel %vm3662, %v132, 0.0
    %v3782 = vsel %vm3662, %v133, 0.0
    %v3783 = vsel %vm3662, %v134, 0.0
    %v3784 = vsel %vm3663, %v135, 0.0
    %v3785 = vsel %vm3663, %v136, 0.0
    %v3786 = vsel %vm3663, %v137, 0.0
    %v3787 = vsel %vm3663, %v138, 0.0
    %v3788 = vsel %vm3663, %v139, 0.0
    %v3789 = vsel %vm3663, %v140, 0.0
    %v3790 = vsel %vm3663, %v141, 0.0
    %v3791 = vsel %vm3663, %v142, 0.0
    %v3792 = vsel %vm3663, %v143, 0.0
    %v3793 = vsel %vm3663, %v144, 0.0
    %v3794 = vsel %vm3663, %v145, 0.0
    %v3795 = vsel %vm3663, %v146, 0.0
    %v3796 = vsel %vm3663, %v147, 0.0
    %v3797 = vsel %vm3663, %v148, 0.0
    %v3798 = vsel %vm3663, %v149, 0.0
    %v3799 = vsel %vm3663, %v150, 0.0
    %v3800 = vsel %vm3664, %v151, 0.0
    %v3801 = vsel %vm3664, %v152, 0.0
    %v3802 = vsel %vm3664, %v153, 0.0
    %v3803 = vsel %vm3664, %v154, 0.0
    %v3804 = vsel %vm3664, %v155, 0.0
    %v3805 = vsel %vm3664, %v156, 0.0
    %v3806 = vsel %vm3664, %v157, 0.0
    %v3807 = vsel %vm3664, %v158, 0.0
    %v3808 = vsel %vm3664, %v159, 0.0
    %v3809 = vsel %vm3664, %v160, 0.0
    %v3810 = vsel %vm3664, %v161, 0.0
    %v3811 = vsel %vm3664, %v162, 0.0
    %v3812 = vsel %vm3664, %v163, 0.0
    %v3813 = vsel %vm3664, %v164, 0.0
    %v3814 = vsel %vm3664, %v165, 0.0
    %v3815 = vsel %vm3664, %v166, 0.0
    %v3816 = vsel %vm3665, %v167, 0.0
    %v3817 = vsel %vm3665, %v168, 0.0
    %v3818 = vsel %vm3665, %v169, 0.0
    %v3819 = vsel %vm3665, %v170, 0.0
    %v3820 = vsel %vm3665, %v171, 0.0
    %v3821 = vsel %vm3665, %v172, 0.0
    %v3822 = vsel %vm3665, %v173, 0.0
    %v3823 = vsel %vm3665, %v174, 0.0
    %v3824 = vsel %vm3665, %v175, 0.0
    %v3825 = vsel %vm3665, %v176, 0.0
    %v3826 = vsel %vm3665, %v177, 0.0
    %v3827 = vsel %vm3665, %v178, 0.0
    %v3828 = vsel %vm3665, %v179, 0.0
    %v3829 = vsel %vm3665, %v180, 0.0
    %v3830 = vsel %vm3665, %v181, 0.0
    %v3831 = vsel %vm3665, %v182, 0.0
    %v3832 = vsel %vm3666, %v183, 0.0
    %v3833 = vsel %vm3666, %v184, 0.0
    %v3834 = vsel %vm3666, %v185, 0.0
    %v3835 = vsel %vm3666, %v186, 0.0
    %v3836 = vsel %vm3666, %v187, 0.0
    %v3837 = vsel %vm3666, %v188, 0.0
    %v3838 = vsel %vm3666, %v189, 0.0
    %v3839 = vsel %vm3666, %v190, 0.0
    %v3840 = vsel %vm3666, %v191, 0.0
    %v3841 = vsel %vm3666, %v192, 0.0
    %v3842 = vsel %vm3666, %v193, 0.0
    %v3843 = vsel %vm3666, %v194, 0.0
    %v3844 = vsel %vm3666, %v195, 0.0
    %v3845 = vsel %vm3666, %v196, 0.0
    %v3846 = vsel %vm3666, %v197, 0.0
    %v3847 = vsel %vm3666, %v198, 0.0
    %v3848 = vsel %vm3667, %v199, 0.0
    %v3849 = vsel %vm3667, %v200, 0.0
    %v3850 = vsel %vm3667, %v201, 0.0
    %v3851 = vsel %vm3667, %v202, 0.0
    %v3852 = vsel %vm3667, %v203, 0.0
    %v3853 = vsel %vm3667, %v204, 0.0
    %v3854 = vsel %vm3667, %v205, 0.0
    %v3855 = vsel %vm3667, %v206, 0.0
    %v3856 = vsel %vm3667, %v207, 0.0
    %v3857 = vsel %vm3667, %v208, 0.0
    %v3858 = vsel %vm3667, %v209, 0.0
    %v3859 = vsel %vm3667, %v210, 0.0
    %v3860 = vsel %vm3667, %v211, 0.0
    %v3861 = vsel %vm3667, %v212, 0.0
    %v3862 = vsel %vm3667, %v213, 0.0
    %v3863 = vsel %vm3667, %v214, 0.0
    %v3864 = vsel %vm3668, %v215, 0.0
    %v3865 = vsel %vm3668, %v216, 0.0
    %v3866 = vsel %vm3668, %v217, 0.0
    %v3867 = vsel %vm3668, %v218, 0.0
    %v3868 = vsel %vm3668, %v219, 0.0
    %v3869 = vsel %vm3668, %v220, 0.0
    %v3870 = vsel %vm3668, %v221, 0.0
    %v3871 = vsel %vm3668, %v222, 0.0
    %v3872 = vsel %vm3668, %v223, 0.0
    %v3873 = vsel %vm3668, %v224, 0.0
    %v3874 = vsel %vm3668, %v225, 0.0
    %v3875 = vsel %vm3668, %v226, 0.0
    %v3876 = vsel %vm3668, %v227, 0.0
    %v3877 = vsel %vm3668, %v228, 0.0
    %v3878 = vsel %vm3668, %v229, 0.0
    %v3879 = vsel %vm3668, %v230, 0.0
    %v3880 = vsel %vm3669, %v231, 0.0
    %v3881 = vsel %vm3669, %v232, 0.0
    %v3882 = vsel %vm3669, %v233, 0.0
    %v3883 = vsel %vm3669, %v234, 0.0
    %v3884 = vsel %vm3669, %v235, 0.0
    %v3885 = vsel %vm3669, %v236, 0.0
    %v3886 = vsel %vm3669, %v237, 0.0
    %v3887 = vsel %vm3669, %v238, 0.0
    %v3888 = vsel %vm3669, %v239, 0.0
    %v3889 = vsel %vm3669, %v240, 0.0
    %v3890 = vsel %vm3669, %v241, 0.0
    %v3891 = vsel %vm3669, %v242, 0.0
    %v3892 = vsel %vm3669, %v243, 0.0
    %v3893 = vsel %vm3669, %v244, 0.0
    %v3894 = vsel %vm3669, %v245, 0.0
    %v3895 = vsel %vm3669, %v246, 0.0
    %v3896 = vsel %vm3670, %v247, 0.0
    %v3897 = vsel %vm3670, %v248, 0.0
    %v3898 = vsel %vm3670, %v249, 0.0
    %v3899 = vsel %vm3670, %v250, 0.0
    %v3900 = vsel %vm3670, %v251, 0.0
    %v3901 = vsel %vm3670, %v252, 0.0
    %v3902 = vsel %vm3670, %v253, 0.0
    %v3903 = vsel %vm3670, %v254, 0.0
    %v3904 = vsel %vm3670, %v255, 0.0
    %v3905 = vsel %vm3670, %v256, 0.0
    %v3906 = vsel %vm3670, %v257, 0.0
    %v3907 = vsel %vm3670, %v258, 0.0
    %v3908 = vsel %vm3670, %v259, 0.0
    %v3909 = vsel %vm3670, %v260, 0.0
    %v3910 = vsel %vm3670, %v261, 0.0
    %v3911 = vsel %vm3670, %v262, 0.0
    %v3912 = vsel %vm3671, %v263, 0.0
    %v3913 = vsel %vm3671, %v264, 0.0
    %v3914 = vsel %vm3671, %v265, 0.0
    %v3915 = vsel %vm3671, %v266, 0.0
    %v3916 = vsel %vm3671, %v267, 0.0
    %v3917 = vsel %vm3671, %v268, 0.0
    %v3918 = vsel %vm3671, %v269, 0.0
    %v3919 = vsel %vm3671, %v270, 0.0
    %v3920 = vsel %vm3671, %v271, 0.0
    %v3921 = vsel %vm3671, %v272, 0.0
    %v3922 = vsel %vm3671, %v273, 0.0
    %v3923 = vsel %vm3671, %v274, 0.0
    %v3924 = vsel %vm3671, %v275, 0.0
    %v3925 = vsel %vm3671, %v276, 0.0
    %v3926 = vsel %vm3671, %v277, 0.0
    %v3927 = vsel %vm3671, %v278, 0.0
    %v3928 = vsel %vm1719, %v3672, 0.0
    %v3929 = vsel %vm1719, %v3688, 0.0
    %v3930 = vadd.f32 %v3928, %v3929
    %v3931 = vsel %vm1719, %v3704, 0.0
    %v3932 = vadd.f32 %v3930, %v3931
    %v3933 = vsel %vm1719, %v3720, 0.0
    %v3934 = vadd.f32 %v3932, %v3933
    %v3935 = vsel %vm1719, %v3736, 0.0
    %v3936 = vadd.f32 %v3934, %v3935
    %v3937 = vsel %vm1719, %v3752, 0.0
    %v3938 = vadd.f32 %v3936, %v3937
    %v3939 = vsel %vm1719, %v3768, 0.0
    %v3940 = vadd.f32 %v3938, %v3939
    %v3941 = vsel %vm1719, %v3784, 0.0
    %v3942 = vadd.f32 %v3940, %v3941
    %v3943 = vsel %vm1719, %v3800, 0.0
    %v3944 = vadd.f32 %v3942, %v3943
    %v3945 = vsel %vm1719, %v3816, 0.0
    %v3946 = vadd.f32 %v3944, %v3945
    %v3947 = vsel %vm1719, %v3832, 0.0
    %v3948 = vadd.f32 %v3946, %v3947
    %v3949 = vsel %vm1719, %v3848, 0.0
    %v3950 = vadd.f32 %v3948, %v3949
    %v3951 = vsel %vm1719, %v3864, 0.0
    %v3952 = vadd.f32 %v3950, %v3951
    %v3953 = vsel %vm1719, %v3880, 0.0
    %v3954 = vadd.f32 %v3952, %v3953
    %v3955 = vsel %vm1719, %v3896, 0.0
    %v3956 = vadd.f32 %v3954, %v3955
    %v3957 = vsel %vm1719, %v3912, 0.0
    %v3958 = vadd.f32 %v3956, %v3957
    %v3959 = vsel %vm1719, %v3673, 0.0
    %v3960 = vsel %vm1719, %v3689, 0.0
    %v3961 = vadd.f32 %v3959, %v3960
    %v3962 = vsel %vm1719, %v3705, 0.0
    %v3963 = vadd.f32 %v3961, %v3962
    %v3964 = vsel %vm1719, %v3721, 0.0
    %v3965 = vadd.f32 %v3963, %v3964
    %v3966 = vsel %vm1719, %v3737, 0.0
    %v3967 = vadd.f32 %v3965, %v3966
    %v3968 = vsel %vm1719, %v3753, 0.0
    %v3969 = vadd.f32 %v3967, %v3968
    %v3970 = vsel %vm1719, %v3769, 0.0
    %v3971 = vadd.f32 %v3969, %v3970
    %v3972 = vsel %vm1719, %v3785, 0.0
    %v3973 = vadd.f32 %v3971, %v3972
    %v3974 = vsel %vm1719, %v3801, 0.0
    %v3975 = vadd.f32 %v3973, %v3974
    %v3976 = vsel %vm1719, %v3817, 0.0
    %v3977 = vadd.f32 %v3975, %v3976
    %v3978 = vsel %vm1719, %v3833, 0.0
    %v3979 = vadd.f32 %v3977, %v3978
    %v3980 = vsel %vm1719, %v3849, 0.0
    %v3981 = vadd.f32 %v3979, %v3980
    %v3982 = vsel %vm1719, %v3865, 0.0
    %v3983 = vadd.f32 %v3981, %v3982
    %v3984 = vsel %vm1719, %v3881, 0.0
    %v3985 = vadd.f32 %v3983, %v3984
    %v3986 = vsel %vm1719, %v3897, 0.0
    %v3987 = vadd.f32 %v3985, %v3986
    %v3988 = vsel %vm1719, %v3913, 0.0
    %v3989 = vadd.f32 %v3987, %v3988
    %v3990 = vsel %vm1719, %v3674, 0.0
    %v3991 = vsel %vm1719, %v3690, 0.0
    %v3992 = vadd.f32 %v3990, %v3991
    %v3993 = vsel %vm1719, %v3706, 0.0
    %v3994 = vadd.f32 %v3992, %v3993
    %v3995 = vsel %vm1719, %v3722, 0.0
    %v3996 = vadd.f32 %v3994, %v3995
    %v3997 = vsel %vm1719, %v3738, 0.0
    %v3998 = vadd.f32 %v3996, %v3997
    %v3999 = vsel %vm1719, %v3754, 0.0
    %v4000 = vadd.f32 %v3998, %v3999
    %v4001 = vsel %vm1719, %v3770, 0.0
    %v4002 = vadd.f32 %v4000, %v4001
    %v4003 = vsel %vm1719, %v3786, 0.0
    %v4004 = vadd.f32 %v4002, %v4003
    %v4005 = vsel %vm1719, %v3802, 0.0
    %v4006 = vadd.f32 %v4004, %v4005
    %v4007 = vsel %vm1719, %v3818, 0.0
    %v4008 = vadd.f32 %v4006, %v4007
    %v4009 = vsel %vm1719, %v3834, 0.0
    %v4010 = vadd.f32 %v4008, %v4009
    %v4011 = vsel %vm1719, %v3850, 0.0
    %v4012 = vadd.f32 %v4010, %v4011
    %v4013 = vsel %vm1719, %v3866, 0.0
    %v4014 = vadd.f32 %v4012, %v4013
    %v4015 = vsel %vm1719, %v3882, 0.0
    %v4016 = vadd.f32 %v4014, %v4015
    %v4017 = vsel %vm1719, %v3898, 0.0
    %v4018 = vadd.f32 %v4016, %v4017
    %v4019 = vsel %vm1719, %v3914, 0.0
    %v4020 = vadd.f32 %v4018, %v4019
    %v4021 = vsel %vm1719, %v3675, 0.0
    %v4022 = vsel %vm1719, %v3691, 0.0
    %v4023 = vadd.f32 %v4021, %v4022
    %v4024 = vsel %vm1719, %v3707, 0.0
    %v4025 = vadd.f32 %v4023, %v4024
    %v4026 = vsel %vm1719, %v3723, 0.0
    %v4027 = vadd.f32 %v4025, %v4026
    %v4028 = vsel %vm1719, %v3739, 0.0
    %v4029 = vadd.f32 %v4027, %v4028
    %v4030 = vsel %vm1719, %v3755, 0.0
    %v4031 = vadd.f32 %v4029, %v4030
    %v4032 = vsel %vm1719, %v3771, 0.0
    %v4033 = vadd.f32 %v4031, %v4032
    %v4034 = vsel %vm1719, %v3787, 0.0
    %v4035 = vadd.f32 %v4033, %v4034
    %v4036 = vsel %vm1719, %v3803, 0.0
    %v4037 = vadd.f32 %v4035, %v4036
    %v4038 = vsel %vm1719, %v3819, 0.0
    %v4039 = vadd.f32 %v4037, %v4038
    %v4040 = vsel %vm1719, %v3835, 0.0
    %v4041 = vadd.f32 %v4039, %v4040
    %v4042 = vsel %vm1719, %v3851, 0.0
    %v4043 = vadd.f32 %v4041, %v4042
    %v4044 = vsel %vm1719, %v3867, 0.0
    %v4045 = vadd.f32 %v4043, %v4044
    %v4046 = vsel %vm1719, %v3883, 0.0
    %v4047 = vadd.f32 %v4045, %v4046
    %v4048 = vsel %vm1719, %v3899, 0.0
    %v4049 = vadd.f32 %v4047, %v4048
    %v4050 = vsel %vm1719, %v3915, 0.0
    %v4051 = vadd.f32 %v4049, %v4050
    %v4052 = vsel %vm1719, %v3676, 0.0
    %v4053 = vsel %vm1719, %v3692, 0.0
    %v4054 = vadd.f32 %v4052, %v4053
    %v4055 = vsel %vm1719, %v3708, 0.0
    %v4056 = vadd.f32 %v4054, %v4055
    %v4057 = vsel %vm1719, %v3724, 0.0
    %v4058 = vadd.f32 %v4056, %v4057
    %v4059 = vsel %vm1719, %v3740, 0.0
    %v4060 = vadd.f32 %v4058, %v4059
    %v4061 = vsel %vm1719, %v3756, 0.0
    %v4062 = vadd.f32 %v4060, %v4061
    %v4063 = vsel %vm1719, %v3772, 0.0
    %v4064 = vadd.f32 %v4062, %v4063
    %v4065 = vsel %vm1719, %v3788, 0.0
    %v4066 = vadd.f32 %v4064, %v4065
    %v4067 = vsel %vm1719, %v3804, 0.0
    %v4068 = vadd.f32 %v4066, %v4067
    %v4069 = vsel %vm1719, %v3820, 0.0
    %v4070 = vadd.f32 %v4068, %v4069
    %v4071 = vsel %vm1719, %v3836, 0.0
    %v4072 = vadd.f32 %v4070, %v4071
    %v4073 = vsel %vm1719, %v3852, 0.0
    %v4074 = vadd.f32 %v4072, %v4073
    %v4075 = vsel %vm1719, %v3868, 0.0
    %v4076 = vadd.f32 %v4074, %v4075
    %v4077 = vsel %vm1719, %v3884, 0.0
    %v4078 = vadd.f32 %v4076, %v4077
    %v4079 = vsel %vm1719, %v3900, 0.0
    %v4080 = vadd.f32 %v4078, %v4079
    %v4081 = vsel %vm1719, %v3916, 0.0
    %v4082 = vadd.f32 %v4080, %v4081
    %v4083 = vsel %vm1719, %v3677, 0.0
    %v4084 = vsel %vm1719, %v3693, 0.0
    %v4085 = vadd.f32 %v4083, %v4084
    %v4086 = vsel %vm1719, %v3709, 0.0
    %v4087 = vadd.f32 %v4085, %v4086
    %v4088 = vsel %vm1719, %v3725, 0.0
    %v4089 = vadd.f32 %v4087, %v4088
    %v4090 = vsel %vm1719, %v3741, 0.0
    %v4091 = vadd.f32 %v4089, %v4090
    %v4092 = vsel %vm1719, %v3757, 0.0
    %v4093 = vadd.f32 %v4091, %v4092
    %v4094 = vsel %vm1719, %v3773, 0.0
    %v4095 = vadd.f32 %v4093, %v4094
    %v4096 = vsel %vm1719, %v3789, 0.0
    %v4097 = vadd.f32 %v4095, %v4096
    %v4098 = vsel %vm1719, %v3805, 0.0
    %v4099 = vadd.f32 %v4097, %v4098
    %v4100 = vsel %vm1719, %v3821, 0.0
    %v4101 = vadd.f32 %v4099, %v4100
    %v4102 = vsel %vm1719, %v3837, 0.0
    %v4103 = vadd.f32 %v4101, %v4102
    %v4104 = vsel %vm1719, %v3853, 0.0
    %v4105 = vadd.f32 %v4103, %v4104
    %v4106 = vsel %vm1719, %v3869, 0.0
    %v4107 = vadd.f32 %v4105, %v4106
    %v4108 = vsel %vm1719, %v3885, 0.0
    %v4109 = vadd.f32 %v4107, %v4108
    %v4110 = vsel %vm1719, %v3901, 0.0
    %v4111 = vadd.f32 %v4109, %v4110
    %v4112 = vsel %vm1719, %v3917, 0.0
    %v4113 = vadd.f32 %v4111, %v4112
    %v4114 = vsel %vm1719, %v3678, 0.0
    %v4115 = vsel %vm1719, %v3694, 0.0
    %v4116 = vadd.f32 %v4114, %v4115
    %v4117 = vsel %vm1719, %v3710, 0.0
    %v4118 = vadd.f32 %v4116, %v4117
    %v4119 = vsel %vm1719, %v3726, 0.0
    %v4120 = vadd.f32 %v4118, %v4119
    %v4121 = vsel %vm1719, %v3742, 0.0
    %v4122 = vadd.f32 %v4120, %v4121
    %v4123 = vsel %vm1719, %v3758, 0.0
    %v4124 = vadd.f32 %v4122, %v4123
    %v4125 = vsel %vm1719, %v3774, 0.0
    %v4126 = vadd.f32 %v4124, %v4125
    %v4127 = vsel %vm1719, %v3790, 0.0
    %v4128 = vadd.f32 %v4126, %v4127
    %v4129 = vsel %vm1719, %v3806, 0.0
    %v4130 = vadd.f32 %v4128, %v4129
    %v4131 = vsel %vm1719, %v3822, 0.0
    %v4132 = vadd.f32 %v4130, %v4131
    %v4133 = vsel %vm1719, %v3838, 0.0
    %v4134 = vadd.f32 %v4132, %v4133
    %v4135 = vsel %vm1719, %v3854, 0.0
    %v4136 = vadd.f32 %v4134, %v4135
    %v4137 = vsel %vm1719, %v3870, 0.0
    %v4138 = vadd.f32 %v4136, %v4137
    %v4139 = vsel %vm1719, %v3886, 0.0
    %v4140 = vadd.f32 %v4138, %v4139
    %v4141 = vsel %vm1719, %v3902, 0.0
    %v4142 = vadd.f32 %v4140, %v4141
    %v4143 = vsel %vm1719, %v3918, 0.0
    %v4144 = vadd.f32 %v4142, %v4143
    %v4145 = vsel %vm1719, %v3679, 0.0
    %v4146 = vsel %vm1719, %v3695, 0.0
    %v4147 = vadd.f32 %v4145, %v4146
    %v4148 = vsel %vm1719, %v3711, 0.0
    %v4149 = vadd.f32 %v4147, %v4148
    %v4150 = vsel %vm1719, %v3727, 0.0
    %v4151 = vadd.f32 %v4149, %v4150
    %v4152 = vsel %vm1719, %v3743, 0.0
    %v4153 = vadd.f32 %v4151, %v4152
    %v4154 = vsel %vm1719, %v3759, 0.0
    %v4155 = vadd.f32 %v4153, %v4154
    %v4156 = vsel %vm1719, %v3775, 0.0
    %v4157 = vadd.f32 %v4155, %v4156
    %v4158 = vsel %vm1719, %v3791, 0.0
    %v4159 = vadd.f32 %v4157, %v4158
    %v4160 = vsel %vm1719, %v3807, 0.0
    %v4161 = vadd.f32 %v4159, %v4160
    %v4162 = vsel %vm1719, %v3823, 0.0
    %v4163 = vadd.f32 %v4161, %v4162
    %v4164 = vsel %vm1719, %v3839, 0.0
    %v4165 = vadd.f32 %v4163, %v4164
    %v4166 = vsel %vm1719, %v3855, 0.0
    %v4167 = vadd.f32 %v4165, %v4166
    %v4168 = vsel %vm1719, %v3871, 0.0
    %v4169 = vadd.f32 %v4167, %v4168
    %v4170 = vsel %vm1719, %v3887, 0.0
    %v4171 = vadd.f32 %v4169, %v4170
    %v4172 = vsel %vm1719, %v3903, 0.0
    %v4173 = vadd.f32 %v4171, %v4172
    %v4174 = vsel %vm1719, %v3919, 0.0
    %v4175 = vadd.f32 %v4173, %v4174
    %v4176 = vsel %vm1719, %v3680, 0.0
    %v4177 = vsel %vm1719, %v3696, 0.0
    %v4178 = vadd.f32 %v4176, %v4177
    %v4179 = vsel %vm1719, %v3712, 0.0
    %v4180 = vadd.f32 %v4178, %v4179
    %v4181 = vsel %vm1719, %v3728, 0.0
    %v4182 = vadd.f32 %v4180, %v4181
    %v4183 = vsel %vm1719, %v3744, 0.0
    %v4184 = vadd.f32 %v4182, %v4183
    %v4185 = vsel %vm1719, %v3760, 0.0
    %v4186 = vadd.f32 %v4184, %v4185
    %v4187 = vsel %vm1719, %v3776, 0.0
    %v4188 = vadd.f32 %v4186, %v4187
    %v4189 = vsel %vm1719, %v3792, 0.0
    %v4190 = vadd.f32 %v4188, %v4189
    %v4191 = vsel %vm1719, %v3808, 0.0
    %v4192 = vadd.f32 %v4190, %v4191
    %v4193 = vsel %vm1719, %v3824, 0.0
    %v4194 = vadd.f32 %v4192, %v4193
    %v4195 = vsel %vm1719, %v3840, 0.0
    %v4196 = vadd.f32 %v4194, %v4195
    %v4197 = vsel %vm1719, %v3856, 0.0
    %v4198 = vadd.f32 %v4196, %v4197
    %v4199 = vsel %vm1719, %v3872, 0.0
    %v4200 = vadd.f32 %v4198, %v4199
    %v4201 = vsel %vm1719, %v3888, 0.0
    %v4202 = vadd.f32 %v4200, %v4201
    %v4203 = vsel %vm1719, %v3904, 0.0
    %v4204 = vadd.f32 %v4202, %v4203
    %v4205 = vsel %vm1719, %v3920, 0.0
    %v4206 = vadd.f32 %v4204, %v4205
    %v4207 = vsel %vm1719, %v3681, 0.0
    %v4208 = vsel %vm1719, %v3697, 0.0
    %v4209 = vadd.f32 %v4207, %v4208
    %v4210 = vsel %vm1719, %v3713, 0.0
    %v4211 = vadd.f32 %v4209, %v4210
    %v4212 = vsel %vm1719, %v3729, 0.0
    %v4213 = vadd.f32 %v4211, %v4212
    %v4214 = vsel %vm1719, %v3745, 0.0
    %v4215 = vadd.f32 %v4213, %v4214
    %v4216 = vsel %vm1719, %v3761, 0.0
    %v4217 = vadd.f32 %v4215, %v4216
    %v4218 = vsel %vm1719, %v3777, 0.0
    %v4219 = vadd.f32 %v4217, %v4218
    %v4220 = vsel %vm1719, %v3793, 0.0
    %v4221 = vadd.f32 %v4219, %v4220
    %v4222 = vsel %vm1719, %v3809, 0.0
    %v4223 = vadd.f32 %v4221, %v4222
    %v4224 = vsel %vm1719, %v3825, 0.0
    %v4225 = vadd.f32 %v4223, %v4224
    %v4226 = vsel %vm1719, %v3841, 0.0
    %v4227 = vadd.f32 %v4225, %v4226
    %v4228 = vsel %vm1719, %v3857, 0.0
    %v4229 = vadd.f32 %v4227, %v4228
    %v4230 = vsel %vm1719, %v3873, 0.0
    %v4231 = vadd.f32 %v4229, %v4230
    %v4232 = vsel %vm1719, %v3889, 0.0
    %v4233 = vadd.f32 %v4231, %v4232
    %v4234 = vsel %vm1719, %v3905, 0.0
    %v4235 = vadd.f32 %v4233, %v4234
    %v4236 = vsel %vm1719, %v3921, 0.0
    %v4237 = vadd.f32 %v4235, %v4236
    %v4238 = vsel %vm1719, %v3682, 0.0
    %v4239 = vsel %vm1719, %v3698, 0.0
    %v4240 = vadd.f32 %v4238, %v4239
    %v4241 = vsel %vm1719, %v3714, 0.0
    %v4242 = vadd.f32 %v4240, %v4241
    %v4243 = vsel %vm1719, %v3730, 0.0
    %v4244 = vadd.f32 %v4242, %v4243
    %v4245 = vsel %vm1719, %v3746, 0.0
    %v4246 = vadd.f32 %v4244, %v4245
    %v4247 = vsel %vm1719, %v3762, 0.0
    %v4248 = vadd.f32 %v4246, %v4247
    %v4249 = vsel %vm1719, %v3778, 0.0
    %v4250 = vadd.f32 %v4248, %v4249
    %v4251 = vsel %vm1719, %v3794, 0.0
    %v4252 = vadd.f32 %v4250, %v4251
    %v4253 = vsel %vm1719, %v3810, 0.0
    %v4254 = vadd.f32 %v4252, %v4253
    %v4255 = vsel %vm1719, %v3826, 0.0
    %v4256 = vadd.f32 %v4254, %v4255
    %v4257 = vsel %vm1719, %v3842, 0.0
    %v4258 = vadd.f32 %v4256, %v4257
    %v4259 = vsel %vm1719, %v3858, 0.0
    %v4260 = vadd.f32 %v4258, %v4259
    %v4261 = vsel %vm1719, %v3874, 0.0
    %v4262 = vadd.f32 %v4260, %v4261
    %v4263 = vsel %vm1719, %v3890, 0.0
    %v4264 = vadd.f32 %v4262, %v4263
    %v4265 = vsel %vm1719, %v3906, 0.0
    %v4266 = vadd.f32 %v4264, %v4265
    %v4267 = vsel %vm1719, %v3922, 0.0
    %v4268 = vadd.f32 %v4266, %v4267
    %v4269 = vsel %vm1719, %v3683, 0.0
    %v4270 = vsel %vm1719, %v3699, 0.0
    %v4271 = vadd.f32 %v4269, %v4270
    %v4272 = vsel %vm1719, %v3715, 0.0
    %v4273 = vadd.f32 %v4271, %v4272
    %v4274 = vsel %vm1719, %v3731, 0.0
    %v4275 = vadd.f32 %v4273, %v4274
    %v4276 = vsel %vm1719, %v3747, 0.0
    %v4277 = vadd.f32 %v4275, %v4276
    %v4278 = vsel %vm1719, %v3763, 0.0
    %v4279 = vadd.f32 %v4277, %v4278
    %v4280 = vsel %vm1719, %v3779, 0.0
    %v4281 = vadd.f32 %v4279, %v4280
    %v4282 = vsel %vm1719, %v3795, 0.0
    %v4283 = vadd.f32 %v4281, %v4282
    %v4284 = vsel %vm1719, %v3811, 0.0
    %v4285 = vadd.f32 %v4283, %v4284
    %v4286 = vsel %vm1719, %v3827, 0.0
    %v4287 = vadd.f32 %v4285, %v4286
    %v4288 = vsel %vm1719, %v3843, 0.0
    %v4289 = vadd.f32 %v4287, %v4288
    %v4290 = vsel %vm1719, %v3859, 0.0
    %v4291 = vadd.f32 %v4289, %v4290
    %v4292 = vsel %vm1719, %v3875, 0.0
    %v4293 = vadd.f32 %v4291, %v4292
    %v4294 = vsel %vm1719, %v3891, 0.0
    %v4295 = vadd.f32 %v4293, %v4294
    %v4296 = vsel %vm1719, %v3907, 0.0
    %v4297 = vadd.f32 %v4295, %v4296
    %v4298 = vsel %vm1719, %v3923, 0.0
    %v4299 = vadd.f32 %v4297, %v4298
    %v4300 = vsel %vm1719, %v3684, 0.0
    %v4301 = vsel %vm1719, %v3700, 0.0
    %v4302 = vadd.f32 %v4300, %v4301
    %v4303 = vsel %vm1719, %v3716, 0.0
    %v4304 = vadd.f32 %v4302, %v4303
    %v4305 = vsel %vm1719, %v3732, 0.0
    %v4306 = vadd.f32 %v4304, %v4305
    %v4307 = vsel %vm1719, %v3748, 0.0
    %v4308 = vadd.f32 %v4306, %v4307
    %v4309 = vsel %vm1719, %v3764, 0.0
    %v4310 = vadd.f32 %v4308, %v4309
    %v4311 = vsel %vm1719, %v3780, 0.0
    %v4312 = vadd.f32 %v4310, %v4311
    %v4313 = vsel %vm1719, %v3796, 0.0
    %v4314 = vadd.f32 %v4312, %v4313
    %v4315 = vsel %vm1719, %v3812, 0.0
    %v4316 = vadd.f32 %v4314, %v4315
    %v4317 = vsel %vm1719, %v3828, 0.0
    %v4318 = vadd.f32 %v4316, %v4317
    %v4319 = vsel %vm1719, %v3844, 0.0
    %v4320 = vadd.f32 %v4318, %v4319
    %v4321 = vsel %vm1719, %v3860, 0.0
    %v4322 = vadd.f32 %v4320, %v4321
    %v4323 = vsel %vm1719, %v3876, 0.0
    %v4324 = vadd.f32 %v4322, %v4323
    %v4325 = vsel %vm1719, %v3892, 0.0
    %v4326 = vadd.f32 %v4324, %v4325
    %v4327 = vsel %vm1719, %v3908, 0.0
    %v4328 = vadd.f32 %v4326, %v4327
    %v4329 = vsel %vm1719, %v3924, 0.0
    %v4330 = vadd.f32 %v4328, %v4329
    %v4331 = vsel %vm1719, %v3685, 0.0
    %v4332 = vsel %vm1719, %v3701, 0.0
    %v4333 = vadd.f32 %v4331, %v4332
    %v4334 = vsel %vm1719, %v3717, 0.0
    %v4335 = vadd.f32 %v4333, %v4334
    %v4336 = vsel %vm1719, %v3733, 0.0
    %v4337 = vadd.f32 %v4335, %v4336
    %v4338 = vsel %vm1719, %v3749, 0.0
    %v4339 = vadd.f32 %v4337, %v4338
    %v4340 = vsel %vm1719, %v3765, 0.0
    %v4341 = vadd.f32 %v4339, %v4340
    %v4342 = vsel %vm1719, %v3781, 0.0
    %v4343 = vadd.f32 %v4341, %v4342
    %v4344 = vsel %vm1719, %v3797, 0.0
    %v4345 = vadd.f32 %v4343, %v4344
    %v4346 = vsel %vm1719, %v3813, 0.0
    %v4347 = vadd.f32 %v4345, %v4346
    %v4348 = vsel %vm1719, %v3829, 0.0
    %v4349 = vadd.f32 %v4347, %v4348
    %v4350 = vsel %vm1719, %v3845, 0.0
    %v4351 = vadd.f32 %v4349, %v4350
    %v4352 = vsel %vm1719, %v3861, 0.0
    %v4353 = vadd.f32 %v4351, %v4352
    %v4354 = vsel %vm1719, %v3877, 0.0
    %v4355 = vadd.f32 %v4353, %v4354
    %v4356 = vsel %vm1719, %v3893, 0.0
    %v4357 = vadd.f32 %v4355, %v4356
    %v4358 = vsel %vm1719, %v3909, 0.0
    %v4359 = vadd.f32 %v4357, %v4358
    %v4360 = vsel %vm1719, %v3925, 0.0
    %v4361 = vadd.f32 %v4359, %v4360
    %v4362 = vsel %vm1719, %v3686, 0.0
    %v4363 = vsel %vm1719, %v3702, 0.0
    %v4364 = vadd.f32 %v4362, %v4363
    %v4365 = vsel %vm1719, %v3718, 0.0
    %v4366 = vadd.f32 %v4364, %v4365
    %v4367 = vsel %vm1719, %v3734, 0.0
    %v4368 = vadd.f32 %v4366, %v4367
    %v4369 = vsel %vm1719, %v3750, 0.0
    %v4370 = vadd.f32 %v4368, %v4369
    %v4371 = vsel %vm1719, %v3766, 0.0
    %v4372 = vadd.f32 %v4370, %v4371
    %v4373 = vsel %vm1719, %v3782, 0.0
    %v4374 = vadd.f32 %v4372, %v4373
    %v4375 = vsel %vm1719, %v3798, 0.0
    %v4376 = vadd.f32 %v4374, %v4375
    %v4377 = vsel %vm1719, %v3814, 0.0
    %v4378 = vadd.f32 %v4376, %v4377
    %v4379 = vsel %vm1719, %v3830, 0.0
    %v4380 = vadd.f32 %v4378, %v4379
    %v4381 = vsel %vm1719, %v3846, 0.0
    %v4382 = vadd.f32 %v4380, %v4381
    %v4383 = vsel %vm1719, %v3862, 0.0
    %v4384 = vadd.f32 %v4382, %v4383
    %v4385 = vsel %vm1719, %v3878, 0.0
    %v4386 = vadd.f32 %v4384, %v4385
    %v4387 = vsel %vm1719, %v3894, 0.0
    %v4388 = vadd.f32 %v4386, %v4387
    %v4389 = vsel %vm1719, %v3910, 0.0
    %v4390 = vadd.f32 %v4388, %v4389
    %v4391 = vsel %vm1719, %v3926, 0.0
    %v4392 = vadd.f32 %v4390, %v4391
    %v4393 = vsel %vm1719, %v3687, 0.0
    %v4394 = vsel %vm1719, %v3703, 0.0
    %v4395 = vadd.f32 %v4393, %v4394
    %v4396 = vsel %vm1719, %v3719, 0.0
    %v4397 = vadd.f32 %v4395, %v4396
    %v4398 = vsel %vm1719, %v3735, 0.0
    %v4399 = vadd.f32 %v4397, %v4398
    %v4400 = vsel %vm1719, %v3751, 0.0
    %v4401 = vadd.f32 %v4399, %v4400
    %v4402 = vsel %vm1719, %v3767, 0.0
    %v4403 = vadd.f32 %v4401, %v4402
    %v4404 = vsel %vm1719, %v3783, 0.0
    %v4405 = vadd.f32 %v4403, %v4404
    %v4406 = vsel %vm1719, %v3799, 0.0
    %v4407 = vadd.f32 %v4405, %v4406
    %v4408 = vsel %vm1719, %v3815, 0.0
    %v4409 = vadd.f32 %v4407, %v4408
    %v4410 = vsel %vm1719, %v3831, 0.0
    %v4411 = vadd.f32 %v4409, %v4410
    %v4412 = vsel %vm1719, %v3847, 0.0
    %v4413 = vadd.f32 %v4411, %v4412
    %v4414 = vsel %vm1719, %v3863, 0.0
    %v4415 = vadd.f32 %v4413, %v4414
    %v4416 = vsel %vm1719, %v3879, 0.0
    %v4417 = vadd.f32 %v4415, %v4416
    %v4418 = vsel %vm1719, %v3895, 0.0
    %v4419 = vadd.f32 %v4417, %v4418
    %v4420 = vsel %vm1719, %v3911, 0.0
    %v4421 = vadd.f32 %v4419, %v4420
    %v4422 = vsel %vm1719, %v3927, 0.0
    %v4423 = vadd.f32 %v4421, %v4422
    %v4424 = vsel %vm3557, %v3958, 0.0
    %v4425 = vsel %vm3558, %v3989, 0.0
    %v4426 = vsel %vm3559, %v4020, 0.0
    %v4427 = vsel %vm3560, %v4051, 0.0
    %v4428 = vsel %vm3561, %v4082, 0.0
    %v4429 = vsel %vm3562, %v4113, 0.0
    %v4430 = vsel %vm3563, %v4144, 0.0
    %v4431 = vsel %vm3564, %v4175, 0.0
    %v4432 = vsel %vm3565, %v4206, 0.0
    %v4433 = vsel %vm3566, %v4237, 0.0
    %v4434 = vsel %vm3567, %v4268, 0.0
    %v4435 = vsel %vm3568, %v4299, 0.0
    %v4436 = vsel %vm3569, %v4330, 0.0
    %v4437 = vsel %vm3570, %v4361, 0.0
    %v4438 = vsel %vm3571, %v4392, 0.0
    %v4439 = vsel %vm3572, %v4423, 0.0
    %v4440 = vsel %vm1719, %v4424, 0.0
    %v4441 = vsel %vm1719, %v4425, 0.0
    %v4442 = vadd.f32 %v4440, %v4441
    %v4443 = vsel %vm1719, %v4426, 0.0
    %v4444 = vadd.f32 %v4442, %v4443
    %v4445 = vsel %vm1719, %v4427, 0.0
    %v4446 = vadd.f32 %v4444, %v4445
    %v4447 = vsel %vm1719, %v4428, 0.0
    %v4448 = vadd.f32 %v4446, %v4447
    %v4449 = vsel %vm1719, %v4429, 0.0
    %v4450 = vadd.f32 %v4448, %v4449
    %v4451 = vsel %vm1719, %v4430, 0.0
    %v4452 = vadd.f32 %v4450, %v4451
    %v4453 = vsel %vm1719, %v4431, 0.0
    %v4454 = vadd.f32 %v4452, %v4453
    %v4455 = vsel %vm1719, %v4432, 0.0
    %v4456 = vadd.f32 %v4454, %v4455
    %v4457 = vsel %vm1719, %v4433, 0.0
    %v4458 = vadd.f32 %v4456, %v4457
    %v4459 = vsel %vm1719, %v4434, 0.0
    %v4460 = vadd.f32 %v4458, %v4459
    %v4461 = vsel %vm1719, %v4435, 0.0
    %v4462 = vadd.f32 %v4460, %v4461
    %v4463 = vsel %vm1719, %v4436, 0.0
    %v4464 = vadd.f32 %v4462, %v4463
    %v4465 = vsel %vm1719, %v4437, 0.0
    %v4466 = vadd.f32 %v4464, %v4465
    %v4467 = vsel %vm1719, %v4438, 0.0
    %v4468 = vadd.f32 %v4466, %v4467
    %v4469 = vsel %vm1719, %v4439, 0.0
    %v4470 = vadd.f32 %v4468, %v4469
    %v4471 = vsel %vm3574, %v3958, 0.0
    %v4472 = vsel %vm3575, %v3989, 0.0
    %v4473 = vsel %vm3576, %v4020, 0.0
    %v4474 = vsel %vm3577, %v4051, 0.0
    %v4475 = vsel %vm3578, %v4082, 0.0
    %v4476 = vsel %vm3579, %v4113, 0.0
    %v4477 = vsel %vm3580, %v4144, 0.0
    %v4478 = vsel %vm3581, %v4175, 0.0
    %v4479 = vsel %vm3582, %v4206, 0.0
    %v4480 = vsel %vm3583, %v4237, 0.0
    %v4481 = vsel %vm3584, %v4268, 0.0
    %v4482 = vsel %vm3585, %v4299, 0.0
    %v4483 = vsel %vm3586, %v4330, 0.0
    %v4484 = vsel %vm3587, %v4361, 0.0
    %v4485 = vsel %vm3588, %v4392, 0.0
    %v4486 = vsel %vm3589, %v4423, 0.0
    %v4487 = vsel %vm1719, %v4471, 0.0
    %v4488 = vsel %vm1719, %v4472, 0.0
    %v4489 = vadd.f32 %v4487, %v4488
    %v4490 = vsel %vm1719, %v4473, 0.0
    %v4491 = vadd.f32 %v4489, %v4490
    %v4492 = vsel %vm1719, %v4474, 0.0
    %v4493 = vadd.f32 %v4491, %v4492
    %v4494 = vsel %vm1719, %v4475, 0.0
    %v4495 = vadd.f32 %v4493, %v4494
    %v4496 = vsel %vm1719, %v4476, 0.0
    %v4497 = vadd.f32 %v4495, %v4496
    %v4498 = vsel %vm1719, %v4477, 0.0
    %v4499 = vadd.f32 %v4497, %v4498
    %v4500 = vsel %vm1719, %v4478, 0.0
    %v4501 = vadd.f32 %v4499, %v4500
    %v4502 = vsel %vm1719, %v4479, 0.0
    %v4503 = vadd.f32 %v4501, %v4502
    %v4504 = vsel %vm1719, %v4480, 0.0
    %v4505 = vadd.f32 %v4503, %v4504
    %v4506 = vsel %vm1719, %v4481, 0.0
    %v4507 = vadd.f32 %v4505, %v4506
    %v4508 = vsel %vm1719, %v4482, 0.0
    %v4509 = vadd.f32 %v4507, %v4508
    %v4510 = vsel %vm1719, %v4483, 0.0
    %v4511 = vadd.f32 %v4509, %v4510
    %v4512 = vsel %vm1719, %v4484, 0.0
    %v4513 = vadd.f32 %v4511, %v4512
    %v4514 = vsel %vm1719, %v4485, 0.0
    %v4515 = vadd.f32 %v4513, %v4514
    %v4516 = vsel %vm1719, %v4486, 0.0
    %v4517 = vadd.f32 %v4515, %v4516
    %v4518 = vsel %vm3591, %v3958, 0.0
    %v4519 = vsel %vm3592, %v3989, 0.0
    %v4520 = vsel %vm3593, %v4020, 0.0
    %v4521 = vsel %vm3594, %v4051, 0.0
    %v4522 = vsel %vm3595, %v4082, 0.0
    %v4523 = vsel %vm3596, %v4113, 0.0
    %v4524 = vsel %vm3597, %v4144, 0.0
    %v4525 = vsel %vm3598, %v4175, 0.0
    %v4526 = vsel %vm3599, %v4206, 0.0
    %v4527 = vsel %vm3600, %v4237, 0.0
    %v4528 = vsel %vm3601, %v4268, 0.0
    %v4529 = vsel %vm3602, %v4299, 0.0
    %v4530 = vsel %vm3603, %v4330, 0.0
    %v4531 = vsel %vm3604, %v4361, 0.0
    %v4532 = vsel %vm3605, %v4392, 0.0
    %v4533 = vsel %vm3606, %v4423, 0.0
    %v4534 = vsel %vm1719, %v4518, 0.0
    %v4535 = vsel %vm1719, %v4519, 0.0
    %v4536 = vadd.f32 %v4534, %v4535
    %v4537 = vsel %vm1719, %v4520, 0.0
    %v4538 = vadd.f32 %v4536, %v4537
    %v4539 = vsel %vm1719, %v4521, 0.0
    %v4540 = vadd.f32 %v4538, %v4539
    %v4541 = vsel %vm1719, %v4522, 0.0
    %v4542 = vadd.f32 %v4540, %v4541
    %v4543 = vsel %vm1719, %v4523, 0.0
    %v4544 = vadd.f32 %v4542, %v4543
    %v4545 = vsel %vm1719, %v4524, 0.0
    %v4546 = vadd.f32 %v4544, %v4545
    %v4547 = vsel %vm1719, %v4525, 0.0
    %v4548 = vadd.f32 %v4546, %v4547
    %v4549 = vsel %vm1719, %v4526, 0.0
    %v4550 = vadd.f32 %v4548, %v4549
    %v4551 = vsel %vm1719, %v4527, 0.0
    %v4552 = vadd.f32 %v4550, %v4551
    %v4553 = vsel %vm1719, %v4528, 0.0
    %v4554 = vadd.f32 %v4552, %v4553
    %v4555 = vsel %vm1719, %v4529, 0.0
    %v4556 = vadd.f32 %v4554, %v4555
    %v4557 = vsel %vm1719, %v4530, 0.0
    %v4558 = vadd.f32 %v4556, %v4557
    %v4559 = vsel %vm1719, %v4531, 0.0
    %v4560 = vadd.f32 %v4558, %v4559
    %v4561 = vsel %vm1719, %v4532, 0.0
    %v4562 = vadd.f32 %v4560, %v4561
    %v4563 = vsel %vm1719, %v4533, 0.0
    %v4564 = vadd.f32 %v4562, %v4563
    %v4565 = vsel %vm3608, %v3958, 0.0
    %v4566 = vsel %vm3609, %v3989, 0.0
    %v4567 = vsel %vm3610, %v4020, 0.0
    %v4568 = vsel %vm3611, %v4051, 0.0
    %v4569 = vsel %vm3612, %v4082, 0.0
    %v4570 = vsel %vm3613, %v4113, 0.0
    %v4571 = vsel %vm3614, %v4144, 0.0
    %v4572 = vsel %vm3615, %v4175, 0.0
    %v4573 = vsel %vm3616, %v4206, 0.0
    %v4574 = vsel %vm3617, %v4237, 0.0
    %v4575 = vsel %vm3618, %v4268, 0.0
    %v4576 = vsel %vm3619, %v4299, 0.0
    %v4577 = vsel %vm3620, %v4330, 0.0
    %v4578 = vsel %vm3621, %v4361, 0.0
    %v4579 = vsel %vm3622, %v4392, 0.0
    %v4580 = vsel %vm3623, %v4423, 0.0
    %v4581 = vsel %vm1719, %v4565, 0.0
    %v4582 = vsel %vm1719, %v4566, 0.0
    %v4583 = vadd.f32 %v4581, %v4582
    %v4584 = vsel %vm1719, %v4567, 0.0
    %v4585 = vadd.f32 %v4583, %v4584
    %v4586 = vsel %vm1719, %v4568, 0.0
    %v4587 = vadd.f32 %v4585, %v4586
    %v4588 = vsel %vm1719, %v4569, 0.0
    %v4589 = vadd.f32 %v4587, %v4588
    %v4590 = vsel %vm1719, %v4570, 0.0
    %v4591 = vadd.f32 %v4589, %v4590
    %v4592 = vsel %vm1719, %v4571, 0.0
    %v4593 = vadd.f32 %v4591, %v4592
    %v4594 = vsel %vm1719, %v4572, 0.0
    %v4595 = vadd.f32 %v4593, %v4594
    %v4596 = vsel %vm1719, %v4573, 0.0
    %v4597 = vadd.f32 %v4595, %v4596
    %v4598 = vsel %vm1719, %v4574, 0.0
    %v4599 = vadd.f32 %v4597, %v4598
    %v4600 = vsel %vm1719, %v4575, 0.0
    %v4601 = vadd.f32 %v4599, %v4600
    %v4602 = vsel %vm1719, %v4576, 0.0
    %v4603 = vadd.f32 %v4601, %v4602
    %v4604 = vsel %vm1719, %v4577, 0.0
    %v4605 = vadd.f32 %v4603, %v4604
    %v4606 = vsel %vm1719, %v4578, 0.0
    %v4607 = vadd.f32 %v4605, %v4606
    %v4608 = vsel %vm1719, %v4579, 0.0
    %v4609 = vadd.f32 %v4607, %v4608
    %v4610 = vsel %vm1719, %v4580, 0.0
    %v4611 = vadd.f32 %v4609, %v4610
    %v4612 = vadd.s32 %v3555, 1
    %vm4613 = vcmp.eq.s32.totalorder %v4612, 0
    %vm4614 = vcmp.eq.s32.totalorder %v4612, 1
    %vm4615 = vcmp.eq.s32.totalorder %v4612, 2
    %vm4616 = vcmp.eq.s32.totalorder %v4612, 3
    %vm4617 = vcmp.eq.s32.totalorder %v4612, 4
    %vm4618 = vcmp.eq.s32.totalorder %v4612, 5
    %vm4619 = vcmp.eq.s32.totalorder %v4612, 6
    %vm4620 = vcmp.eq.s32.totalorder %v4612, 7
    %vm4621 = vcmp.eq.s32.totalorder %v4612, 8
    %vm4622 = vcmp.eq.s32.totalorder %v4612, 9
    %vm4623 = vcmp.eq.s32.totalorder %v4612, 10
    %vm4624 = vcmp.eq.s32.totalorder %v4612, 11
    %vm4625 = vcmp.eq.s32.totalorder %v4612, 12
    %vm4626 = vcmp.eq.s32.totalorder %v4612, 13
    %vm4627 = vcmp.eq.s32.totalorder %v4612, 14
    %vm4628 = vcmp.eq.s32.totalorder %v4612, 15
    %v4629 = vsel %vm4613, 1, 0
    %v4630 = vsel %vm4614, 1, 0
    %v4631 = vsel %vm4615, 1, 0
    %v4632 = vsel %vm4616, 1, 0
    %v4633 = vsel %vm4617, 1, 0
    %v4634 = vsel %vm4618, 1, 0
    %v4635 = vsel %vm4619, 1, 0
    %v4636 = vsel %vm4620, 1, 0
    %v4637 = vsel %vm4621, 1, 0
    %v4638 = vsel %vm4622, 1, 0
    %v4639 = vsel %vm4623, 1, 0
    %v4640 = vsel %vm4624, 1, 0
    %v4641 = vsel %vm4625, 1, 0
    %v4642 = vsel %vm4626, 1, 0
    %v4643 = vsel %vm4627, 1, 0
    %v4644 = vsel %vm4628, 1, 0
    %vm4645 = vcmp.eq.s32.totalorder %v4629, 1
    %vm4646 = vcmp.eq.s32.totalorder %v4630, 1
    %vm4647 = vcmp.eq.s32.totalorder %v4631, 1
    %vm4648 = vcmp.eq.s32.totalorder %v4632, 1
    %vm4649 = vcmp.eq.s32.totalorder %v4633, 1
    %vm4650 = vcmp.eq.s32.totalorder %v4634, 1
    %vm4651 = vcmp.eq.s32.totalorder %v4635, 1
    %vm4652 = vcmp.eq.s32.totalorder %v4636, 1
    %vm4653 = vcmp.eq.s32.totalorder %v4637, 1
    %vm4654 = vcmp.eq.s32.totalorder %v4638, 1
    %vm4655 = vcmp.eq.s32.totalorder %v4639, 1
    %vm4656 = vcmp.eq.s32.totalorder %v4640, 1
    %vm4657 = vcmp.eq.s32.totalorder %v4641, 1
    %vm4658 = vcmp.eq.s32.totalorder %v4642, 1
    %vm4659 = vcmp.eq.s32.totalorder %v4643, 1
    %vm4660 = vcmp.eq.s32.totalorder %v4644, 1
    %v4661 = vsel %vm4645, %v23, 0.0
    %v4662 = vsel %vm4645, %v24, 0.0
    %v4663 = vsel %vm4645, %v25, 0.0
    %v4664 = vsel %vm4645, %v26, 0.0
    %v4665 = vsel %vm4645, %v27, 0.0
    %v4666 = vsel %vm4645, %v28, 0.0
    %v4667 = vsel %vm4645, %v29, 0.0
    %v4668 = vsel %vm4645, %v30, 0.0
    %v4669 = vsel %vm4645, %v31, 0.0
    %v4670 = vsel %vm4645, %v32, 0.0
    %v4671 = vsel %vm4645, %v33, 0.0
    %v4672 = vsel %vm4645, %v34, 0.0
    %v4673 = vsel %vm4645, %v35, 0.0
    %v4674 = vsel %vm4645, %v36, 0.0
    %v4675 = vsel %vm4645, %v37, 0.0
    %v4676 = vsel %vm4645, %v38, 0.0
    %v4677 = vsel %vm4646, %v39, 0.0
    %v4678 = vsel %vm4646, %v40, 0.0
    %v4679 = vsel %vm4646, %v41, 0.0
    %v4680 = vsel %vm4646, %v42, 0.0
    %v4681 = vsel %vm4646, %v43, 0.0
    %v4682 = vsel %vm4646, %v44, 0.0
    %v4683 = vsel %vm4646, %v45, 0.0
    %v4684 = vsel %vm4646, %v46, 0.0
    %v4685 = vsel %vm4646, %v47, 0.0
    %v4686 = vsel %vm4646, %v48, 0.0
    %v4687 = vsel %vm4646, %v49, 0.0
    %v4688 = vsel %vm4646, %v50, 0.0
    %v4689 = vsel %vm4646, %v51, 0.0
    %v4690 = vsel %vm4646, %v52, 0.0
    %v4691 = vsel %vm4646, %v53, 0.0
    %v4692 = vsel %vm4646, %v54, 0.0
    %v4693 = vsel %vm4647, %v55, 0.0
    %v4694 = vsel %vm4647, %v56, 0.0
    %v4695 = vsel %vm4647, %v57, 0.0
    %v4696 = vsel %vm4647, %v58, 0.0
    %v4697 = vsel %vm4647, %v59, 0.0
    %v4698 = vsel %vm4647, %v60, 0.0
    %v4699 = vsel %vm4647, %v61, 0.0
    %v4700 = vsel %vm4647, %v62, 0.0
    %v4701 = vsel %vm4647, %v63, 0.0
    %v4702 = vsel %vm4647, %v64, 0.0
    %v4703 = vsel %vm4647, %v65, 0.0
    %v4704 = vsel %vm4647, %v66, 0.0
    %v4705 = vsel %vm4647, %v67, 0.0
    %v4706 = vsel %vm4647, %v68, 0.0
    %v4707 = vsel %vm4647, %v69, 0.0
    %v4708 = vsel %vm4647, %v70, 0.0
    %v4709 = vsel %vm4648, %v71, 0.0
    %v4710 = vsel %vm4648, %v72, 0.0
    %v4711 = vsel %vm4648, %v73, 0.0
    %v4712 = vsel %vm4648, %v74, 0.0
    %v4713 = vsel %vm4648, %v75, 0.0
    %v4714 = vsel %vm4648, %v76, 0.0
    %v4715 = vsel %vm4648, %v77, 0.0
    %v4716 = vsel %vm4648, %v78, 0.0
    %v4717 = vsel %vm4648, %v79, 0.0
    %v4718 = vsel %vm4648, %v80, 0.0
    %v4719 = vsel %vm4648, %v81, 0.0
    %v4720 = vsel %vm4648, %v82, 0.0
    %v4721 = vsel %vm4648, %v83, 0.0
    %v4722 = vsel %vm4648, %v84, 0.0
    %v4723 = vsel %vm4648, %v85, 0.0
    %v4724 = vsel %vm4648, %v86, 0.0
    %v4725 = vsel %vm4649, %v87, 0.0
    %v4726 = vsel %vm4649, %v88, 0.0
    %v4727 = vsel %vm4649, %v89, 0.0
    %v4728 = vsel %vm4649, %v90, 0.0
    %v4729 = vsel %vm4649, %v91, 0.0
    %v4730 = vsel %vm4649, %v92, 0.0
    %v4731 = vsel %vm4649, %v93, 0.0
    %v4732 = vsel %vm4649, %v94, 0.0
    %v4733 = vsel %vm4649, %v95, 0.0
    %v4734 = vsel %vm4649, %v96, 0.0
    %v4735 = vsel %vm4649, %v97, 0.0
    %v4736 = vsel %vm4649, %v98, 0.0
    %v4737 = vsel %vm4649, %v99, 0.0
    %v4738 = vsel %vm4649, %v100, 0.0
    %v4739 = vsel %vm4649, %v101, 0.0
    %v4740 = vsel %vm4649, %v102, 0.0
    %v4741 = vsel %vm4650, %v103, 0.0
    %v4742 = vsel %vm4650, %v104, 0.0
    %v4743 = vsel %vm4650, %v105, 0.0
    %v4744 = vsel %vm4650, %v106, 0.0
    %v4745 = vsel %vm4650, %v107, 0.0
    %v4746 = vsel %vm4650, %v108, 0.0
    %v4747 = vsel %vm4650, %v109, 0.0
    %v4748 = vsel %vm4650, %v110, 0.0
    %v4749 = vsel %vm4650, %v111, 0.0
    %v4750 = vsel %vm4650, %v112, 0.0
    %v4751 = vsel %vm4650, %v113, 0.0
    %v4752 = vsel %vm4650, %v114, 0.0
    %v4753 = vsel %vm4650, %v115, 0.0
    %v4754 = vsel %vm4650, %v116, 0.0
    %v4755 = vsel %vm4650, %v117, 0.0
    %v4756 = vsel %vm4650, %v118, 0.0
    %v4757 = vsel %vm4651, %v119, 0.0
    %v4758 = vsel %vm4651, %v120, 0.0
    %v4759 = vsel %vm4651, %v121, 0.0
    %v4760 = vsel %vm4651, %v122, 0.0
    %v4761 = vsel %vm4651, %v123, 0.0
    %v4762 = vsel %vm4651, %v124, 0.0
    %v4763 = vsel %vm4651, %v125, 0.0
    %v4764 = vsel %vm4651, %v126, 0.0
    %v4765 = vsel %vm4651, %v127, 0.0
    %v4766 = vsel %vm4651, %v128, 0.0
    %v4767 = vsel %vm4651, %v129, 0.0
    %v4768 = vsel %vm4651, %v130, 0.0
    %v4769 = vsel %vm4651, %v131, 0.0
    %v4770 = vsel %vm4651, %v132, 0.0
    %v4771 = vsel %vm4651, %v133, 0.0
    %v4772 = vsel %vm4651, %v134, 0.0
    %v4773 = vsel %vm4652, %v135, 0.0
    %v4774 = vsel %vm4652, %v136, 0.0
    %v4775 = vsel %vm4652, %v137, 0.0
    %v4776 = vsel %vm4652, %v138, 0.0
    %v4777 = vsel %vm4652, %v139, 0.0
    %v4778 = vsel %vm4652, %v140, 0.0
    %v4779 = vsel %vm4652, %v141, 0.0
    %v4780 = vsel %vm4652, %v142, 0.0
    %v4781 = vsel %vm4652, %v143, 0.0
    %v4782 = vsel %vm4652, %v144, 0.0
    %v4783 = vsel %vm4652, %v145, 0.0
    %v4784 = vsel %vm4652, %v146, 0.0
    %v4785 = vsel %vm4652, %v147, 0.0
    %v4786 = vsel %vm4652, %v148, 0.0
    %v4787 = vsel %vm4652, %v149, 0.0
    %v4788 = vsel %vm4652, %v150, 0.0
    %v4789 = vsel %vm4653, %v151, 0.0
    %v4790 = vsel %vm4653, %v152, 0.0
    %v4791 = vsel %vm4653, %v153, 0.0
    %v4792 = vsel %vm4653, %v154, 0.0
    %v4793 = vsel %vm4653, %v155, 0.0
    %v4794 = vsel %vm4653, %v156, 0.0
    %v4795 = vsel %vm4653, %v157, 0.0
    %v4796 = vsel %vm4653, %v158, 0.0
    %v4797 = vsel %vm4653, %v159, 0.0
    %v4798 = vsel %vm4653, %v160, 0.0
    %v4799 = vsel %vm4653, %v161, 0.0
    %v4800 = vsel %vm4653, %v162, 0.0
    %v4801 = vsel %vm4653, %v163, 0.0
    %v4802 = vsel %vm4653, %v164, 0.0
    %v4803 = vsel %vm4653, %v165, 0.0
    %v4804 = vsel %vm4653, %v166, 0.0
    %v4805 = vsel %vm4654, %v167, 0.0
    %v4806 = vsel %vm4654, %v168, 0.0
    %v4807 = vsel %vm4654, %v169, 0.0
    %v4808 = vsel %vm4654, %v170, 0.0
    %v4809 = vsel %vm4654, %v171, 0.0
    %v4810 = vsel %vm4654, %v172, 0.0
    %v4811 = vsel %vm4654, %v173, 0.0
    %v4812 = vsel %vm4654, %v174, 0.0
    %v4813 = vsel %vm4654, %v175, 0.0
    %v4814 = vsel %vm4654, %v176, 0.0
    %v4815 = vsel %vm4654, %v177, 0.0
    %v4816 = vsel %vm4654, %v178, 0.0
    %v4817 = vsel %vm4654, %v179, 0.0
    %v4818 = vsel %vm4654, %v180, 0.0
    %v4819 = vsel %vm4654, %v181, 0.0
    %v4820 = vsel %vm4654, %v182, 0.0
    %v4821 = vsel %vm4655, %v183, 0.0
    %v4822 = vsel %vm4655, %v184, 0.0
    %v4823 = vsel %vm4655, %v185, 0.0
    %v4824 = vsel %vm4655, %v186, 0.0
    %v4825 = vsel %vm4655, %v187, 0.0
    %v4826 = vsel %vm4655, %v188, 0.0
    %v4827 = vsel %vm4655, %v189, 0.0
    %v4828 = vsel %vm4655, %v190, 0.0
    %v4829 = vsel %vm4655, %v191, 0.0
    %v4830 = vsel %vm4655, %v192, 0.0
    %v4831 = vsel %vm4655, %v193, 0.0
    %v4832 = vsel %vm4655, %v194, 0.0
    %v4833 = vsel %vm4655, %v195, 0.0
    %v4834 = vsel %vm4655, %v196, 0.0
    %v4835 = vsel %vm4655, %v197, 0.0
    %v4836 = vsel %vm4655, %v198, 0.0
    %v4837 = vsel %vm4656, %v199, 0.0
    %v4838 = vsel %vm4656, %v200, 0.0
    %v4839 = vsel %vm4656, %v201, 0.0
    %v4840 = vsel %vm4656, %v202, 0.0
    %v4841 = vsel %vm4656, %v203, 0.0
    %v4842 = vsel %vm4656, %v204, 0.0
    %v4843 = vsel %vm4656, %v205, 0.0
    %v4844 = vsel %vm4656, %v206, 0.0
    %v4845 = vsel %vm4656, %v207, 0.0
    %v4846 = vsel %vm4656, %v208, 0.0
    %v4847 = vsel %vm4656, %v209, 0.0
    %v4848 = vsel %vm4656, %v210, 0.0
    %v4849 = vsel %vm4656, %v211, 0.0
    %v4850 = vsel %vm4656, %v212, 0.0
    %v4851 = vsel %vm4656, %v213, 0.0
    %v4852 = vsel %vm4656, %v214, 0.0
    %v4853 = vsel %vm4657, %v215, 0.0
    %v4854 = vsel %vm4657, %v216, 0.0
    %v4855 = vsel %vm4657, %v217, 0.0
    %v4856 = vsel %vm4657, %v218, 0.0
    %v4857 = vsel %vm4657, %v219, 0.0
    %v4858 = vsel %vm4657, %v220, 0.0
    %v4859 = vsel %vm4657, %v221, 0.0
    %v4860 = vsel %vm4657, %v222, 0.0
    %v4861 = vsel %vm4657, %v223, 0.0
    %v4862 = vsel %vm4657, %v224, 0.0
    %v4863 = vsel %vm4657, %v225, 0.0
    %v4864 = vsel %vm4657, %v226, 0.0
    %v4865 = vsel %vm4657, %v227, 0.0
    %v4866 = vsel %vm4657, %v228, 0.0
    %v4867 = vsel %vm4657, %v229, 0.0
    %v4868 = vsel %vm4657, %v230, 0.0
    %v4869 = vsel %vm4658, %v231, 0.0
    %v4870 = vsel %vm4658, %v232, 0.0
    %v4871 = vsel %vm4658, %v233, 0.0
    %v4872 = vsel %vm4658, %v234, 0.0
    %v4873 = vsel %vm4658, %v235, 0.0
    %v4874 = vsel %vm4658, %v236, 0.0
    %v4875 = vsel %vm4658, %v237, 0.0
    %v4876 = vsel %vm4658, %v238, 0.0
    %v4877 = vsel %vm4658, %v239, 0.0
    %v4878 = vsel %vm4658, %v240, 0.0
    %v4879 = vsel %vm4658, %v241, 0.0
    %v4880 = vsel %vm4658, %v242, 0.0
    %v4881 = vsel %vm4658, %v243, 0.0
    %v4882 = vsel %vm4658, %v244, 0.0
    %v4883 = vsel %vm4658, %v245, 0.0
    %v4884 = vsel %vm4658, %v246, 0.0
    %v4885 = vsel %vm4659, %v247, 0.0
    %v4886 = vsel %vm4659, %v248, 0.0
    %v4887 = vsel %vm4659, %v249, 0.0
    %v4888 = vsel %vm4659, %v250, 0.0
    %v4889 = vsel %vm4659, %v251, 0.0
    %v4890 = vsel %vm4659, %v252, 0.0
    %v4891 = vsel %vm4659, %v253, 0.0
    %v4892 = vsel %vm4659, %v254, 0.0
    %v4893 = vsel %vm4659, %v255, 0.0
    %v4894 = vsel %vm4659, %v256, 0.0
    %v4895 = vsel %vm4659, %v257, 0.0
    %v4896 = vsel %vm4659, %v258, 0.0
    %v4897 = vsel %vm4659, %v259, 0.0
    %v4898 = vsel %vm4659, %v260, 0.0
    %v4899 = vsel %vm4659, %v261, 0.0
    %v4900 = vsel %vm4659, %v262, 0.0
    %v4901 = vsel %vm4660, %v263, 0.0
    %v4902 = vsel %vm4660, %v264, 0.0
    %v4903 = vsel %vm4660, %v265, 0.0
    %v4904 = vsel %vm4660, %v266, 0.0
    %v4905 = vsel %vm4660, %v267, 0.0
    %v4906 = vsel %vm4660, %v268, 0.0
    %v4907 = vsel %vm4660, %v269, 0.0
    %v4908 = vsel %vm4660, %v270, 0.0
    %v4909 = vsel %vm4660, %v271, 0.0
    %v4910 = vsel %vm4660, %v272, 0.0
    %v4911 = vsel %vm4660, %v273, 0.0
    %v4912 = vsel %vm4660, %v274, 0.0
    %v4913 = vsel %vm4660, %v275, 0.0
    %v4914 = vsel %vm4660, %v276, 0.0
    %v4915 = vsel %vm4660, %v277, 0.0
    %v4916 = vsel %vm4660, %v278, 0.0
    %v4917 = vsel %vm1719, %v4661, 0.0
    %v4918 = vsel %vm1719, %v4677, 0.0
    %v4919 = vadd.f32 %v4917, %v4918
    %v4920 = vsel %vm1719, %v4693, 0.0
    %v4921 = vadd.f32 %v4919, %v4920
    %v4922 = vsel %vm1719, %v4709, 0.0
    %v4923 = vadd.f32 %v4921, %v4922
    %v4924 = vsel %vm1719, %v4725, 0.0
    %v4925 = vadd.f32 %v4923, %v4924
    %v4926 = vsel %vm1719, %v4741, 0.0
    %v4927 = vadd.f32 %v4925, %v4926
    %v4928 = vsel %vm1719, %v4757, 0.0
    %v4929 = vadd.f32 %v4927, %v4928
    %v4930 = vsel %vm1719, %v4773, 0.0
    %v4931 = vadd.f32 %v4929, %v4930
    %v4932 = vsel %vm1719, %v4789, 0.0
    %v4933 = vadd.f32 %v4931, %v4932
    %v4934 = vsel %vm1719, %v4805, 0.0
    %v4935 = vadd.f32 %v4933, %v4934
    %v4936 = vsel %vm1719, %v4821, 0.0
    %v4937 = vadd.f32 %v4935, %v4936
    %v4938 = vsel %vm1719, %v4837, 0.0
    %v4939 = vadd.f32 %v4937, %v4938
    %v4940 = vsel %vm1719, %v4853, 0.0
    %v4941 = vadd.f32 %v4939, %v4940
    %v4942 = vsel %vm1719, %v4869, 0.0
    %v4943 = vadd.f32 %v4941, %v4942
    %v4944 = vsel %vm1719, %v4885, 0.0
    %v4945 = vadd.f32 %v4943, %v4944
    %v4946 = vsel %vm1719, %v4901, 0.0
    %v4947 = vadd.f32 %v4945, %v4946
    %v4948 = vsel %vm1719, %v4662, 0.0
    %v4949 = vsel %vm1719, %v4678, 0.0
    %v4950 = vadd.f32 %v4948, %v4949
    %v4951 = vsel %vm1719, %v4694, 0.0
    %v4952 = vadd.f32 %v4950, %v4951
    %v4953 = vsel %vm1719, %v4710, 0.0
    %v4954 = vadd.f32 %v4952, %v4953
    %v4955 = vsel %vm1719, %v4726, 0.0
    %v4956 = vadd.f32 %v4954, %v4955
    %v4957 = vsel %vm1719, %v4742, 0.0
    %v4958 = vadd.f32 %v4956, %v4957
    %v4959 = vsel %vm1719, %v4758, 0.0
    %v4960 = vadd.f32 %v4958, %v4959
    %v4961 = vsel %vm1719, %v4774, 0.0
    %v4962 = vadd.f32 %v4960, %v4961
    %v4963 = vsel %vm1719, %v4790, 0.0
    %v4964 = vadd.f32 %v4962, %v4963
    %v4965 = vsel %vm1719, %v4806, 0.0
    %v4966 = vadd.f32 %v4964, %v4965
    %v4967 = vsel %vm1719, %v4822, 0.0
    %v4968 = vadd.f32 %v4966, %v4967
    %v4969 = vsel %vm1719, %v4838, 0.0
    %v4970 = vadd.f32 %v4968, %v4969
    %v4971 = vsel %vm1719, %v4854, 0.0
    %v4972 = vadd.f32 %v4970, %v4971
    %v4973 = vsel %vm1719, %v4870, 0.0
    %v4974 = vadd.f32 %v4972, %v4973
    %v4975 = vsel %vm1719, %v4886, 0.0
    %v4976 = vadd.f32 %v4974, %v4975
    %v4977 = vsel %vm1719, %v4902, 0.0
    %v4978 = vadd.f32 %v4976, %v4977
    %v4979 = vsel %vm1719, %v4663, 0.0
    %v4980 = vsel %vm1719, %v4679, 0.0
    %v4981 = vadd.f32 %v4979, %v4980
    %v4982 = vsel %vm1719, %v4695, 0.0
    %v4983 = vadd.f32 %v4981, %v4982
    %v4984 = vsel %vm1719, %v4711, 0.0
    %v4985 = vadd.f32 %v4983, %v4984
    %v4986 = vsel %vm1719, %v4727, 0.0
    %v4987 = vadd.f32 %v4985, %v4986
    %v4988 = vsel %vm1719, %v4743, 0.0
    %v4989 = vadd.f32 %v4987, %v4988
    %v4990 = vsel %vm1719, %v4759, 0.0
    %v4991 = vadd.f32 %v4989, %v4990
    %v4992 = vsel %vm1719, %v4775, 0.0
    %v4993 = vadd.f32 %v4991, %v4992
    %v4994 = vsel %vm1719, %v4791, 0.0
    %v4995 = vadd.f32 %v4993, %v4994
    %v4996 = vsel %vm1719, %v4807, 0.0
    %v4997 = vadd.f32 %v4995, %v4996
    %v4998 = vsel %vm1719, %v4823, 0.0
    %v4999 = vadd.f32 %v4997, %v4998
    %v5000 = vsel %vm1719, %v4839, 0.0
    %v5001 = vadd.f32 %v4999, %v5000
    %v5002 = vsel %vm1719, %v4855, 0.0
    %v5003 = vadd.f32 %v5001, %v5002
    %v5004 = vsel %vm1719, %v4871, 0.0
    %v5005 = vadd.f32 %v5003, %v5004
    %v5006 = vsel %vm1719, %v4887, 0.0
    %v5007 = vadd.f32 %v5005, %v5006
    %v5008 = vsel %vm1719, %v4903, 0.0
    %v5009 = vadd.f32 %v5007, %v5008
    %v5010 = vsel %vm1719, %v4664, 0.0
    %v5011 = vsel %vm1719, %v4680, 0.0
    %v5012 = vadd.f32 %v5010, %v5011
    %v5013 = vsel %vm1719, %v4696, 0.0
    %v5014 = vadd.f32 %v5012, %v5013
    %v5015 = vsel %vm1719, %v4712, 0.0
    %v5016 = vadd.f32 %v5014, %v5015
    %v5017 = vsel %vm1719, %v4728, 0.0
    %v5018 = vadd.f32 %v5016, %v5017
    %v5019 = vsel %vm1719, %v4744, 0.0
    %v5020 = vadd.f32 %v5018, %v5019
    %v5021 = vsel %vm1719, %v4760, 0.0
    %v5022 = vadd.f32 %v5020, %v5021
    %v5023 = vsel %vm1719, %v4776, 0.0
    %v5024 = vadd.f32 %v5022, %v5023
    %v5025 = vsel %vm1719, %v4792, 0.0
    %v5026 = vadd.f32 %v5024, %v5025
    %v5027 = vsel %vm1719, %v4808, 0.0
    %v5028 = vadd.f32 %v5026, %v5027
    %v5029 = vsel %vm1719, %v4824, 0.0
    %v5030 = vadd.f32 %v5028, %v5029
    %v5031 = vsel %vm1719, %v4840, 0.0
    %v5032 = vadd.f32 %v5030, %v5031
    %v5033 = vsel %vm1719, %v4856, 0.0
    %v5034 = vadd.f32 %v5032, %v5033
    %v5035 = vsel %vm1719, %v4872, 0.0
    %v5036 = vadd.f32 %v5034, %v5035
    %v5037 = vsel %vm1719, %v4888, 0.0
    %v5038 = vadd.f32 %v5036, %v5037
    %v5039 = vsel %vm1719, %v4904, 0.0
    %v5040 = vadd.f32 %v5038, %v5039
    %v5041 = vsel %vm1719, %v4665, 0.0
    %v5042 = vsel %vm1719, %v4681, 0.0
    %v5043 = vadd.f32 %v5041, %v5042
    %v5044 = vsel %vm1719, %v4697, 0.0
    %v5045 = vadd.f32 %v5043, %v5044
    %v5046 = vsel %vm1719, %v4713, 0.0
    %v5047 = vadd.f32 %v5045, %v5046
    %v5048 = vsel %vm1719, %v4729, 0.0
    %v5049 = vadd.f32 %v5047, %v5048
    %v5050 = vsel %vm1719, %v4745, 0.0
    %v5051 = vadd.f32 %v5049, %v5050
    %v5052 = vsel %vm1719, %v4761, 0.0
    %v5053 = vadd.f32 %v5051, %v5052
    %v5054 = vsel %vm1719, %v4777, 0.0
    %v5055 = vadd.f32 %v5053, %v5054
    %v5056 = vsel %vm1719, %v4793, 0.0
    %v5057 = vadd.f32 %v5055, %v5056
    %v5058 = vsel %vm1719, %v4809, 0.0
    %v5059 = vadd.f32 %v5057, %v5058
    %v5060 = vsel %vm1719, %v4825, 0.0
    %v5061 = vadd.f32 %v5059, %v5060
    %v5062 = vsel %vm1719, %v4841, 0.0
    %v5063 = vadd.f32 %v5061, %v5062
    %v5064 = vsel %vm1719, %v4857, 0.0
    %v5065 = vadd.f32 %v5063, %v5064
    %v5066 = vsel %vm1719, %v4873, 0.0
    %v5067 = vadd.f32 %v5065, %v5066
    %v5068 = vsel %vm1719, %v4889, 0.0
    %v5069 = vadd.f32 %v5067, %v5068
    %v5070 = vsel %vm1719, %v4905, 0.0
    %v5071 = vadd.f32 %v5069, %v5070
    %v5072 = vsel %vm1719, %v4666, 0.0
    %v5073 = vsel %vm1719, %v4682, 0.0
    %v5074 = vadd.f32 %v5072, %v5073
    %v5075 = vsel %vm1719, %v4698, 0.0
    %v5076 = vadd.f32 %v5074, %v5075
    %v5077 = vsel %vm1719, %v4714, 0.0
    %v5078 = vadd.f32 %v5076, %v5077
    %v5079 = vsel %vm1719, %v4730, 0.0
    %v5080 = vadd.f32 %v5078, %v5079
    %v5081 = vsel %vm1719, %v4746, 0.0
    %v5082 = vadd.f32 %v5080, %v5081
    %v5083 = vsel %vm1719, %v4762, 0.0
    %v5084 = vadd.f32 %v5082, %v5083
    %v5085 = vsel %vm1719, %v4778, 0.0
    %v5086 = vadd.f32 %v5084, %v5085
    %v5087 = vsel %vm1719, %v4794, 0.0
    %v5088 = vadd.f32 %v5086, %v5087
    %v5089 = vsel %vm1719, %v4810, 0.0
    %v5090 = vadd.f32 %v5088, %v5089
    %v5091 = vsel %vm1719, %v4826, 0.0
    %v5092 = vadd.f32 %v5090, %v5091
    %v5093 = vsel %vm1719, %v4842, 0.0
    %v5094 = vadd.f32 %v5092, %v5093
    %v5095 = vsel %vm1719, %v4858, 0.0
    %v5096 = vadd.f32 %v5094, %v5095
    %v5097 = vsel %vm1719, %v4874, 0.0
    %v5098 = vadd.f32 %v5096, %v5097
    %v5099 = vsel %vm1719, %v4890, 0.0
    %v5100 = vadd.f32 %v5098, %v5099
    %v5101 = vsel %vm1719, %v4906, 0.0
    %v5102 = vadd.f32 %v5100, %v5101
    %v5103 = vsel %vm1719, %v4667, 0.0
    %v5104 = vsel %vm1719, %v4683, 0.0
    %v5105 = vadd.f32 %v5103, %v5104
    %v5106 = vsel %vm1719, %v4699, 0.0
    %v5107 = vadd.f32 %v5105, %v5106
    %v5108 = vsel %vm1719, %v4715, 0.0
    %v5109 = vadd.f32 %v5107, %v5108
    %v5110 = vsel %vm1719, %v4731, 0.0
    %v5111 = vadd.f32 %v5109, %v5110
    %v5112 = vsel %vm1719, %v4747, 0.0
    %v5113 = vadd.f32 %v5111, %v5112
    %v5114 = vsel %vm1719, %v4763, 0.0
    %v5115 = vadd.f32 %v5113, %v5114
    %v5116 = vsel %vm1719, %v4779, 0.0
    %v5117 = vadd.f32 %v5115, %v5116
    %v5118 = vsel %vm1719, %v4795, 0.0
    %v5119 = vadd.f32 %v5117, %v5118
    %v5120 = vsel %vm1719, %v4811, 0.0
    %v5121 = vadd.f32 %v5119, %v5120
    %v5122 = vsel %vm1719, %v4827, 0.0
    %v5123 = vadd.f32 %v5121, %v5122
    %v5124 = vsel %vm1719, %v4843, 0.0
    %v5125 = vadd.f32 %v5123, %v5124
    %v5126 = vsel %vm1719, %v4859, 0.0
    %v5127 = vadd.f32 %v5125, %v5126
    %v5128 = vsel %vm1719, %v4875, 0.0
    %v5129 = vadd.f32 %v5127, %v5128
    %v5130 = vsel %vm1719, %v4891, 0.0
    %v5131 = vadd.f32 %v5129, %v5130
    %v5132 = vsel %vm1719, %v4907, 0.0
    %v5133 = vadd.f32 %v5131, %v5132
    %v5134 = vsel %vm1719, %v4668, 0.0
    %v5135 = vsel %vm1719, %v4684, 0.0
    %v5136 = vadd.f32 %v5134, %v5135
    %v5137 = vsel %vm1719, %v4700, 0.0
    %v5138 = vadd.f32 %v5136, %v5137
    %v5139 = vsel %vm1719, %v4716, 0.0
    %v5140 = vadd.f32 %v5138, %v5139
    %v5141 = vsel %vm1719, %v4732, 0.0
    %v5142 = vadd.f32 %v5140, %v5141
    %v5143 = vsel %vm1719, %v4748, 0.0
    %v5144 = vadd.f32 %v5142, %v5143
    %v5145 = vsel %vm1719, %v4764, 0.0
    %v5146 = vadd.f32 %v5144, %v5145
    %v5147 = vsel %vm1719, %v4780, 0.0
    %v5148 = vadd.f32 %v5146, %v5147
    %v5149 = vsel %vm1719, %v4796, 0.0
    %v5150 = vadd.f32 %v5148, %v5149
    %v5151 = vsel %vm1719, %v4812, 0.0
    %v5152 = vadd.f32 %v5150, %v5151
    %v5153 = vsel %vm1719, %v4828, 0.0
    %v5154 = vadd.f32 %v5152, %v5153
    %v5155 = vsel %vm1719, %v4844, 0.0
    %v5156 = vadd.f32 %v5154, %v5155
    %v5157 = vsel %vm1719, %v4860, 0.0
    %v5158 = vadd.f32 %v5156, %v5157
    %v5159 = vsel %vm1719, %v4876, 0.0
    %v5160 = vadd.f32 %v5158, %v5159
    %v5161 = vsel %vm1719, %v4892, 0.0
    %v5162 = vadd.f32 %v5160, %v5161
    %v5163 = vsel %vm1719, %v4908, 0.0
    %v5164 = vadd.f32 %v5162, %v5163
    %v5165 = vsel %vm1719, %v4669, 0.0
    %v5166 = vsel %vm1719, %v4685, 0.0
    %v5167 = vadd.f32 %v5165, %v5166
    %v5168 = vsel %vm1719, %v4701, 0.0
    %v5169 = vadd.f32 %v5167, %v5168
    %v5170 = vsel %vm1719, %v4717, 0.0
    %v5171 = vadd.f32 %v5169, %v5170
    %v5172 = vsel %vm1719, %v4733, 0.0
    %v5173 = vadd.f32 %v5171, %v5172
    %v5174 = vsel %vm1719, %v4749, 0.0
    %v5175 = vadd.f32 %v5173, %v5174
    %v5176 = vsel %vm1719, %v4765, 0.0
    %v5177 = vadd.f32 %v5175, %v5176
    %v5178 = vsel %vm1719, %v4781, 0.0
    %v5179 = vadd.f32 %v5177, %v5178
    %v5180 = vsel %vm1719, %v4797, 0.0
    %v5181 = vadd.f32 %v5179, %v5180
    %v5182 = vsel %vm1719, %v4813, 0.0
    %v5183 = vadd.f32 %v5181, %v5182
    %v5184 = vsel %vm1719, %v4829, 0.0
    %v5185 = vadd.f32 %v5183, %v5184
    %v5186 = vsel %vm1719, %v4845, 0.0
    %v5187 = vadd.f32 %v5185, %v5186
    %v5188 = vsel %vm1719, %v4861, 0.0
    %v5189 = vadd.f32 %v5187, %v5188
    %v5190 = vsel %vm1719, %v4877, 0.0
    %v5191 = vadd.f32 %v5189, %v5190
    %v5192 = vsel %vm1719, %v4893, 0.0
    %v5193 = vadd.f32 %v5191, %v5192
    %v5194 = vsel %vm1719, %v4909, 0.0
    %v5195 = vadd.f32 %v5193, %v5194
    %v5196 = vsel %vm1719, %v4670, 0.0
    %v5197 = vsel %vm1719, %v4686, 0.0
    %v5198 = vadd.f32 %v5196, %v5197
    %v5199 = vsel %vm1719, %v4702, 0.0
    %v5200 = vadd.f32 %v5198, %v5199
    %v5201 = vsel %vm1719, %v4718, 0.0
    %v5202 = vadd.f32 %v5200, %v5201
    %v5203 = vsel %vm1719, %v4734, 0.0
    %v5204 = vadd.f32 %v5202, %v5203
    %v5205 = vsel %vm1719, %v4750, 0.0
    %v5206 = vadd.f32 %v5204, %v5205
    %v5207 = vsel %vm1719, %v4766, 0.0
    %v5208 = vadd.f32 %v5206, %v5207
    %v5209 = vsel %vm1719, %v4782, 0.0
    %v5210 = vadd.f32 %v5208, %v5209
    %v5211 = vsel %vm1719, %v4798, 0.0
    %v5212 = vadd.f32 %v5210, %v5211
    %v5213 = vsel %vm1719, %v4814, 0.0
    %v5214 = vadd.f32 %v5212, %v5213
    %v5215 = vsel %vm1719, %v4830, 0.0
    %v5216 = vadd.f32 %v5214, %v5215
    %v5217 = vsel %vm1719, %v4846, 0.0
    %v5218 = vadd.f32 %v5216, %v5217
    %v5219 = vsel %vm1719, %v4862, 0.0
    %v5220 = vadd.f32 %v5218, %v5219
    %v5221 = vsel %vm1719, %v4878, 0.0
    %v5222 = vadd.f32 %v5220, %v5221
    %v5223 = vsel %vm1719, %v4894, 0.0
    %v5224 = vadd.f32 %v5222, %v5223
    %v5225 = vsel %vm1719, %v4910, 0.0
    %v5226 = vadd.f32 %v5224, %v5225
    %v5227 = vsel %vm1719, %v4671, 0.0
    %v5228 = vsel %vm1719, %v4687, 0.0
    %v5229 = vadd.f32 %v5227, %v5228
    %v5230 = vsel %vm1719, %v4703, 0.0
    %v5231 = vadd.f32 %v5229, %v5230
    %v5232 = vsel %vm1719, %v4719, 0.0
    %v5233 = vadd.f32 %v5231, %v5232
    %v5234 = vsel %vm1719, %v4735, 0.0
    %v5235 = vadd.f32 %v5233, %v5234
    %v5236 = vsel %vm1719, %v4751, 0.0
    %v5237 = vadd.f32 %v5235, %v5236
    %v5238 = vsel %vm1719, %v4767, 0.0
    %v5239 = vadd.f32 %v5237, %v5238
    %v5240 = vsel %vm1719, %v4783, 0.0
    %v5241 = vadd.f32 %v5239, %v5240
    %v5242 = vsel %vm1719, %v4799, 0.0
    %v5243 = vadd.f32 %v5241, %v5242
    %v5244 = vsel %vm1719, %v4815, 0.0
    %v5245 = vadd.f32 %v5243, %v5244
    %v5246 = vsel %vm1719, %v4831, 0.0
    %v5247 = vadd.f32 %v5245, %v5246
    %v5248 = vsel %vm1719, %v4847, 0.0
    %v5249 = vadd.f32 %v5247, %v5248
    %v5250 = vsel %vm1719, %v4863, 0.0
    %v5251 = vadd.f32 %v5249, %v5250
    %v5252 = vsel %vm1719, %v4879, 0.0
    %v5253 = vadd.f32 %v5251, %v5252
    %v5254 = vsel %vm1719, %v4895, 0.0
    %v5255 = vadd.f32 %v5253, %v5254
    %v5256 = vsel %vm1719, %v4911, 0.0
    %v5257 = vadd.f32 %v5255, %v5256
    %v5258 = vsel %vm1719, %v4672, 0.0
    %v5259 = vsel %vm1719, %v4688, 0.0
    %v5260 = vadd.f32 %v5258, %v5259
    %v5261 = vsel %vm1719, %v4704, 0.0
    %v5262 = vadd.f32 %v5260, %v5261
    %v5263 = vsel %vm1719, %v4720, 0.0
    %v5264 = vadd.f32 %v5262, %v5263
    %v5265 = vsel %vm1719, %v4736, 0.0
    %v5266 = vadd.f32 %v5264, %v5265
    %v5267 = vsel %vm1719, %v4752, 0.0
    %v5268 = vadd.f32 %v5266, %v5267
    %v5269 = vsel %vm1719, %v4768, 0.0
    %v5270 = vadd.f32 %v5268, %v5269
    %v5271 = vsel %vm1719, %v4784, 0.0
    %v5272 = vadd.f32 %v5270, %v5271
    %v5273 = vsel %vm1719, %v4800, 0.0
    %v5274 = vadd.f32 %v5272, %v5273
    %v5275 = vsel %vm1719, %v4816, 0.0
    %v5276 = vadd.f32 %v5274, %v5275
    %v5277 = vsel %vm1719, %v4832, 0.0
    %v5278 = vadd.f32 %v5276, %v5277
    %v5279 = vsel %vm1719, %v4848, 0.0
    %v5280 = vadd.f32 %v5278, %v5279
    %v5281 = vsel %vm1719, %v4864, 0.0
    %v5282 = vadd.f32 %v5280, %v5281
    %v5283 = vsel %vm1719, %v4880, 0.0
    %v5284 = vadd.f32 %v5282, %v5283
    %v5285 = vsel %vm1719, %v4896, 0.0
    %v5286 = vadd.f32 %v5284, %v5285
    %v5287 = vsel %vm1719, %v4912, 0.0
    %v5288 = vadd.f32 %v5286, %v5287
    %v5289 = vsel %vm1719, %v4673, 0.0
    %v5290 = vsel %vm1719, %v4689, 0.0
    %v5291 = vadd.f32 %v5289, %v5290
    %v5292 = vsel %vm1719, %v4705, 0.0
    %v5293 = vadd.f32 %v5291, %v5292
    %v5294 = vsel %vm1719, %v4721, 0.0
    %v5295 = vadd.f32 %v5293, %v5294
    %v5296 = vsel %vm1719, %v4737, 0.0
    %v5297 = vadd.f32 %v5295, %v5296
    %v5298 = vsel %vm1719, %v4753, 0.0
    %v5299 = vadd.f32 %v5297, %v5298
    %v5300 = vsel %vm1719, %v4769, 0.0
    %v5301 = vadd.f32 %v5299, %v5300
    %v5302 = vsel %vm1719, %v4785, 0.0
    %v5303 = vadd.f32 %v5301, %v5302
    %v5304 = vsel %vm1719, %v4801, 0.0
    %v5305 = vadd.f32 %v5303, %v5304
    %v5306 = vsel %vm1719, %v4817, 0.0
    %v5307 = vadd.f32 %v5305, %v5306
    %v5308 = vsel %vm1719, %v4833, 0.0
    %v5309 = vadd.f32 %v5307, %v5308
    %v5310 = vsel %vm1719, %v4849, 0.0
    %v5311 = vadd.f32 %v5309, %v5310
    %v5312 = vsel %vm1719, %v4865, 0.0
    %v5313 = vadd.f32 %v5311, %v5312
    %v5314 = vsel %vm1719, %v4881, 0.0
    %v5315 = vadd.f32 %v5313, %v5314
    %v5316 = vsel %vm1719, %v4897, 0.0
    %v5317 = vadd.f32 %v5315, %v5316
    %v5318 = vsel %vm1719, %v4913, 0.0
    %v5319 = vadd.f32 %v5317, %v5318
    %v5320 = vsel %vm1719, %v4674, 0.0
    %v5321 = vsel %vm1719, %v4690, 0.0
    %v5322 = vadd.f32 %v5320, %v5321
    %v5323 = vsel %vm1719, %v4706, 0.0
    %v5324 = vadd.f32 %v5322, %v5323
    %v5325 = vsel %vm1719, %v4722, 0.0
    %v5326 = vadd.f32 %v5324, %v5325
    %v5327 = vsel %vm1719, %v4738, 0.0
    %v5328 = vadd.f32 %v5326, %v5327
    %v5329 = vsel %vm1719, %v4754, 0.0
    %v5330 = vadd.f32 %v5328, %v5329
    %v5331 = vsel %vm1719, %v4770, 0.0
    %v5332 = vadd.f32 %v5330, %v5331
    %v5333 = vsel %vm1719, %v4786, 0.0
    %v5334 = vadd.f32 %v5332, %v5333
    %v5335 = vsel %vm1719, %v4802, 0.0
    %v5336 = vadd.f32 %v5334, %v5335
    %v5337 = vsel %vm1719, %v4818, 0.0
    %v5338 = vadd.f32 %v5336, %v5337
    %v5339 = vsel %vm1719, %v4834, 0.0
    %v5340 = vadd.f32 %v5338, %v5339
    %v5341 = vsel %vm1719, %v4850, 0.0
    %v5342 = vadd.f32 %v5340, %v5341
    %v5343 = vsel %vm1719, %v4866, 0.0
    %v5344 = vadd.f32 %v5342, %v5343
    %v5345 = vsel %vm1719, %v4882, 0.0
    %v5346 = vadd.f32 %v5344, %v5345
    %v5347 = vsel %vm1719, %v4898, 0.0
    %v5348 = vadd.f32 %v5346, %v5347
    %v5349 = vsel %vm1719, %v4914, 0.0
    %v5350 = vadd.f32 %v5348, %v5349
    %v5351 = vsel %vm1719, %v4675, 0.0
    %v5352 = vsel %vm1719, %v4691, 0.0
    %v5353 = vadd.f32 %v5351, %v5352
    %v5354 = vsel %vm1719, %v4707, 0.0
    %v5355 = vadd.f32 %v5353, %v5354
    %v5356 = vsel %vm1719, %v4723, 0.0
    %v5357 = vadd.f32 %v5355, %v5356
    %v5358 = vsel %vm1719, %v4739, 0.0
    %v5359 = vadd.f32 %v5357, %v5358
    %v5360 = vsel %vm1719, %v4755, 0.0
    %v5361 = vadd.f32 %v5359, %v5360
    %v5362 = vsel %vm1719, %v4771, 0.0
    %v5363 = vadd.f32 %v5361, %v5362
    %v5364 = vsel %vm1719, %v4787, 0.0
    %v5365 = vadd.f32 %v5363, %v5364
    %v5366 = vsel %vm1719, %v4803, 0.0
    %v5367 = vadd.f32 %v5365, %v5366
    %v5368 = vsel %vm1719, %v4819, 0.0
    %v5369 = vadd.f32 %v5367, %v5368
    %v5370 = vsel %vm1719, %v4835, 0.0
    %v5371 = vadd.f32 %v5369, %v5370
    %v5372 = vsel %vm1719, %v4851, 0.0
    %v5373 = vadd.f32 %v5371, %v5372
    %v5374 = vsel %vm1719, %v4867, 0.0
    %v5375 = vadd.f32 %v5373, %v5374
    %v5376 = vsel %vm1719, %v4883, 0.0
    %v5377 = vadd.f32 %v5375, %v5376
    %v5378 = vsel %vm1719, %v4899, 0.0
    %v5379 = vadd.f32 %v5377, %v5378
    %v5380 = vsel %vm1719, %v4915, 0.0
    %v5381 = vadd.f32 %v5379, %v5380
    %v5382 = vsel %vm1719, %v4676, 0.0
    %v5383 = vsel %vm1719, %v4692, 0.0
    %v5384 = vadd.f32 %v5382, %v5383
    %v5385 = vsel %vm1719, %v4708, 0.0
    %v5386 = vadd.f32 %v5384, %v5385
    %v5387 = vsel %vm1719, %v4724, 0.0
    %v5388 = vadd.f32 %v5386, %v5387
    %v5389 = vsel %vm1719, %v4740, 0.0
    %v5390 = vadd.f32 %v5388, %v5389
    %v5391 = vsel %vm1719, %v4756, 0.0
    %v5392 = vadd.f32 %v5390, %v5391
    %v5393 = vsel %vm1719, %v4772, 0.0
    %v5394 = vadd.f32 %v5392, %v5393
    %v5395 = vsel %vm1719, %v4788, 0.0
    %v5396 = vadd.f32 %v5394, %v5395
    %v5397 = vsel %vm1719, %v4804, 0.0
    %v5398 = vadd.f32 %v5396, %v5397
    %v5399 = vsel %vm1719, %v4820, 0.0
    %v5400 = vadd.f32 %v5398, %v5399
    %v5401 = vsel %vm1719, %v4836, 0.0
    %v5402 = vadd.f32 %v5400, %v5401
    %v5403 = vsel %vm1719, %v4852, 0.0
    %v5404 = vadd.f32 %v5402, %v5403
    %v5405 = vsel %vm1719, %v4868, 0.0
    %v5406 = vadd.f32 %v5404, %v5405
    %v5407 = vsel %vm1719, %v4884, 0.0
    %v5408 = vadd.f32 %v5406, %v5407
    %v5409 = vsel %vm1719, %v4900, 0.0
    %v5410 = vadd.f32 %v5408, %v5409
    %v5411 = vsel %vm1719, %v4916, 0.0
    %v5412 = vadd.f32 %v5410, %v5411
    %v5413 = vsel %vm3557, %v4947, 0.0
    %v5414 = vsel %vm3558, %v4978, 0.0
    %v5415 = vsel %vm3559, %v5009, 0.0
    %v5416 = vsel %vm3560, %v5040, 0.0
    %v5417 = vsel %vm3561, %v5071, 0.0
    %v5418 = vsel %vm3562, %v5102, 0.0
    %v5419 = vsel %vm3563, %v5133, 0.0
    %v5420 = vsel %vm3564, %v5164, 0.0
    %v5421 = vsel %vm3565, %v5195, 0.0
    %v5422 = vsel %vm3566, %v5226, 0.0
    %v5423 = vsel %vm3567, %v5257, 0.0
    %v5424 = vsel %vm3568, %v5288, 0.0
    %v5425 = vsel %vm3569, %v5319, 0.0
    %v5426 = vsel %vm3570, %v5350, 0.0
    %v5427 = vsel %vm3571, %v5381, 0.0
    %v5428 = vsel %vm3572, %v5412, 0.0
    %v5429 = vsel %vm1719, %v5413, 0.0
    %v5430 = vsel %vm1719, %v5414, 0.0
    %v5431 = vadd.f32 %v5429, %v5430
    %v5432 = vsel %vm1719, %v5415, 0.0
    %v5433 = vadd.f32 %v5431, %v5432
    %v5434 = vsel %vm1719, %v5416, 0.0
    %v5435 = vadd.f32 %v5433, %v5434
    %v5436 = vsel %vm1719, %v5417, 0.0
    %v5437 = vadd.f32 %v5435, %v5436
    %v5438 = vsel %vm1719, %v5418, 0.0
    %v5439 = vadd.f32 %v5437, %v5438
    %v5440 = vsel %vm1719, %v5419, 0.0
    %v5441 = vadd.f32 %v5439, %v5440
    %v5442 = vsel %vm1719, %v5420, 0.0
    %v5443 = vadd.f32 %v5441, %v5442
    %v5444 = vsel %vm1719, %v5421, 0.0
    %v5445 = vadd.f32 %v5443, %v5444
    %v5446 = vsel %vm1719, %v5422, 0.0
    %v5447 = vadd.f32 %v5445, %v5446
    %v5448 = vsel %vm1719, %v5423, 0.0
    %v5449 = vadd.f32 %v5447, %v5448
    %v5450 = vsel %vm1719, %v5424, 0.0
    %v5451 = vadd.f32 %v5449, %v5450
    %v5452 = vsel %vm1719, %v5425, 0.0
    %v5453 = vadd.f32 %v5451, %v5452
    %v5454 = vsel %vm1719, %v5426, 0.0
    %v5455 = vadd.f32 %v5453, %v5454
    %v5456 = vsel %vm1719, %v5427, 0.0
    %v5457 = vadd.f32 %v5455, %v5456
    %v5458 = vsel %vm1719, %v5428, 0.0
    %v5459 = vadd.f32 %v5457, %v5458
    %v5460 = vsel %vm3574, %v4947, 0.0
    %v5461 = vsel %vm3575, %v4978, 0.0
    %v5462 = vsel %vm3576, %v5009, 0.0
    %v5463 = vsel %vm3577, %v5040, 0.0
    %v5464 = vsel %vm3578, %v5071, 0.0
    %v5465 = vsel %vm3579, %v5102, 0.0
    %v5466 = vsel %vm3580, %v5133, 0.0
    %v5467 = vsel %vm3581, %v5164, 0.0
    %v5468 = vsel %vm3582, %v5195, 0.0
    %v5469 = vsel %vm3583, %v5226, 0.0
    %v5470 = vsel %vm3584, %v5257, 0.0
    %v5471 = vsel %vm3585, %v5288, 0.0
    %v5472 = vsel %vm3586, %v5319, 0.0
    %v5473 = vsel %vm3587, %v5350, 0.0
    %v5474 = vsel %vm3588, %v5381, 0.0
    %v5475 = vsel %vm3589, %v5412, 0.0
    %v5476 = vsel %vm1719, %v5460, 0.0
    %v5477 = vsel %vm1719, %v5461, 0.0
    %v5478 = vadd.f32 %v5476, %v5477
    %v5479 = vsel %vm1719, %v5462, 0.0
    %v5480 = vadd.f32 %v5478, %v5479
    %v5481 = vsel %vm1719, %v5463, 0.0
    %v5482 = vadd.f32 %v5480, %v5481
    %v5483 = vsel %vm1719, %v5464, 0.0
    %v5484 = vadd.f32 %v5482, %v5483
    %v5485 = vsel %vm1719, %v5465, 0.0
    %v5486 = vadd.f32 %v5484, %v5485
    %v5487 = vsel %vm1719, %v5466, 0.0
    %v5488 = vadd.f32 %v5486, %v5487
    %v5489 = vsel %vm1719, %v5467, 0.0
    %v5490 = vadd.f32 %v5488, %v5489
    %v5491 = vsel %vm1719, %v5468, 0.0
    %v5492 = vadd.f32 %v5490, %v5491
    %v5493 = vsel %vm1719, %v5469, 0.0
    %v5494 = vadd.f32 %v5492, %v5493
    %v5495 = vsel %vm1719, %v5470, 0.0
    %v5496 = vadd.f32 %v5494, %v5495
    %v5497 = vsel %vm1719, %v5471, 0.0
    %v5498 = vadd.f32 %v5496, %v5497
    %v5499 = vsel %vm1719, %v5472, 0.0
    %v5500 = vadd.f32 %v5498, %v5499
    %v5501 = vsel %vm1719, %v5473, 0.0
    %v5502 = vadd.f32 %v5500, %v5501
    %v5503 = vsel %vm1719, %v5474, 0.0
    %v5504 = vadd.f32 %v5502, %v5503
    %v5505 = vsel %vm1719, %v5475, 0.0
    %v5506 = vadd.f32 %v5504, %v5505
    %v5507 = vsel %vm3591, %v4947, 0.0
    %v5508 = vsel %vm3592, %v4978, 0.0
    %v5509 = vsel %vm3593, %v5009, 0.0
    %v5510 = vsel %vm3594, %v5040, 0.0
    %v5511 = vsel %vm3595, %v5071, 0.0
    %v5512 = vsel %vm3596, %v5102, 0.0
    %v5513 = vsel %vm3597, %v5133, 0.0
    %v5514 = vsel %vm3598, %v5164, 0.0
    %v5515 = vsel %vm3599, %v5195, 0.0
    %v5516 = vsel %vm3600, %v5226, 0.0
    %v5517 = vsel %vm3601, %v5257, 0.0
    %v5518 = vsel %vm3602, %v5288, 0.0
    %v5519 = vsel %vm3603, %v5319, 0.0
    %v5520 = vsel %vm3604, %v5350, 0.0
    %v5521 = vsel %vm3605, %v5381, 0.0
    %v5522 = vsel %vm3606, %v5412, 0.0
    %v5523 = vsel %vm1719, %v5507, 0.0
    %v5524 = vsel %vm1719, %v5508, 0.0
    %v5525 = vadd.f32 %v5523, %v5524
    %v5526 = vsel %vm1719, %v5509, 0.0
    %v5527 = vadd.f32 %v5525, %v5526
    %v5528 = vsel %vm1719, %v5510, 0.0
    %v5529 = vadd.f32 %v5527, %v5528
    %v5530 = vsel %vm1719, %v5511, 0.0
    %v5531 = vadd.f32 %v5529, %v5530
    %v5532 = vsel %vm1719, %v5512, 0.0
    %v5533 = vadd.f32 %v5531, %v5532
    %v5534 = vsel %vm1719, %v5513, 0.0
    %v5535 = vadd.f32 %v5533, %v5534
    %v5536 = vsel %vm1719, %v5514, 0.0
    %v5537 = vadd.f32 %v5535, %v5536
    %v5538 = vsel %vm1719, %v5515, 0.0
    %v5539 = vadd.f32 %v5537, %v5538
    %v5540 = vsel %vm1719, %v5516, 0.0
    %v5541 = vadd.f32 %v5539, %v5540
    %v5542 = vsel %vm1719, %v5517, 0.0
    %v5543 = vadd.f32 %v5541, %v5542
    %v5544 = vsel %vm1719, %v5518, 0.0
    %v5545 = vadd.f32 %v5543, %v5544
    %v5546 = vsel %vm1719, %v5519, 0.0
    %v5547 = vadd.f32 %v5545, %v5546
    %v5548 = vsel %vm1719, %v5520, 0.0
    %v5549 = vadd.f32 %v5547, %v5548
    %v5550 = vsel %vm1719, %v5521, 0.0
    %v5551 = vadd.f32 %v5549, %v5550
    %v5552 = vsel %vm1719, %v5522, 0.0
    %v5553 = vadd.f32 %v5551, %v5552
    %v5554 = vsel %vm3608, %v4947, 0.0
    %v5555 = vsel %vm3609, %v4978, 0.0
    %v5556 = vsel %vm3610, %v5009, 0.0
    %v5557 = vsel %vm3611, %v5040, 0.0
    %v5558 = vsel %vm3612, %v5071, 0.0
    %v5559 = vsel %vm3613, %v5102, 0.0
    %v5560 = vsel %vm3614, %v5133, 0.0
    %v5561 = vsel %vm3615, %v5164, 0.0
    %v5562 = vsel %vm3616, %v5195, 0.0
    %v5563 = vsel %vm3617, %v5226, 0.0
    %v5564 = vsel %vm3618, %v5257, 0.0
    %v5565 = vsel %vm3619, %v5288, 0.0
    %v5566 = vsel %vm3620, %v5319, 0.0
    %v5567 = vsel %vm3621, %v5350, 0.0
    %v5568 = vsel %vm3622, %v5381, 0.0
    %v5569 = vsel %vm3623, %v5412, 0.0
    %v5570 = vsel %vm1719, %v5554, 0.0
    %v5571 = vsel %vm1719, %v5555, 0.0
    %v5572 = vadd.f32 %v5570, %v5571
    %v5573 = vsel %vm1719, %v5556, 0.0
    %v5574 = vadd.f32 %v5572, %v5573
    %v5575 = vsel %vm1719, %v5557, 0.0
    %v5576 = vadd.f32 %v5574, %v5575
    %v5577 = vsel %vm1719, %v5558, 0.0
    %v5578 = vadd.f32 %v5576, %v5577
    %v5579 = vsel %vm1719, %v5559, 0.0
    %v5580 = vadd.f32 %v5578, %v5579
    %v5581 = vsel %vm1719, %v5560, 0.0
    %v5582 = vadd.f32 %v5580, %v5581
    %v5583 = vsel %vm1719, %v5561, 0.0
    %v5584 = vadd.f32 %v5582, %v5583
    %v5585 = vsel %vm1719, %v5562, 0.0
    %v5586 = vadd.f32 %v5584, %v5585
    %v5587 = vsel %vm1719, %v5563, 0.0
    %v5588 = vadd.f32 %v5586, %v5587
    %v5589 = vsel %vm1719, %v5564, 0.0
    %v5590 = vadd.f32 %v5588, %v5589
    %v5591 = vsel %vm1719, %v5565, 0.0
    %v5592 = vadd.f32 %v5590, %v5591
    %v5593 = vsel %vm1719, %v5566, 0.0
    %v5594 = vadd.f32 %v5592, %v5593
    %v5595 = vsel %vm1719, %v5567, 0.0
    %v5596 = vadd.f32 %v5594, %v5595
    %v5597 = vsel %vm1719, %v5568, 0.0
    %v5598 = vadd.f32 %v5596, %v5597
    %v5599 = vsel %vm1719, %v5569, 0.0
    %v5600 = vadd.f32 %v5598, %v5599
    %v5601 = vadd.s32 %v3555, 2
    %vm5602 = vcmp.eq.s32.totalorder %v5601, 0
    %vm5603 = vcmp.eq.s32.totalorder %v5601, 1
    %vm5604 = vcmp.eq.s32.totalorder %v5601, 2
    %vm5605 = vcmp.eq.s32.totalorder %v5601, 3
    %vm5606 = vcmp.eq.s32.totalorder %v5601, 4
    %vm5607 = vcmp.eq.s32.totalorder %v5601, 5
    %vm5608 = vcmp.eq.s32.totalorder %v5601, 6
    %vm5609 = vcmp.eq.s32.totalorder %v5601, 7
    %vm5610 = vcmp.eq.s32.totalorder %v5601, 8
    %vm5611 = vcmp.eq.s32.totalorder %v5601, 9
    %vm5612 = vcmp.eq.s32.totalorder %v5601, 10
    %vm5613 = vcmp.eq.s32.totalorder %v5601, 11
    %vm5614 = vcmp.eq.s32.totalorder %v5601, 12
    %vm5615 = vcmp.eq.s32.totalorder %v5601, 13
    %vm5616 = vcmp.eq.s32.totalorder %v5601, 14
    %vm5617 = vcmp.eq.s32.totalorder %v5601, 15
    %v5618 = vsel %vm5602, 1, 0
    %v5619 = vsel %vm5603, 1, 0
    %v5620 = vsel %vm5604, 1, 0
    %v5621 = vsel %vm5605, 1, 0
    %v5622 = vsel %vm5606, 1, 0
    %v5623 = vsel %vm5607, 1, 0
    %v5624 = vsel %vm5608, 1, 0
    %v5625 = vsel %vm5609, 1, 0
    %v5626 = vsel %vm5610, 1, 0
    %v5627 = vsel %vm5611, 1, 0
    %v5628 = vsel %vm5612, 1, 0
    %v5629 = vsel %vm5613, 1, 0
    %v5630 = vsel %vm5614, 1, 0
    %v5631 = vsel %vm5615, 1, 0
    %v5632 = vsel %vm5616, 1, 0
    %v5633 = vsel %vm5617, 1, 0
    %vm5634 = vcmp.eq.s32.totalorder %v5618, 1
    %vm5635 = vcmp.eq.s32.totalorder %v5619, 1
    %vm5636 = vcmp.eq.s32.totalorder %v5620, 1
    %vm5637 = vcmp.eq.s32.totalorder %v5621, 1
    %vm5638 = vcmp.eq.s32.totalorder %v5622, 1
    %vm5639 = vcmp.eq.s32.totalorder %v5623, 1
    %vm5640 = vcmp.eq.s32.totalorder %v5624, 1
    %vm5641 = vcmp.eq.s32.totalorder %v5625, 1
    %vm5642 = vcmp.eq.s32.totalorder %v5626, 1
    %vm5643 = vcmp.eq.s32.totalorder %v5627, 1
    %vm5644 = vcmp.eq.s32.totalorder %v5628, 1
    %vm5645 = vcmp.eq.s32.totalorder %v5629, 1
    %vm5646 = vcmp.eq.s32.totalorder %v5630, 1
    %vm5647 = vcmp.eq.s32.totalorder %v5631, 1
    %vm5648 = vcmp.eq.s32.totalorder %v5632, 1
    %vm5649 = vcmp.eq.s32.totalorder %v5633, 1
    %v5650 = vsel %vm5634, %v23, 0.0
    %v5651 = vsel %vm5634, %v24, 0.0
    %v5652 = vsel %vm5634, %v25, 0.0
    %v5653 = vsel %vm5634, %v26, 0.0
    %v5654 = vsel %vm5634, %v27, 0.0
    %v5655 = vsel %vm5634, %v28, 0.0
    %v5656 = vsel %vm5634, %v29, 0.0
    %v5657 = vsel %vm5634, %v30, 0.0
    %v5658 = vsel %vm5634, %v31, 0.0
    %v5659 = vsel %vm5634, %v32, 0.0
    %v5660 = vsel %vm5634, %v33, 0.0
    %v5661 = vsel %vm5634, %v34, 0.0
    %v5662 = vsel %vm5634, %v35, 0.0
    %v5663 = vsel %vm5634, %v36, 0.0
    %v5664 = vsel %vm5634, %v37, 0.0
    %v5665 = vsel %vm5634, %v38, 0.0
    %v5666 = vsel %vm5635, %v39, 0.0
    %v5667 = vsel %vm5635, %v40, 0.0
    %v5668 = vsel %vm5635, %v41, 0.0
    %v5669 = vsel %vm5635, %v42, 0.0
    %v5670 = vsel %vm5635, %v43, 0.0
    %v5671 = vsel %vm5635, %v44, 0.0
    %v5672 = vsel %vm5635, %v45, 0.0
    %v5673 = vsel %vm5635, %v46, 0.0
    %v5674 = vsel %vm5635, %v47, 0.0
    %v5675 = vsel %vm5635, %v48, 0.0
    %v5676 = vsel %vm5635, %v49, 0.0
    %v5677 = vsel %vm5635, %v50, 0.0
    %v5678 = vsel %vm5635, %v51, 0.0
    %v5679 = vsel %vm5635, %v52, 0.0
    %v5680 = vsel %vm5635, %v53, 0.0
    %v5681 = vsel %vm5635, %v54, 0.0
    %v5682 = vsel %vm5636, %v55, 0.0
    %v5683 = vsel %vm5636, %v56, 0.0
    %v5684 = vsel %vm5636, %v57, 0.0
    %v5685 = vsel %vm5636, %v58, 0.0
    %v5686 = vsel %vm5636, %v59, 0.0
    %v5687 = vsel %vm5636, %v60, 0.0
    %v5688 = vsel %vm5636, %v61, 0.0
    %v5689 = vsel %vm5636, %v62, 0.0
    %v5690 = vsel %vm5636, %v63, 0.0
    %v5691 = vsel %vm5636, %v64, 0.0
    %v5692 = vsel %vm5636, %v65, 0.0
    %v5693 = vsel %vm5636, %v66, 0.0
    %v5694 = vsel %vm5636, %v67, 0.0
    %v5695 = vsel %vm5636, %v68, 0.0
    %v5696 = vsel %vm5636, %v69, 0.0
    %v5697 = vsel %vm5636, %v70, 0.0
    %v5698 = vsel %vm5637, %v71, 0.0
    %v5699 = vsel %vm5637, %v72, 0.0
    %v5700 = vsel %vm5637, %v73, 0.0
    %v5701 = vsel %vm5637, %v74, 0.0
    %v5702 = vsel %vm5637, %v75, 0.0
    %v5703 = vsel %vm5637, %v76, 0.0
    %v5704 = vsel %vm5637, %v77, 0.0
    %v5705 = vsel %vm5637, %v78, 0.0
    %v5706 = vsel %vm5637, %v79, 0.0
    %v5707 = vsel %vm5637, %v80, 0.0
    %v5708 = vsel %vm5637, %v81, 0.0
    %v5709 = vsel %vm5637, %v82, 0.0
    %v5710 = vsel %vm5637, %v83, 0.0
    %v5711 = vsel %vm5637, %v84, 0.0
    %v5712 = vsel %vm5637, %v85, 0.0
    %v5713 = vsel %vm5637, %v86, 0.0
    %v5714 = vsel %vm5638, %v87, 0.0
    %v5715 = vsel %vm5638, %v88, 0.0
    %v5716 = vsel %vm5638, %v89, 0.0
    %v5717 = vsel %vm5638, %v90, 0.0
    %v5718 = vsel %vm5638, %v91, 0.0
    %v5719 = vsel %vm5638, %v92, 0.0
    %v5720 = vsel %vm5638, %v93, 0.0
    %v5721 = vsel %vm5638, %v94, 0.0
    %v5722 = vsel %vm5638, %v95, 0.0
    %v5723 = vsel %vm5638, %v96, 0.0
    %v5724 = vsel %vm5638, %v97, 0.0
    %v5725 = vsel %vm5638, %v98, 0.0
    %v5726 = vsel %vm5638, %v99, 0.0
    %v5727 = vsel %vm5638, %v100, 0.0
    %v5728 = vsel %vm5638, %v101, 0.0
    %v5729 = vsel %vm5638, %v102, 0.0
    %v5730 = vsel %vm5639, %v103, 0.0
    %v5731 = vsel %vm5639, %v104, 0.0
    %v5732 = vsel %vm5639, %v105, 0.0
    %v5733 = vsel %vm5639, %v106, 0.0
    %v5734 = vsel %vm5639, %v107, 0.0
    %v5735 = vsel %vm5639, %v108, 0.0
    %v5736 = vsel %vm5639, %v109, 0.0
    %v5737 = vsel %vm5639, %v110, 0.0
    %v5738 = vsel %vm5639, %v111, 0.0
    %v5739 = vsel %vm5639, %v112, 0.0
    %v5740 = vsel %vm5639, %v113, 0.0
    %v5741 = vsel %vm5639, %v114, 0.0
    %v5742 = vsel %vm5639, %v115, 0.0
    %v5743 = vsel %vm5639, %v116, 0.0
    %v5744 = vsel %vm5639, %v117, 0.0
    %v5745 = vsel %vm5639, %v118, 0.0
    %v5746 = vsel %vm5640, %v119, 0.0
    %v5747 = vsel %vm5640, %v120, 0.0
    %v5748 = vsel %vm5640, %v121, 0.0
    %v5749 = vsel %vm5640, %v122, 0.0
    %v5750 = vsel %vm5640, %v123, 0.0
    %v5751 = vsel %vm5640, %v124, 0.0
    %v5752 = vsel %vm5640, %v125, 0.0
    %v5753 = vsel %vm5640, %v126, 0.0
    %v5754 = vsel %vm5640, %v127, 0.0
    %v5755 = vsel %vm5640, %v128, 0.0
    %v5756 = vsel %vm5640, %v129, 0.0
    %v5757 = vsel %vm5640, %v130, 0.0
    %v5758 = vsel %vm5640, %v131, 0.0
    %v5759 = vsel %vm5640, %v132, 0.0
    %v5760 = vsel %vm5640, %v133, 0.0
    %v5761 = vsel %vm5640, %v134, 0.0
    %v5762 = vsel %vm5641, %v135, 0.0
    %v5763 = vsel %vm5641, %v136, 0.0
    %v5764 = vsel %vm5641, %v137, 0.0
    %v5765 = vsel %vm5641, %v138, 0.0
    %v5766 = vsel %vm5641, %v139, 0.0
    %v5767 = vsel %vm5641, %v140, 0.0
    %v5768 = vsel %vm5641, %v141, 0.0
    %v5769 = vsel %vm5641, %v142, 0.0
    %v5770 = vsel %vm5641, %v143, 0.0
    %v5771 = vsel %vm5641, %v144, 0.0
    %v5772 = vsel %vm5641, %v145, 0.0
    %v5773 = vsel %vm5641, %v146, 0.0
    %v5774 = vsel %vm5641, %v147, 0.0
    %v5775 = vsel %vm5641, %v148, 0.0
    %v5776 = vsel %vm5641, %v149, 0.0
    %v5777 = vsel %vm5641, %v150, 0.0
    %v5778 = vsel %vm5642, %v151, 0.0
    %v5779 = vsel %vm5642, %v152, 0.0
    %v5780 = vsel %vm5642, %v153, 0.0
    %v5781 = vsel %vm5642, %v154, 0.0
    %v5782 = vsel %vm5642, %v155, 0.0
    %v5783 = vsel %vm5642, %v156, 0.0
    %v5784 = vsel %vm5642, %v157, 0.0
    %v5785 = vsel %vm5642, %v158, 0.0
    %v5786 = vsel %vm5642, %v159, 0.0
    %v5787 = vsel %vm5642, %v160, 0.0
    %v5788 = vsel %vm5642, %v161, 0.0
    %v5789 = vsel %vm5642, %v162, 0.0
    %v5790 = vsel %vm5642, %v163, 0.0
    %v5791 = vsel %vm5642, %v164, 0.0
    %v5792 = vsel %vm5642, %v165, 0.0
    %v5793 = vsel %vm5642, %v166, 0.0
    %v5794 = vsel %vm5643, %v167, 0.0
    %v5795 = vsel %vm5643, %v168, 0.0
    %v5796 = vsel %vm5643, %v169, 0.0
    %v5797 = vsel %vm5643, %v170, 0.0
    %v5798 = vsel %vm5643, %v171, 0.0
    %v5799 = vsel %vm5643, %v172, 0.0
    %v5800 = vsel %vm5643, %v173, 0.0
    %v5801 = vsel %vm5643, %v174, 0.0
    %v5802 = vsel %vm5643, %v175, 0.0
    %v5803 = vsel %vm5643, %v176, 0.0
    %v5804 = vsel %vm5643, %v177, 0.0
    %v5805 = vsel %vm5643, %v178, 0.0
    %v5806 = vsel %vm5643, %v179, 0.0
    %v5807 = vsel %vm5643, %v180, 0.0
    %v5808 = vsel %vm5643, %v181, 0.0
    %v5809 = vsel %vm5643, %v182, 0.0
    %v5810 = vsel %vm5644, %v183, 0.0
    %v5811 = vsel %vm5644, %v184, 0.0
    %v5812 = vsel %vm5644, %v185, 0.0
    %v5813 = vsel %vm5644, %v186, 0.0
    %v5814 = vsel %vm5644, %v187, 0.0
    %v5815 = vsel %vm5644, %v188, 0.0
    %v5816 = vsel %vm5644, %v189, 0.0
    %v5817 = vsel %vm5644, %v190, 0.0
    %v5818 = vsel %vm5644, %v191, 0.0
    %v5819 = vsel %vm5644, %v192, 0.0
    %v5820 = vsel %vm5644, %v193, 0.0
    %v5821 = vsel %vm5644, %v194, 0.0
    %v5822 = vsel %vm5644, %v195, 0.0
    %v5823 = vsel %vm5644, %v196, 0.0
    %v5824 = vsel %vm5644, %v197, 0.0
    %v5825 = vsel %vm5644, %v198, 0.0
    %v5826 = vsel %vm5645, %v199, 0.0
    %v5827 = vsel %vm5645, %v200, 0.0
    %v5828 = vsel %vm5645, %v201, 0.0
    %v5829 = vsel %vm5645, %v202, 0.0
    %v5830 = vsel %vm5645, %v203, 0.0
    %v5831 = vsel %vm5645, %v204, 0.0
    %v5832 = vsel %vm5645, %v205, 0.0
    %v5833 = vsel %vm5645, %v206, 0.0
    %v5834 = vsel %vm5645, %v207, 0.0
    %v5835 = vsel %vm5645, %v208, 0.0
    %v5836 = vsel %vm5645, %v209, 0.0
    %v5837 = vsel %vm5645, %v210, 0.0
    %v5838 = vsel %vm5645, %v211, 0.0
    %v5839 = vsel %vm5645, %v212, 0.0
    %v5840 = vsel %vm5645, %v213, 0.0
    %v5841 = vsel %vm5645, %v214, 0.0
    %v5842 = vsel %vm5646, %v215, 0.0
    %v5843 = vsel %vm5646, %v216, 0.0
    %v5844 = vsel %vm5646, %v217, 0.0
    %v5845 = vsel %vm5646, %v218, 0.0
    %v5846 = vsel %vm5646, %v219, 0.0
    %v5847 = vsel %vm5646, %v220, 0.0
    %v5848 = vsel %vm5646, %v221, 0.0
    %v5849 = vsel %vm5646, %v222, 0.0
    %v5850 = vsel %vm5646, %v223, 0.0
    %v5851 = vsel %vm5646, %v224, 0.0
    %v5852 = vsel %vm5646, %v225, 0.0
    %v5853 = vsel %vm5646, %v226, 0.0
    %v5854 = vsel %vm5646, %v227, 0.0
    %v5855 = vsel %vm5646, %v228, 0.0
    %v5856 = vsel %vm5646, %v229, 0.0
    %v5857 = vsel %vm5646, %v230, 0.0
    %v5858 = vsel %vm5647, %v231, 0.0
    %v5859 = vsel %vm5647, %v232, 0.0
    %v5860 = vsel %vm5647, %v233, 0.0
    %v5861 = vsel %vm5647, %v234, 0.0
    %v5862 = vsel %vm5647, %v235, 0.0
    %v5863 = vsel %vm5647, %v236, 0.0
    %v5864 = vsel %vm5647, %v237, 0.0
    %v5865 = vsel %vm5647, %v238, 0.0
    %v5866 = vsel %vm5647, %v239, 0.0
    %v5867 = vsel %vm5647, %v240, 0.0
    %v5868 = vsel %vm5647, %v241, 0.0
    %v5869 = vsel %vm5647, %v242, 0.0
    %v5870 = vsel %vm5647, %v243, 0.0
    %v5871 = vsel %vm5647, %v244, 0.0
    %v5872 = vsel %vm5647, %v245, 0.0
    %v5873 = vsel %vm5647, %v246, 0.0
    %v5874 = vsel %vm5648, %v247, 0.0
    %v5875 = vsel %vm5648, %v248, 0.0
    %v5876 = vsel %vm5648, %v249, 0.0
    %v5877 = vsel %vm5648, %v250, 0.0
    %v5878 = vsel %vm5648, %v251, 0.0
    %v5879 = vsel %vm5648, %v252, 0.0
    %v5880 = vsel %vm5648, %v253, 0.0
    %v5881 = vsel %vm5648, %v254, 0.0
    %v5882 = vsel %vm5648, %v255, 0.0
    %v5883 = vsel %vm5648, %v256, 0.0
    %v5884 = vsel %vm5648, %v257, 0.0
    %v5885 = vsel %vm5648, %v258, 0.0
    %v5886 = vsel %vm5648, %v259, 0.0
    %v5887 = vsel %vm5648, %v260, 0.0
    %v5888 = vsel %vm5648, %v261, 0.0
    %v5889 = vsel %vm5648, %v262, 0.0
    %v5890 = vsel %vm5649, %v263, 0.0
    %v5891 = vsel %vm5649, %v264, 0.0
    %v5892 = vsel %vm5649, %v265, 0.0
    %v5893 = vsel %vm5649, %v266, 0.0
    %v5894 = vsel %vm5649, %v267, 0.0
    %v5895 = vsel %vm5649, %v268, 0.0
    %v5896 = vsel %vm5649, %v269, 0.0
    %v5897 = vsel %vm5649, %v270, 0.0
    %v5898 = vsel %vm5649, %v271, 0.0
    %v5899 = vsel %vm5649, %v272, 0.0
    %v5900 = vsel %vm5649, %v273, 0.0
    %v5901 = vsel %vm5649, %v274, 0.0
    %v5902 = vsel %vm5649, %v275, 0.0
    %v5903 = vsel %vm5649, %v276, 0.0
    %v5904 = vsel %vm5649, %v277, 0.0
    %v5905 = vsel %vm5649, %v278, 0.0
    %v5906 = vsel %vm1719, %v5650, 0.0
    %v5907 = vsel %vm1719, %v5666, 0.0
    %v5908 = vadd.f32 %v5906, %v5907
    %v5909 = vsel %vm1719, %v5682, 0.0
    %v5910 = vadd.f32 %v5908, %v5909
    %v5911 = vsel %vm1719, %v5698, 0.0
    %v5912 = vadd.f32 %v5910, %v5911
    %v5913 = vsel %vm1719, %v5714, 0.0
    %v5914 = vadd.f32 %v5912, %v5913
    %v5915 = vsel %vm1719, %v5730, 0.0
    %v5916 = vadd.f32 %v5914, %v5915
    %v5917 = vsel %vm1719, %v5746, 0.0
    %v5918 = vadd.f32 %v5916, %v5917
    %v5919 = vsel %vm1719, %v5762, 0.0
    %v5920 = vadd.f32 %v5918, %v5919
    %v5921 = vsel %vm1719, %v5778, 0.0
    %v5922 = vadd.f32 %v5920, %v5921
    %v5923 = vsel %vm1719, %v5794, 0.0
    %v5924 = vadd.f32 %v5922, %v5923
    %v5925 = vsel %vm1719, %v5810, 0.0
    %v5926 = vadd.f32 %v5924, %v5925
    %v5927 = vsel %vm1719, %v5826, 0.0
    %v5928 = vadd.f32 %v5926, %v5927
    %v5929 = vsel %vm1719, %v5842, 0.0
    %v5930 = vadd.f32 %v5928, %v5929
    %v5931 = vsel %vm1719, %v5858, 0.0
    %v5932 = vadd.f32 %v5930, %v5931
    %v5933 = vsel %vm1719, %v5874, 0.0
    %v5934 = vadd.f32 %v5932, %v5933
    %v5935 = vsel %vm1719, %v5890, 0.0
    %v5936 = vadd.f32 %v5934, %v5935
    %v5937 = vsel %vm1719, %v5651, 0.0
    %v5938 = vsel %vm1719, %v5667, 0.0
    %v5939 = vadd.f32 %v5937, %v5938
    %v5940 = vsel %vm1719, %v5683, 0.0
    %v5941 = vadd.f32 %v5939, %v5940
    %v5942 = vsel %vm1719, %v5699, 0.0
    %v5943 = vadd.f32 %v5941, %v5942
    %v5944 = vsel %vm1719, %v5715, 0.0
    %v5945 = vadd.f32 %v5943, %v5944
    %v5946 = vsel %vm1719, %v5731, 0.0
    %v5947 = vadd.f32 %v5945, %v5946
    %v5948 = vsel %vm1719, %v5747, 0.0
    %v5949 = vadd.f32 %v5947, %v5948
    %v5950 = vsel %vm1719, %v5763, 0.0
    %v5951 = vadd.f32 %v5949, %v5950
    %v5952 = vsel %vm1719, %v5779, 0.0
    %v5953 = vadd.f32 %v5951, %v5952
    %v5954 = vsel %vm1719, %v5795, 0.0
    %v5955 = vadd.f32 %v5953, %v5954
    %v5956 = vsel %vm1719, %v5811, 0.0
    %v5957 = vadd.f32 %v5955, %v5956
    %v5958 = vsel %vm1719, %v5827, 0.0
    %v5959 = vadd.f32 %v5957, %v5958
    %v5960 = vsel %vm1719, %v5843, 0.0
    %v5961 = vadd.f32 %v5959, %v5960
    %v5962 = vsel %vm1719, %v5859, 0.0
    %v5963 = vadd.f32 %v5961, %v5962
    %v5964 = vsel %vm1719, %v5875, 0.0
    %v5965 = vadd.f32 %v5963, %v5964
    %v5966 = vsel %vm1719, %v5891, 0.0
    %v5967 = vadd.f32 %v5965, %v5966
    %v5968 = vsel %vm1719, %v5652, 0.0
    %v5969 = vsel %vm1719, %v5668, 0.0
    %v5970 = vadd.f32 %v5968, %v5969
    %v5971 = vsel %vm1719, %v5684, 0.0
    %v5972 = vadd.f32 %v5970, %v5971
    %v5973 = vsel %vm1719, %v5700, 0.0
    %v5974 = vadd.f32 %v5972, %v5973
    %v5975 = vsel %vm1719, %v5716, 0.0
    %v5976 = vadd.f32 %v5974, %v5975
    %v5977 = vsel %vm1719, %v5732, 0.0
    %v5978 = vadd.f32 %v5976, %v5977
    %v5979 = vsel %vm1719, %v5748, 0.0
    %v5980 = vadd.f32 %v5978, %v5979
    %v5981 = vsel %vm1719, %v5764, 0.0
    %v5982 = vadd.f32 %v5980, %v5981
    %v5983 = vsel %vm1719, %v5780, 0.0
    %v5984 = vadd.f32 %v5982, %v5983
    %v5985 = vsel %vm1719, %v5796, 0.0
    %v5986 = vadd.f32 %v5984, %v5985
    %v5987 = vsel %vm1719, %v5812, 0.0
    %v5988 = vadd.f32 %v5986, %v5987
    %v5989 = vsel %vm1719, %v5828, 0.0
    %v5990 = vadd.f32 %v5988, %v5989
    %v5991 = vsel %vm1719, %v5844, 0.0
    %v5992 = vadd.f32 %v5990, %v5991
    %v5993 = vsel %vm1719, %v5860, 0.0
    %v5994 = vadd.f32 %v5992, %v5993
    %v5995 = vsel %vm1719, %v5876, 0.0
    %v5996 = vadd.f32 %v5994, %v5995
    %v5997 = vsel %vm1719, %v5892, 0.0
    %v5998 = vadd.f32 %v5996, %v5997
    %v5999 = vsel %vm1719, %v5653, 0.0
    %v6000 = vsel %vm1719, %v5669, 0.0
    %v6001 = vadd.f32 %v5999, %v6000
    %v6002 = vsel %vm1719, %v5685, 0.0
    %v6003 = vadd.f32 %v6001, %v6002
    %v6004 = vsel %vm1719, %v5701, 0.0
    %v6005 = vadd.f32 %v6003, %v6004
    %v6006 = vsel %vm1719, %v5717, 0.0
    %v6007 = vadd.f32 %v6005, %v6006
    %v6008 = vsel %vm1719, %v5733, 0.0
    %v6009 = vadd.f32 %v6007, %v6008
    %v6010 = vsel %vm1719, %v5749, 0.0
    %v6011 = vadd.f32 %v6009, %v6010
    %v6012 = vsel %vm1719, %v5765, 0.0
    %v6013 = vadd.f32 %v6011, %v6012
    %v6014 = vsel %vm1719, %v5781, 0.0
    %v6015 = vadd.f32 %v6013, %v6014
    %v6016 = vsel %vm1719, %v5797, 0.0
    %v6017 = vadd.f32 %v6015, %v6016
    %v6018 = vsel %vm1719, %v5813, 0.0
    %v6019 = vadd.f32 %v6017, %v6018
    %v6020 = vsel %vm1719, %v5829, 0.0
    %v6021 = vadd.f32 %v6019, %v6020
    %v6022 = vsel %vm1719, %v5845, 0.0
    %v6023 = vadd.f32 %v6021, %v6022
    %v6024 = vsel %vm1719, %v5861, 0.0
    %v6025 = vadd.f32 %v6023, %v6024
    %v6026 = vsel %vm1719, %v5877, 0.0
    %v6027 = vadd.f32 %v6025, %v6026
    %v6028 = vsel %vm1719, %v5893, 0.0
    %v6029 = vadd.f32 %v6027, %v6028
    %v6030 = vsel %vm1719, %v5654, 0.0
    %v6031 = vsel %vm1719, %v5670, 0.0
    %v6032 = vadd.f32 %v6030, %v6031
    %v6033 = vsel %vm1719, %v5686, 0.0
    %v6034 = vadd.f32 %v6032, %v6033
    %v6035 = vsel %vm1719, %v5702, 0.0
    %v6036 = vadd.f32 %v6034, %v6035
    %v6037 = vsel %vm1719, %v5718, 0.0
    %v6038 = vadd.f32 %v6036, %v6037
    %v6039 = vsel %vm1719, %v5734, 0.0
    %v6040 = vadd.f32 %v6038, %v6039
    %v6041 = vsel %vm1719, %v5750, 0.0
    %v6042 = vadd.f32 %v6040, %v6041
    %v6043 = vsel %vm1719, %v5766, 0.0
    %v6044 = vadd.f32 %v6042, %v6043
    %v6045 = vsel %vm1719, %v5782, 0.0
    %v6046 = vadd.f32 %v6044, %v6045
    %v6047 = vsel %vm1719, %v5798, 0.0
    %v6048 = vadd.f32 %v6046, %v6047
    %v6049 = vsel %vm1719, %v5814, 0.0
    %v6050 = vadd.f32 %v6048, %v6049
    %v6051 = vsel %vm1719, %v5830, 0.0
    %v6052 = vadd.f32 %v6050, %v6051
    %v6053 = vsel %vm1719, %v5846, 0.0
    %v6054 = vadd.f32 %v6052, %v6053
    %v6055 = vsel %vm1719, %v5862, 0.0
    %v6056 = vadd.f32 %v6054, %v6055
    %v6057 = vsel %vm1719, %v5878, 0.0
    %v6058 = vadd.f32 %v6056, %v6057
    %v6059 = vsel %vm1719, %v5894, 0.0
    %v6060 = vadd.f32 %v6058, %v6059
    %v6061 = vsel %vm1719, %v5655, 0.0
    %v6062 = vsel %vm1719, %v5671, 0.0
    %v6063 = vadd.f32 %v6061, %v6062
    %v6064 = vsel %vm1719, %v5687, 0.0
    %v6065 = vadd.f32 %v6063, %v6064
    %v6066 = vsel %vm1719, %v5703, 0.0
    %v6067 = vadd.f32 %v6065, %v6066
    %v6068 = vsel %vm1719, %v5719, 0.0
    %v6069 = vadd.f32 %v6067, %v6068
    %v6070 = vsel %vm1719, %v5735, 0.0
    %v6071 = vadd.f32 %v6069, %v6070
    %v6072 = vsel %vm1719, %v5751, 0.0
    %v6073 = vadd.f32 %v6071, %v6072
    %v6074 = vsel %vm1719, %v5767, 0.0
    %v6075 = vadd.f32 %v6073, %v6074
    %v6076 = vsel %vm1719, %v5783, 0.0
    %v6077 = vadd.f32 %v6075, %v6076
    %v6078 = vsel %vm1719, %v5799, 0.0
    %v6079 = vadd.f32 %v6077, %v6078
    %v6080 = vsel %vm1719, %v5815, 0.0
    %v6081 = vadd.f32 %v6079, %v6080
    %v6082 = vsel %vm1719, %v5831, 0.0
    %v6083 = vadd.f32 %v6081, %v6082
    %v6084 = vsel %vm1719, %v5847, 0.0
    %v6085 = vadd.f32 %v6083, %v6084
    %v6086 = vsel %vm1719, %v5863, 0.0
    %v6087 = vadd.f32 %v6085, %v6086
    %v6088 = vsel %vm1719, %v5879, 0.0
    %v6089 = vadd.f32 %v6087, %v6088
    %v6090 = vsel %vm1719, %v5895, 0.0
    %v6091 = vadd.f32 %v6089, %v6090
    %v6092 = vsel %vm1719, %v5656, 0.0
    %v6093 = vsel %vm1719, %v5672, 0.0
    %v6094 = vadd.f32 %v6092, %v6093
    %v6095 = vsel %vm1719, %v5688, 0.0
    %v6096 = vadd.f32 %v6094, %v6095
    %v6097 = vsel %vm1719, %v5704, 0.0
    %v6098 = vadd.f32 %v6096, %v6097
    %v6099 = vsel %vm1719, %v5720, 0.0
    %v6100 = vadd.f32 %v6098, %v6099
    %v6101 = vsel %vm1719, %v5736, 0.0
    %v6102 = vadd.f32 %v6100, %v6101
    %v6103 = vsel %vm1719, %v5752, 0.0
    %v6104 = vadd.f32 %v6102, %v6103
    %v6105 = vsel %vm1719, %v5768, 0.0
    %v6106 = vadd.f32 %v6104, %v6105
    %v6107 = vsel %vm1719, %v5784, 0.0
    %v6108 = vadd.f32 %v6106, %v6107
    %v6109 = vsel %vm1719, %v5800, 0.0
    %v6110 = vadd.f32 %v6108, %v6109
    %v6111 = vsel %vm1719, %v5816, 0.0
    %v6112 = vadd.f32 %v6110, %v6111
    %v6113 = vsel %vm1719, %v5832, 0.0
    %v6114 = vadd.f32 %v6112, %v6113
    %v6115 = vsel %vm1719, %v5848, 0.0
    %v6116 = vadd.f32 %v6114, %v6115
    %v6117 = vsel %vm1719, %v5864, 0.0
    %v6118 = vadd.f32 %v6116, %v6117
    %v6119 = vsel %vm1719, %v5880, 0.0
    %v6120 = vadd.f32 %v6118, %v6119
    %v6121 = vsel %vm1719, %v5896, 0.0
    %v6122 = vadd.f32 %v6120, %v6121
    %v6123 = vsel %vm1719, %v5657, 0.0
    %v6124 = vsel %vm1719, %v5673, 0.0
    %v6125 = vadd.f32 %v6123, %v6124
    %v6126 = vsel %vm1719, %v5689, 0.0
    %v6127 = vadd.f32 %v6125, %v6126
    %v6128 = vsel %vm1719, %v5705, 0.0
    %v6129 = vadd.f32 %v6127, %v6128
    %v6130 = vsel %vm1719, %v5721, 0.0
    %v6131 = vadd.f32 %v6129, %v6130
    %v6132 = vsel %vm1719, %v5737, 0.0
    %v6133 = vadd.f32 %v6131, %v6132
    %v6134 = vsel %vm1719, %v5753, 0.0
    %v6135 = vadd.f32 %v6133, %v6134
    %v6136 = vsel %vm1719, %v5769, 0.0
    %v6137 = vadd.f32 %v6135, %v6136
    %v6138 = vsel %vm1719, %v5785, 0.0
    %v6139 = vadd.f32 %v6137, %v6138
    %v6140 = vsel %vm1719, %v5801, 0.0
    %v6141 = vadd.f32 %v6139, %v6140
    %v6142 = vsel %vm1719, %v5817, 0.0
    %v6143 = vadd.f32 %v6141, %v6142
    %v6144 = vsel %vm1719, %v5833, 0.0
    %v6145 = vadd.f32 %v6143, %v6144
    %v6146 = vsel %vm1719, %v5849, 0.0
    %v6147 = vadd.f32 %v6145, %v6146
    %v6148 = vsel %vm1719, %v5865, 0.0
    %v6149 = vadd.f32 %v6147, %v6148
    %v6150 = vsel %vm1719, %v5881, 0.0
    %v6151 = vadd.f32 %v6149, %v6150
    %v6152 = vsel %vm1719, %v5897, 0.0
    %v6153 = vadd.f32 %v6151, %v6152
    %v6154 = vsel %vm1719, %v5658, 0.0
    %v6155 = vsel %vm1719, %v5674, 0.0
    %v6156 = vadd.f32 %v6154, %v6155
    %v6157 = vsel %vm1719, %v5690, 0.0
    %v6158 = vadd.f32 %v6156, %v6157
    %v6159 = vsel %vm1719, %v5706, 0.0
    %v6160 = vadd.f32 %v6158, %v6159
    %v6161 = vsel %vm1719, %v5722, 0.0
    %v6162 = vadd.f32 %v6160, %v6161
    %v6163 = vsel %vm1719, %v5738, 0.0
    %v6164 = vadd.f32 %v6162, %v6163
    %v6165 = vsel %vm1719, %v5754, 0.0
    %v6166 = vadd.f32 %v6164, %v6165
    %v6167 = vsel %vm1719, %v5770, 0.0
    %v6168 = vadd.f32 %v6166, %v6167
    %v6169 = vsel %vm1719, %v5786, 0.0
    %v6170 = vadd.f32 %v6168, %v6169
    %v6171 = vsel %vm1719, %v5802, 0.0
    %v6172 = vadd.f32 %v6170, %v6171
    %v6173 = vsel %vm1719, %v5818, 0.0
    %v6174 = vadd.f32 %v6172, %v6173
    %v6175 = vsel %vm1719, %v5834, 0.0
    %v6176 = vadd.f32 %v6174, %v6175
    %v6177 = vsel %vm1719, %v5850, 0.0
    %v6178 = vadd.f32 %v6176, %v6177
    %v6179 = vsel %vm1719, %v5866, 0.0
    %v6180 = vadd.f32 %v6178, %v6179
    %v6181 = vsel %vm1719, %v5882, 0.0
    %v6182 = vadd.f32 %v6180, %v6181
    %v6183 = vsel %vm1719, %v5898, 0.0
    %v6184 = vadd.f32 %v6182, %v6183
    %v6185 = vsel %vm1719, %v5659, 0.0
    %v6186 = vsel %vm1719, %v5675, 0.0
    %v6187 = vadd.f32 %v6185, %v6186
    %v6188 = vsel %vm1719, %v5691, 0.0
    %v6189 = vadd.f32 %v6187, %v6188
    %v6190 = vsel %vm1719, %v5707, 0.0
    %v6191 = vadd.f32 %v6189, %v6190
    %v6192 = vsel %vm1719, %v5723, 0.0
    %v6193 = vadd.f32 %v6191, %v6192
    %v6194 = vsel %vm1719, %v5739, 0.0
    %v6195 = vadd.f32 %v6193, %v6194
    %v6196 = vsel %vm1719, %v5755, 0.0
    %v6197 = vadd.f32 %v6195, %v6196
    %v6198 = vsel %vm1719, %v5771, 0.0
    %v6199 = vadd.f32 %v6197, %v6198
    %v6200 = vsel %vm1719, %v5787, 0.0
    %v6201 = vadd.f32 %v6199, %v6200
    %v6202 = vsel %vm1719, %v5803, 0.0
    %v6203 = vadd.f32 %v6201, %v6202
    %v6204 = vsel %vm1719, %v5819, 0.0
    %v6205 = vadd.f32 %v6203, %v6204
    %v6206 = vsel %vm1719, %v5835, 0.0
    %v6207 = vadd.f32 %v6205, %v6206
    %v6208 = vsel %vm1719, %v5851, 0.0
    %v6209 = vadd.f32 %v6207, %v6208
    %v6210 = vsel %vm1719, %v5867, 0.0
    %v6211 = vadd.f32 %v6209, %v6210
    %v6212 = vsel %vm1719, %v5883, 0.0
    %v6213 = vadd.f32 %v6211, %v6212
    %v6214 = vsel %vm1719, %v5899, 0.0
    %v6215 = vadd.f32 %v6213, %v6214
    %v6216 = vsel %vm1719, %v5660, 0.0
    %v6217 = vsel %vm1719, %v5676, 0.0
    %v6218 = vadd.f32 %v6216, %v6217
    %v6219 = vsel %vm1719, %v5692, 0.0
    %v6220 = vadd.f32 %v6218, %v6219
    %v6221 = vsel %vm1719, %v5708, 0.0
    %v6222 = vadd.f32 %v6220, %v6221
    %v6223 = vsel %vm1719, %v5724, 0.0
    %v6224 = vadd.f32 %v6222, %v6223
    %v6225 = vsel %vm1719, %v5740, 0.0
    %v6226 = vadd.f32 %v6224, %v6225
    %v6227 = vsel %vm1719, %v5756, 0.0
    %v6228 = vadd.f32 %v6226, %v6227
    %v6229 = vsel %vm1719, %v5772, 0.0
    %v6230 = vadd.f32 %v6228, %v6229
    %v6231 = vsel %vm1719, %v5788, 0.0
    %v6232 = vadd.f32 %v6230, %v6231
    %v6233 = vsel %vm1719, %v5804, 0.0
    %v6234 = vadd.f32 %v6232, %v6233
    %v6235 = vsel %vm1719, %v5820, 0.0
    %v6236 = vadd.f32 %v6234, %v6235
    %v6237 = vsel %vm1719, %v5836, 0.0
    %v6238 = vadd.f32 %v6236, %v6237
    %v6239 = vsel %vm1719, %v5852, 0.0
    %v6240 = vadd.f32 %v6238, %v6239
    %v6241 = vsel %vm1719, %v5868, 0.0
    %v6242 = vadd.f32 %v6240, %v6241
    %v6243 = vsel %vm1719, %v5884, 0.0
    %v6244 = vadd.f32 %v6242, %v6243
    %v6245 = vsel %vm1719, %v5900, 0.0
    %v6246 = vadd.f32 %v6244, %v6245
    %v6247 = vsel %vm1719, %v5661, 0.0
    %v6248 = vsel %vm1719, %v5677, 0.0
    %v6249 = vadd.f32 %v6247, %v6248
    %v6250 = vsel %vm1719, %v5693, 0.0
    %v6251 = vadd.f32 %v6249, %v6250
    %v6252 = vsel %vm1719, %v5709, 0.0
    %v6253 = vadd.f32 %v6251, %v6252
    %v6254 = vsel %vm1719, %v5725, 0.0
    %v6255 = vadd.f32 %v6253, %v6254
    %v6256 = vsel %vm1719, %v5741, 0.0
    %v6257 = vadd.f32 %v6255, %v6256
    %v6258 = vsel %vm1719, %v5757, 0.0
    %v6259 = vadd.f32 %v6257, %v6258
    %v6260 = vsel %vm1719, %v5773, 0.0
    %v6261 = vadd.f32 %v6259, %v6260
    %v6262 = vsel %vm1719, %v5789, 0.0
    %v6263 = vadd.f32 %v6261, %v6262
    %v6264 = vsel %vm1719, %v5805, 0.0
    %v6265 = vadd.f32 %v6263, %v6264
    %v6266 = vsel %vm1719, %v5821, 0.0
    %v6267 = vadd.f32 %v6265, %v6266
    %v6268 = vsel %vm1719, %v5837, 0.0
    %v6269 = vadd.f32 %v6267, %v6268
    %v6270 = vsel %vm1719, %v5853, 0.0
    %v6271 = vadd.f32 %v6269, %v6270
    %v6272 = vsel %vm1719, %v5869, 0.0
    %v6273 = vadd.f32 %v6271, %v6272
    %v6274 = vsel %vm1719, %v5885, 0.0
    %v6275 = vadd.f32 %v6273, %v6274
    %v6276 = vsel %vm1719, %v5901, 0.0
    %v6277 = vadd.f32 %v6275, %v6276
    %v6278 = vsel %vm1719, %v5662, 0.0
    %v6279 = vsel %vm1719, %v5678, 0.0
    %v6280 = vadd.f32 %v6278, %v6279
    %v6281 = vsel %vm1719, %v5694, 0.0
    %v6282 = vadd.f32 %v6280, %v6281
    %v6283 = vsel %vm1719, %v5710, 0.0
    %v6284 = vadd.f32 %v6282, %v6283
    %v6285 = vsel %vm1719, %v5726, 0.0
    %v6286 = vadd.f32 %v6284, %v6285
    %v6287 = vsel %vm1719, %v5742, 0.0
    %v6288 = vadd.f32 %v6286, %v6287
    %v6289 = vsel %vm1719, %v5758, 0.0
    %v6290 = vadd.f32 %v6288, %v6289
    %v6291 = vsel %vm1719, %v5774, 0.0
    %v6292 = vadd.f32 %v6290, %v6291
    %v6293 = vsel %vm1719, %v5790, 0.0
    %v6294 = vadd.f32 %v6292, %v6293
    %v6295 = vsel %vm1719, %v5806, 0.0
    %v6296 = vadd.f32 %v6294, %v6295
    %v6297 = vsel %vm1719, %v5822, 0.0
    %v6298 = vadd.f32 %v6296, %v6297
    %v6299 = vsel %vm1719, %v5838, 0.0
    %v6300 = vadd.f32 %v6298, %v6299
    %v6301 = vsel %vm1719, %v5854, 0.0
    %v6302 = vadd.f32 %v6300, %v6301
    %v6303 = vsel %vm1719, %v5870, 0.0
    %v6304 = vadd.f32 %v6302, %v6303
    %v6305 = vsel %vm1719, %v5886, 0.0
    %v6306 = vadd.f32 %v6304, %v6305
    %v6307 = vsel %vm1719, %v5902, 0.0
    %v6308 = vadd.f32 %v6306, %v6307
    %v6309 = vsel %vm1719, %v5663, 0.0
    %v6310 = vsel %vm1719, %v5679, 0.0
    %v6311 = vadd.f32 %v6309, %v6310
    %v6312 = vsel %vm1719, %v5695, 0.0
    %v6313 = vadd.f32 %v6311, %v6312
    %v6314 = vsel %vm1719, %v5711, 0.0
    %v6315 = vadd.f32 %v6313, %v6314
    %v6316 = vsel %vm1719, %v5727, 0.0
    %v6317 = vadd.f32 %v6315, %v6316
    %v6318 = vsel %vm1719, %v5743, 0.0
    %v6319 = vadd.f32 %v6317, %v6318
    %v6320 = vsel %vm1719, %v5759, 0.0
    %v6321 = vadd.f32 %v6319, %v6320
    %v6322 = vsel %vm1719, %v5775, 0.0
    %v6323 = vadd.f32 %v6321, %v6322
    %v6324 = vsel %vm1719, %v5791, 0.0
    %v6325 = vadd.f32 %v6323, %v6324
    %v6326 = vsel %vm1719, %v5807, 0.0
    %v6327 = vadd.f32 %v6325, %v6326
    %v6328 = vsel %vm1719, %v5823, 0.0
    %v6329 = vadd.f32 %v6327, %v6328
    %v6330 = vsel %vm1719, %v5839, 0.0
    %v6331 = vadd.f32 %v6329, %v6330
    %v6332 = vsel %vm1719, %v5855, 0.0
    %v6333 = vadd.f32 %v6331, %v6332
    %v6334 = vsel %vm1719, %v5871, 0.0
    %v6335 = vadd.f32 %v6333, %v6334
    %v6336 = vsel %vm1719, %v5887, 0.0
    %v6337 = vadd.f32 %v6335, %v6336
    %v6338 = vsel %vm1719, %v5903, 0.0
    %v6339 = vadd.f32 %v6337, %v6338
    %v6340 = vsel %vm1719, %v5664, 0.0
    %v6341 = vsel %vm1719, %v5680, 0.0
    %v6342 = vadd.f32 %v6340, %v6341
    %v6343 = vsel %vm1719, %v5696, 0.0
    %v6344 = vadd.f32 %v6342, %v6343
    %v6345 = vsel %vm1719, %v5712, 0.0
    %v6346 = vadd.f32 %v6344, %v6345
    %v6347 = vsel %vm1719, %v5728, 0.0
    %v6348 = vadd.f32 %v6346, %v6347
    %v6349 = vsel %vm1719, %v5744, 0.0
    %v6350 = vadd.f32 %v6348, %v6349
    %v6351 = vsel %vm1719, %v5760, 0.0
    %v6352 = vadd.f32 %v6350, %v6351
    %v6353 = vsel %vm1719, %v5776, 0.0
    %v6354 = vadd.f32 %v6352, %v6353
    %v6355 = vsel %vm1719, %v5792, 0.0
    %v6356 = vadd.f32 %v6354, %v6355
    %v6357 = vsel %vm1719, %v5808, 0.0
    %v6358 = vadd.f32 %v6356, %v6357
    %v6359 = vsel %vm1719, %v5824, 0.0
    %v6360 = vadd.f32 %v6358, %v6359
    %v6361 = vsel %vm1719, %v5840, 0.0
    %v6362 = vadd.f32 %v6360, %v6361
    %v6363 = vsel %vm1719, %v5856, 0.0
    %v6364 = vadd.f32 %v6362, %v6363
    %v6365 = vsel %vm1719, %v5872, 0.0
    %v6366 = vadd.f32 %v6364, %v6365
    %v6367 = vsel %vm1719, %v5888, 0.0
    %v6368 = vadd.f32 %v6366, %v6367
    %v6369 = vsel %vm1719, %v5904, 0.0
    %v6370 = vadd.f32 %v6368, %v6369
    %v6371 = vsel %vm1719, %v5665, 0.0
    %v6372 = vsel %vm1719, %v5681, 0.0
    %v6373 = vadd.f32 %v6371, %v6372
    %v6374 = vsel %vm1719, %v5697, 0.0
    %v6375 = vadd.f32 %v6373, %v6374
    %v6376 = vsel %vm1719, %v5713, 0.0
    %v6377 = vadd.f32 %v6375, %v6376
    %v6378 = vsel %vm1719, %v5729, 0.0
    %v6379 = vadd.f32 %v6377, %v6378
    %v6380 = vsel %vm1719, %v5745, 0.0
    %v6381 = vadd.f32 %v6379, %v6380
    %v6382 = vsel %vm1719, %v5761, 0.0
    %v6383 = vadd.f32 %v6381, %v6382
    %v6384 = vsel %vm1719, %v5777, 0.0
    %v6385 = vadd.f32 %v6383, %v6384
    %v6386 = vsel %vm1719, %v5793, 0.0
    %v6387 = vadd.f32 %v6385, %v6386
    %v6388 = vsel %vm1719, %v5809, 0.0
    %v6389 = vadd.f32 %v6387, %v6388
    %v6390 = vsel %vm1719, %v5825, 0.0
    %v6391 = vadd.f32 %v6389, %v6390
    %v6392 = vsel %vm1719, %v5841, 0.0
    %v6393 = vadd.f32 %v6391, %v6392
    %v6394 = vsel %vm1719, %v5857, 0.0
    %v6395 = vadd.f32 %v6393, %v6394
    %v6396 = vsel %vm1719, %v5873, 0.0
    %v6397 = vadd.f32 %v6395, %v6396
    %v6398 = vsel %vm1719, %v5889, 0.0
    %v6399 = vadd.f32 %v6397, %v6398
    %v6400 = vsel %vm1719, %v5905, 0.0
    %v6401 = vadd.f32 %v6399, %v6400
    %v6402 = vsel %vm3557, %v5936, 0.0
    %v6403 = vsel %vm3558, %v5967, 0.0
    %v6404 = vsel %vm3559, %v5998, 0.0
    %v6405 = vsel %vm3560, %v6029, 0.0
    %v6406 = vsel %vm3561, %v6060, 0.0
    %v6407 = vsel %vm3562, %v6091, 0.0
    %v6408 = vsel %vm3563, %v6122, 0.0
    %v6409 = vsel %vm3564, %v6153, 0.0
    %v6410 = vsel %vm3565, %v6184, 0.0
    %v6411 = vsel %vm3566, %v6215, 0.0
    %v6412 = vsel %vm3567, %v6246, 0.0
    %v6413 = vsel %vm3568, %v6277, 0.0
    %v6414 = vsel %vm3569, %v6308, 0.0
    %v6415 = vsel %vm3570, %v6339, 0.0
    %v6416 = vsel %vm3571, %v6370, 0.0
    %v6417 = vsel %vm3572, %v6401, 0.0
    %v6418 = vsel %vm1719, %v6402, 0.0
    %v6419 = vsel %vm1719, %v6403, 0.0
    %v6420 = vadd.f32 %v6418, %v6419
    %v6421 = vsel %vm1719, %v6404, 0.0
    %v6422 = vadd.f32 %v6420, %v6421
    %v6423 = vsel %vm1719, %v6405, 0.0
    %v6424 = vadd.f32 %v6422, %v6423
    %v6425 = vsel %vm1719, %v6406, 0.0
    %v6426 = vadd.f32 %v6424, %v6425
    %v6427 = vsel %vm1719, %v6407, 0.0
    %v6428 = vadd.f32 %v6426, %v6427
    %v6429 = vsel %vm1719, %v6408, 0.0
    %v6430 = vadd.f32 %v6428, %v6429
    %v6431 = vsel %vm1719, %v6409, 0.0
    %v6432 = vadd.f32 %v6430, %v6431
    %v6433 = vsel %vm1719, %v6410, 0.0
    %v6434 = vadd.f32 %v6432, %v6433
    %v6435 = vsel %vm1719, %v6411, 0.0
    %v6436 = vadd.f32 %v6434, %v6435
    %v6437 = vsel %vm1719, %v6412, 0.0
    %v6438 = vadd.f32 %v6436, %v6437
    %v6439 = vsel %vm1719, %v6413, 0.0
    %v6440 = vadd.f32 %v6438, %v6439
    %v6441 = vsel %vm1719, %v6414, 0.0
    %v6442 = vadd.f32 %v6440, %v6441
    %v6443 = vsel %vm1719, %v6415, 0.0
    %v6444 = vadd.f32 %v6442, %v6443
    %v6445 = vsel %vm1719, %v6416, 0.0
    %v6446 = vadd.f32 %v6444, %v6445
    %v6447 = vsel %vm1719, %v6417, 0.0
    %v6448 = vadd.f32 %v6446, %v6447
    %v6449 = vsel %vm3574, %v5936, 0.0
    %v6450 = vsel %vm3575, %v5967, 0.0
    %v6451 = vsel %vm3576, %v5998, 0.0
    %v6452 = vsel %vm3577, %v6029, 0.0
    %v6453 = vsel %vm3578, %v6060, 0.0
    %v6454 = vsel %vm3579, %v6091, 0.0
    %v6455 = vsel %vm3580, %v6122, 0.0
    %v6456 = vsel %vm3581, %v6153, 0.0
    %v6457 = vsel %vm3582, %v6184, 0.0
    %v6458 = vsel %vm3583, %v6215, 0.0
    %v6459 = vsel %vm3584, %v6246, 0.0
    %v6460 = vsel %vm3585, %v6277, 0.0
    %v6461 = vsel %vm3586, %v6308, 0.0
    %v6462 = vsel %vm3587, %v6339, 0.0
    %v6463 = vsel %vm3588, %v6370, 0.0
    %v6464 = vsel %vm3589, %v6401, 0.0
    %v6465 = vsel %vm1719, %v6449, 0.0
    %v6466 = vsel %vm1719, %v6450, 0.0
    %v6467 = vadd.f32 %v6465, %v6466
    %v6468 = vsel %vm1719, %v6451, 0.0
    %v6469 = vadd.f32 %v6467, %v6468
    %v6470 = vsel %vm1719, %v6452, 0.0
    %v6471 = vadd.f32 %v6469, %v6470
    %v6472 = vsel %vm1719, %v6453, 0.0
    %v6473 = vadd.f32 %v6471, %v6472
    %v6474 = vsel %vm1719, %v6454, 0.0
    %v6475 = vadd.f32 %v6473, %v6474
    %v6476 = vsel %vm1719, %v6455, 0.0
    %v6477 = vadd.f32 %v6475, %v6476
    %v6478 = vsel %vm1719, %v6456, 0.0
    %v6479 = vadd.f32 %v6477, %v6478
    %v6480 = vsel %vm1719, %v6457, 0.0
    %v6481 = vadd.f32 %v6479, %v6480
    %v6482 = vsel %vm1719, %v6458, 0.0
    %v6483 = vadd.f32 %v6481, %v6482
    %v6484 = vsel %vm1719, %v6459, 0.0
    %v6485 = vadd.f32 %v6483, %v6484
    %v6486 = vsel %vm1719, %v6460, 0.0
    %v6487 = vadd.f32 %v6485, %v6486
    %v6488 = vsel %vm1719, %v6461, 0.0
    %v6489 = vadd.f32 %v6487, %v6488
    %v6490 = vsel %vm1719, %v6462, 0.0
    %v6491 = vadd.f32 %v6489, %v6490
    %v6492 = vsel %vm1719, %v6463, 0.0
    %v6493 = vadd.f32 %v6491, %v6492
    %v6494 = vsel %vm1719, %v6464, 0.0
    %v6495 = vadd.f32 %v6493, %v6494
    %v6496 = vsel %vm3591, %v5936, 0.0
    %v6497 = vsel %vm3592, %v5967, 0.0
    %v6498 = vsel %vm3593, %v5998, 0.0
    %v6499 = vsel %vm3594, %v6029, 0.0
    %v6500 = vsel %vm3595, %v6060, 0.0
    %v6501 = vsel %vm3596, %v6091, 0.0
    %v6502 = vsel %vm3597, %v6122, 0.0
    %v6503 = vsel %vm3598, %v6153, 0.0
    %v6504 = vsel %vm3599, %v6184, 0.0
    %v6505 = vsel %vm3600, %v6215, 0.0
    %v6506 = vsel %vm3601, %v6246, 0.0
    %v6507 = vsel %vm3602, %v6277, 0.0
    %v6508 = vsel %vm3603, %v6308, 0.0
    %v6509 = vsel %vm3604, %v6339, 0.0
    %v6510 = vsel %vm3605, %v6370, 0.0
    %v6511 = vsel %vm3606, %v6401, 0.0
    %v6512 = vsel %vm1719, %v6496, 0.0
    %v6513 = vsel %vm1719, %v6497, 0.0
    %v6514 = vadd.f32 %v6512, %v6513
    %v6515 = vsel %vm1719, %v6498, 0.0
    %v6516 = vadd.f32 %v6514, %v6515
    %v6517 = vsel %vm1719, %v6499, 0.0
    %v6518 = vadd.f32 %v6516, %v6517
    %v6519 = vsel %vm1719, %v6500, 0.0
    %v6520 = vadd.f32 %v6518, %v6519
    %v6521 = vsel %vm1719, %v6501, 0.0
    %v6522 = vadd.f32 %v6520, %v6521
    %v6523 = vsel %vm1719, %v6502, 0.0
    %v6524 = vadd.f32 %v6522, %v6523
    %v6525 = vsel %vm1719, %v6503, 0.0
    %v6526 = vadd.f32 %v6524, %v6525
    %v6527 = vsel %vm1719, %v6504, 0.0
    %v6528 = vadd.f32 %v6526, %v6527
    %v6529 = vsel %vm1719, %v6505, 0.0
    %v6530 = vadd.f32 %v6528, %v6529
    %v6531 = vsel %vm1719, %v6506, 0.0
    %v6532 = vadd.f32 %v6530, %v6531
    %v6533 = vsel %vm1719, %v6507, 0.0
    %v6534 = vadd.f32 %v6532, %v6533
    %v6535 = vsel %vm1719, %v6508, 0.0
    %v6536 = vadd.f32 %v6534, %v6535
    %v6537 = vsel %vm1719, %v6509, 0.0
    %v6538 = vadd.f32 %v6536, %v6537
    %v6539 = vsel %vm1719, %v6510, 0.0
    %v6540 = vadd.f32 %v6538, %v6539
    %v6541 = vsel %vm1719, %v6511, 0.0
    %v6542 = vadd.f32 %v6540, %v6541
    %v6543 = vsel %vm3608, %v5936, 0.0
    %v6544 = vsel %vm3609, %v5967, 0.0
    %v6545 = vsel %vm3610, %v5998, 0.0
    %v6546 = vsel %vm3611, %v6029, 0.0
    %v6547 = vsel %vm3612, %v6060, 0.0
    %v6548 = vsel %vm3613, %v6091, 0.0
    %v6549 = vsel %vm3614, %v6122, 0.0
    %v6550 = vsel %vm3615, %v6153, 0.0
    %v6551 = vsel %vm3616, %v6184, 0.0
    %v6552 = vsel %vm3617, %v6215, 0.0
    %v6553 = vsel %vm3618, %v6246, 0.0
    %v6554 = vsel %vm3619, %v6277, 0.0
    %v6555 = vsel %vm3620, %v6308, 0.0
    %v6556 = vsel %vm3621, %v6339, 0.0
    %v6557 = vsel %vm3622, %v6370, 0.0
    %v6558 = vsel %vm3623, %v6401, 0.0
    %v6559 = vsel %vm1719, %v6543, 0.0
    %v6560 = vsel %vm1719, %v6544, 0.0
    %v6561 = vadd.f32 %v6559, %v6560
    %v6562 = vsel %vm1719, %v6545, 0.0
    %v6563 = vadd.f32 %v6561, %v6562
    %v6564 = vsel %vm1719, %v6546, 0.0
    %v6565 = vadd.f32 %v6563, %v6564
    %v6566 = vsel %vm1719, %v6547, 0.0
    %v6567 = vadd.f32 %v6565, %v6566
    %v6568 = vsel %vm1719, %v6548, 0.0
    %v6569 = vadd.f32 %v6567, %v6568
    %v6570 = vsel %vm1719, %v6549, 0.0
    %v6571 = vadd.f32 %v6569, %v6570
    %v6572 = vsel %vm1719, %v6550, 0.0
    %v6573 = vadd.f32 %v6571, %v6572
    %v6574 = vsel %vm1719, %v6551, 0.0
    %v6575 = vadd.f32 %v6573, %v6574
    %v6576 = vsel %vm1719, %v6552, 0.0
    %v6577 = vadd.f32 %v6575, %v6576
    %v6578 = vsel %vm1719, %v6553, 0.0
    %v6579 = vadd.f32 %v6577, %v6578
    %v6580 = vsel %vm1719, %v6554, 0.0
    %v6581 = vadd.f32 %v6579, %v6580
    %v6582 = vsel %vm1719, %v6555, 0.0
    %v6583 = vadd.f32 %v6581, %v6582
    %v6584 = vsel %vm1719, %v6556, 0.0
    %v6585 = vadd.f32 %v6583, %v6584
    %v6586 = vsel %vm1719, %v6557, 0.0
    %v6587 = vadd.f32 %v6585, %v6586
    %v6588 = vsel %vm1719, %v6558, 0.0
    %v6589 = vadd.f32 %v6587, %v6588
    %v6590 = vadd.s32 %v3555, 3
    %vm6591 = vcmp.eq.s32.totalorder %v6590, 0
    %vm6592 = vcmp.eq.s32.totalorder %v6590, 1
    %vm6593 = vcmp.eq.s32.totalorder %v6590, 2
    %vm6594 = vcmp.eq.s32.totalorder %v6590, 3
    %vm6595 = vcmp.eq.s32.totalorder %v6590, 4
    %vm6596 = vcmp.eq.s32.totalorder %v6590, 5
    %vm6597 = vcmp.eq.s32.totalorder %v6590, 6
    %vm6598 = vcmp.eq.s32.totalorder %v6590, 7
    %vm6599 = vcmp.eq.s32.totalorder %v6590, 8
    %vm6600 = vcmp.eq.s32.totalorder %v6590, 9
    %vm6601 = vcmp.eq.s32.totalorder %v6590, 10
    %vm6602 = vcmp.eq.s32.totalorder %v6590, 11
    %vm6603 = vcmp.eq.s32.totalorder %v6590, 12
    %vm6604 = vcmp.eq.s32.totalorder %v6590, 13
    %vm6605 = vcmp.eq.s32.totalorder %v6590, 14
    %vm6606 = vcmp.eq.s32.totalorder %v6590, 15
    %v6607 = vsel %vm6591, 1, 0
    %v6608 = vsel %vm6592, 1, 0
    %v6609 = vsel %vm6593, 1, 0
    %v6610 = vsel %vm6594, 1, 0
    %v6611 = vsel %vm6595, 1, 0
    %v6612 = vsel %vm6596, 1, 0
    %v6613 = vsel %vm6597, 1, 0
    %v6614 = vsel %vm6598, 1, 0
    %v6615 = vsel %vm6599, 1, 0
    %v6616 = vsel %vm6600, 1, 0
    %v6617 = vsel %vm6601, 1, 0
    %v6618 = vsel %vm6602, 1, 0
    %v6619 = vsel %vm6603, 1, 0
    %v6620 = vsel %vm6604, 1, 0
    %v6621 = vsel %vm6605, 1, 0
    %v6622 = vsel %vm6606, 1, 0
    %vm6623 = vcmp.eq.s32.totalorder %v6607, 1
    %vm6624 = vcmp.eq.s32.totalorder %v6608, 1
    %vm6625 = vcmp.eq.s32.totalorder %v6609, 1
    %vm6626 = vcmp.eq.s32.totalorder %v6610, 1
    %vm6627 = vcmp.eq.s32.totalorder %v6611, 1
    %vm6628 = vcmp.eq.s32.totalorder %v6612, 1
    %vm6629 = vcmp.eq.s32.totalorder %v6613, 1
    %vm6630 = vcmp.eq.s32.totalorder %v6614, 1
    %vm6631 = vcmp.eq.s32.totalorder %v6615, 1
    %vm6632 = vcmp.eq.s32.totalorder %v6616, 1
    %vm6633 = vcmp.eq.s32.totalorder %v6617, 1
    %vm6634 = vcmp.eq.s32.totalorder %v6618, 1
    %vm6635 = vcmp.eq.s32.totalorder %v6619, 1
    %vm6636 = vcmp.eq.s32.totalorder %v6620, 1
    %vm6637 = vcmp.eq.s32.totalorder %v6621, 1
    %vm6638 = vcmp.eq.s32.totalorder %v6622, 1
    %v6639 = vsel %vm6623, %v23, 0.0
    %v6640 = vsel %vm6623, %v24, 0.0
    %v6641 = vsel %vm6623, %v25, 0.0
    %v6642 = vsel %vm6623, %v26, 0.0
    %v6643 = vsel %vm6623, %v27, 0.0
    %v6644 = vsel %vm6623, %v28, 0.0
    %v6645 = vsel %vm6623, %v29, 0.0
    %v6646 = vsel %vm6623, %v30, 0.0
    %v6647 = vsel %vm6623, %v31, 0.0
    %v6648 = vsel %vm6623, %v32, 0.0
    %v6649 = vsel %vm6623, %v33, 0.0
    %v6650 = vsel %vm6623, %v34, 0.0
    %v6651 = vsel %vm6623, %v35, 0.0
    %v6652 = vsel %vm6623, %v36, 0.0
    %v6653 = vsel %vm6623, %v37, 0.0
    %v6654 = vsel %vm6623, %v38, 0.0
    %v6655 = vsel %vm6624, %v39, 0.0
    %v6656 = vsel %vm6624, %v40, 0.0
    %v6657 = vsel %vm6624, %v41, 0.0
    %v6658 = vsel %vm6624, %v42, 0.0
    %v6659 = vsel %vm6624, %v43, 0.0
    %v6660 = vsel %vm6624, %v44, 0.0
    %v6661 = vsel %vm6624, %v45, 0.0
    %v6662 = vsel %vm6624, %v46, 0.0
    %v6663 = vsel %vm6624, %v47, 0.0
    %v6664 = vsel %vm6624, %v48, 0.0
    %v6665 = vsel %vm6624, %v49, 0.0
    %v6666 = vsel %vm6624, %v50, 0.0
    %v6667 = vsel %vm6624, %v51, 0.0
    %v6668 = vsel %vm6624, %v52, 0.0
    %v6669 = vsel %vm6624, %v53, 0.0
    %v6670 = vsel %vm6624, %v54, 0.0
    %v6671 = vsel %vm6625, %v55, 0.0
    %v6672 = vsel %vm6625, %v56, 0.0
    %v6673 = vsel %vm6625, %v57, 0.0
    %v6674 = vsel %vm6625, %v58, 0.0
    %v6675 = vsel %vm6625, %v59, 0.0
    %v6676 = vsel %vm6625, %v60, 0.0
    %v6677 = vsel %vm6625, %v61, 0.0
    %v6678 = vsel %vm6625, %v62, 0.0
    %v6679 = vsel %vm6625, %v63, 0.0
    %v6680 = vsel %vm6625, %v64, 0.0
    %v6681 = vsel %vm6625, %v65, 0.0
    %v6682 = vsel %vm6625, %v66, 0.0
    %v6683 = vsel %vm6625, %v67, 0.0
    %v6684 = vsel %vm6625, %v68, 0.0
    %v6685 = vsel %vm6625, %v69, 0.0
    %v6686 = vsel %vm6625, %v70, 0.0
    %v6687 = vsel %vm6626, %v71, 0.0
    %v6688 = vsel %vm6626, %v72, 0.0
    %v6689 = vsel %vm6626, %v73, 0.0
    %v6690 = vsel %vm6626, %v74, 0.0
    %v6691 = vsel %vm6626, %v75, 0.0
    %v6692 = vsel %vm6626, %v76, 0.0
    %v6693 = vsel %vm6626, %v77, 0.0
    %v6694 = vsel %vm6626, %v78, 0.0
    %v6695 = vsel %vm6626, %v79, 0.0
    %v6696 = vsel %vm6626, %v80, 0.0
    %v6697 = vsel %vm6626, %v81, 0.0
    %v6698 = vsel %vm6626, %v82, 0.0
    %v6699 = vsel %vm6626, %v83, 0.0
    %v6700 = vsel %vm6626, %v84, 0.0
    %v6701 = vsel %vm6626, %v85, 0.0
    %v6702 = vsel %vm6626, %v86, 0.0
    %v6703 = vsel %vm6627, %v87, 0.0
    %v6704 = vsel %vm6627, %v88, 0.0
    %v6705 = vsel %vm6627, %v89, 0.0
    %v6706 = vsel %vm6627, %v90, 0.0
    %v6707 = vsel %vm6627, %v91, 0.0
    %v6708 = vsel %vm6627, %v92, 0.0
    %v6709 = vsel %vm6627, %v93, 0.0
    %v6710 = vsel %vm6627, %v94, 0.0
    %v6711 = vsel %vm6627, %v95, 0.0
    %v6712 = vsel %vm6627, %v96, 0.0
    %v6713 = vsel %vm6627, %v97, 0.0
    %v6714 = vsel %vm6627, %v98, 0.0
    %v6715 = vsel %vm6627, %v99, 0.0
    %v6716 = vsel %vm6627, %v100, 0.0
    %v6717 = vsel %vm6627, %v101, 0.0
    %v6718 = vsel %vm6627, %v102, 0.0
    %v6719 = vsel %vm6628, %v103, 0.0
    %v6720 = vsel %vm6628, %v104, 0.0
    %v6721 = vsel %vm6628, %v105, 0.0
    %v6722 = vsel %vm6628, %v106, 0.0
    %v6723 = vsel %vm6628, %v107, 0.0
    %v6724 = vsel %vm6628, %v108, 0.0
    %v6725 = vsel %vm6628, %v109, 0.0
    %v6726 = vsel %vm6628, %v110, 0.0
    %v6727 = vsel %vm6628, %v111, 0.0
    %v6728 = vsel %vm6628, %v112, 0.0
    %v6729 = vsel %vm6628, %v113, 0.0
    %v6730 = vsel %vm6628, %v114, 0.0
    %v6731 = vsel %vm6628, %v115, 0.0
    %v6732 = vsel %vm6628, %v116, 0.0
    %v6733 = vsel %vm6628, %v117, 0.0
    %v6734 = vsel %vm6628, %v118, 0.0
    %v6735 = vsel %vm6629, %v119, 0.0
    %v6736 = vsel %vm6629, %v120, 0.0
    %v6737 = vsel %vm6629, %v121, 0.0
    %v6738 = vsel %vm6629, %v122, 0.0
    %v6739 = vsel %vm6629, %v123, 0.0
    %v6740 = vsel %vm6629, %v124, 0.0
    %v6741 = vsel %vm6629, %v125, 0.0
    %v6742 = vsel %vm6629, %v126, 0.0
    %v6743 = vsel %vm6629, %v127, 0.0
    %v6744 = vsel %vm6629, %v128, 0.0
    %v6745 = vsel %vm6629, %v129, 0.0
    %v6746 = vsel %vm6629, %v130, 0.0
    %v6747 = vsel %vm6629, %v131, 0.0
    %v6748 = vsel %vm6629, %v132, 0.0
    %v6749 = vsel %vm6629, %v133, 0.0
    %v6750 = vsel %vm6629, %v134, 0.0
    %v6751 = vsel %vm6630, %v135, 0.0
    %v6752 = vsel %vm6630, %v136, 0.0
    %v6753 = vsel %vm6630, %v137, 0.0
    %v6754 = vsel %vm6630, %v138, 0.0
    %v6755 = vsel %vm6630, %v139, 0.0
    %v6756 = vsel %vm6630, %v140, 0.0
    %v6757 = vsel %vm6630, %v141, 0.0
    %v6758 = vsel %vm6630, %v142, 0.0
    %v6759 = vsel %vm6630, %v143, 0.0
    %v6760 = vsel %vm6630, %v144, 0.0
    %v6761 = vsel %vm6630, %v145, 0.0
    %v6762 = vsel %vm6630, %v146, 0.0
    %v6763 = vsel %vm6630, %v147, 0.0
    %v6764 = vsel %vm6630, %v148, 0.0
    %v6765 = vsel %vm6630, %v149, 0.0
    %v6766 = vsel %vm6630, %v150, 0.0
    %v6767 = vsel %vm6631, %v151, 0.0
    %v6768 = vsel %vm6631, %v152, 0.0
    %v6769 = vsel %vm6631, %v153, 0.0
    %v6770 = vsel %vm6631, %v154, 0.0
    %v6771 = vsel %vm6631, %v155, 0.0
    %v6772 = vsel %vm6631, %v156, 0.0
    %v6773 = vsel %vm6631, %v157, 0.0
    %v6774 = vsel %vm6631, %v158, 0.0
    %v6775 = vsel %vm6631, %v159, 0.0
    %v6776 = vsel %vm6631, %v160, 0.0
    %v6777 = vsel %vm6631, %v161, 0.0
    %v6778 = vsel %vm6631, %v162, 0.0
    %v6779 = vsel %vm6631, %v163, 0.0
    %v6780 = vsel %vm6631, %v164, 0.0
    %v6781 = vsel %vm6631, %v165, 0.0
    %v6782 = vsel %vm6631, %v166, 0.0
    %v6783 = vsel %vm6632, %v167, 0.0
    %v6784 = vsel %vm6632, %v168, 0.0
    %v6785 = vsel %vm6632, %v169, 0.0
    %v6786 = vsel %vm6632, %v170, 0.0
    %v6787 = vsel %vm6632, %v171, 0.0
    %v6788 = vsel %vm6632, %v172, 0.0
    %v6789 = vsel %vm6632, %v173, 0.0
    %v6790 = vsel %vm6632, %v174, 0.0
    %v6791 = vsel %vm6632, %v175, 0.0
    %v6792 = vsel %vm6632, %v176, 0.0
    %v6793 = vsel %vm6632, %v177, 0.0
    %v6794 = vsel %vm6632, %v178, 0.0
    %v6795 = vsel %vm6632, %v179, 0.0
    %v6796 = vsel %vm6632, %v180, 0.0
    %v6797 = vsel %vm6632, %v181, 0.0
    %v6798 = vsel %vm6632, %v182, 0.0
    %v6799 = vsel %vm6633, %v183, 0.0
    %v6800 = vsel %vm6633, %v184, 0.0
    %v6801 = vsel %vm6633, %v185, 0.0
    %v6802 = vsel %vm6633, %v186, 0.0
    %v6803 = vsel %vm6633, %v187, 0.0
    %v6804 = vsel %vm6633, %v188, 0.0
    %v6805 = vsel %vm6633, %v189, 0.0
    %v6806 = vsel %vm6633, %v190, 0.0
    %v6807 = vsel %vm6633, %v191, 0.0
    %v6808 = vsel %vm6633, %v192, 0.0
    %v6809 = vsel %vm6633, %v193, 0.0
    %v6810 = vsel %vm6633, %v194, 0.0
    %v6811 = vsel %vm6633, %v195, 0.0
    %v6812 = vsel %vm6633, %v196, 0.0
    %v6813 = vsel %vm6633, %v197, 0.0
    %v6814 = vsel %vm6633, %v198, 0.0
    %v6815 = vsel %vm6634, %v199, 0.0
    %v6816 = vsel %vm6634, %v200, 0.0
    %v6817 = vsel %vm6634, %v201, 0.0
    %v6818 = vsel %vm6634, %v202, 0.0
    %v6819 = vsel %vm6634, %v203, 0.0
    %v6820 = vsel %vm6634, %v204, 0.0
    %v6821 = vsel %vm6634, %v205, 0.0
    %v6822 = vsel %vm6634, %v206, 0.0
    %v6823 = vsel %vm6634, %v207, 0.0
    %v6824 = vsel %vm6634, %v208, 0.0
    %v6825 = vsel %vm6634, %v209, 0.0
    %v6826 = vsel %vm6634, %v210, 0.0
    %v6827 = vsel %vm6634, %v211, 0.0
    %v6828 = vsel %vm6634, %v212, 0.0
    %v6829 = vsel %vm6634, %v213, 0.0
    %v6830 = vsel %vm6634, %v214, 0.0
    %v6831 = vsel %vm6635, %v215, 0.0
    %v6832 = vsel %vm6635, %v216, 0.0
    %v6833 = vsel %vm6635, %v217, 0.0
    %v6834 = vsel %vm6635, %v218, 0.0
    %v6835 = vsel %vm6635, %v219, 0.0
    %v6836 = vsel %vm6635, %v220, 0.0
    %v6837 = vsel %vm6635, %v221, 0.0
    %v6838 = vsel %vm6635, %v222, 0.0
    %v6839 = vsel %vm6635, %v223, 0.0
    %v6840 = vsel %vm6635, %v224, 0.0
    %v6841 = vsel %vm6635, %v225, 0.0
    %v6842 = vsel %vm6635, %v226, 0.0
    %v6843 = vsel %vm6635, %v227, 0.0
    %v6844 = vsel %vm6635, %v228, 0.0
    %v6845 = vsel %vm6635, %v229, 0.0
    %v6846 = vsel %vm6635, %v230, 0.0
    %v6847 = vsel %vm6636, %v231, 0.0
    %v6848 = vsel %vm6636, %v232, 0.0
    %v6849 = vsel %vm6636, %v233, 0.0
    %v6850 = vsel %vm6636, %v234, 0.0
    %v6851 = vsel %vm6636, %v235, 0.0
    %v6852 = vsel %vm6636, %v236, 0.0
    %v6853 = vsel %vm6636, %v237, 0.0
    %v6854 = vsel %vm6636, %v238, 0.0
    %v6855 = vsel %vm6636, %v239, 0.0
    %v6856 = vsel %vm6636, %v240, 0.0
    %v6857 = vsel %vm6636, %v241, 0.0
    %v6858 = vsel %vm6636, %v242, 0.0
    %v6859 = vsel %vm6636, %v243, 0.0
    %v6860 = vsel %vm6636, %v244, 0.0
    %v6861 = vsel %vm6636, %v245, 0.0
    %v6862 = vsel %vm6636, %v246, 0.0
    %v6863 = vsel %vm6637, %v247, 0.0
    %v6864 = vsel %vm6637, %v248, 0.0
    %v6865 = vsel %vm6637, %v249, 0.0
    %v6866 = vsel %vm6637, %v250, 0.0
    %v6867 = vsel %vm6637, %v251, 0.0
    %v6868 = vsel %vm6637, %v252, 0.0
    %v6869 = vsel %vm6637, %v253, 0.0
    %v6870 = vsel %vm6637, %v254, 0.0
    %v6871 = vsel %vm6637, %v255, 0.0
    %v6872 = vsel %vm6637, %v256, 0.0
    %v6873 = vsel %vm6637, %v257, 0.0
    %v6874 = vsel %vm6637, %v258, 0.0
    %v6875 = vsel %vm6637, %v259, 0.0
    %v6876 = vsel %vm6637, %v260, 0.0
    %v6877 = vsel %vm6637, %v261, 0.0
    %v6878 = vsel %vm6637, %v262, 0.0
    %v6879 = vsel %vm6638, %v263, 0.0
    %v6880 = vsel %vm6638, %v264, 0.0
    %v6881 = vsel %vm6638, %v265, 0.0
    %v6882 = vsel %vm6638, %v266, 0.0
    %v6883 = vsel %vm6638, %v267, 0.0
    %v6884 = vsel %vm6638, %v268, 0.0
    %v6885 = vsel %vm6638, %v269, 0.0
    %v6886 = vsel %vm6638, %v270, 0.0
    %v6887 = vsel %vm6638, %v271, 0.0
    %v6888 = vsel %vm6638, %v272, 0.0
    %v6889 = vsel %vm6638, %v273, 0.0
    %v6890 = vsel %vm6638, %v274, 0.0
    %v6891 = vsel %vm6638, %v275, 0.0
    %v6892 = vsel %vm6638, %v276, 0.0
    %v6893 = vsel %vm6638, %v277, 0.0
    %v6894 = vsel %vm6638, %v278, 0.0
    %v6895 = vsel %vm1719, %v6639, 0.0
    %v6896 = vsel %vm1719, %v6655, 0.0
    %v6897 = vadd.f32 %v6895, %v6896
    %v6898 = vsel %vm1719, %v6671, 0.0
    %v6899 = vadd.f32 %v6897, %v6898
    %v6900 = vsel %vm1719, %v6687, 0.0
    %v6901 = vadd.f32 %v6899, %v6900
    %v6902 = vsel %vm1719, %v6703, 0.0
    %v6903 = vadd.f32 %v6901, %v6902
    %v6904 = vsel %vm1719, %v6719, 0.0
    %v6905 = vadd.f32 %v6903, %v6904
    %v6906 = vsel %vm1719, %v6735, 0.0
    %v6907 = vadd.f32 %v6905, %v6906
    %v6908 = vsel %vm1719, %v6751, 0.0
    %v6909 = vadd.f32 %v6907, %v6908
    %v6910 = vsel %vm1719, %v6767, 0.0
    %v6911 = vadd.f32 %v6909, %v6910
    %v6912 = vsel %vm1719, %v6783, 0.0
    %v6913 = vadd.f32 %v6911, %v6912
    %v6914 = vsel %vm1719, %v6799, 0.0
    %v6915 = vadd.f32 %v6913, %v6914
    %v6916 = vsel %vm1719, %v6815, 0.0
    %v6917 = vadd.f32 %v6915, %v6916
    %v6918 = vsel %vm1719, %v6831, 0.0
    %v6919 = vadd.f32 %v6917, %v6918
    %v6920 = vsel %vm1719, %v6847, 0.0
    %v6921 = vadd.f32 %v6919, %v6920
    %v6922 = vsel %vm1719, %v6863, 0.0
    %v6923 = vadd.f32 %v6921, %v6922
    %v6924 = vsel %vm1719, %v6879, 0.0
    %v6925 = vadd.f32 %v6923, %v6924
    %v6926 = vsel %vm1719, %v6640, 0.0
    %v6927 = vsel %vm1719, %v6656, 0.0
    %v6928 = vadd.f32 %v6926, %v6927
    %v6929 = vsel %vm1719, %v6672, 0.0
    %v6930 = vadd.f32 %v6928, %v6929
    %v6931 = vsel %vm1719, %v6688, 0.0
    %v6932 = vadd.f32 %v6930, %v6931
    %v6933 = vsel %vm1719, %v6704, 0.0
    %v6934 = vadd.f32 %v6932, %v6933
    %v6935 = vsel %vm1719, %v6720, 0.0
    %v6936 = vadd.f32 %v6934, %v6935
    %v6937 = vsel %vm1719, %v6736, 0.0
    %v6938 = vadd.f32 %v6936, %v6937
    %v6939 = vsel %vm1719, %v6752, 0.0
    %v6940 = vadd.f32 %v6938, %v6939
    %v6941 = vsel %vm1719, %v6768, 0.0
    %v6942 = vadd.f32 %v6940, %v6941
    %v6943 = vsel %vm1719, %v6784, 0.0
    %v6944 = vadd.f32 %v6942, %v6943
    %v6945 = vsel %vm1719, %v6800, 0.0
    %v6946 = vadd.f32 %v6944, %v6945
    %v6947 = vsel %vm1719, %v6816, 0.0
    %v6948 = vadd.f32 %v6946, %v6947
    %v6949 = vsel %vm1719, %v6832, 0.0
    %v6950 = vadd.f32 %v6948, %v6949
    %v6951 = vsel %vm1719, %v6848, 0.0
    %v6952 = vadd.f32 %v6950, %v6951
    %v6953 = vsel %vm1719, %v6864, 0.0
    %v6954 = vadd.f32 %v6952, %v6953
    %v6955 = vsel %vm1719, %v6880, 0.0
    %v6956 = vadd.f32 %v6954, %v6955
    %v6957 = vsel %vm1719, %v6641, 0.0
    %v6958 = vsel %vm1719, %v6657, 0.0
    %v6959 = vadd.f32 %v6957, %v6958
    %v6960 = vsel %vm1719, %v6673, 0.0
    %v6961 = vadd.f32 %v6959, %v6960
    %v6962 = vsel %vm1719, %v6689, 0.0
    %v6963 = vadd.f32 %v6961, %v6962
    %v6964 = vsel %vm1719, %v6705, 0.0
    %v6965 = vadd.f32 %v6963, %v6964
    %v6966 = vsel %vm1719, %v6721, 0.0
    %v6967 = vadd.f32 %v6965, %v6966
    %v6968 = vsel %vm1719, %v6737, 0.0
    %v6969 = vadd.f32 %v6967, %v6968
    %v6970 = vsel %vm1719, %v6753, 0.0
    %v6971 = vadd.f32 %v6969, %v6970
    %v6972 = vsel %vm1719, %v6769, 0.0
    %v6973 = vadd.f32 %v6971, %v6972
    %v6974 = vsel %vm1719, %v6785, 0.0
    %v6975 = vadd.f32 %v6973, %v6974
    %v6976 = vsel %vm1719, %v6801, 0.0
    %v6977 = vadd.f32 %v6975, %v6976
    %v6978 = vsel %vm1719, %v6817, 0.0
    %v6979 = vadd.f32 %v6977, %v6978
    %v6980 = vsel %vm1719, %v6833, 0.0
    %v6981 = vadd.f32 %v6979, %v6980
    %v6982 = vsel %vm1719, %v6849, 0.0
    %v6983 = vadd.f32 %v6981, %v6982
    %v6984 = vsel %vm1719, %v6865, 0.0
    %v6985 = vadd.f32 %v6983, %v6984
    %v6986 = vsel %vm1719, %v6881, 0.0
    %v6987 = vadd.f32 %v6985, %v6986
    %v6988 = vsel %vm1719, %v6642, 0.0
    %v6989 = vsel %vm1719, %v6658, 0.0
    %v6990 = vadd.f32 %v6988, %v6989
    %v6991 = vsel %vm1719, %v6674, 0.0
    %v6992 = vadd.f32 %v6990, %v6991
    %v6993 = vsel %vm1719, %v6690, 0.0
    %v6994 = vadd.f32 %v6992, %v6993
    %v6995 = vsel %vm1719, %v6706, 0.0
    %v6996 = vadd.f32 %v6994, %v6995
    %v6997 = vsel %vm1719, %v6722, 0.0
    %v6998 = vadd.f32 %v6996, %v6997
    %v6999 = vsel %vm1719, %v6738, 0.0
    %v7000 = vadd.f32 %v6998, %v6999
    %v7001 = vsel %vm1719, %v6754, 0.0
    %v7002 = vadd.f32 %v7000, %v7001
    %v7003 = vsel %vm1719, %v6770, 0.0
    %v7004 = vadd.f32 %v7002, %v7003
    %v7005 = vsel %vm1719, %v6786, 0.0
    %v7006 = vadd.f32 %v7004, %v7005
    %v7007 = vsel %vm1719, %v6802, 0.0
    %v7008 = vadd.f32 %v7006, %v7007
    %v7009 = vsel %vm1719, %v6818, 0.0
    %v7010 = vadd.f32 %v7008, %v7009
    %v7011 = vsel %vm1719, %v6834, 0.0
    %v7012 = vadd.f32 %v7010, %v7011
    %v7013 = vsel %vm1719, %v6850, 0.0
    %v7014 = vadd.f32 %v7012, %v7013
    %v7015 = vsel %vm1719, %v6866, 0.0
    %v7016 = vadd.f32 %v7014, %v7015
    %v7017 = vsel %vm1719, %v6882, 0.0
    %v7018 = vadd.f32 %v7016, %v7017
    %v7019 = vsel %vm1719, %v6643, 0.0
    %v7020 = vsel %vm1719, %v6659, 0.0
    %v7021 = vadd.f32 %v7019, %v7020
    %v7022 = vsel %vm1719, %v6675, 0.0
    %v7023 = vadd.f32 %v7021, %v7022
    %v7024 = vsel %vm1719, %v6691, 0.0
    %v7025 = vadd.f32 %v7023, %v7024
    %v7026 = vsel %vm1719, %v6707, 0.0
    %v7027 = vadd.f32 %v7025, %v7026
    %v7028 = vsel %vm1719, %v6723, 0.0
    %v7029 = vadd.f32 %v7027, %v7028
    %v7030 = vsel %vm1719, %v6739, 0.0
    %v7031 = vadd.f32 %v7029, %v7030
    %v7032 = vsel %vm1719, %v6755, 0.0
    %v7033 = vadd.f32 %v7031, %v7032
    %v7034 = vsel %vm1719, %v6771, 0.0
    %v7035 = vadd.f32 %v7033, %v7034
    %v7036 = vsel %vm1719, %v6787, 0.0
    %v7037 = vadd.f32 %v7035, %v7036
    %v7038 = vsel %vm1719, %v6803, 0.0
    %v7039 = vadd.f32 %v7037, %v7038
    %v7040 = vsel %vm1719, %v6819, 0.0
    %v7041 = vadd.f32 %v7039, %v7040
    %v7042 = vsel %vm1719, %v6835, 0.0
    %v7043 = vadd.f32 %v7041, %v7042
    %v7044 = vsel %vm1719, %v6851, 0.0
    %v7045 = vadd.f32 %v7043, %v7044
    %v7046 = vsel %vm1719, %v6867, 0.0
    %v7047 = vadd.f32 %v7045, %v7046
    %v7048 = vsel %vm1719, %v6883, 0.0
    %v7049 = vadd.f32 %v7047, %v7048
    %v7050 = vsel %vm1719, %v6644, 0.0
    %v7051 = vsel %vm1719, %v6660, 0.0
    %v7052 = vadd.f32 %v7050, %v7051
    %v7053 = vsel %vm1719, %v6676, 0.0
    %v7054 = vadd.f32 %v7052, %v7053
    %v7055 = vsel %vm1719, %v6692, 0.0
    %v7056 = vadd.f32 %v7054, %v7055
    %v7057 = vsel %vm1719, %v6708, 0.0
    %v7058 = vadd.f32 %v7056, %v7057
    %v7059 = vsel %vm1719, %v6724, 0.0
    %v7060 = vadd.f32 %v7058, %v7059
    %v7061 = vsel %vm1719, %v6740, 0.0
    %v7062 = vadd.f32 %v7060, %v7061
    %v7063 = vsel %vm1719, %v6756, 0.0
    %v7064 = vadd.f32 %v7062, %v7063
    %v7065 = vsel %vm1719, %v6772, 0.0
    %v7066 = vadd.f32 %v7064, %v7065
    %v7067 = vsel %vm1719, %v6788, 0.0
    %v7068 = vadd.f32 %v7066, %v7067
    %v7069 = vsel %vm1719, %v6804, 0.0
    %v7070 = vadd.f32 %v7068, %v7069
    %v7071 = vsel %vm1719, %v6820, 0.0
    %v7072 = vadd.f32 %v7070, %v7071
    %v7073 = vsel %vm1719, %v6836, 0.0
    %v7074 = vadd.f32 %v7072, %v7073
    %v7075 = vsel %vm1719, %v6852, 0.0
    %v7076 = vadd.f32 %v7074, %v7075
    %v7077 = vsel %vm1719, %v6868, 0.0
    %v7078 = vadd.f32 %v7076, %v7077
    %v7079 = vsel %vm1719, %v6884, 0.0
    %v7080 = vadd.f32 %v7078, %v7079
    %v7081 = vsel %vm1719, %v6645, 0.0
    %v7082 = vsel %vm1719, %v6661, 0.0
    %v7083 = vadd.f32 %v7081, %v7082
    %v7084 = vsel %vm1719, %v6677, 0.0
    %v7085 = vadd.f32 %v7083, %v7084
    %v7086 = vsel %vm1719, %v6693, 0.0
    %v7087 = vadd.f32 %v7085, %v7086
    %v7088 = vsel %vm1719, %v6709, 0.0
    %v7089 = vadd.f32 %v7087, %v7088
    %v7090 = vsel %vm1719, %v6725, 0.0
    %v7091 = vadd.f32 %v7089, %v7090
    %v7092 = vsel %vm1719, %v6741, 0.0
    %v7093 = vadd.f32 %v7091, %v7092
    %v7094 = vsel %vm1719, %v6757, 0.0
    %v7095 = vadd.f32 %v7093, %v7094
    %v7096 = vsel %vm1719, %v6773, 0.0
    %v7097 = vadd.f32 %v7095, %v7096
    %v7098 = vsel %vm1719, %v6789, 0.0
    %v7099 = vadd.f32 %v7097, %v7098
    %v7100 = vsel %vm1719, %v6805, 0.0
    %v7101 = vadd.f32 %v7099, %v7100
    %v7102 = vsel %vm1719, %v6821, 0.0
    %v7103 = vadd.f32 %v7101, %v7102
    %v7104 = vsel %vm1719, %v6837, 0.0
    %v7105 = vadd.f32 %v7103, %v7104
    %v7106 = vsel %vm1719, %v6853, 0.0
    %v7107 = vadd.f32 %v7105, %v7106
    %v7108 = vsel %vm1719, %v6869, 0.0
    %v7109 = vadd.f32 %v7107, %v7108
    %v7110 = vsel %vm1719, %v6885, 0.0
    %v7111 = vadd.f32 %v7109, %v7110
    %v7112 = vsel %vm1719, %v6646, 0.0
    %v7113 = vsel %vm1719, %v6662, 0.0
    %v7114 = vadd.f32 %v7112, %v7113
    %v7115 = vsel %vm1719, %v6678, 0.0
    %v7116 = vadd.f32 %v7114, %v7115
    %v7117 = vsel %vm1719, %v6694, 0.0
    %v7118 = vadd.f32 %v7116, %v7117
    %v7119 = vsel %vm1719, %v6710, 0.0
    %v7120 = vadd.f32 %v7118, %v7119
    %v7121 = vsel %vm1719, %v6726, 0.0
    %v7122 = vadd.f32 %v7120, %v7121
    %v7123 = vsel %vm1719, %v6742, 0.0
    %v7124 = vadd.f32 %v7122, %v7123
    %v7125 = vsel %vm1719, %v6758, 0.0
    %v7126 = vadd.f32 %v7124, %v7125
    %v7127 = vsel %vm1719, %v6774, 0.0
    %v7128 = vadd.f32 %v7126, %v7127
    %v7129 = vsel %vm1719, %v6790, 0.0
    %v7130 = vadd.f32 %v7128, %v7129
    %v7131 = vsel %vm1719, %v6806, 0.0
    %v7132 = vadd.f32 %v7130, %v7131
    %v7133 = vsel %vm1719, %v6822, 0.0
    %v7134 = vadd.f32 %v7132, %v7133
    %v7135 = vsel %vm1719, %v6838, 0.0
    %v7136 = vadd.f32 %v7134, %v7135
    %v7137 = vsel %vm1719, %v6854, 0.0
    %v7138 = vadd.f32 %v7136, %v7137
    %v7139 = vsel %vm1719, %v6870, 0.0
    %v7140 = vadd.f32 %v7138, %v7139
    %v7141 = vsel %vm1719, %v6886, 0.0
    %v7142 = vadd.f32 %v7140, %v7141
    %v7143 = vsel %vm1719, %v6647, 0.0
    %v7144 = vsel %vm1719, %v6663, 0.0
    %v7145 = vadd.f32 %v7143, %v7144
    %v7146 = vsel %vm1719, %v6679, 0.0
    %v7147 = vadd.f32 %v7145, %v7146
    %v7148 = vsel %vm1719, %v6695, 0.0
    %v7149 = vadd.f32 %v7147, %v7148
    %v7150 = vsel %vm1719, %v6711, 0.0
    %v7151 = vadd.f32 %v7149, %v7150
    %v7152 = vsel %vm1719, %v6727, 0.0
    %v7153 = vadd.f32 %v7151, %v7152
    %v7154 = vsel %vm1719, %v6743, 0.0
    %v7155 = vadd.f32 %v7153, %v7154
    %v7156 = vsel %vm1719, %v6759, 0.0
    %v7157 = vadd.f32 %v7155, %v7156
    %v7158 = vsel %vm1719, %v6775, 0.0
    %v7159 = vadd.f32 %v7157, %v7158
    %v7160 = vsel %vm1719, %v6791, 0.0
    %v7161 = vadd.f32 %v7159, %v7160
    %v7162 = vsel %vm1719, %v6807, 0.0
    %v7163 = vadd.f32 %v7161, %v7162
    %v7164 = vsel %vm1719, %v6823, 0.0
    %v7165 = vadd.f32 %v7163, %v7164
    %v7166 = vsel %vm1719, %v6839, 0.0
    %v7167 = vadd.f32 %v7165, %v7166
    %v7168 = vsel %vm1719, %v6855, 0.0
    %v7169 = vadd.f32 %v7167, %v7168
    %v7170 = vsel %vm1719, %v6871, 0.0
    %v7171 = vadd.f32 %v7169, %v7170
    %v7172 = vsel %vm1719, %v6887, 0.0
    %v7173 = vadd.f32 %v7171, %v7172
    %v7174 = vsel %vm1719, %v6648, 0.0
    %v7175 = vsel %vm1719, %v6664, 0.0
    %v7176 = vadd.f32 %v7174, %v7175
    %v7177 = vsel %vm1719, %v6680, 0.0
    %v7178 = vadd.f32 %v7176, %v7177
    %v7179 = vsel %vm1719, %v6696, 0.0
    %v7180 = vadd.f32 %v7178, %v7179
    %v7181 = vsel %vm1719, %v6712, 0.0
    %v7182 = vadd.f32 %v7180, %v7181
    %v7183 = vsel %vm1719, %v6728, 0.0
    %v7184 = vadd.f32 %v7182, %v7183
    %v7185 = vsel %vm1719, %v6744, 0.0
    %v7186 = vadd.f32 %v7184, %v7185
    %v7187 = vsel %vm1719, %v6760, 0.0
    %v7188 = vadd.f32 %v7186, %v7187
    %v7189 = vsel %vm1719, %v6776, 0.0
    %v7190 = vadd.f32 %v7188, %v7189
    %v7191 = vsel %vm1719, %v6792, 0.0
    %v7192 = vadd.f32 %v7190, %v7191
    %v7193 = vsel %vm1719, %v6808, 0.0
    %v7194 = vadd.f32 %v7192, %v7193
    %v7195 = vsel %vm1719, %v6824, 0.0
    %v7196 = vadd.f32 %v7194, %v7195
    %v7197 = vsel %vm1719, %v6840, 0.0
    %v7198 = vadd.f32 %v7196, %v7197
    %v7199 = vsel %vm1719, %v6856, 0.0
    %v7200 = vadd.f32 %v7198, %v7199
    %v7201 = vsel %vm1719, %v6872, 0.0
    %v7202 = vadd.f32 %v7200, %v7201
    %v7203 = vsel %vm1719, %v6888, 0.0
    %v7204 = vadd.f32 %v7202, %v7203
    %v7205 = vsel %vm1719, %v6649, 0.0
    %v7206 = vsel %vm1719, %v6665, 0.0
    %v7207 = vadd.f32 %v7205, %v7206
    %v7208 = vsel %vm1719, %v6681, 0.0
    %v7209 = vadd.f32 %v7207, %v7208
    %v7210 = vsel %vm1719, %v6697, 0.0
    %v7211 = vadd.f32 %v7209, %v7210
    %v7212 = vsel %vm1719, %v6713, 0.0
    %v7213 = vadd.f32 %v7211, %v7212
    %v7214 = vsel %vm1719, %v6729, 0.0
    %v7215 = vadd.f32 %v7213, %v7214
    %v7216 = vsel %vm1719, %v6745, 0.0
    %v7217 = vadd.f32 %v7215, %v7216
    %v7218 = vsel %vm1719, %v6761, 0.0
    %v7219 = vadd.f32 %v7217, %v7218
    %v7220 = vsel %vm1719, %v6777, 0.0
    %v7221 = vadd.f32 %v7219, %v7220
    %v7222 = vsel %vm1719, %v6793, 0.0
    %v7223 = vadd.f32 %v7221, %v7222
    %v7224 = vsel %vm1719, %v6809, 0.0
    %v7225 = vadd.f32 %v7223, %v7224
    %v7226 = vsel %vm1719, %v6825, 0.0
    %v7227 = vadd.f32 %v7225, %v7226
    %v7228 = vsel %vm1719, %v6841, 0.0
    %v7229 = vadd.f32 %v7227, %v7228
    %v7230 = vsel %vm1719, %v6857, 0.0
    %v7231 = vadd.f32 %v7229, %v7230
    %v7232 = vsel %vm1719, %v6873, 0.0
    %v7233 = vadd.f32 %v7231, %v7232
    %v7234 = vsel %vm1719, %v6889, 0.0
    %v7235 = vadd.f32 %v7233, %v7234
    %v7236 = vsel %vm1719, %v6650, 0.0
    %v7237 = vsel %vm1719, %v6666, 0.0
    %v7238 = vadd.f32 %v7236, %v7237
    %v7239 = vsel %vm1719, %v6682, 0.0
    %v7240 = vadd.f32 %v7238, %v7239
    %v7241 = vsel %vm1719, %v6698, 0.0
    %v7242 = vadd.f32 %v7240, %v7241
    %v7243 = vsel %vm1719, %v6714, 0.0
    %v7244 = vadd.f32 %v7242, %v7243
    %v7245 = vsel %vm1719, %v6730, 0.0
    %v7246 = vadd.f32 %v7244, %v7245
    %v7247 = vsel %vm1719, %v6746, 0.0
    %v7248 = vadd.f32 %v7246, %v7247
    %v7249 = vsel %vm1719, %v6762, 0.0
    %v7250 = vadd.f32 %v7248, %v7249
    %v7251 = vsel %vm1719, %v6778, 0.0
    %v7252 = vadd.f32 %v7250, %v7251
    %v7253 = vsel %vm1719, %v6794, 0.0
    %v7254 = vadd.f32 %v7252, %v7253
    %v7255 = vsel %vm1719, %v6810, 0.0
    %v7256 = vadd.f32 %v7254, %v7255
    %v7257 = vsel %vm1719, %v6826, 0.0
    %v7258 = vadd.f32 %v7256, %v7257
    %v7259 = vsel %vm1719, %v6842, 0.0
    %v7260 = vadd.f32 %v7258, %v7259
    %v7261 = vsel %vm1719, %v6858, 0.0
    %v7262 = vadd.f32 %v7260, %v7261
    %v7263 = vsel %vm1719, %v6874, 0.0
    %v7264 = vadd.f32 %v7262, %v7263
    %v7265 = vsel %vm1719, %v6890, 0.0
    %v7266 = vadd.f32 %v7264, %v7265
    %v7267 = vsel %vm1719, %v6651, 0.0
    %v7268 = vsel %vm1719, %v6667, 0.0
    %v7269 = vadd.f32 %v7267, %v7268
    %v7270 = vsel %vm1719, %v6683, 0.0
    %v7271 = vadd.f32 %v7269, %v7270
    %v7272 = vsel %vm1719, %v6699, 0.0
    %v7273 = vadd.f32 %v7271, %v7272
    %v7274 = vsel %vm1719, %v6715, 0.0
    %v7275 = vadd.f32 %v7273, %v7274
    %v7276 = vsel %vm1719, %v6731, 0.0
    %v7277 = vadd.f32 %v7275, %v7276
    %v7278 = vsel %vm1719, %v6747, 0.0
    %v7279 = vadd.f32 %v7277, %v7278
    %v7280 = vsel %vm1719, %v6763, 0.0
    %v7281 = vadd.f32 %v7279, %v7280
    %v7282 = vsel %vm1719, %v6779, 0.0
    %v7283 = vadd.f32 %v7281, %v7282
    %v7284 = vsel %vm1719, %v6795, 0.0
    %v7285 = vadd.f32 %v7283, %v7284
    %v7286 = vsel %vm1719, %v6811, 0.0
    %v7287 = vadd.f32 %v7285, %v7286
    %v7288 = vsel %vm1719, %v6827, 0.0
    %v7289 = vadd.f32 %v7287, %v7288
    %v7290 = vsel %vm1719, %v6843, 0.0
    %v7291 = vadd.f32 %v7289, %v7290
    %v7292 = vsel %vm1719, %v6859, 0.0
    %v7293 = vadd.f32 %v7291, %v7292
    %v7294 = vsel %vm1719, %v6875, 0.0
    %v7295 = vadd.f32 %v7293, %v7294
    %v7296 = vsel %vm1719, %v6891, 0.0
    %v7297 = vadd.f32 %v7295, %v7296
    %v7298 = vsel %vm1719, %v6652, 0.0
    %v7299 = vsel %vm1719, %v6668, 0.0
    %v7300 = vadd.f32 %v7298, %v7299
    %v7301 = vsel %vm1719, %v6684, 0.0
    %v7302 = vadd.f32 %v7300, %v7301
    %v7303 = vsel %vm1719, %v6700, 0.0
    %v7304 = vadd.f32 %v7302, %v7303
    %v7305 = vsel %vm1719, %v6716, 0.0
    %v7306 = vadd.f32 %v7304, %v7305
    %v7307 = vsel %vm1719, %v6732, 0.0
    %v7308 = vadd.f32 %v7306, %v7307
    %v7309 = vsel %vm1719, %v6748, 0.0
    %v7310 = vadd.f32 %v7308, %v7309
    %v7311 = vsel %vm1719, %v6764, 0.0
    %v7312 = vadd.f32 %v7310, %v7311
    %v7313 = vsel %vm1719, %v6780, 0.0
    %v7314 = vadd.f32 %v7312, %v7313
    %v7315 = vsel %vm1719, %v6796, 0.0
    %v7316 = vadd.f32 %v7314, %v7315
    %v7317 = vsel %vm1719, %v6812, 0.0
    %v7318 = vadd.f32 %v7316, %v7317
    %v7319 = vsel %vm1719, %v6828, 0.0
    %v7320 = vadd.f32 %v7318, %v7319
    %v7321 = vsel %vm1719, %v6844, 0.0
    %v7322 = vadd.f32 %v7320, %v7321
    %v7323 = vsel %vm1719, %v6860, 0.0
    %v7324 = vadd.f32 %v7322, %v7323
    %v7325 = vsel %vm1719, %v6876, 0.0
    %v7326 = vadd.f32 %v7324, %v7325
    %v7327 = vsel %vm1719, %v6892, 0.0
    %v7328 = vadd.f32 %v7326, %v7327
    %v7329 = vsel %vm1719, %v6653, 0.0
    %v7330 = vsel %vm1719, %v6669, 0.0
    %v7331 = vadd.f32 %v7329, %v7330
    %v7332 = vsel %vm1719, %v6685, 0.0
    %v7333 = vadd.f32 %v7331, %v7332
    %v7334 = vsel %vm1719, %v6701, 0.0
    %v7335 = vadd.f32 %v7333, %v7334
    %v7336 = vsel %vm1719, %v6717, 0.0
    %v7337 = vadd.f32 %v7335, %v7336
    %v7338 = vsel %vm1719, %v6733, 0.0
    %v7339 = vadd.f32 %v7337, %v7338
    %v7340 = vsel %vm1719, %v6749, 0.0
    %v7341 = vadd.f32 %v7339, %v7340
    %v7342 = vsel %vm1719, %v6765, 0.0
    %v7343 = vadd.f32 %v7341, %v7342
    %v7344 = vsel %vm1719, %v6781, 0.0
    %v7345 = vadd.f32 %v7343, %v7344
    %v7346 = vsel %vm1719, %v6797, 0.0
    %v7347 = vadd.f32 %v7345, %v7346
    %v7348 = vsel %vm1719, %v6813, 0.0
    %v7349 = vadd.f32 %v7347, %v7348
    %v7350 = vsel %vm1719, %v6829, 0.0
    %v7351 = vadd.f32 %v7349, %v7350
    %v7352 = vsel %vm1719, %v6845, 0.0
    %v7353 = vadd.f32 %v7351, %v7352
    %v7354 = vsel %vm1719, %v6861, 0.0
    %v7355 = vadd.f32 %v7353, %v7354
    %v7356 = vsel %vm1719, %v6877, 0.0
    %v7357 = vadd.f32 %v7355, %v7356
    %v7358 = vsel %vm1719, %v6893, 0.0
    %v7359 = vadd.f32 %v7357, %v7358
    %v7360 = vsel %vm1719, %v6654, 0.0
    %v7361 = vsel %vm1719, %v6670, 0.0
    %v7362 = vadd.f32 %v7360, %v7361
    %v7363 = vsel %vm1719, %v6686, 0.0
    %v7364 = vadd.f32 %v7362, %v7363
    %v7365 = vsel %vm1719, %v6702, 0.0
    %v7366 = vadd.f32 %v7364, %v7365
    %v7367 = vsel %vm1719, %v6718, 0.0
    %v7368 = vadd.f32 %v7366, %v7367
    %v7369 = vsel %vm1719, %v6734, 0.0
    %v7370 = vadd.f32 %v7368, %v7369
    %v7371 = vsel %vm1719, %v6750, 0.0
    %v7372 = vadd.f32 %v7370, %v7371
    %v7373 = vsel %vm1719, %v6766, 0.0
    %v7374 = vadd.f32 %v7372, %v7373
    %v7375 = vsel %vm1719, %v6782, 0.0
    %v7376 = vadd.f32 %v7374, %v7375
    %v7377 = vsel %vm1719, %v6798, 0.0
    %v7378 = vadd.f32 %v7376, %v7377
    %v7379 = vsel %vm1719, %v6814, 0.0
    %v7380 = vadd.f32 %v7378, %v7379
    %v7381 = vsel %vm1719, %v6830, 0.0
    %v7382 = vadd.f32 %v7380, %v7381
    %v7383 = vsel %vm1719, %v6846, 0.0
    %v7384 = vadd.f32 %v7382, %v7383
    %v7385 = vsel %vm1719, %v6862, 0.0
    %v7386 = vadd.f32 %v7384, %v7385
    %v7387 = vsel %vm1719, %v6878, 0.0
    %v7388 = vadd.f32 %v7386, %v7387
    %v7389 = vsel %vm1719, %v6894, 0.0
    %v7390 = vadd.f32 %v7388, %v7389
    %v7391 = vsel %vm3557, %v6925, 0.0
    %v7392 = vsel %vm3558, %v6956, 0.0
    %v7393 = vsel %vm3559, %v6987, 0.0
    %v7394 = vsel %vm3560, %v7018, 0.0
    %v7395 = vsel %vm3561, %v7049, 0.0
    %v7396 = vsel %vm3562, %v7080, 0.0
    %v7397 = vsel %vm3563, %v7111, 0.0
    %v7398 = vsel %vm3564, %v7142, 0.0
    %v7399 = vsel %vm3565, %v7173, 0.0
    %v7400 = vsel %vm3566, %v7204, 0.0
    %v7401 = vsel %vm3567, %v7235, 0.0
    %v7402 = vsel %vm3568, %v7266, 0.0
    %v7403 = vsel %vm3569, %v7297, 0.0
    %v7404 = vsel %vm3570, %v7328, 0.0
    %v7405 = vsel %vm3571, %v7359, 0.0
    %v7406 = vsel %vm3572, %v7390, 0.0
    %v7407 = vsel %vm1719, %v7391, 0.0
    %v7408 = vsel %vm1719, %v7392, 0.0
    %v7409 = vadd.f32 %v7407, %v7408
    %v7410 = vsel %vm1719, %v7393, 0.0
    %v7411 = vadd.f32 %v7409, %v7410
    %v7412 = vsel %vm1719, %v7394, 0.0
    %v7413 = vadd.f32 %v7411, %v7412
    %v7414 = vsel %vm1719, %v7395, 0.0
    %v7415 = vadd.f32 %v7413, %v7414
    %v7416 = vsel %vm1719, %v7396, 0.0
    %v7417 = vadd.f32 %v7415, %v7416
    %v7418 = vsel %vm1719, %v7397, 0.0
    %v7419 = vadd.f32 %v7417, %v7418
    %v7420 = vsel %vm1719, %v7398, 0.0
    %v7421 = vadd.f32 %v7419, %v7420
    %v7422 = vsel %vm1719, %v7399, 0.0
    %v7423 = vadd.f32 %v7421, %v7422
    %v7424 = vsel %vm1719, %v7400, 0.0
    %v7425 = vadd.f32 %v7423, %v7424
    %v7426 = vsel %vm1719, %v7401, 0.0
    %v7427 = vadd.f32 %v7425, %v7426
    %v7428 = vsel %vm1719, %v7402, 0.0
    %v7429 = vadd.f32 %v7427, %v7428
    %v7430 = vsel %vm1719, %v7403, 0.0
    %v7431 = vadd.f32 %v7429, %v7430
    %v7432 = vsel %vm1719, %v7404, 0.0
    %v7433 = vadd.f32 %v7431, %v7432
    %v7434 = vsel %vm1719, %v7405, 0.0
    %v7435 = vadd.f32 %v7433, %v7434
    %v7436 = vsel %vm1719, %v7406, 0.0
    %v7437 = vadd.f32 %v7435, %v7436
    %v7438 = vsel %vm3574, %v6925, 0.0
    %v7439 = vsel %vm3575, %v6956, 0.0
    %v7440 = vsel %vm3576, %v6987, 0.0
    %v7441 = vsel %vm3577, %v7018, 0.0
    %v7442 = vsel %vm3578, %v7049, 0.0
    %v7443 = vsel %vm3579, %v7080, 0.0
    %v7444 = vsel %vm3580, %v7111, 0.0
    %v7445 = vsel %vm3581, %v7142, 0.0
    %v7446 = vsel %vm3582, %v7173, 0.0
    %v7447 = vsel %vm3583, %v7204, 0.0
    %v7448 = vsel %vm3584, %v7235, 0.0
    %v7449 = vsel %vm3585, %v7266, 0.0
    %v7450 = vsel %vm3586, %v7297, 0.0
    %v7451 = vsel %vm3587, %v7328, 0.0
    %v7452 = vsel %vm3588, %v7359, 0.0
    %v7453 = vsel %vm3589, %v7390, 0.0
    %v7454 = vsel %vm1719, %v7438, 0.0
    %v7455 = vsel %vm1719, %v7439, 0.0
    %v7456 = vadd.f32 %v7454, %v7455
    %v7457 = vsel %vm1719, %v7440, 0.0
    %v7458 = vadd.f32 %v7456, %v7457
    %v7459 = vsel %vm1719, %v7441, 0.0
    %v7460 = vadd.f32 %v7458, %v7459
    %v7461 = vsel %vm1719, %v7442, 0.0
    %v7462 = vadd.f32 %v7460, %v7461
    %v7463 = vsel %vm1719, %v7443, 0.0
    %v7464 = vadd.f32 %v7462, %v7463
    %v7465 = vsel %vm1719, %v7444, 0.0
    %v7466 = vadd.f32 %v7464, %v7465
    %v7467 = vsel %vm1719, %v7445, 0.0
    %v7468 = vadd.f32 %v7466, %v7467
    %v7469 = vsel %vm1719, %v7446, 0.0
    %v7470 = vadd.f32 %v7468, %v7469
    %v7471 = vsel %vm1719, %v7447, 0.0
    %v7472 = vadd.f32 %v7470, %v7471
    %v7473 = vsel %vm1719, %v7448, 0.0
    %v7474 = vadd.f32 %v7472, %v7473
    %v7475 = vsel %vm1719, %v7449, 0.0
    %v7476 = vadd.f32 %v7474, %v7475
    %v7477 = vsel %vm1719, %v7450, 0.0
    %v7478 = vadd.f32 %v7476, %v7477
    %v7479 = vsel %vm1719, %v7451, 0.0
    %v7480 = vadd.f32 %v7478, %v7479
    %v7481 = vsel %vm1719, %v7452, 0.0
    %v7482 = vadd.f32 %v7480, %v7481
    %v7483 = vsel %vm1719, %v7453, 0.0
    %v7484 = vadd.f32 %v7482, %v7483
    %v7485 = vsel %vm3591, %v6925, 0.0
    %v7486 = vsel %vm3592, %v6956, 0.0
    %v7487 = vsel %vm3593, %v6987, 0.0
    %v7488 = vsel %vm3594, %v7018, 0.0
    %v7489 = vsel %vm3595, %v7049, 0.0
    %v7490 = vsel %vm3596, %v7080, 0.0
    %v7491 = vsel %vm3597, %v7111, 0.0
    %v7492 = vsel %vm3598, %v7142, 0.0
    %v7493 = vsel %vm3599, %v7173, 0.0
    %v7494 = vsel %vm3600, %v7204, 0.0
    %v7495 = vsel %vm3601, %v7235, 0.0
    %v7496 = vsel %vm3602, %v7266, 0.0
    %v7497 = vsel %vm3603, %v7297, 0.0
    %v7498 = vsel %vm3604, %v7328, 0.0
    %v7499 = vsel %vm3605, %v7359, 0.0
    %v7500 = vsel %vm3606, %v7390, 0.0
    %v7501 = vsel %vm1719, %v7485, 0.0
    %v7502 = vsel %vm1719, %v7486, 0.0
    %v7503 = vadd.f32 %v7501, %v7502
    %v7504 = vsel %vm1719, %v7487, 0.0
    %v7505 = vadd.f32 %v7503, %v7504
    %v7506 = vsel %vm1719, %v7488, 0.0
    %v7507 = vadd.f32 %v7505, %v7506
    %v7508 = vsel %vm1719, %v7489, 0.0
    %v7509 = vadd.f32 %v7507, %v7508
    %v7510 = vsel %vm1719, %v7490, 0.0
    %v7511 = vadd.f32 %v7509, %v7510
    %v7512 = vsel %vm1719, %v7491, 0.0
    %v7513 = vadd.f32 %v7511, %v7512
    %v7514 = vsel %vm1719, %v7492, 0.0
    %v7515 = vadd.f32 %v7513, %v7514
    %v7516 = vsel %vm1719, %v7493, 0.0
    %v7517 = vadd.f32 %v7515, %v7516
    %v7518 = vsel %vm1719, %v7494, 0.0
    %v7519 = vadd.f32 %v7517, %v7518
    %v7520 = vsel %vm1719, %v7495, 0.0
    %v7521 = vadd.f32 %v7519, %v7520
    %v7522 = vsel %vm1719, %v7496, 0.0
    %v7523 = vadd.f32 %v7521, %v7522
    %v7524 = vsel %vm1719, %v7497, 0.0
    %v7525 = vadd.f32 %v7523, %v7524
    %v7526 = vsel %vm1719, %v7498, 0.0
    %v7527 = vadd.f32 %v7525, %v7526
    %v7528 = vsel %vm1719, %v7499, 0.0
    %v7529 = vadd.f32 %v7527, %v7528
    %v7530 = vsel %vm1719, %v7500, 0.0
    %v7531 = vadd.f32 %v7529, %v7530
    %v7532 = vsel %vm3608, %v6925, 0.0
    %v7533 = vsel %vm3609, %v6956, 0.0
    %v7534 = vsel %vm3610, %v6987, 0.0
    %v7535 = vsel %vm3611, %v7018, 0.0
    %v7536 = vsel %vm3612, %v7049, 0.0
    %v7537 = vsel %vm3613, %v7080, 0.0
    %v7538 = vsel %vm3614, %v7111, 0.0
    %v7539 = vsel %vm3615, %v7142, 0.0
    %v7540 = vsel %vm3616, %v7173, 0.0
    %v7541 = vsel %vm3617, %v7204, 0.0
    %v7542 = vsel %vm3618, %v7235, 0.0
    %v7543 = vsel %vm3619, %v7266, 0.0
    %v7544 = vsel %vm3620, %v7297, 0.0
    %v7545 = vsel %vm3621, %v7328, 0.0
    %v7546 = vsel %vm3622, %v7359, 0.0
    %v7547 = vsel %vm3623, %v7390, 0.0
    %v7548 = vsel %vm1719, %v7532, 0.0
    %v7549 = vsel %vm1719, %v7533, 0.0
    %v7550 = vadd.f32 %v7548, %v7549
    %v7551 = vsel %vm1719, %v7534, 0.0
    %v7552 = vadd.f32 %v7550, %v7551
    %v7553 = vsel %vm1719, %v7535, 0.0
    %v7554 = vadd.f32 %v7552, %v7553
    %v7555 = vsel %vm1719, %v7536, 0.0
    %v7556 = vadd.f32 %v7554, %v7555
    %v7557 = vsel %vm1719, %v7537, 0.0
    %v7558 = vadd.f32 %v7556, %v7557
    %v7559 = vsel %vm1719, %v7538, 0.0
    %v7560 = vadd.f32 %v7558, %v7559
    %v7561 = vsel %vm1719, %v7539, 0.0
    %v7562 = vadd.f32 %v7560, %v7561
    %v7563 = vsel %vm1719, %v7540, 0.0
    %v7564 = vadd.f32 %v7562, %v7563
    %v7565 = vsel %vm1719, %v7541, 0.0
    %v7566 = vadd.f32 %v7564, %v7565
    %v7567 = vsel %vm1719, %v7542, 0.0
    %v7568 = vadd.f32 %v7566, %v7567
    %v7569 = vsel %vm1719, %v7543, 0.0
    %v7570 = vadd.f32 %v7568, %v7569
    %v7571 = vsel %vm1719, %v7544, 0.0
    %v7572 = vadd.f32 %v7570, %v7571
    %v7573 = vsel %vm1719, %v7545, 0.0
    %v7574 = vadd.f32 %v7572, %v7573
    %v7575 = vsel %vm1719, %v7546, 0.0
    %v7576 = vadd.f32 %v7574, %v7575
    %v7577 = vsel %vm1719, %v7547, 0.0
    %v7578 = vadd.f32 %v7576, %v7577
    %7579 = vst [vmem:[#allocation5] sm:$0x1] %v4470
    %7580 = vst [vmem:[#allocation5 + $0x1] sm:$0x1] %v4517
    %7581 = vst [vmem:[#allocation5 + $0x2] sm:$0x1] %v4564
    %7582 = vst [vmem:[#allocation5 + $0x3] sm:$0x1] %v4611
    %7583 = vst [vmem:[#allocation5 + $0x4] sm:$0x1] %v5459
    %7584 = vst [vmem:[#allocation5 + $0x5] sm:$0x1] %v5506
    %7585 = vst [vmem:[#allocation5 + $0x6] sm:$0x1] %v5553
    %7586 = vst [vmem:[#allocation5 + $0x7] sm:$0x1] %v5600
    %7587 = vst [vmem:[#allocation5 + $0x8] sm:$0x1] %v6448
    %7588 = vst [vmem:[#allocation5 + $0x9] sm:$0x1] %v6495
    %7589 = vst [vmem:[#allocation5 + $0xa] sm:$0x1] %v6542
    %7590 = vst [vmem:[#allocation5 + $0xb] sm:$0x1] %v6589
    %7591 = vst [vmem:[#allocation5 + $0xc] sm:$0x1] %v7437
    %7592 = vst [vmem:[#allocation5 + $0xd] sm:$0x1] %v7484
    %7593 = vst [vmem:[#allocation5 + $0xe] sm:$0x1] %v7531
    %7594 = vst [vmem:[#allocation5 + $0xf] sm:$0x1] %v7578
    // Predicated region
    $region10: #{tpu_custom_call.1} parent=1 // pred_check
      _
    $region11: #{tpu_custom_call.1} parent=1 // pred_check_branch
      %7596 = sbr.rel (0) target = $region13
    $region12: #{tpu_custom_call.1} parent=1 // pred_region
      %s7598 = ssub.s32 256, 256
      %7599 = vsyncadd [#allocation4], %s7598
      %s7600 = sshll.u32 [#allocation5], 4
      %s7601 = int_to_ptr.vmem [resolvable:$true] %s7600
      %7606 = dma.vmem_to_hbm [thread:$0]  %s7601, 256, %s1, [#allocation4], 16, 16, 1
    $region13: #{tpu_custom_call.1} parent=1 // pred_fallthru
      _
    // Predicated region
    $region14: #{tpu_custom_call.1} parent=1 // pred_check
      _
    $region15: #{tpu_custom_call.1} parent=1 // pred_check_branch
      %7608 = sbr.rel (0) target = $region17
    $region16: #{tpu_custom_call.1} parent=1 // pred_region
      %7609 = dma.done [#allocation4], 256
    $region17: #{tpu_custom_call.1} parent=1 // pred_fallthru
      _
    %7610 = vsyncpa [#allocation3], 1
    %7611 = vsyncpa [#allocation4], 1

</llo_original>
